<compile_context>
chip_gen: v5e
topology: v5e:2x2
jax: 0.10.0
libtpu: 0.0.40
codegen_flags: <defaults>
</compile_context>

<pallas_src>
import jax
import jax.numpy as jnp
from jax import lax
from jax.experimental import pallas as pl
from jax.experimental.pallas import tpu as pltpu

N_ALLERGENS = 7           # FP.CONTAINS_{EGGS,GLUTEN,MILK,PEANUTS_OR_NUTS,SOY,FISH,SESAME}
E_CHUNK = 128             # element-axis chunk (lane aligned)
CPAD = 128                # category axis padded to one full lane width
INV_VAR = 100.0           # 1 / 0.01
BOUND_CUTOFF = 222.5
BOUND_SLOPE = 50.0
ALLERGENS_PENALTY = 3.0
PAD_ID = -4096.0          # far outside [0, N_FOODS): exp(-(PAD_ID - i)^2*100) == 0 exactly


def _allergens_kernel(true_ref, pred_ref, w_ref, o_ref):
    # true_ref / pred_ref : (TILE_B, E_PAD)  f32 dense menu ids
    # w_ref               : (NPAD, CPAD)     f32 binary weights (VMEM-resident)
    # o_ref               : (TILE_B, CPAD)   f32 per-(batch, category) loss terms
    tb, e_pad = true_ref.shape
    npad, _ = w_ref.shape
    n_chunks = e_pad // E_CHUNK                               # static python int (== 2)

    # Food-id grid along the lane axis: idx[..., i] = i.
    idx = lax.broadcasted_iota(jnp.int32, (1, 1, npad), 2).astype(jnp.float32)

    acc_g = jnp.zeros((tb, npad), jnp.float32)                # sum_e exp(-(t  - i)^2 * 100)
    acc_p = jnp.zeros((tb, npad), jnp.float32)                # sum_e exp(-(rb - i)^2 * 100)

    # Chunk the element axis so only a (tb, E_CHUNK, npad) slab is live at a time.
    for c in range(n_chunks):                                 # tiny, fully unrolled
        sl = slice(c * E_CHUNK, (c + 1) * E_CHUNK)
        t = true_ref[:, sl]                                   # (tb, EC) dense layout
        p = pred_ref[:, sl]

        # round + bound on the dense layout (~2 vregs, near-free).
        # For r >> 222.5 the exp overflows to inf -> pb == 0, matching torch.sigmoid.
        r = jnp.round(p)
        pb = r / (1.0 + jnp.exp(-BOUND_SLOPE * (BOUND_CUTOFF - r)))

        dg = t[:, :, None] - idx                              # (tb, EC, npad)
        acc_g = acc_g + jnp.sum(jnp.exp(dg * dg * (-INV_VAR)), axis=1)
        dp = pb[:, :, None] - idx
        acc_p = acc_p + jnp.sum(jnp.exp(dp * dp * (-INV_VAR)), axis=1)

    # Fold the binary per-category weights in on the (otherwise idle) MXU:
    #   gbv[b, c] = sum_i acc[b, i] * W[i, c]      (exact because data is {0,1}).
    w = w_ref[...]
    gold = jnp.dot(acc_g, w, preferred_element_type=jnp.float32)   # (tb, CPAD)
    pred = jnp.dot(acc_p, w, preferred_element_type=jnp.float32)

    # Padded categories have all-zero weight columns -> gold = pred = 0 -> exp(0)*0 = 0.
    o_ref[...] = jnp.exp(-10.0 * gold) * (pred * pred)


def _pick_tile_b(batch):
    # Biggest tile (<= 32 rows) that still yields >= 2 grid steps so v7x's second
    # TensorCore gets work; falls back to the minimum aligned tile of 8.
    for t in (32, 16, 8):
        if batch >= 2 * t:
            return t
    return 8


def allergens_loss(y_pred, y, data, allergen_cols):
    """y_pred, y: (B, 7, 3, 10, 2); data: (N_FOODS, N_COLS) *binary* foods table.

    The shared-exp + matmul restructure is exact only for a binary foods table:
    v = 0 terms vanish either way, v = 1 targets collapse to the food index i.
    """
    B = y_pred.shape[0]
    E = 1
    for d in y_pred.shape[1:-1]:
        E *= d                                                 # 7*3*10 = 210

    true_ids = y[..., 0].reshape(B, E).astype(jnp.float32)
    pred_ids = y_pred[..., 0].reshape(B, E).astype(jnp.float32)

    # Binary weight matrix W[i, c] = data[i, allergen_cols[c]], zero padded.
    n_foods = data.shape[0]
    n_cat = len(allergen_cols)
    npad = ((n_foods + 127) // 128) * 128
    w = jnp.zeros((npad, CPAD), jnp.float32)
    w = w.at[:n_foods, :n_cat].set(data[:, jnp.asarray(allergen_cols)].astype(jnp.float32))

    # Pad the element axis to a lane-aligned multiple of E_CHUNK and the batch to
    # the tile size.  PAD_ID is far outside [0, N), so padded elements contribute
    # exactly 0 to both gaussian sums; padded batch rows are sliced off below.
    e_pad = ((E + E_CHUNK - 1) // E_CHUNK) * E_CHUNK
    tile_b = _pick_tile_b(B)
    b_pad = ((B + tile_b - 1) // tile_b) * tile_b
    pad = ((0, b_pad - B), (0, e_pad - E))
    true_ids = jnp.pad(true_ids, pad, constant_values=PAD_ID)
    pred_ids = jnp.pad(pred_ids, pad, constant_values=PAD_ID)

    out = pl.pallas_call(
        _allergens_kernel,
        out_shape=jax.ShapeDtypeStruct((b_pad, CPAD), jnp.float32),
        grid_spec=pltpu.PrefetchScalarGridSpec(
            num_scalar_prefetch=0,
            grid=(b_pad // tile_b,),
            in_specs=[
                pl.BlockSpec((tile_b, e_pad), lambda i: (i, 0)),
                pl.BlockSpec((tile_b, e_pad), lambda i: (i, 0)),
                # Constant index_map -> weight matrix fetched once, stays resident.
                pl.BlockSpec((npad, CPAD), lambda i: (0, 0)),
            ],
            out_specs=pl.BlockSpec((tile_b, CPAD), lambda i: (i, 0)),
        ),
        compiler_params=pltpu.CompilerParams(
            dimension_semantics=("parallel",),
            vmem_limit_bytes=32 * 1024 * 1024),
    )(true_ids, pred_ids, w)

    per_cat = out[:B, :n_cat]                                  # (B, 7)
    # sum_c mean_b(...) == mean_b(sum_c ...): kernel emits per-(b, c) terms,
    # the wrapper does the cheap scalar glue.
    return ALLERGENS_PENALTY * per_cat.sum(axis=1).mean()


# ----------------------------- pure-JAX reference -----------------------------

def _get_binary_value_ref(x, data, col):
    v = data[:, col]                                           # (N,)
    i = jnp.arange(data.shape[0], dtype=jnp.float32)
    shp = (-1,) + (1,) * x.ndim
    terms = v.reshape(shp) * jnp.exp(-((x[None, ...] - (i * v).reshape(shp)) ** 2) / 0.01)
    return terms.sum(axis=0)


def _reference(y_pred, y, data, allergen_cols):
    pred_ids = y_pred[..., 0]
    true_ids = y[..., 0]
    r = jnp.round(pred_ids)
    rb = r * (1.0 / (1.0 + jnp.exp(-BOUND_SLOPE * (BOUND_CUTOFF - r))))
    total = jnp.float32(0.0)
    for col in allergen_cols:
        gold = _get_binary_value_ref(true_ids, data, col).sum(axis=(1, 2, 3))
        pred = _get_binary_value_ref(rb, data, col).sum(axis=(1, 2, 3))
        total = total + (jnp.exp(-10.0 * gold) * pred ** 2).mean()
    return total * ALLERGENS_PENALTY


if __name__ == "__main__":
    key = jax.random.PRNGKey(0)
    k_data, k_true, k_pred, k_g1, k_g2 = jax.random.split(key, 5)

    B = 8
    N_FOODS = 223            # food ids 0..222 (matches bound()'s 222.5 cutoff)
    N_COLS = 12
    ALLERGEN_COLS = (3, 4, 5, 6, 7, 8, 9)   # stand-ins for FP.CONTAINS_*.value

    # TODO(synk): read_foods_tensor() reads the real foods file; use a synthetic
    # sparse binary foods table instead (same shape/semantics).
    data = (jax.random.uniform(k_data, (N_FOODS, N_COLS)) < 0.005).astype(jnp.float32)
    # The shared-exp kernel relies on the foods table being binary.
    assert bool(jnp.all((data == 0.0) | (data == 1.0)))

    true_ids = jax.random.randint(k_true, (B, 7, 3, 10), 0, N_FOODS).astype(jnp.float32)
    pred_ids = jax.random.uniform(k_pred, (B, 7, 3, 10), jnp.float32,
                                  minval=-2.0, maxval=float(N_FOODS) + 10.0)
    y = jnp.stack([true_ids, jax.random.uniform(k_g1, true_ids.shape)], axis=-1)
    y_pred = jnp.stack([pred_ids, jax.random.uniform(k_g2, pred_ids.shape)], axis=-1)

    loss = allergens_loss(y_pred, y, data, ALLERGEN_COLS)
    loss = jax.block_until_ready(loss)

    ref = _reference(y_pred, y, data, ALLERGEN_COLS)
    assert jnp.isfinite(loss), loss
    assert jnp.allclose(loss, ref, rtol=1e-3, atol=1e-6), (loss, ref)

    print("KERNEL_OK")
</pallas_src>

<mosaic_0001>
module attributes {stable_mosaic.version = 11 : i64} {
  func.func @_allergens_kernel(%arg0: i32, %arg1: memref<8x256xf32, #tpu.memory_space<vmem>>, %arg2: memref<8x256xf32, #tpu.memory_space<vmem>>, %arg3: memref<256x128xf32, #tpu.memory_space<vmem>>, %arg4: memref<8x128xf32, #tpu.memory_space<vmem>>) attributes {dimension_semantics = [#tpu.dimension_semantics<parallel>], iteration_bounds = array<i64: 1>, scalar_prefetch = 0 : i64, scratch_operands = 0 : i64, tpu.core_type = #tpu.core_type<tc>, window_params = [{transform_indices = @transform_0, window_bounds = array<i64: 8, 256>}, {transform_indices = @transform_1, window_bounds = array<i64: 8, 256>}, {pipeline_mode = #tpu.pipeline_mode<synchronous>, transform_indices = @transform_2, window_bounds = array<i64: 256, 128>}, {transform_indices = @transform_3, window_bounds = array<i64: 8, 128>}]} {
    %0 = tpu.iota {dimensions = array<i32: 2>} : vector<1x1x256xi32>
    %1 = arith.sitofp %0 : vector<1x1x256xi32> to vector<1x1x256xf32>
    %cst = arith.constant 0.000000e+00 : f32
    %2 = vector.broadcast %cst : f32 to vector<8x256xf32>
    %cst_0 = arith.constant 0.000000e+00 : f32
    %3 = vector.broadcast %cst_0 : f32 to vector<8x256xf32>
    %c0 = arith.constant 0 : index
    %c0_1 = arith.constant 0 : index
    %4 = vector.load %arg1[%c0, %c0_1] : memref<8x256xf32, #tpu.memory_space<vmem>>, vector<8x128xf32>
    %c0_2 = arith.constant 0 : index
    %c0_3 = arith.constant 0 : index
    %5 = vector.load %arg2[%c0_2, %c0_3] : memref<8x256xf32, #tpu.memory_space<vmem>>, vector<8x128xf32>
    %6 = math.roundeven %5 : vector<8x128xf32>
    %cst_4 = arith.constant 2.225000e+02 : f32
    %7 = vector.broadcast %cst_4 : f32 to vector<8x128xf32>
    %8 = arith.subf %7, %6 : vector<8x128xf32>
    %cst_5 = arith.constant -5.000000e+01 : f32
    %9 = vector.broadcast %cst_5 : f32 to vector<8x128xf32>
    %10 = arith.mulf %9, %8 : vector<8x128xf32>
    %11 = math.exp %10 : vector<8x128xf32>
    %cst_6 = arith.constant 1.000000e+00 : f32
    %12 = vector.broadcast %cst_6 : f32 to vector<8x128xf32>
    %13 = arith.addf %12, %11 : vector<8x128xf32>
    %14 = arith.divf %6, %13 : vector<8x128xf32>
    %15 = vector.shape_cast %4 : vector<8x128xf32> to vector<8x128x1xf32>
    %16 = vector.broadcast %15 : vector<8x128x1xf32> to vector<8x128x256xf32>
    %17 = vector.broadcast %1 : vector<1x1x256xf32> to vector<8x128x256xf32>
    %18 = arith.subf %16, %17 : vector<8x128x256xf32>
    %19 = arith.mulf %18, %18 : vector<8x128x256xf32>
    %cst_7 = arith.constant -1.000000e+02 : f32
    %20 = vector.broadcast %cst_7 : f32 to vector<8x128x256xf32>
    %21 = arith.mulf %19, %20 : vector<8x128x256xf32>
    %22 = math.exp %21 : vector<8x128x256xf32>
    %cst_8 = arith.constant dense<0.000000e+00> : vector<8x256xf32>
    %23 = vector.multi_reduction <add>, %22, %cst_8 [1] : vector<8x128x256xf32> to vector<8x256xf32>
    %24 = arith.addf %2, %23 : vector<8x256xf32>
    %25 = vector.shape_cast %14 : vector<8x128xf32> to vector<8x128x1xf32>
    %26 = vector.broadcast %25 : vector<8x128x1xf32> to vector<8x128x256xf32>
    %27 = vector.broadcast %1 : vector<1x1x256xf32> to vector<8x128x256xf32>
    %28 = arith.subf %26, %27 : vector<8x128x256xf32>
    %29 = arith.mulf %28, %28 : vector<8x128x256xf32>
    %cst_9 = arith.constant -1.000000e+02 : f32
    %30 = vector.broadcast %cst_9 : f32 to vector<8x128x256xf32>
    %31 = arith.mulf %29, %30 : vector<8x128x256xf32>
    %32 = math.exp %31 : vector<8x128x256xf32>
    %cst_10 = arith.constant dense<0.000000e+00> : vector<8x256xf32>
    %33 = vector.multi_reduction <add>, %32, %cst_10 [1] : vector<8x128x256xf32> to vector<8x256xf32>
    %34 = arith.addf %3, %33 : vector<8x256xf32>
    %c0_11 = arith.constant 0 : index
    %c128 = arith.constant 128 : index
    %35 = vector.load %arg1[%c0_11, %c128] : memref<8x256xf32, #tpu.memory_space<vmem>>, vector<8x128xf32>
    %c0_12 = arith.constant 0 : index
    %c128_13 = arith.constant 128 : index
    %36 = vector.load %arg2[%c0_12, %c128_13] : memref<8x256xf32, #tpu.memory_space<vmem>>, vector<8x128xf32>
    %37 = math.roundeven %36 : vector<8x128xf32>
    %cst_14 = arith.constant 2.225000e+02 : f32
    %38 = vector.broadcast %cst_14 : f32 to vector<8x128xf32>
    %39 = arith.subf %38, %37 : vector<8x128xf32>
    %cst_15 = arith.constant -5.000000e+01 : f32
    %40 = vector.broadcast %cst_15 : f32 to vector<8x128xf32>
    %41 = arith.mulf %40, %39 : vector<8x128xf32>
    %42 = math.exp %41 : vector<8x128xf32>
    %cst_16 = arith.constant 1.000000e+00 : f32
    %43 = vector.broadcast %cst_16 : f32 to vector<8x128xf32>
    %44 = arith.addf %43, %42 : vector<8x128xf32>
    %45 = arith.divf %37, %44 : vector<8x128xf32>
    %46 = vector.shape_cast %35 : vector<8x128xf32> to vector<8x128x1xf32>
    %47 = vector.broadcast %46 : vector<8x128x1xf32> to vector<8x128x256xf32>
    %48 = vector.broadcast %1 : vector<1x1x256xf32> to vector<8x128x256xf32>
    %49 = arith.subf %47, %48 : vector<8x128x256xf32>
    %50 = arith.mulf %49, %49 : vector<8x128x256xf32>
    %cst_17 = arith.constant -1.000000e+02 : f32
    %51 = vector.broadcast %cst_17 : f32 to vector<8x128x256xf32>
    %52 = arith.mulf %50, %51 : vector<8x128x256xf32>
    %53 = math.exp %52 : vector<8x128x256xf32>
    %cst_18 = arith.constant dense<0.000000e+00> : vector<8x256xf32>
    %54 = vector.multi_reduction <add>, %53, %cst_18 [1] : vector<8x128x256xf32> to vector<8x256xf32>
    %55 = arith.addf %24, %54 : vector<8x256xf32>
    %56 = vector.shape_cast %45 : vector<8x128xf32> to vector<8x128x1xf32>
    %57 = vector.broadcast %56 : vector<8x128x1xf32> to vector<8x128x256xf32>
    %58 = vector.broadcast %1 : vector<1x1x256xf32> to vector<8x128x256xf32>
    %59 = arith.subf %57, %58 : vector<8x128x256xf32>
    %60 = arith.mulf %59, %59 : vector<8x128x256xf32>
    %cst_19 = arith.constant -1.000000e+02 : f32
    %61 = vector.broadcast %cst_19 : f32 to vector<8x128x256xf32>
    %62 = arith.mulf %60, %61 : vector<8x128x256xf32>
    %63 = math.exp %62 : vector<8x128x256xf32>
    %cst_20 = arith.constant dense<0.000000e+00> : vector<8x256xf32>
    %64 = vector.multi_reduction <add>, %63, %cst_20 [1] : vector<8x128x256xf32> to vector<8x256xf32>
    %65 = arith.addf %34, %64 : vector<8x256xf32>
    %c0_21 = arith.constant 0 : index
    %c0_22 = arith.constant 0 : index
    %66 = vector.load %arg3[%c0_21, %c0_22] : memref<256x128xf32, #tpu.memory_space<vmem>>, vector<256x128xf32>
    %cst_23 = arith.constant dense<0.000000e+00> : vector<8x128xf32>
    %67 = tpu.matmul %55, %66, %cst_23 {dimension_numbers = #tpu.dot_dimension_numbers<[1], [0], [0], [1], [0, 0, 1, 1], [], []>} : vector<8x256xf32>, vector<256x128xf32>, vector<8x128xf32> -> vector<8x128xf32>
    %cst_24 = arith.constant dense<0.000000e+00> : vector<8x128xf32>
    %68 = tpu.matmul %65, %66, %cst_24 {dimension_numbers = #tpu.dot_dimension_numbers<[1], [0], [0], [1], [0, 0, 1, 1], [], []>} : vector<8x256xf32>, vector<256x128xf32>, vector<8x128xf32> -> vector<8x128xf32>
    %cst_25 = arith.constant -1.000000e+01 : f32
    %69 = vector.broadcast %cst_25 : f32 to vector<8x128xf32>
    %70 = arith.mulf %69, %67 : vector<8x128xf32>
    %71 = math.exp %70 : vector<8x128xf32>
    %72 = arith.mulf %68, %68 : vector<8x128xf32>
    %73 = arith.mulf %71, %72 : vector<8x128xf32>
    %c0_26 = arith.constant 0 : index
    %c0_27 = arith.constant 0 : index
    %74 = vector.load %arg4[%c0_26, %c0_27] : memref<8x128xf32, #tpu.memory_space<vmem>>, vector<8x128xf32>
    tpu.vector_store %arg4[%c0_26, %c0_27], %73 {strides = array<i32>} : memref<8x128xf32, #tpu.memory_space<vmem>>, vector<8x128xf32>,
    return
  }
  func.func @transform_0(%arg0: i32) -> (i32, i32) {
    %c0_i32 = arith.constant 0 : i32
    %c0_i32_0 = arith.constant 0 : i32
    return %arg0, %c0_i32 : i32, i32
  }
  func.func @transform_1(%arg0: i32) -> (i32, i32) {
    %c0_i32 = arith.constant 0 : i32
    %c0_i32_0 = arith.constant 0 : i32
    return %arg0, %c0_i32 : i32, i32
  }
  func.func @transform_2(%arg0: i32) -> (i32, i32) {
    %c0_i32 = arith.constant 0 : i32
    %c0_i32_0 = arith.constant 0 : i32
    %c0_i32_1 = arith.constant 0 : i32
    return %c0_i32, %c0_i32_0 : i32, i32
  }
  func.func @transform_3(%arg0: i32) -> (i32, i32) {
    %c0_i32 = arith.constant 0 : i32
    %c0_i32_0 = arith.constant 0 : i32
    return %arg0, %c0_i32 : i32, i32
  }
}

</mosaic_0001>

<llo_original>
// kernel: tpu_custom_call.1
$region0: #{tpu_custom_call.1}
  #allocation0 [shape = 'u32[]', space=smem, size = 0x4, offset = 0x4, fixed_abs, tag = 'smem constant byte address 0x4 - core index']
  #allocation1 [shape = 'u32[72,128]{1,0:T(1,128)}', space=vmem, size = 0x9000, scoped, tag = 'internal scratch']
  %s0 = inlined_call_operand.hbm [shape: f32[8,256], index: 0, kind: input, shape index: {}]
  %s1 = inlined_call_operand.hbm [shape: f32[8,256], index: 1, kind: input, shape index: {}]
  %s2 = inlined_call_operand.hbm [shape: f32[256,128], index: 2, kind: input, shape index: {}]
  %s3 = inlined_call_operand.hbm [shape: f32[8,128], index: 3, kind: output, shape index: {}]
  %s4 = sld [smem:[#allocation0]]
  $region34: #{tpu_custom_call.1} parent=0
    _
  %s6 = ssub.s32 1, %s4
  %s7 = scalar_select 0, %s6, %s4
  $region1: #{tpu_custom_call.1} parent=0
    #allocation2 [shape = 'u8[8192]{0}', space=vmem, size = 0x2000, scoped, tag = 'input window, operand 0, single buffered']
    #allocation3 [shape = 's32[1]{0}', space=sflag, size = 0x4, scoped, tag = 'scoped memory for tpu_custom_call.1']
    #allocation4 [shape = 's32[1]{0}', space=sflag, size = 0x4, scoped, tag = 'scoped memory for tpu_custom_call.1']
    #allocation5 [shape = 'u8[8192]{0}', space=vmem, size = 0x2000, scoped, tag = 'input window, operand 1, single buffered']
    #allocation6 [shape = 's32[1]{0}', space=sflag, size = 0x4, scoped, tag = 'scoped memory for tpu_custom_call.1']
    #allocation7 [shape = 'u8[131072]{0}', space=vmem, size = 0x20000, scoped, tag = 'input window, operand 2, single buffered']
    #allocation8 [shape = 'u8[4096]{0}', space=vmem, size = 0x1000, scoped, tag = 'output window, operand 0, single buffered']
    %8 = vsyncpa [#allocation3], 0
    %9 = vsyncpa [#allocation6], 0
    %10 = vsyncpa [#allocation4], 0
    // Predicated region
    $region2: #{tpu_custom_call.1} parent=1 // pred_check
      _
    $region3: #{tpu_custom_call.1} parent=1 // pred_check_branch
      %12 = sbr.rel (0) target = $region5
    $region4: #{tpu_custom_call.1} parent=1 // pred_region
      %14 = vsyncadd [#allocation3], 0
      %s16 = sshll.u32 %s0, 4
      %s17 = int_to_ptr.hbm [resolvable:$true] %s16
      %s18 = sshll.u32 [#allocation2], 4
      %s19 = int_to_ptr.vmem [resolvable:$true] %s18
      %21 = dma.hbm_to_vmem [thread:$0]  %s17, 256, %s19, [#allocation3]
    $region5: #{tpu_custom_call.1} parent=1 // pred_fallthru
      _
    // Predicated region
    $region6: #{tpu_custom_call.1} parent=1 // pred_check
      _
    $region7: #{tpu_custom_call.1} parent=1 // pred_check_branch
      %23 = sbr.rel (0) target = $region9
    $region8: #{tpu_custom_call.1} parent=1 // pred_region
      %25 = vsyncadd [#allocation6], 0
      %s27 = sshll.u32 %s1, 4
      %s28 = int_to_ptr.hbm [resolvable:$true] %s27
      %s29 = sshll.u32 [#allocation5], 4
      %s30 = int_to_ptr.vmem [resolvable:$true] %s29
      %32 = dma.hbm_to_vmem [thread:$0]  %s28, 256, %s30, [#allocation6]
    $region9: #{tpu_custom_call.1} parent=1 // pred_fallthru
      _
    // Predicated region
    $region10: #{tpu_custom_call.1} parent=1 // pred_check
      _
    $region11: #{tpu_custom_call.1} parent=1 // pred_check_branch
      %34 = sbr.rel (0) target = $region13
    $region12: #{tpu_custom_call.1} parent=1 // pred_region
      %36 = vsyncadd [#allocation6], 0
      %s37 = sshll.u32 %s2, 4
      %s38 = int_to_ptr.hbm [resolvable:$true] %s37
      %s39 = sshll.u32 [#allocation7], 4
      %s40 = int_to_ptr.vmem [resolvable:$true] %s39
      %45 = dma.hbm_to_vmem [thread:$0]  %s38, 4096, %s40, [#allocation6], 128, 128, 8
    $region13: #{tpu_custom_call.1} parent=1 // pred_fallthru
      _
    // Predicated region
    $region14: #{tpu_custom_call.1} parent=1 // pred_check
      _
    $region15: #{tpu_custom_call.1} parent=1 // pred_check_branch
      %47 = sbr.rel (0) target = $region17
    $region16: #{tpu_custom_call.1} parent=1 // pred_region
      %49 = dma.done [#allocation3], 256
    $region17: #{tpu_custom_call.1} parent=1 // pred_fallthru
      _
    // Predicated region
    $region18: #{tpu_custom_call.1} parent=1 // pred_check
      _
    $region19: #{tpu_custom_call.1} parent=1 // pred_check_branch
      %51 = sbr.rel (0) target = $region21
    $region20: #{tpu_custom_call.1} parent=1 // pred_region
      %53 = dma.done [#allocation6], 256
    $region21: #{tpu_custom_call.1} parent=1 // pred_fallthru
      _
    // Predicated region
    $region22: #{tpu_custom_call.1} parent=1 // pred_check
      _
    $region23: #{tpu_custom_call.1} parent=1 // pred_check_branch
      %55 = sbr.rel (0) target = $region25
    $region24: #{tpu_custom_call.1} parent=1 // pred_region
      %57 = dma.done [#allocation6], 4096
    $region25: #{tpu_custom_call.1} parent=1 // pred_fallthru
      _
    %v58 = vlaneseq
    %v59 = vand.u32 %v58, 127
    %v60 = vadd.s32 %v59, 128
    %v61 = vcvt.s32.f32 %v59
    %v62 = vcvt.s32.f32 %v60
    %v63 = vld [vmem:[#allocation2] sm:$0xff]
    %v64 = vld [vmem:[#allocation5] sm:$0xff]
    %v65 = vround.ne.pseudo %v64
    %v66 = vsub.f32 222.5, %v65
    %v67 = vmul.f32 %v66, -50.0
    %v68 = vmul.f32 %v67, 1.442695
    %v69 = vpow.pop %v68
    %v70 = vadd.f32 %v69, 1.0
    %v71 = vrcp.pop %v70
    %v72 = vmul.f32 %v70, %v71
    %v73 = vsub.f32 1.0, %v72
    %v74 = vmul.f32 %v71, %v73
    %v75 = vadd.f32 %v71, %v74
    %vm76 = vweird.f32 %v70
    %vm77 = vweird.f32 %v71
    %vm78 = vmor %vm76, %vm77
    %v79 = vsel %vm78, %v71, %v75
    %v80 = vand.u32 2147483647, %v70
    %vm81 = vcmp.eq.f32.partialorder %v80, 8.507059e+37
    %v82 = vand.u32 %v70, 2147483648
    %v83 = vor.u32 1.1754944e-38, %v82
    %v84 = vsel %vm81, %v83, %v79
    %v85 = vmul.f32 %v65, %v84
    %v86 = vperm.slane %v63, 0
    %v87 = vlaneseq
    %v88 = vshrl.u32 %v87, 7
    %90 = vset.pattern.permute.xlu0 %v88
    %91 = vperm.xlu0 %90, %v86
    %v92 = vpop.permute.xlu0 %91
    %v93 = vlaneseq
    %v94 = vshrl.u32 %v93, 7
    %v95 = vadd.s32 %v94, 8
    %96 = vset.pattern.permute.xlu0 %v95
    %97 = vperm.xlu0 %96, %v86
    %v98 = vpop.permute.xlu0 %97
    %v99 = vlaneseq
    %v100 = vshrl.u32 %v99, 7
    %v101 = vadd.s32 %v100, 16
    %102 = vset.pattern.permute.xlu0 %v101
    %103 = vperm.xlu0 %102, %v86
    %v104 = vpop.permute.xlu0 %103
    %v105 = vlaneseq
    %v106 = vshrl.u32 %v105, 7
    %v107 = vadd.s32 %v106, 24
    %108 = vset.pattern.permute.xlu0 %v107
    %109 = vperm.xlu0 %108, %v86
    %v110 = vpop.permute.xlu0 %109
    %v111 = vlaneseq
    %v112 = vshrl.u32 %v111, 7
    %v113 = vadd.s32 %v112, 32
    %114 = vset.pattern.permute.xlu0 %v113
    %115 = vperm.xlu0 %114, %v86
    %v116 = vpop.permute.xlu0 %115
    %v117 = vlaneseq
    %v118 = vshrl.u32 %v117, 7
    %v119 = vadd.s32 %v118, 40
    %120 = vset.pattern.permute.xlu0 %v119
    %121 = vperm.xlu0 %120, %v86
    %v122 = vpop.permute.xlu0 %121
    %v123 = vlaneseq
    %v124 = vshrl.u32 %v123, 7
    %v125 = vadd.s32 %v124, 48
    %126 = vset.pattern.permute.xlu0 %v125
    %127 = vperm.xlu0 %126, %v86
    %v128 = vpop.permute.xlu0 %127
    %v129 = vlaneseq
    %v130 = vshrl.u32 %v129, 7
    %v131 = vadd.s32 %v130, 56
    %132 = vset.pattern.permute.xlu0 %v131
    %133 = vperm.xlu0 %132, %v86
    %v134 = vpop.permute.xlu0 %133
    %v135 = vlaneseq
    %v136 = vshrl.u32 %v135, 7
    %v137 = vadd.s32 %v136, 64
    %138 = vset.pattern.permute.xlu0 %v137
    %139 = vperm.xlu0 %138, %v86
    %v140 = vpop.permute.xlu0 %139
    %v141 = vlaneseq
    %v142 = vshrl.u32 %v141, 7
    %v143 = vadd.s32 %v142, 72
    %144 = vset.pattern.permute.xlu0 %v143
    %145 = vperm.xlu0 %144, %v86
    %v146 = vpop.permute.xlu0 %145
    %v147 = vlaneseq
    %v148 = vshrl.u32 %v147, 7
    %v149 = vadd.s32 %v148, 80
    %150 = vset.pattern.permute.xlu0 %v149
    %151 = vperm.xlu0 %150, %v86
    %v152 = vpop.permute.xlu0 %151
    %v153 = vlaneseq
    %v154 = vshrl.u32 %v153, 7
    %v155 = vadd.s32 %v154, 88
    %156 = vset.pattern.permute.xlu0 %v155
    %157 = vperm.xlu0 %156, %v86
    %v158 = vpop.permute.xlu0 %157
    %v159 = vlaneseq
    %v160 = vshrl.u32 %v159, 7
    %v161 = vadd.s32 %v160, 96
    %162 = vset.pattern.permute.xlu0 %v161
    %163 = vperm.xlu0 %162, %v86
    %v164 = vpop.permute.xlu0 %163
    %v165 = vlaneseq
    %v166 = vshrl.u32 %v165, 7
    %v167 = vadd.s32 %v166, 104
    %168 = vset.pattern.permute.xlu0 %v167
    %169 = vperm.xlu0 %168, %v86
    %v170 = vpop.permute.xlu0 %169
    %v171 = vlaneseq
    %v172 = vshrl.u32 %v171, 7
    %v173 = vadd.s32 %v172, 112
    %174 = vset.pattern.permute.xlu0 %v173
    %175 = vperm.xlu0 %174, %v86
    %v176 = vpop.permute.xlu0 %175
    %v177 = vlaneseq
    %v178 = vshrl.u32 %v177, 7
    %v179 = vadd.s32 %v178, 120
    %180 = vset.pattern.permute.xlu0 %v179
    %181 = vperm.xlu0 %180, %v86
    %v182 = vpop.permute.xlu0 %181
    %v183 = vperm.slane %v63, 1
    %v184 = vlaneseq
    %v185 = vshrl.u32 %v184, 7
    %187 = vset.pattern.permute.xlu0 %v185
    %188 = vperm.xlu0 %187, %v183
    %v189 = vpop.permute.xlu0 %188
    %v190 = vlaneseq
    %v191 = vshrl.u32 %v190, 7
    %v192 = vadd.s32 %v191, 8
    %193 = vset.pattern.permute.xlu0 %v192
    %194 = vperm.xlu0 %193, %v183
    %v195 = vpop.permute.xlu0 %194
    %v196 = vlaneseq
    %v197 = vshrl.u32 %v196, 7
    %v198 = vadd.s32 %v197, 16
    %199 = vset.pattern.permute.xlu0 %v198
    %200 = vperm.xlu0 %199, %v183
    %v201 = vpop.permute.xlu0 %200
    %v202 = vlaneseq
    %v203 = vshrl.u32 %v202, 7
    %v204 = vadd.s32 %v203, 24
    %205 = vset.pattern.permute.xlu0 %v204
    %206 = vperm.xlu0 %205, %v183
    %v207 = vpop.permute.xlu0 %206
    %v208 = vlaneseq
    %v209 = vshrl.u32 %v208, 7
    %v210 = vadd.s32 %v209, 32
    %211 = vset.pattern.permute.xlu0 %v210
    %212 = vperm.xlu0 %211, %v183
    %v213 = vpop.permute.xlu0 %212
    %v214 = vlaneseq
    %v215 = vshrl.u32 %v214, 7
    %v216 = vadd.s32 %v215, 40
    %217 = vset.pattern.permute.xlu0 %v216
    %218 = vperm.xlu0 %217, %v183
    %v219 = vpop.permute.xlu0 %218
    %v220 = vlaneseq
    %v221 = vshrl.u32 %v220, 7
    %v222 = vadd.s32 %v221, 48
    %223 = vset.pattern.permute.xlu0 %v222
    %224 = vperm.xlu0 %223, %v183
    %v225 = vpop.permute.xlu0 %224
    %v226 = vlaneseq
    %v227 = vshrl.u32 %v226, 7
    %v228 = vadd.s32 %v227, 56
    %229 = vset.pattern.permute.xlu0 %v228
    %230 = vperm.xlu0 %229, %v183
    %v231 = vpop.permute.xlu0 %230
    %v232 = vlaneseq
    %v233 = vshrl.u32 %v232, 7
    %v234 = vadd.s32 %v233, 64
    %235 = vset.pattern.permute.xlu0 %v234
    %236 = vperm.xlu0 %235, %v183
    %v237 = vpop.permute.xlu0 %236
    %v238 = vlaneseq
    %v239 = vshrl.u32 %v238, 7
    %v240 = vadd.s32 %v239, 72
    %241 = vset.pattern.permute.xlu0 %v240
    %242 = vperm.xlu0 %241, %v183
    %v243 = vpop.permute.xlu0 %242
    %v244 = vlaneseq
    %v245 = vshrl.u32 %v244, 7
    %v246 = vadd.s32 %v245, 80
    %247 = vset.pattern.permute.xlu0 %v246
    %248 = vperm.xlu0 %247, %v183
    %v249 = vpop.permute.xlu0 %248
    %v250 = vlaneseq
    %v251 = vshrl.u32 %v250, 7
    %v252 = vadd.s32 %v251, 88
    %253 = vset.pattern.permute.xlu0 %v252
    %254 = vperm.xlu0 %253, %v183
    %v255 = vpop.permute.xlu0 %254
    %v256 = vlaneseq
    %v257 = vshrl.u32 %v256, 7
    %v258 = vadd.s32 %v257, 96
    %259 = vset.pattern.permute.xlu0 %v258
    %260 = vperm.xlu0 %259, %v183
    %v261 = vpop.permute.xlu0 %260
    %v262 = vlaneseq
    %v263 = vshrl.u32 %v262, 7
    %v264 = vadd.s32 %v263, 104
    %265 = vset.pattern.permute.xlu0 %v264
    %266 = vperm.xlu0 %265, %v183
    %v267 = vpop.permute.xlu0 %266
    %v268 = vlaneseq
    %v269 = vshrl.u32 %v268, 7
    %v270 = vadd.s32 %v269, 112
    %271 = vset.pattern.permute.xlu0 %v270
    %272 = vperm.xlu0 %271, %v183
    %v273 = vpop.permute.xlu0 %272
    %v274 = vlaneseq
    %v275 = vshrl.u32 %v274, 7
    %v276 = vadd.s32 %v275, 120
    %277 = vset.pattern.permute.xlu0 %v276
    %278 = vperm.xlu0 %277, %v183
    %v279 = vpop.permute.xlu0 %278
    %v280 = vperm.slane %v63, 2
    %v281 = vlaneseq
    %v282 = vshrl.u32 %v281, 7
    %284 = vset.pattern.permute.xlu0 %v282
    %285 = vperm.xlu0 %284, %v280
    %v286 = vpop.permute.xlu0 %285
    %v287 = vlaneseq
    %v288 = vshrl.u32 %v287, 7
    %v289 = vadd.s32 %v288, 8
    %290 = vset.pattern.permute.xlu0 %v289
    %291 = vperm.xlu0 %290, %v280
    %v292 = vpop.permute.xlu0 %291
    %v293 = vlaneseq
    %v294 = vshrl.u32 %v293, 7
    %v295 = vadd.s32 %v294, 16
    %296 = vset.pattern.permute.xlu0 %v295
    %297 = vperm.xlu0 %296, %v280
    %v298 = vpop.permute.xlu0 %297
    %v299 = vlaneseq
    %v300 = vshrl.u32 %v299, 7
    %v301 = vadd.s32 %v300, 24
    %302 = vset.pattern.permute.xlu0 %v301
    %303 = vperm.xlu0 %302, %v280
    %v304 = vpop.permute.xlu0 %303
    %v305 = vlaneseq
    %v306 = vshrl.u32 %v305, 7
    %v307 = vadd.s32 %v306, 32
    %308 = vset.pattern.permute.xlu0 %v307
    %309 = vperm.xlu0 %308, %v280
    %v310 = vpop.permute.xlu0 %309
    %v311 = vlaneseq
    %v312 = vshrl.u32 %v311, 7
    %v313 = vadd.s32 %v312, 40
    %314 = vset.pattern.permute.xlu0 %v313
    %315 = vperm.xlu0 %314, %v280
    %v316 = vpop.permute.xlu0 %315
    %v317 = vlaneseq
    %v318 = vshrl.u32 %v317, 7
    %v319 = vadd.s32 %v318, 48
    %320 = vset.pattern.permute.xlu0 %v319
    %321 = vperm.xlu0 %320, %v280
    %v322 = vpop.permute.xlu0 %321
    %v323 = vlaneseq
    %v324 = vshrl.u32 %v323, 7
    %v325 = vadd.s32 %v324, 56
    %326 = vset.pattern.permute.xlu0 %v325
    %327 = vperm.xlu0 %326, %v280
    %v328 = vpop.permute.xlu0 %327
    %v329 = vlaneseq
    %v330 = vshrl.u32 %v329, 7
    %v331 = vadd.s32 %v330, 64
    %332 = vset.pattern.permute.xlu0 %v331
    %333 = vperm.xlu0 %332, %v280
    %v334 = vpop.permute.xlu0 %333
    %v335 = vlaneseq
    %v336 = vshrl.u32 %v335, 7
    %v337 = vadd.s32 %v336, 72
    %338 = vset.pattern.permute.xlu0 %v337
    %339 = vperm.xlu0 %338, %v280
    %v340 = vpop.permute.xlu0 %339
    %v341 = vlaneseq
    %v342 = vshrl.u32 %v341, 7
    %v343 = vadd.s32 %v342, 80
    %344 = vset.pattern.permute.xlu0 %v343
    %345 = vperm.xlu0 %344, %v280
    %v346 = vpop.permute.xlu0 %345
    %v347 = vlaneseq
    %v348 = vshrl.u32 %v347, 7
    %v349 = vadd.s32 %v348, 88
    %350 = vset.pattern.permute.xlu0 %v349
    %351 = vperm.xlu0 %350, %v280
    %v352 = vpop.permute.xlu0 %351
    %v353 = vlaneseq
    %v354 = vshrl.u32 %v353, 7
    %v355 = vadd.s32 %v354, 96
    %356 = vset.pattern.permute.xlu0 %v355
    %357 = vperm.xlu0 %356, %v280
    %v358 = vpop.permute.xlu0 %357
    %v359 = vlaneseq
    %v360 = vshrl.u32 %v359, 7
    %v361 = vadd.s32 %v360, 104
    %362 = vset.pattern.permute.xlu0 %v361
    %363 = vperm.xlu0 %362, %v280
    %v364 = vpop.permute.xlu0 %363
    %v365 = vlaneseq
    %v366 = vshrl.u32 %v365, 7
    %v367 = vadd.s32 %v366, 112
    %368 = vset.pattern.permute.xlu0 %v367
    %369 = vperm.xlu0 %368, %v280
    %v370 = vpop.permute.xlu0 %369
    %v371 = vlaneseq
    %v372 = vshrl.u32 %v371, 7
    %v373 = vadd.s32 %v372, 120
    %374 = vset.pattern.permute.xlu0 %v373
    %375 = vperm.xlu0 %374, %v280
    %v376 = vpop.permute.xlu0 %375
    %v377 = vperm.slane %v63, 3
    %v378 = vlaneseq
    %v379 = vshrl.u32 %v378, 7
    %381 = vset.pattern.permute.xlu0 %v379
    %382 = vperm.xlu0 %381, %v377
    %v383 = vpop.permute.xlu0 %382
    %v384 = vlaneseq
    %v385 = vshrl.u32 %v384, 7
    %v386 = vadd.s32 %v385, 8
    %387 = vset.pattern.permute.xlu0 %v386
    %388 = vperm.xlu0 %387, %v377
    %v389 = vpop.permute.xlu0 %388
    %v390 = vlaneseq
    %v391 = vshrl.u32 %v390, 7
    %v392 = vadd.s32 %v391, 16
    %393 = vset.pattern.permute.xlu0 %v392
    %394 = vperm.xlu0 %393, %v377
    %v395 = vpop.permute.xlu0 %394
    %v396 = vlaneseq
    %v397 = vshrl.u32 %v396, 7
    %v398 = vadd.s32 %v397, 24
    %399 = vset.pattern.permute.xlu0 %v398
    %400 = vperm.xlu0 %399, %v377
    %v401 = vpop.permute.xlu0 %400
    %v402 = vlaneseq
    %v403 = vshrl.u32 %v402, 7
    %v404 = vadd.s32 %v403, 32
    %405 = vset.pattern.permute.xlu0 %v404
    %406 = vperm.xlu0 %405, %v377
    %v407 = vpop.permute.xlu0 %406
    %v408 = vlaneseq
    %v409 = vshrl.u32 %v408, 7
    %v410 = vadd.s32 %v409, 40
    %411 = vset.pattern.permute.xlu0 %v410
    %412 = vperm.xlu0 %411, %v377
    %v413 = vpop.permute.xlu0 %412
    %v414 = vlaneseq
    %v415 = vshrl.u32 %v414, 7
    %v416 = vadd.s32 %v415, 48
    %417 = vset.pattern.permute.xlu0 %v416
    %418 = vperm.xlu0 %417, %v377
    %v419 = vpop.permute.xlu0 %418
    %v420 = vlaneseq
    %v421 = vshrl.u32 %v420, 7
    %v422 = vadd.s32 %v421, 56
    %423 = vset.pattern.permute.xlu0 %v422
    %424 = vperm.xlu0 %423, %v377
    %v425 = vpop.permute.xlu0 %424
    %v426 = vlaneseq
    %v427 = vshrl.u32 %v426, 7
    %v428 = vadd.s32 %v427, 64
    %429 = vset.pattern.permute.xlu0 %v428
    %430 = vperm.xlu0 %429, %v377
    %v431 = vpop.permute.xlu0 %430
    %v432 = vlaneseq
    %v433 = vshrl.u32 %v432, 7
    %v434 = vadd.s32 %v433, 72
    %435 = vset.pattern.permute.xlu0 %v434
    %436 = vperm.xlu0 %435, %v377
    %v437 = vpop.permute.xlu0 %436
    %v438 = vlaneseq
    %v439 = vshrl.u32 %v438, 7
    %v440 = vadd.s32 %v439, 80
    %441 = vset.pattern.permute.xlu0 %v440
    %442 = vperm.xlu0 %441, %v377
    %v443 = vpop.permute.xlu0 %442
    %v444 = vlaneseq
    %v445 = vshrl.u32 %v444, 7
    %v446 = vadd.s32 %v445, 88
    %447 = vset.pattern.permute.xlu0 %v446
    %448 = vperm.xlu0 %447, %v377
    %v449 = vpop.permute.xlu0 %448
    %v450 = vlaneseq
    %v451 = vshrl.u32 %v450, 7
    %v452 = vadd.s32 %v451, 96
    %453 = vset.pattern.permute.xlu0 %v452
    %454 = vperm.xlu0 %453, %v377
    %v455 = vpop.permute.xlu0 %454
    %v456 = vlaneseq
    %v457 = vshrl.u32 %v456, 7
    %v458 = vadd.s32 %v457, 104
    %459 = vset.pattern.permute.xlu0 %v458
    %460 = vperm.xlu0 %459, %v377
    %v461 = vpop.permute.xlu0 %460
    %v462 = vlaneseq
    %v463 = vshrl.u32 %v462, 7
    %v464 = vadd.s32 %v463, 112
    %465 = vset.pattern.permute.xlu0 %v464
    %466 = vperm.xlu0 %465, %v377
    %v467 = vpop.permute.xlu0 %466
    %v468 = vlaneseq
    %v469 = vshrl.u32 %v468, 7
    %v470 = vadd.s32 %v469, 120
    %471 = vset.pattern.permute.xlu0 %v470
    %472 = vperm.xlu0 %471, %v377
    %v473 = vpop.permute.xlu0 %472
    %v474 = vperm.slane %v63, 4
    %v475 = vlaneseq
    %v476 = vshrl.u32 %v475, 7
    %478 = vset.pattern.permute.xlu0 %v476
    %479 = vperm.xlu0 %478, %v474
    %v480 = vpop.permute.xlu0 %479
    %v481 = vlaneseq
    %v482 = vshrl.u32 %v481, 7
    %v483 = vadd.s32 %v482, 8
    %484 = vset.pattern.permute.xlu0 %v483
    %485 = vperm.xlu0 %484, %v474
    %v486 = vpop.permute.xlu0 %485
    %v487 = vlaneseq
    %v488 = vshrl.u32 %v487, 7
    %v489 = vadd.s32 %v488, 16
    %490 = vset.pattern.permute.xlu0 %v489
    %491 = vperm.xlu0 %490, %v474
    %v492 = vpop.permute.xlu0 %491
    %v493 = vlaneseq
    %v494 = vshrl.u32 %v493, 7
    %v495 = vadd.s32 %v494, 24
    %496 = vset.pattern.permute.xlu0 %v495
    %497 = vperm.xlu0 %496, %v474
    %v498 = vpop.permute.xlu0 %497
    %v499 = vlaneseq
    %v500 = vshrl.u32 %v499, 7
    %v501 = vadd.s32 %v500, 32
    %502 = vset.pattern.permute.xlu0 %v501
    %503 = vperm.xlu0 %502, %v474
    %v504 = vpop.permute.xlu0 %503
    %v505 = vlaneseq
    %v506 = vshrl.u32 %v505, 7
    %v507 = vadd.s32 %v506, 40
    %508 = vset.pattern.permute.xlu0 %v507
    %509 = vperm.xlu0 %508, %v474
    %v510 = vpop.permute.xlu0 %509
    %v511 = vlaneseq
    %v512 = vshrl.u32 %v511, 7
    %v513 = vadd.s32 %v512, 48
    %514 = vset.pattern.permute.xlu0 %v513
    %515 = vperm.xlu0 %514, %v474
    %v516 = vpop.permute.xlu0 %515
    %v517 = vlaneseq
    %v518 = vshrl.u32 %v517, 7
    %v519 = vadd.s32 %v518, 56
    %520 = vset.pattern.permute.xlu0 %v519
    %521 = vperm.xlu0 %520, %v474
    %v522 = vpop.permute.xlu0 %521
    %v523 = vlaneseq
    %v524 = vshrl.u32 %v523, 7
    %v525 = vadd.s32 %v524, 64
    %526 = vset.pattern.permute.xlu0 %v525
    %527 = vperm.xlu0 %526, %v474
    %v528 = vpop.permute.xlu0 %527
    %v529 = vlaneseq
    %v530 = vshrl.u32 %v529, 7
    %v531 = vadd.s32 %v530, 72
    %532 = vset.pattern.permute.xlu0 %v531
    %533 = vperm.xlu0 %532, %v474
    %v534 = vpop.permute.xlu0 %533
    %v535 = vlaneseq
    %v536 = vshrl.u32 %v535, 7
    %v537 = vadd.s32 %v536, 80
    %538 = vset.pattern.permute.xlu0 %v537
    %539 = vperm.xlu0 %538, %v474
    %v540 = vpop.permute.xlu0 %539
    %v541 = vlaneseq
    %v542 = vshrl.u32 %v541, 7
    %v543 = vadd.s32 %v542, 88
    %544 = vset.pattern.permute.xlu0 %v543
    %545 = vperm.xlu0 %544, %v474
    %v546 = vpop.permute.xlu0 %545
    %v547 = vlaneseq
    %v548 = vshrl.u32 %v547, 7
    %v549 = vadd.s32 %v548, 96
    %550 = vset.pattern.permute.xlu0 %v549
    %551 = vperm.xlu0 %550, %v474
    %v552 = vpop.permute.xlu0 %551
    %v553 = vlaneseq
    %v554 = vshrl.u32 %v553, 7
    %v555 = vadd.s32 %v554, 104
    %556 = vset.pattern.permute.xlu0 %v555
    %557 = vperm.xlu0 %556, %v474
    %v558 = vpop.permute.xlu0 %557
    %v559 = vlaneseq
    %v560 = vshrl.u32 %v559, 7
    %v561 = vadd.s32 %v560, 112
    %562 = vset.pattern.permute.xlu0 %v561
    %563 = vperm.xlu0 %562, %v474
    %v564 = vpop.permute.xlu0 %563
    %v565 = vlaneseq
    %v566 = vshrl.u32 %v565, 7
    %v567 = vadd.s32 %v566, 120
    %568 = vset.pattern.permute.xlu0 %v567
    %569 = vperm.xlu0 %568, %v474
    %v570 = vpop.permute.xlu0 %569
    %v571 = vperm.slane %v63, 5
    %v572 = vlaneseq
    %v573 = vshrl.u32 %v572, 7
    %575 = vset.pattern.permute.xlu0 %v573
    %576 = vperm.xlu0 %575, %v571
    %v577 = vpop.permute.xlu0 %576
    %v578 = vlaneseq
    %v579 = vshrl.u32 %v578, 7
    %v580 = vadd.s32 %v579, 8
    %581 = vset.pattern.permute.xlu0 %v580
    %582 = vperm.xlu0 %581, %v571
    %v583 = vpop.permute.xlu0 %582
    %v584 = vlaneseq
    %v585 = vshrl.u32 %v584, 7
    %v586 = vadd.s32 %v585, 16
    %587 = vset.pattern.permute.xlu0 %v586
    %588 = vperm.xlu0 %587, %v571
    %v589 = vpop.permute.xlu0 %588
    %v590 = vlaneseq
    %v591 = vshrl.u32 %v590, 7
    %v592 = vadd.s32 %v591, 24
    %593 = vset.pattern.permute.xlu0 %v592
    %594 = vperm.xlu0 %593, %v571
    %v595 = vpop.permute.xlu0 %594
    %v596 = vlaneseq
    %v597 = vshrl.u32 %v596, 7
    %v598 = vadd.s32 %v597, 32
    %599 = vset.pattern.permute.xlu0 %v598
    %600 = vperm.xlu0 %599, %v571
    %v601 = vpop.permute.xlu0 %600
    %v602 = vlaneseq
    %v603 = vshrl.u32 %v602, 7
    %v604 = vadd.s32 %v603, 40
    %605 = vset.pattern.permute.xlu0 %v604
    %606 = vperm.xlu0 %605, %v571
    %v607 = vpop.permute.xlu0 %606
    %v608 = vlaneseq
    %v609 = vshrl.u32 %v608, 7
    %v610 = vadd.s32 %v609, 48
    %611 = vset.pattern.permute.xlu0 %v610
    %612 = vperm.xlu0 %611, %v571
    %v613 = vpop.permute.xlu0 %612
    %v614 = vlaneseq
    %v615 = vshrl.u32 %v614, 7
    %v616 = vadd.s32 %v615, 56
    %617 = vset.pattern.permute.xlu0 %v616
    %618 = vperm.xlu0 %617, %v571
    %v619 = vpop.permute.xlu0 %618
    %v620 = vlaneseq
    %v621 = vshrl.u32 %v620, 7
    %v622 = vadd.s32 %v621, 64
    %623 = vset.pattern.permute.xlu0 %v622
    %624 = vperm.xlu0 %623, %v571
    %v625 = vpop.permute.xlu0 %624
    %v626 = vlaneseq
    %v627 = vshrl.u32 %v626, 7
    %v628 = vadd.s32 %v627, 72
    %629 = vset.pattern.permute.xlu0 %v628
    %630 = vperm.xlu0 %629, %v571
    %v631 = vpop.permute.xlu0 %630
    %v632 = vlaneseq
    %v633 = vshrl.u32 %v632, 7
    %v634 = vadd.s32 %v633, 80
    %635 = vset.pattern.permute.xlu0 %v634
    %636 = vperm.xlu0 %635, %v571
    %v637 = vpop.permute.xlu0 %636
    %v638 = vlaneseq
    %v639 = vshrl.u32 %v638, 7
    %v640 = vadd.s32 %v639, 88
    %641 = vset.pattern.permute.xlu0 %v640
    %642 = vperm.xlu0 %641, %v571
    %v643 = vpop.permute.xlu0 %642
    %v644 = vlaneseq
    %v645 = vshrl.u32 %v644, 7
    %v646 = vadd.s32 %v645, 96
    %647 = vset.pattern.permute.xlu0 %v646
    %648 = vperm.xlu0 %647, %v571
    %v649 = vpop.permute.xlu0 %648
    %v650 = vlaneseq
    %v651 = vshrl.u32 %v650, 7
    %v652 = vadd.s32 %v651, 104
    %653 = vset.pattern.permute.xlu0 %v652
    %654 = vperm.xlu0 %653, %v571
    %v655 = vpop.permute.xlu0 %654
    %v656 = vlaneseq
    %v657 = vshrl.u32 %v656, 7
    %v658 = vadd.s32 %v657, 112
    %659 = vset.pattern.permute.xlu0 %v658
    %660 = vperm.xlu0 %659, %v571
    %v661 = vpop.permute.xlu0 %660
    %v662 = vlaneseq
    %v663 = vshrl.u32 %v662, 7
    %v664 = vadd.s32 %v663, 120
    %665 = vset.pattern.permute.xlu0 %v664
    %666 = vperm.xlu0 %665, %v571
    %v667 = vpop.permute.xlu0 %666
    %v668 = vperm.slane %v63, 6
    %v669 = vlaneseq
    %v670 = vshrl.u32 %v669, 7
    %672 = vset.pattern.permute.xlu0 %v670
    %673 = vperm.xlu0 %672, %v668
    %v674 = vpop.permute.xlu0 %673
    %v675 = vlaneseq
    %v676 = vshrl.u32 %v675, 7
    %v677 = vadd.s32 %v676, 8
    %678 = vset.pattern.permute.xlu0 %v677
    %679 = vperm.xlu0 %678, %v668
    %v680 = vpop.permute.xlu0 %679
    %v681 = vlaneseq
    %v682 = vshrl.u32 %v681, 7
    %v683 = vadd.s32 %v682, 16
    %684 = vset.pattern.permute.xlu0 %v683
    %685 = vperm.xlu0 %684, %v668
    %v686 = vpop.permute.xlu0 %685
    %v687 = vlaneseq
    %v688 = vshrl.u32 %v687, 7
    %v689 = vadd.s32 %v688, 24
    %690 = vset.pattern.permute.xlu0 %v689
    %691 = vperm.xlu0 %690, %v668
    %v692 = vpop.permute.xlu0 %691
    %v693 = vlaneseq
    %v694 = vshrl.u32 %v693, 7
    %v695 = vadd.s32 %v694, 32
    %696 = vset.pattern.permute.xlu0 %v695
    %697 = vperm.xlu0 %696, %v668
    %v698 = vpop.permute.xlu0 %697
    %v699 = vlaneseq
    %v700 = vshrl.u32 %v699, 7
    %v701 = vadd.s32 %v700, 40
    %702 = vset.pattern.permute.xlu0 %v701
    %703 = vperm.xlu0 %702, %v668
    %v704 = vpop.permute.xlu0 %703
    %v705 = vlaneseq
    %v706 = vshrl.u32 %v705, 7
    %v707 = vadd.s32 %v706, 48
    %708 = vset.pattern.permute.xlu0 %v707
    %709 = vperm.xlu0 %708, %v668
    %v710 = vpop.permute.xlu0 %709
    %v711 = vlaneseq
    %v712 = vshrl.u32 %v711, 7
    %v713 = vadd.s32 %v712, 56
    %714 = vset.pattern.permute.xlu0 %v713
    %715 = vperm.xlu0 %714, %v668
    %v716 = vpop.permute.xlu0 %715
    %v717 = vlaneseq
    %v718 = vshrl.u32 %v717, 7
    %v719 = vadd.s32 %v718, 64
    %720 = vset.pattern.permute.xlu0 %v719
    %721 = vperm.xlu0 %720, %v668
    %v722 = vpop.permute.xlu0 %721
    %v723 = vlaneseq
    %v724 = vshrl.u32 %v723, 7
    %v725 = vadd.s32 %v724, 72
    %726 = vset.pattern.permute.xlu0 %v725
    %727 = vperm.xlu0 %726, %v668
    %v728 = vpop.permute.xlu0 %727
    %v729 = vlaneseq
    %v730 = vshrl.u32 %v729, 7
    %v731 = vadd.s32 %v730, 80
    %732 = vset.pattern.permute.xlu0 %v731
    %733 = vperm.xlu0 %732, %v668
    %v734 = vpop.permute.xlu0 %733
    %v735 = vlaneseq
    %v736 = vshrl.u32 %v735, 7
    %v737 = vadd.s32 %v736, 88
    %738 = vset.pattern.permute.xlu0 %v737
    %739 = vperm.xlu0 %738, %v668
    %v740 = vpop.permute.xlu0 %739
    %v741 = vlaneseq
    %v742 = vshrl.u32 %v741, 7
    %v743 = vadd.s32 %v742, 96
    %744 = vset.pattern.permute.xlu0 %v743
    %745 = vperm.xlu0 %744, %v668
    %v746 = vpop.permute.xlu0 %745
    %v747 = vlaneseq
    %v748 = vshrl.u32 %v747, 7
    %v749 = vadd.s32 %v748, 104
    %750 = vset.pattern.permute.xlu0 %v749
    %751 = vperm.xlu0 %750, %v668
    %v752 = vpop.permute.xlu0 %751
    %v753 = vlaneseq
    %v754 = vshrl.u32 %v753, 7
    %v755 = vadd.s32 %v754, 112
    %756 = vset.pattern.permute.xlu0 %v755
    %757 = vperm.xlu0 %756, %v668
    %v758 = vpop.permute.xlu0 %757
    %v759 = vlaneseq
    %v760 = vshrl.u32 %v759, 7
    %v761 = vadd.s32 %v760, 120
    %762 = vset.pattern.permute.xlu0 %v761
    %763 = vperm.xlu0 %762, %v668
    %v764 = vpop.permute.xlu0 %763
    %v765 = vperm.slane %v63, 7
    %v766 = vlaneseq
    %v767 = vshrl.u32 %v766, 7
    %769 = vset.pattern.permute.xlu0 %v767
    %770 = vperm.xlu0 %769, %v765
    %v771 = vpop.permute.xlu0 %770
    %v772 = vlaneseq
    %v773 = vshrl.u32 %v772, 7
    %v774 = vadd.s32 %v773, 8
    %775 = vset.pattern.permute.xlu0 %v774
    %776 = vperm.xlu0 %775, %v765
    %v777 = vpop.permute.xlu0 %776
    %v778 = vlaneseq
    %v779 = vshrl.u32 %v778, 7
    %v780 = vadd.s32 %v779, 16
    %781 = vset.pattern.permute.xlu0 %v780
    %782 = vperm.xlu0 %781, %v765
    %v783 = vpop.permute.xlu0 %782
    %v784 = vlaneseq
    %v785 = vshrl.u32 %v784, 7
    %v786 = vadd.s32 %v785, 24
    %787 = vset.pattern.permute.xlu0 %v786
    %788 = vperm.xlu0 %787, %v765
    %v789 = vpop.permute.xlu0 %788
    %v790 = vlaneseq
    %v791 = vshrl.u32 %v790, 7
    %v792 = vadd.s32 %v791, 32
    %793 = vset.pattern.permute.xlu0 %v792
    %794 = vperm.xlu0 %793, %v765
    %v795 = vpop.permute.xlu0 %794
    %v796 = vlaneseq
    %v797 = vshrl.u32 %v796, 7
    %v798 = vadd.s32 %v797, 40
    %799 = vset.pattern.permute.xlu0 %v798
    %800 = vperm.xlu0 %799, %v765
    %v801 = vpop.permute.xlu0 %800
    %v802 = vlaneseq
    %v803 = vshrl.u32 %v802, 7
    %v804 = vadd.s32 %v803, 48
    %805 = vset.pattern.permute.xlu0 %v804
    %806 = vperm.xlu0 %805, %v765
    %v807 = vpop.permute.xlu0 %806
    %v808 = vlaneseq
    %v809 = vshrl.u32 %v808, 7
    %v810 = vadd.s32 %v809, 56
    %811 = vset.pattern.permute.xlu0 %v810
    %812 = vperm.xlu0 %811, %v765
    %v813 = vpop.permute.xlu0 %812
    %v814 = vlaneseq
    %v815 = vshrl.u32 %v814, 7
    %v816 = vadd.s32 %v815, 64
    %817 = vset.pattern.permute.xlu0 %v816
    %818 = vperm.xlu0 %817, %v765
    %v819 = vpop.permute.xlu0 %818
    %v820 = vlaneseq
    %v821 = vshrl.u32 %v820, 7
    %v822 = vadd.s32 %v821, 72
    %823 = vset.pattern.permute.xlu0 %v822
    %824 = vperm.xlu0 %823, %v765
    %v825 = vpop.permute.xlu0 %824
    %v826 = vlaneseq
    %v827 = vshrl.u32 %v826, 7
    %v828 = vadd.s32 %v827, 80
    %829 = vset.pattern.permute.xlu0 %v828
    %830 = vperm.xlu0 %829, %v765
    %v831 = vpop.permute.xlu0 %830
    %v832 = vlaneseq
    %v833 = vshrl.u32 %v832, 7
    %v834 = vadd.s32 %v833, 88
    %835 = vset.pattern.permute.xlu0 %v834
    %836 = vperm.xlu0 %835, %v765
    %v837 = vpop.permute.xlu0 %836
    %v838 = vlaneseq
    %v839 = vshrl.u32 %v838, 7
    %v840 = vadd.s32 %v839, 96
    %841 = vset.pattern.permute.xlu0 %v840
    %842 = vperm.xlu0 %841, %v765
    %v843 = vpop.permute.xlu0 %842
    %v844 = vlaneseq
    %v845 = vshrl.u32 %v844, 7
    %v846 = vadd.s32 %v845, 104
    %847 = vset.pattern.permute.xlu0 %v846
    %848 = vperm.xlu0 %847, %v765
    %v849 = vpop.permute.xlu0 %848
    %v850 = vlaneseq
    %v851 = vshrl.u32 %v850, 7
    %v852 = vadd.s32 %v851, 112
    %853 = vset.pattern.permute.xlu0 %v852
    %854 = vperm.xlu0 %853, %v765
    %v855 = vpop.permute.xlu0 %854
    %v856 = vlaneseq
    %v857 = vshrl.u32 %v856, 7
    %v858 = vadd.s32 %v857, 120
    %859 = vset.pattern.permute.xlu0 %v858
    %860 = vperm.xlu0 %859, %v765
    %v861 = vpop.permute.xlu0 %860
    %v862 = vsub.f32 %v92, %v61
    %v863 = vsub.f32 %v92, %v62
    %v864 = vsub.f32 %v98, %v61
    %v865 = vsub.f32 %v98, %v62
    %v866 = vsub.f32 %v104, %v61
    %v867 = vsub.f32 %v104, %v62
    %v868 = vsub.f32 %v110, %v61
    %v869 = vsub.f32 %v110, %v62
    %v870 = vsub.f32 %v116, %v61
    %v871 = vsub.f32 %v116, %v62
    %v872 = vsub.f32 %v122, %v61
    %v873 = vsub.f32 %v122, %v62
    %v874 = vsub.f32 %v128, %v61
    %v875 = vsub.f32 %v128, %v62
    %v876 = vsub.f32 %v134, %v61
    %v877 = vsub.f32 %v134, %v62
    %v878 = vsub.f32 %v140, %v61
    %v879 = vsub.f32 %v140, %v62
    %v880 = vsub.f32 %v146, %v61
    %v881 = vsub.f32 %v146, %v62
    %v882 = vsub.f32 %v152, %v61
    %v883 = vsub.f32 %v152, %v62
    %v884 = vsub.f32 %v158, %v61
    %v885 = vsub.f32 %v158, %v62
    %v886 = vsub.f32 %v164, %v61
    %v887 = vsub.f32 %v164, %v62
    %v888 = vsub.f32 %v170, %v61
    %v889 = vsub.f32 %v170, %v62
    %v890 = vsub.f32 %v176, %v61
    %v891 = vsub.f32 %v176, %v62
    %v892 = vsub.f32 %v182, %v61
    %v893 = vsub.f32 %v182, %v62
    %v894 = vsub.f32 %v189, %v61
    %v895 = vsub.f32 %v189, %v62
    %v896 = vsub.f32 %v195, %v61
    %v897 = vsub.f32 %v195, %v62
    %v898 = vsub.f32 %v201, %v61
    %v899 = vsub.f32 %v201, %v62
    %v900 = vsub.f32 %v207, %v61
    %v901 = vsub.f32 %v207, %v62
    %v902 = vsub.f32 %v213, %v61
    %v903 = vsub.f32 %v213, %v62
    %v904 = vsub.f32 %v219, %v61
    %v905 = vsub.f32 %v219, %v62
    %v906 = vsub.f32 %v225, %v61
    %v907 = vsub.f32 %v225, %v62
    %v908 = vsub.f32 %v231, %v61
    %v909 = vsub.f32 %v231, %v62
    %v910 = vsub.f32 %v237, %v61
    %v911 = vsub.f32 %v237, %v62
    %v912 = vsub.f32 %v243, %v61
    %v913 = vsub.f32 %v243, %v62
    %v914 = vsub.f32 %v249, %v61
    %v915 = vsub.f32 %v249, %v62
    %v916 = vsub.f32 %v255, %v61
    %v917 = vsub.f32 %v255, %v62
    %v918 = vsub.f32 %v261, %v61
    %v919 = vsub.f32 %v261, %v62
    %v920 = vsub.f32 %v267, %v61
    %v921 = vsub.f32 %v267, %v62
    %v922 = vsub.f32 %v273, %v61
    %v923 = vsub.f32 %v273, %v62
    %v924 = vsub.f32 %v279, %v61
    %v925 = vsub.f32 %v279, %v62
    %v926 = vsub.f32 %v286, %v61
    %v927 = vsub.f32 %v286, %v62
    %v928 = vsub.f32 %v292, %v61
    %v929 = vsub.f32 %v292, %v62
    %v930 = vsub.f32 %v298, %v61
    %v931 = vsub.f32 %v298, %v62
    %v932 = vsub.f32 %v304, %v61
    %v933 = vsub.f32 %v304, %v62
    %v934 = vsub.f32 %v310, %v61
    %v935 = vsub.f32 %v310, %v62
    %v936 = vsub.f32 %v316, %v61
    %v937 = vsub.f32 %v316, %v62
    %v938 = vsub.f32 %v322, %v61
    %v939 = vsub.f32 %v322, %v62
    %v940 = vsub.f32 %v328, %v61
    %v941 = vsub.f32 %v328, %v62
    %v942 = vsub.f32 %v334, %v61
    %v943 = vsub.f32 %v334, %v62
    %v944 = vsub.f32 %v340, %v61
    %v945 = vsub.f32 %v340, %v62
    %v946 = vsub.f32 %v346, %v61
    %v947 = vsub.f32 %v346, %v62
    %v948 = vsub.f32 %v352, %v61
    %v949 = vsub.f32 %v352, %v62
    %v950 = vsub.f32 %v358, %v61
    %v951 = vsub.f32 %v358, %v62
    %v952 = vsub.f32 %v364, %v61
    %v953 = vsub.f32 %v364, %v62
    %v954 = vsub.f32 %v370, %v61
    %v955 = vsub.f32 %v370, %v62
    %v956 = vsub.f32 %v376, %v61
    %v957 = vsub.f32 %v376, %v62
    %v958 = vsub.f32 %v383, %v61
    %v959 = vsub.f32 %v383, %v62
    %v960 = vsub.f32 %v389, %v61
    %v961 = vsub.f32 %v389, %v62
    %v962 = vsub.f32 %v395, %v61
    %v963 = vsub.f32 %v395, %v62
    %v964 = vsub.f32 %v401, %v61
    %v965 = vsub.f32 %v401, %v62
    %v966 = vsub.f32 %v407, %v61
    %v967 = vsub.f32 %v407, %v62
    %v968 = vsub.f32 %v413, %v61
    %v969 = vsub.f32 %v413, %v62
    %v970 = vsub.f32 %v419, %v61
    %v971 = vsub.f32 %v419, %v62
    %v972 = vsub.f32 %v425, %v61
    %v973 = vsub.f32 %v425, %v62
    %v974 = vsub.f32 %v431, %v61
    %v975 = vsub.f32 %v431, %v62
    %v976 = vsub.f32 %v437, %v61
    %v977 = vsub.f32 %v437, %v62
    %v978 = vsub.f32 %v443, %v61
    %v979 = vsub.f32 %v443, %v62
    %v980 = vsub.f32 %v449, %v61
    %v981 = vsub.f32 %v449, %v62
    %v982 = vsub.f32 %v455, %v61
    %v983 = vsub.f32 %v455, %v62
    %v984 = vsub.f32 %v461, %v61
    %v985 = vsub.f32 %v461, %v62
    %v986 = vsub.f32 %v467, %v61
    %v987 = vsub.f32 %v467, %v62
    %v988 = vsub.f32 %v473, %v61
    %v989 = vsub.f32 %v473, %v62
    %v990 = vsub.f32 %v480, %v61
    %v991 = vsub.f32 %v480, %v62
    %v992 = vsub.f32 %v486, %v61
    %v993 = vsub.f32 %v486, %v62
    %v994 = vsub.f32 %v492, %v61
    %v995 = vsub.f32 %v492, %v62
    %v996 = vsub.f32 %v498, %v61
    %v997 = vsub.f32 %v498, %v62
    %v998 = vsub.f32 %v504, %v61
    %v999 = vsub.f32 %v504, %v62
    %v1000 = vsub.f32 %v510, %v61
    %v1001 = vsub.f32 %v510, %v62
    %v1002 = vsub.f32 %v516, %v61
    %v1003 = vsub.f32 %v516, %v62
    %v1004 = vsub.f32 %v522, %v61
    %v1005 = vsub.f32 %v522, %v62
    %v1006 = vsub.f32 %v528, %v61
    %v1007 = vsub.f32 %v528, %v62
    %v1008 = vsub.f32 %v534, %v61
    %v1009 = vsub.f32 %v534, %v62
    %v1010 = vsub.f32 %v540, %v61
    %v1011 = vsub.f32 %v540, %v62
    %v1012 = vsub.f32 %v546, %v61
    %v1013 = vsub.f32 %v546, %v62
    %v1014 = vsub.f32 %v552, %v61
    %v1015 = vsub.f32 %v552, %v62
    %v1016 = vsub.f32 %v558, %v61
    %v1017 = vsub.f32 %v558, %v62
    %v1018 = vsub.f32 %v564, %v61
    %v1019 = vsub.f32 %v564, %v62
    %v1020 = vsub.f32 %v570, %v61
    %v1021 = vsub.f32 %v570, %v62
    %v1022 = vsub.f32 %v577, %v61
    %v1023 = vsub.f32 %v577, %v62
    %v1024 = vsub.f32 %v583, %v61
    %v1025 = vsub.f32 %v583, %v62
    %v1026 = vsub.f32 %v589, %v61
    %v1027 = vsub.f32 %v589, %v62
    %v1028 = vsub.f32 %v595, %v61
    %v1029 = vsub.f32 %v595, %v62
    %v1030 = vsub.f32 %v601, %v61
    %v1031 = vsub.f32 %v601, %v62
    %v1032 = vsub.f32 %v607, %v61
    %v1033 = vsub.f32 %v607, %v62
    %v1034 = vsub.f32 %v613, %v61
    %v1035 = vsub.f32 %v613, %v62
    %v1036 = vsub.f32 %v619, %v61
    %v1037 = vsub.f32 %v619, %v62
    %v1038 = vsub.f32 %v625, %v61
    %v1039 = vsub.f32 %v625, %v62
    %v1040 = vsub.f32 %v631, %v61
    %v1041 = vsub.f32 %v631, %v62
    %v1042 = vsub.f32 %v637, %v61
    %v1043 = vsub.f32 %v637, %v62
    %v1044 = vsub.f32 %v643, %v61
    %v1045 = vsub.f32 %v643, %v62
    %v1046 = vsub.f32 %v649, %v61
    %v1047 = vsub.f32 %v649, %v62
    %v1048 = vsub.f32 %v655, %v61
    %v1049 = vsub.f32 %v655, %v62
    %v1050 = vsub.f32 %v661, %v61
    %v1051 = vsub.f32 %v661, %v62
    %v1052 = vsub.f32 %v667, %v61
    %v1053 = vsub.f32 %v667, %v62
    %v1054 = vsub.f32 %v674, %v61
    %v1055 = vsub.f32 %v674, %v62
    %v1056 = vsub.f32 %v680, %v61
    %v1057 = vsub.f32 %v680, %v62
    %v1058 = vsub.f32 %v686, %v61
    %v1059 = vsub.f32 %v686, %v62
    %v1060 = vsub.f32 %v692, %v61
    %v1061 = vsub.f32 %v692, %v62
    %v1062 = vsub.f32 %v698, %v61
    %v1063 = vsub.f32 %v698, %v62
    %v1064 = vsub.f32 %v704, %v61
    %v1065 = vsub.f32 %v704, %v62
    %v1066 = vsub.f32 %v710, %v61
    %v1067 = vsub.f32 %v710, %v62
    %v1068 = vsub.f32 %v716, %v61
    %v1069 = vsub.f32 %v716, %v62
    %v1070 = vsub.f32 %v722, %v61
    %v1071 = vsub.f32 %v722, %v62
    %v1072 = vsub.f32 %v728, %v61
    %v1073 = vsub.f32 %v728, %v62
    %v1074 = vsub.f32 %v734, %v61
    %v1075 = vsub.f32 %v734, %v62
    %v1076 = vsub.f32 %v740, %v61
    %v1077 = vsub.f32 %v740, %v62
    %v1078 = vsub.f32 %v746, %v61
    %v1079 = vsub.f32 %v746, %v62
    %v1080 = vsub.f32 %v752, %v61
    %v1081 = vsub.f32 %v752, %v62
    %v1082 = vsub.f32 %v758, %v61
    %v1083 = vsub.f32 %v758, %v62
    %v1084 = vsub.f32 %v764, %v61
    %v1085 = vsub.f32 %v764, %v62
    %v1086 = vsub.f32 %v771, %v61
    %v1087 = vsub.f32 %v771, %v62
    %v1088 = vsub.f32 %v777, %v61
    %v1089 = vsub.f32 %v777, %v62
    %v1090 = vsub.f32 %v783, %v61
    %v1091 = vsub.f32 %v783, %v62
    %v1092 = vsub.f32 %v789, %v61
    %v1093 = vsub.f32 %v789, %v62
    %v1094 = vsub.f32 %v795, %v61
    %v1095 = vsub.f32 %v795, %v62
    %v1096 = vsub.f32 %v801, %v61
    %v1097 = vsub.f32 %v801, %v62
    %v1098 = vsub.f32 %v807, %v61
    %v1099 = vsub.f32 %v807, %v62
    %v1100 = vsub.f32 %v813, %v61
    %v1101 = vsub.f32 %v813, %v62
    %v1102 = vsub.f32 %v819, %v61
    %v1103 = vsub.f32 %v819, %v62
    %v1104 = vsub.f32 %v825, %v61
    %v1105 = vsub.f32 %v825, %v62
    %v1106 = vsub.f32 %v831, %v61
    %v1107 = vsub.f32 %v831, %v62
    %v1108 = vsub.f32 %v837, %v61
    %v1109 = vsub.f32 %v837, %v62
    %v1110 = vsub.f32 %v843, %v61
    %v1111 = vsub.f32 %v843, %v62
    %v1112 = vsub.f32 %v849, %v61
    %v1113 = vsub.f32 %v849, %v62
    %v1114 = vsub.f32 %v855, %v61
    %v1115 = vsub.f32 %v855, %v62
    %v1116 = vsub.f32 %v861, %v61
    %v1117 = vsub.f32 %v861, %v62
    %v1118 = vmul.f32 %v862, %v862
    %v1119 = vmul.f32 %v863, %v863
    %v1120 = vmul.f32 %v864, %v864
    %v1121 = vmul.f32 %v865, %v865
    %v1122 = vmul.f32 %v866, %v866
    %v1123 = vmul.f32 %v867, %v867
    %v1124 = vmul.f32 %v868, %v868
    %v1125 = vmul.f32 %v869, %v869
    %v1126 = vmul.f32 %v870, %v870
    %v1127 = vmul.f32 %v871, %v871
    %v1128 = vmul.f32 %v872, %v872
    %v1129 = vmul.f32 %v873, %v873
    %v1130 = vmul.f32 %v874, %v874
    %v1131 = vmul.f32 %v875, %v875
    %v1132 = vmul.f32 %v876, %v876
    %v1133 = vmul.f32 %v877, %v877
    %v1134 = vmul.f32 %v878, %v878
    %v1135 = vmul.f32 %v879, %v879
    %v1136 = vmul.f32 %v880, %v880
    %v1137 = vmul.f32 %v881, %v881
    %v1138 = vmul.f32 %v882, %v882
    %v1139 = vmul.f32 %v883, %v883
    %v1140 = vmul.f32 %v884, %v884
    %v1141 = vmul.f32 %v885, %v885
    %v1142 = vmul.f32 %v886, %v886
    %v1143 = vmul.f32 %v887, %v887
    %v1144 = vmul.f32 %v888, %v888
    %v1145 = vmul.f32 %v889, %v889
    %v1146 = vmul.f32 %v890, %v890
    %v1147 = vmul.f32 %v891, %v891
    %v1148 = vmul.f32 %v892, %v892
    %v1149 = vmul.f32 %v893, %v893
    %v1150 = vmul.f32 %v894, %v894
    %v1151 = vmul.f32 %v895, %v895
    %v1152 = vmul.f32 %v896, %v896
    %v1153 = vmul.f32 %v897, %v897
    %v1154 = vmul.f32 %v898, %v898
    %v1155 = vmul.f32 %v899, %v899
    %v1156 = vmul.f32 %v900, %v900
    %v1157 = vmul.f32 %v901, %v901
    %v1158 = vmul.f32 %v902, %v902
    %v1159 = vmul.f32 %v903, %v903
    %v1160 = vmul.f32 %v904, %v904
    %v1161 = vmul.f32 %v905, %v905
    %v1162 = vmul.f32 %v906, %v906
    %v1163 = vmul.f32 %v907, %v907
    %v1164 = vmul.f32 %v908, %v908
    %v1165 = vmul.f32 %v909, %v909
    %v1166 = vmul.f32 %v910, %v910
    %v1167 = vmul.f32 %v911, %v911
    %v1168 = vmul.f32 %v912, %v912
    %v1169 = vmul.f32 %v913, %v913
    %v1170 = vmul.f32 %v914, %v914
    %v1171 = vmul.f32 %v915, %v915
    %v1172 = vmul.f32 %v916, %v916
    %v1173 = vmul.f32 %v917, %v917
    %v1174 = vmul.f32 %v918, %v918
    %v1175 = vmul.f32 %v919, %v919
    %v1176 = vmul.f32 %v920, %v920
    %v1177 = vmul.f32 %v921, %v921
    %v1178 = vmul.f32 %v922, %v922
    %v1179 = vmul.f32 %v923, %v923
    %v1180 = vmul.f32 %v924, %v924
    %v1181 = vmul.f32 %v925, %v925
    %v1182 = vmul.f32 %v926, %v926
    %v1183 = vmul.f32 %v927, %v927
    %v1184 = vmul.f32 %v928, %v928
    %v1185 = vmul.f32 %v929, %v929
    %v1186 = vmul.f32 %v930, %v930
    %v1187 = vmul.f32 %v931, %v931
    %v1188 = vmul.f32 %v932, %v932
    %v1189 = vmul.f32 %v933, %v933
    %v1190 = vmul.f32 %v934, %v934
    %v1191 = vmul.f32 %v935, %v935
    %v1192 = vmul.f32 %v936, %v936
    %v1193 = vmul.f32 %v937, %v937
    %v1194 = vmul.f32 %v938, %v938
    %v1195 = vmul.f32 %v939, %v939
    %v1196 = vmul.f32 %v940, %v940
    %v1197 = vmul.f32 %v941, %v941
    %v1198 = vmul.f32 %v942, %v942
    %v1199 = vmul.f32 %v943, %v943
    %v1200 = vmul.f32 %v944, %v944
    %v1201 = vmul.f32 %v945, %v945
    %v1202 = vmul.f32 %v946, %v946
    %v1203 = vmul.f32 %v947, %v947
    %v1204 = vmul.f32 %v948, %v948
    %v1205 = vmul.f32 %v949, %v949
    %v1206 = vmul.f32 %v950, %v950
    %v1207 = vmul.f32 %v951, %v951
    %v1208 = vmul.f32 %v952, %v952
    %v1209 = vmul.f32 %v953, %v953
    %v1210 = vmul.f32 %v954, %v954
    %v1211 = vmul.f32 %v955, %v955
    %v1212 = vmul.f32 %v956, %v956
    %v1213 = vmul.f32 %v957, %v957
    %v1214 = vmul.f32 %v958, %v958
    %v1215 = vmul.f32 %v959, %v959
    %v1216 = vmul.f32 %v960, %v960
    %v1217 = vmul.f32 %v961, %v961
    %v1218 = vmul.f32 %v962, %v962
    %v1219 = vmul.f32 %v963, %v963
    %v1220 = vmul.f32 %v964, %v964
    %v1221 = vmul.f32 %v965, %v965
    %v1222 = vmul.f32 %v966, %v966
    %v1223 = vmul.f32 %v967, %v967
    %v1224 = vmul.f32 %v968, %v968
    %v1225 = vmul.f32 %v969, %v969
    %v1226 = vmul.f32 %v970, %v970
    %v1227 = vmul.f32 %v971, %v971
    %v1228 = vmul.f32 %v972, %v972
    %v1229 = vmul.f32 %v973, %v973
    %v1230 = vmul.f32 %v974, %v974
    %v1231 = vmul.f32 %v975, %v975
    %v1232 = vmul.f32 %v976, %v976
    %v1233 = vmul.f32 %v977, %v977
    %v1234 = vmul.f32 %v978, %v978
    %v1235 = vmul.f32 %v979, %v979
    %v1236 = vmul.f32 %v980, %v980
    %v1237 = vmul.f32 %v981, %v981
    %v1238 = vmul.f32 %v982, %v982
    %v1239 = vmul.f32 %v983, %v983
    %v1240 = vmul.f32 %v984, %v984
    %v1241 = vmul.f32 %v985, %v985
    %v1242 = vmul.f32 %v986, %v986
    %v1243 = vmul.f32 %v987, %v987
    %v1244 = vmul.f32 %v988, %v988
    %v1245 = vmul.f32 %v989, %v989
    %v1246 = vmul.f32 %v990, %v990
    %v1247 = vmul.f32 %v991, %v991
    %v1248 = vmul.f32 %v992, %v992
    %v1249 = vmul.f32 %v993, %v993
    %v1250 = vmul.f32 %v994, %v994
    %v1251 = vmul.f32 %v995, %v995
    %v1252 = vmul.f32 %v996, %v996
    %v1253 = vmul.f32 %v997, %v997
    %v1254 = vmul.f32 %v998, %v998
    %v1255 = vmul.f32 %v999, %v999
    %v1256 = vmul.f32 %v1000, %v1000
    %v1257 = vmul.f32 %v1001, %v1001
    %v1258 = vmul.f32 %v1002, %v1002
    %v1259 = vmul.f32 %v1003, %v1003
    %v1260 = vmul.f32 %v1004, %v1004
    %v1261 = vmul.f32 %v1005, %v1005
    %v1262 = vmul.f32 %v1006, %v1006
    %v1263 = vmul.f32 %v1007, %v1007
    %v1264 = vmul.f32 %v1008, %v1008
    %v1265 = vmul.f32 %v1009, %v1009
    %v1266 = vmul.f32 %v1010, %v1010
    %v1267 = vmul.f32 %v1011, %v1011
    %v1268 = vmul.f32 %v1012, %v1012
    %v1269 = vmul.f32 %v1013, %v1013
    %v1270 = vmul.f32 %v1014, %v1014
    %v1271 = vmul.f32 %v1015, %v1015
    %v1272 = vmul.f32 %v1016, %v1016
    %v1273 = vmul.f32 %v1017, %v1017
    %v1274 = vmul.f32 %v1018, %v1018
    %v1275 = vmul.f32 %v1019, %v1019
    %v1276 = vmul.f32 %v1020, %v1020
    %v1277 = vmul.f32 %v1021, %v1021
    %v1278 = vmul.f32 %v1022, %v1022
    %v1279 = vmul.f32 %v1023, %v1023
    %v1280 = vmul.f32 %v1024, %v1024
    %v1281 = vmul.f32 %v1025, %v1025
    %v1282 = vmul.f32 %v1026, %v1026
    %v1283 = vmul.f32 %v1027, %v1027
    %v1284 = vmul.f32 %v1028, %v1028
    %v1285 = vmul.f32 %v1029, %v1029
    %v1286 = vmul.f32 %v1030, %v1030
    %v1287 = vmul.f32 %v1031, %v1031
    %v1288 = vmul.f32 %v1032, %v1032
    %v1289 = vmul.f32 %v1033, %v1033
    %v1290 = vmul.f32 %v1034, %v1034
    %v1291 = vmul.f32 %v1035, %v1035
    %v1292 = vmul.f32 %v1036, %v1036
    %v1293 = vmul.f32 %v1037, %v1037
    %v1294 = vmul.f32 %v1038, %v1038
    %v1295 = vmul.f32 %v1039, %v1039
    %v1296 = vmul.f32 %v1040, %v1040
    %v1297 = vmul.f32 %v1041, %v1041
    %v1298 = vmul.f32 %v1042, %v1042
    %v1299 = vmul.f32 %v1043, %v1043
    %v1300 = vmul.f32 %v1044, %v1044
    %v1301 = vmul.f32 %v1045, %v1045
    %v1302 = vmul.f32 %v1046, %v1046
    %v1303 = vmul.f32 %v1047, %v1047
    %v1304 = vmul.f32 %v1048, %v1048
    %v1305 = vmul.f32 %v1049, %v1049
    %v1306 = vmul.f32 %v1050, %v1050
    %v1307 = vmul.f32 %v1051, %v1051
    %v1308 = vmul.f32 %v1052, %v1052
    %v1309 = vmul.f32 %v1053, %v1053
    %v1310 = vmul.f32 %v1054, %v1054
    %v1311 = vmul.f32 %v1055, %v1055
    %v1312 = vmul.f32 %v1056, %v1056
    %v1313 = vmul.f32 %v1057, %v1057
    %v1314 = vmul.f32 %v1058, %v1058
    %v1315 = vmul.f32 %v1059, %v1059
    %v1316 = vmul.f32 %v1060, %v1060
    %v1317 = vmul.f32 %v1061, %v1061
    %v1318 = vmul.f32 %v1062, %v1062
    %v1319 = vmul.f32 %v1063, %v1063
    %v1320 = vmul.f32 %v1064, %v1064
    %v1321 = vmul.f32 %v1065, %v1065
    %v1322 = vmul.f32 %v1066, %v1066
    %v1323 = vmul.f32 %v1067, %v1067
    %v1324 = vmul.f32 %v1068, %v1068
    %v1325 = vmul.f32 %v1069, %v1069
    %v1326 = vmul.f32 %v1070, %v1070
    %v1327 = vmul.f32 %v1071, %v1071
    %v1328 = vmul.f32 %v1072, %v1072
    %v1329 = vmul.f32 %v1073, %v1073
    %v1330 = vmul.f32 %v1074, %v1074
    %v1331 = vmul.f32 %v1075, %v1075
    %v1332 = vmul.f32 %v1076, %v1076
    %v1333 = vmul.f32 %v1077, %v1077
    %v1334 = vmul.f32 %v1078, %v1078
    %v1335 = vmul.f32 %v1079, %v1079
    %v1336 = vmul.f32 %v1080, %v1080
    %v1337 = vmul.f32 %v1081, %v1081
    %v1338 = vmul.f32 %v1082, %v1082
    %v1339 = vmul.f32 %v1083, %v1083
    %v1340 = vmul.f32 %v1084, %v1084
    %v1341 = vmul.f32 %v1085, %v1085
    %v1342 = vmul.f32 %v1086, %v1086
    %v1343 = vmul.f32 %v1087, %v1087
    %v1344 = vmul.f32 %v1088, %v1088
    %v1345 = vmul.f32 %v1089, %v1089
    %v1346 = vmul.f32 %v1090, %v1090
    %v1347 = vmul.f32 %v1091, %v1091
    %v1348 = vmul.f32 %v1092, %v1092
    %v1349 = vmul.f32 %v1093, %v1093
    %v1350 = vmul.f32 %v1094, %v1094
    %v1351 = vmul.f32 %v1095, %v1095
    %v1352 = vmul.f32 %v1096, %v1096
    %v1353 = vmul.f32 %v1097, %v1097
    %v1354 = vmul.f32 %v1098, %v1098
    %v1355 = vmul.f32 %v1099, %v1099
    %v1356 = vmul.f32 %v1100, %v1100
    %v1357 = vmul.f32 %v1101, %v1101
    %v1358 = vmul.f32 %v1102, %v1102
    %v1359 = vmul.f32 %v1103, %v1103
    %v1360 = vmul.f32 %v1104, %v1104
    %v1361 = vmul.f32 %v1105, %v1105
    %v1362 = vmul.f32 %v1106, %v1106
    %v1363 = vmul.f32 %v1107, %v1107
    %v1364 = vmul.f32 %v1108, %v1108
    %v1365 = vmul.f32 %v1109, %v1109
    %v1366 = vmul.f32 %v1110, %v1110
    %v1367 = vmul.f32 %v1111, %v1111
    %v1368 = vmul.f32 %v1112, %v1112
    %v1369 = vmul.f32 %v1113, %v1113
    %v1370 = vmul.f32 %v1114, %v1114
    %v1371 = vmul.f32 %v1115, %v1115
    %v1372 = vmul.f32 %v1116, %v1116
    %v1373 = vmul.f32 %v1117, %v1117
    %v1374 = vmul.f32 %v1118, -100.0
    %v1375 = vmul.f32 %v1119, -100.0
    %v1376 = vmul.f32 %v1120, -100.0
    %v1377 = vmul.f32 %v1121, -100.0
    %v1378 = vmul.f32 %v1122, -100.0
    %v1379 = vmul.f32 %v1123, -100.0
    %v1380 = vmul.f32 %v1124, -100.0
    %v1381 = vmul.f32 %v1125, -100.0
    %v1382 = vmul.f32 %v1126, -100.0
    %v1383 = vmul.f32 %v1127, -100.0
    %v1384 = vmul.f32 %v1128, -100.0
    %v1385 = vmul.f32 %v1129, -100.0
    %v1386 = vmul.f32 %v1130, -100.0
    %v1387 = vmul.f32 %v1131, -100.0
    %v1388 = vmul.f32 %v1132, -100.0
    %v1389 = vmul.f32 %v1133, -100.0
    %v1390 = vmul.f32 %v1134, -100.0
    %v1391 = vmul.f32 %v1135, -100.0
    %v1392 = vmul.f32 %v1136, -100.0
    %v1393 = vmul.f32 %v1137, -100.0
    %v1394 = vmul.f32 %v1138, -100.0
    %v1395 = vmul.f32 %v1139, -100.0
    %v1396 = vmul.f32 %v1140, -100.0
    %v1397 = vmul.f32 %v1141, -100.0
    %v1398 = vmul.f32 %v1142, -100.0
    %v1399 = vmul.f32 %v1143, -100.0
    %v1400 = vmul.f32 %v1144, -100.0
    %v1401 = vmul.f32 %v1145, -100.0
    %v1402 = vmul.f32 %v1146, -100.0
    %v1403 = vmul.f32 %v1147, -100.0
    %v1404 = vmul.f32 %v1148, -100.0
    %v1405 = vmul.f32 %v1149, -100.0
    %v1406 = vmul.f32 %v1150, -100.0
    %v1407 = vmul.f32 %v1151, -100.0
    %v1408 = vmul.f32 %v1152, -100.0
    %v1409 = vmul.f32 %v1153, -100.0
    %v1410 = vmul.f32 %v1154, -100.0
    %v1411 = vmul.f32 %v1155, -100.0
    %v1412 = vmul.f32 %v1156, -100.0
    %v1413 = vmul.f32 %v1157, -100.0
    %v1414 = vmul.f32 %v1158, -100.0
    %v1415 = vmul.f32 %v1159, -100.0
    %v1416 = vmul.f32 %v1160, -100.0
    %v1417 = vmul.f32 %v1161, -100.0
    %v1418 = vmul.f32 %v1162, -100.0
    %v1419 = vmul.f32 %v1163, -100.0
    %v1420 = vmul.f32 %v1164, -100.0
    %v1421 = vmul.f32 %v1165, -100.0
    %v1422 = vmul.f32 %v1166, -100.0
    %v1423 = vmul.f32 %v1167, -100.0
    %v1424 = vmul.f32 %v1168, -100.0
    %v1425 = vmul.f32 %v1169, -100.0
    %v1426 = vmul.f32 %v1170, -100.0
    %v1427 = vmul.f32 %v1171, -100.0
    %v1428 = vmul.f32 %v1172, -100.0
    %v1429 = vmul.f32 %v1173, -100.0
    %v1430 = vmul.f32 %v1174, -100.0
    %v1431 = vmul.f32 %v1175, -100.0
    %v1432 = vmul.f32 %v1176, -100.0
    %v1433 = vmul.f32 %v1177, -100.0
    %v1434 = vmul.f32 %v1178, -100.0
    %v1435 = vmul.f32 %v1179, -100.0
    %v1436 = vmul.f32 %v1180, -100.0
    %v1437 = vmul.f32 %v1181, -100.0
    %v1438 = vmul.f32 %v1182, -100.0
    %v1439 = vmul.f32 %v1183, -100.0
    %v1440 = vmul.f32 %v1184, -100.0
    %v1441 = vmul.f32 %v1185, -100.0
    %v1442 = vmul.f32 %v1186, -100.0
    %v1443 = vmul.f32 %v1187, -100.0
    %v1444 = vmul.f32 %v1188, -100.0
    %v1445 = vmul.f32 %v1189, -100.0
    %v1446 = vmul.f32 %v1190, -100.0
    %v1447 = vmul.f32 %v1191, -100.0
    %v1448 = vmul.f32 %v1192, -100.0
    %v1449 = vmul.f32 %v1193, -100.0
    %v1450 = vmul.f32 %v1194, -100.0
    %v1451 = vmul.f32 %v1195, -100.0
    %v1452 = vmul.f32 %v1196, -100.0
    %v1453 = vmul.f32 %v1197, -100.0
    %v1454 = vmul.f32 %v1198, -100.0
    %v1455 = vmul.f32 %v1199, -100.0
    %v1456 = vmul.f32 %v1200, -100.0
    %v1457 = vmul.f32 %v1201, -100.0
    %v1458 = vmul.f32 %v1202, -100.0
    %v1459 = vmul.f32 %v1203, -100.0
    %v1460 = vmul.f32 %v1204, -100.0
    %v1461 = vmul.f32 %v1205, -100.0
    %v1462 = vmul.f32 %v1206, -100.0
    %v1463 = vmul.f32 %v1207, -100.0
    %v1464 = vmul.f32 %v1208, -100.0
    %v1465 = vmul.f32 %v1209, -100.0
    %v1466 = vmul.f32 %v1210, -100.0
    %v1467 = vmul.f32 %v1211, -100.0
    %v1468 = vmul.f32 %v1212, -100.0
    %v1469 = vmul.f32 %v1213, -100.0
    %v1470 = vmul.f32 %v1214, -100.0
    %v1471 = vmul.f32 %v1215, -100.0
    %v1472 = vmul.f32 %v1216, -100.0
    %v1473 = vmul.f32 %v1217, -100.0
    %v1474 = vmul.f32 %v1218, -100.0
    %v1475 = vmul.f32 %v1219, -100.0
    %v1476 = vmul.f32 %v1220, -100.0
    %v1477 = vmul.f32 %v1221, -100.0
    %v1478 = vmul.f32 %v1222, -100.0
    %v1479 = vmul.f32 %v1223, -100.0
    %v1480 = vmul.f32 %v1224, -100.0
    %v1481 = vmul.f32 %v1225, -100.0
    %v1482 = vmul.f32 %v1226, -100.0
    %v1483 = vmul.f32 %v1227, -100.0
    %v1484 = vmul.f32 %v1228, -100.0
    %v1485 = vmul.f32 %v1229, -100.0
    %v1486 = vmul.f32 %v1230, -100.0
    %v1487 = vmul.f32 %v1231, -100.0
    %v1488 = vmul.f32 %v1232, -100.0
    %v1489 = vmul.f32 %v1233, -100.0
    %v1490 = vmul.f32 %v1234, -100.0
    %v1491 = vmul.f32 %v1235, -100.0
    %v1492 = vmul.f32 %v1236, -100.0
    %v1493 = vmul.f32 %v1237, -100.0
    %v1494 = vmul.f32 %v1238, -100.0
    %v1495 = vmul.f32 %v1239, -100.0
    %v1496 = vmul.f32 %v1240, -100.0
    %v1497 = vmul.f32 %v1241, -100.0
    %v1498 = vmul.f32 %v1242, -100.0
    %v1499 = vmul.f32 %v1243, -100.0
    %v1500 = vmul.f32 %v1244, -100.0
    %v1501 = vmul.f32 %v1245, -100.0
    %v1502 = vmul.f32 %v1246, -100.0
    %v1503 = vmul.f32 %v1247, -100.0
    %v1504 = vmul.f32 %v1248, -100.0
    %v1505 = vmul.f32 %v1249, -100.0
    %v1506 = vmul.f32 %v1250, -100.0
    %v1507 = vmul.f32 %v1251, -100.0
    %v1508 = vmul.f32 %v1252, -100.0
    %v1509 = vmul.f32 %v1253, -100.0
    %v1510 = vmul.f32 %v1254, -100.0
    %v1511 = vmul.f32 %v1255, -100.0
    %v1512 = vmul.f32 %v1256, -100.0
    %v1513 = vmul.f32 %v1257, -100.0
    %v1514 = vmul.f32 %v1258, -100.0
    %v1515 = vmul.f32 %v1259, -100.0
    %v1516 = vmul.f32 %v1260, -100.0
    %v1517 = vmul.f32 %v1261, -100.0
    %v1518 = vmul.f32 %v1262, -100.0
    %v1519 = vmul.f32 %v1263, -100.0
    %v1520 = vmul.f32 %v1264, -100.0
    %v1521 = vmul.f32 %v1265, -100.0
    %v1522 = vmul.f32 %v1266, -100.0
    %v1523 = vmul.f32 %v1267, -100.0
    %v1524 = vmul.f32 %v1268, -100.0
    %v1525 = vmul.f32 %v1269, -100.0
    %v1526 = vmul.f32 %v1270, -100.0
    %v1527 = vmul.f32 %v1271, -100.0
    %v1528 = vmul.f32 %v1272, -100.0
    %v1529 = vmul.f32 %v1273, -100.0
    %v1530 = vmul.f32 %v1274, -100.0
    %v1531 = vmul.f32 %v1275, -100.0
    %v1532 = vmul.f32 %v1276, -100.0
    %v1533 = vmul.f32 %v1277, -100.0
    %v1534 = vmul.f32 %v1278, -100.0
    %v1535 = vmul.f32 %v1279, -100.0
    %v1536 = vmul.f32 %v1280, -100.0
    %v1537 = vmul.f32 %v1281, -100.0
    %v1538 = vmul.f32 %v1282, -100.0
    %v1539 = vmul.f32 %v1283, -100.0
    %v1540 = vmul.f32 %v1284, -100.0
    %v1541 = vmul.f32 %v1285, -100.0
    %v1542 = vmul.f32 %v1286, -100.0
    %v1543 = vmul.f32 %v1287, -100.0
    %v1544 = vmul.f32 %v1288, -100.0
    %v1545 = vmul.f32 %v1289, -100.0
    %v1546 = vmul.f32 %v1290, -100.0
    %v1547 = vmul.f32 %v1291, -100.0
    %v1548 = vmul.f32 %v1292, -100.0
    %v1549 = vmul.f32 %v1293, -100.0
    %v1550 = vmul.f32 %v1294, -100.0
    %v1551 = vmul.f32 %v1295, -100.0
    %v1552 = vmul.f32 %v1296, -100.0
    %v1553 = vmul.f32 %v1297, -100.0
    %v1554 = vmul.f32 %v1298, -100.0
    %v1555 = vmul.f32 %v1299, -100.0
    %v1556 = vmul.f32 %v1300, -100.0
    %v1557 = vmul.f32 %v1301, -100.0
    %v1558 = vmul.f32 %v1302, -100.0
    %v1559 = vmul.f32 %v1303, -100.0
    %v1560 = vmul.f32 %v1304, -100.0
    %v1561 = vmul.f32 %v1305, -100.0
    %v1562 = vmul.f32 %v1306, -100.0
    %v1563 = vmul.f32 %v1307, -100.0
    %v1564 = vmul.f32 %v1308, -100.0
    %v1565 = vmul.f32 %v1309, -100.0
    %v1566 = vmul.f32 %v1310, -100.0
    %v1567 = vmul.f32 %v1311, -100.0
    %v1568 = vmul.f32 %v1312, -100.0
    %v1569 = vmul.f32 %v1313, -100.0
    %v1570 = vmul.f32 %v1314, -100.0
    %v1571 = vmul.f32 %v1315, -100.0
    %v1572 = vmul.f32 %v1316, -100.0
    %v1573 = vmul.f32 %v1317, -100.0
    %v1574 = vmul.f32 %v1318, -100.0
    %v1575 = vmul.f32 %v1319, -100.0
    %v1576 = vmul.f32 %v1320, -100.0
    %v1577 = vmul.f32 %v1321, -100.0
    %v1578 = vmul.f32 %v1322, -100.0
    %v1579 = vmul.f32 %v1323, -100.0
    %v1580 = vmul.f32 %v1324, -100.0
    %v1581 = vmul.f32 %v1325, -100.0
    %v1582 = vmul.f32 %v1326, -100.0
    %v1583 = vmul.f32 %v1327, -100.0
    %v1584 = vmul.f32 %v1328, -100.0
    %v1585 = vmul.f32 %v1329, -100.0
    %v1586 = vmul.f32 %v1330, -100.0
    %v1587 = vmul.f32 %v1331, -100.0
    %v1588 = vmul.f32 %v1332, -100.0
    %v1589 = vmul.f32 %v1333, -100.0
    %v1590 = vmul.f32 %v1334, -100.0
    %v1591 = vmul.f32 %v1335, -100.0
    %v1592 = vmul.f32 %v1336, -100.0
    %v1593 = vmul.f32 %v1337, -100.0
    %v1594 = vmul.f32 %v1338, -100.0
    %v1595 = vmul.f32 %v1339, -100.0
    %v1596 = vmul.f32 %v1340, -100.0
    %v1597 = vmul.f32 %v1341, -100.0
    %v1598 = vmul.f32 %v1342, -100.0
    %v1599 = vmul.f32 %v1343, -100.0
    %v1600 = vmul.f32 %v1344, -100.0
    %v1601 = vmul.f32 %v1345, -100.0
    %v1602 = vmul.f32 %v1346, -100.0
    %v1603 = vmul.f32 %v1347, -100.0
    %v1604 = vmul.f32 %v1348, -100.0
    %v1605 = vmul.f32 %v1349, -100.0
    %v1606 = vmul.f32 %v1350, -100.0
    %v1607 = vmul.f32 %v1351, -100.0
    %v1608 = vmul.f32 %v1352, -100.0
    %v1609 = vmul.f32 %v1353, -100.0
    %v1610 = vmul.f32 %v1354, -100.0
    %v1611 = vmul.f32 %v1355, -100.0
    %v1612 = vmul.f32 %v1356, -100.0
    %v1613 = vmul.f32 %v1357, -100.0
    %v1614 = vmul.f32 %v1358, -100.0
    %v1615 = vmul.f32 %v1359, -100.0
    %v1616 = vmul.f32 %v1360, -100.0
    %v1617 = vmul.f32 %v1361, -100.0
    %v1618 = vmul.f32 %v1362, -100.0
    %v1619 = vmul.f32 %v1363, -100.0
    %v1620 = vmul.f32 %v1364, -100.0
    %v1621 = vmul.f32 %v1365, -100.0
    %v1622 = vmul.f32 %v1366, -100.0
    %v1623 = vmul.f32 %v1367, -100.0
    %v1624 = vmul.f32 %v1368, -100.0
    %v1625 = vmul.f32 %v1369, -100.0
    %v1626 = vmul.f32 %v1370, -100.0
    %v1627 = vmul.f32 %v1371, -100.0
    %v1628 = vmul.f32 %v1372, -100.0
    %v1629 = vmul.f32 %v1373, -100.0
    %v1630 = vmul.f32 %v1374, 1.442695
    %v1631 = vpow.pop %v1630
    %v1632 = vmul.f32 %v1375, 1.442695
    %v1633 = vpow.pop %v1632
    %v1634 = vmul.f32 %v1376, 1.442695
    %v1635 = vpow.pop %v1634
    %v1636 = vmul.f32 %v1377, 1.442695
    %v1637 = vpow.pop %v1636
    %v1638 = vmul.f32 %v1378, 1.442695
    %v1639 = vpow.pop %v1638
    %v1640 = vmul.f32 %v1379, 1.442695
    %v1641 = vpow.pop %v1640
    %v1642 = vmul.f32 %v1380, 1.442695
    %v1643 = vpow.pop %v1642
    %v1644 = vmul.f32 %v1381, 1.442695
    %v1645 = vpow.pop %v1644
    %v1646 = vmul.f32 %v1382, 1.442695
    %v1647 = vpow.pop %v1646
    %v1648 = vmul.f32 %v1383, 1.442695
    %v1649 = vpow.pop %v1648
    %v1650 = vmul.f32 %v1384, 1.442695
    %v1651 = vpow.pop %v1650
    %v1652 = vmul.f32 %v1385, 1.442695
    %v1653 = vpow.pop %v1652
    %v1654 = vmul.f32 %v1386, 1.442695
    %v1655 = vpow.pop %v1654
    %v1656 = vmul.f32 %v1387, 1.442695
    %v1657 = vpow.pop %v1656
    %v1658 = vmul.f32 %v1388, 1.442695
    %v1659 = vpow.pop %v1658
    %v1660 = vmul.f32 %v1389, 1.442695
    %v1661 = vpow.pop %v1660
    %v1662 = vmul.f32 %v1390, 1.442695
    %v1663 = vpow.pop %v1662
    %v1664 = vmul.f32 %v1391, 1.442695
    %v1665 = vpow.pop %v1664
    %v1666 = vmul.f32 %v1392, 1.442695
    %v1667 = vpow.pop %v1666
    %v1668 = vmul.f32 %v1393, 1.442695
    %v1669 = vpow.pop %v1668
    %v1670 = vmul.f32 %v1394, 1.442695
    %v1671 = vpow.pop %v1670
    %v1672 = vmul.f32 %v1395, 1.442695
    %v1673 = vpow.pop %v1672
    %v1674 = vmul.f32 %v1396, 1.442695
    %v1675 = vpow.pop %v1674
    %v1676 = vmul.f32 %v1397, 1.442695
    %v1677 = vpow.pop %v1676
    %v1678 = vmul.f32 %v1398, 1.442695
    %v1679 = vpow.pop %v1678
    %v1680 = vmul.f32 %v1399, 1.442695
    %v1681 = vpow.pop %v1680
    %v1682 = vmul.f32 %v1400, 1.442695
    %v1683 = vpow.pop %v1682
    %v1684 = vmul.f32 %v1401, 1.442695
    %v1685 = vpow.pop %v1684
    %v1686 = vmul.f32 %v1402, 1.442695
    %v1687 = vpow.pop %v1686
    %v1688 = vmul.f32 %v1403, 1.442695
    %v1689 = vpow.pop %v1688
    %v1690 = vmul.f32 %v1404, 1.442695
    %v1691 = vpow.pop %v1690
    %v1692 = vmul.f32 %v1405, 1.442695
    %v1693 = vpow.pop %v1692
    %v1694 = vmul.f32 %v1406, 1.442695
    %v1695 = vpow.pop %v1694
    %v1696 = vmul.f32 %v1407, 1.442695
    %v1697 = vpow.pop %v1696
    %v1698 = vmul.f32 %v1408, 1.442695
    %v1699 = vpow.pop %v1698
    %v1700 = vmul.f32 %v1409, 1.442695
    %v1701 = vpow.pop %v1700
    %v1702 = vmul.f32 %v1410, 1.442695
    %v1703 = vpow.pop %v1702
    %v1704 = vmul.f32 %v1411, 1.442695
    %v1705 = vpow.pop %v1704
    %v1706 = vmul.f32 %v1412, 1.442695
    %v1707 = vpow.pop %v1706
    %v1708 = vmul.f32 %v1413, 1.442695
    %v1709 = vpow.pop %v1708
    %v1710 = vmul.f32 %v1414, 1.442695
    %v1711 = vpow.pop %v1710
    %v1712 = vmul.f32 %v1415, 1.442695
    %v1713 = vpow.pop %v1712
    %v1714 = vmul.f32 %v1416, 1.442695
    %v1715 = vpow.pop %v1714
    %v1716 = vmul.f32 %v1417, 1.442695
    %v1717 = vpow.pop %v1716
    %v1718 = vmul.f32 %v1418, 1.442695
    %v1719 = vpow.pop %v1718
    %v1720 = vmul.f32 %v1419, 1.442695
    %v1721 = vpow.pop %v1720
    %v1722 = vmul.f32 %v1420, 1.442695
    %v1723 = vpow.pop %v1722
    %v1724 = vmul.f32 %v1421, 1.442695
    %v1725 = vpow.pop %v1724
    %v1726 = vmul.f32 %v1422, 1.442695
    %v1727 = vpow.pop %v1726
    %v1728 = vmul.f32 %v1423, 1.442695
    %v1729 = vpow.pop %v1728
    %v1730 = vmul.f32 %v1424, 1.442695
    %v1731 = vpow.pop %v1730
    %v1732 = vmul.f32 %v1425, 1.442695
    %v1733 = vpow.pop %v1732
    %v1734 = vmul.f32 %v1426, 1.442695
    %v1735 = vpow.pop %v1734
    %v1736 = vmul.f32 %v1427, 1.442695
    %v1737 = vpow.pop %v1736
    %v1738 = vmul.f32 %v1428, 1.442695
    %v1739 = vpow.pop %v1738
    %v1740 = vmul.f32 %v1429, 1.442695
    %v1741 = vpow.pop %v1740
    %v1742 = vmul.f32 %v1430, 1.442695
    %v1743 = vpow.pop %v1742
    %v1744 = vmul.f32 %v1431, 1.442695
    %v1745 = vpow.pop %v1744
    %v1746 = vmul.f32 %v1432, 1.442695
    %v1747 = vpow.pop %v1746
    %v1748 = vmul.f32 %v1433, 1.442695
    %v1749 = vpow.pop %v1748
    %v1750 = vmul.f32 %v1434, 1.442695
    %v1751 = vpow.pop %v1750
    %v1752 = vmul.f32 %v1435, 1.442695
    %v1753 = vpow.pop %v1752
    %v1754 = vmul.f32 %v1436, 1.442695
    %v1755 = vpow.pop %v1754
    %v1756 = vmul.f32 %v1437, 1.442695
    %v1757 = vpow.pop %v1756
    %v1758 = vmul.f32 %v1438, 1.442695
    %v1759 = vpow.pop %v1758
    %v1760 = vmul.f32 %v1439, 1.442695
    %v1761 = vpow.pop %v1760
    %v1762 = vmul.f32 %v1440, 1.442695
    %v1763 = vpow.pop %v1762
    %v1764 = vmul.f32 %v1441, 1.442695
    %v1765 = vpow.pop %v1764
    %v1766 = vmul.f32 %v1442, 1.442695
    %v1767 = vpow.pop %v1766
    %v1768 = vmul.f32 %v1443, 1.442695
    %v1769 = vpow.pop %v1768
    %v1770 = vmul.f32 %v1444, 1.442695
    %v1771 = vpow.pop %v1770
    %v1772 = vmul.f32 %v1445, 1.442695
    %v1773 = vpow.pop %v1772
    %v1774 = vmul.f32 %v1446, 1.442695
    %v1775 = vpow.pop %v1774
    %v1776 = vmul.f32 %v1447, 1.442695
    %v1777 = vpow.pop %v1776
    %v1778 = vmul.f32 %v1448, 1.442695
    %v1779 = vpow.pop %v1778
    %v1780 = vmul.f32 %v1449, 1.442695
    %v1781 = vpow.pop %v1780
    %v1782 = vmul.f32 %v1450, 1.442695
    %v1783 = vpow.pop %v1782
    %v1784 = vmul.f32 %v1451, 1.442695
    %v1785 = vpow.pop %v1784
    %v1786 = vmul.f32 %v1452, 1.442695
    %v1787 = vpow.pop %v1786
    %v1788 = vmul.f32 %v1453, 1.442695
    %v1789 = vpow.pop %v1788
    %v1790 = vmul.f32 %v1454, 1.442695
    %v1791 = vpow.pop %v1790
    %v1792 = vmul.f32 %v1455, 1.442695
    %v1793 = vpow.pop %v1792
    %v1794 = vmul.f32 %v1456, 1.442695
    %v1795 = vpow.pop %v1794
    %v1796 = vmul.f32 %v1457, 1.442695
    %v1797 = vpow.pop %v1796
    %v1798 = vmul.f32 %v1458, 1.442695
    %v1799 = vpow.pop %v1798
    %v1800 = vmul.f32 %v1459, 1.442695
    %v1801 = vpow.pop %v1800
    %v1802 = vmul.f32 %v1460, 1.442695
    %v1803 = vpow.pop %v1802
    %v1804 = vmul.f32 %v1461, 1.442695
    %v1805 = vpow.pop %v1804
    %v1806 = vmul.f32 %v1462, 1.442695
    %v1807 = vpow.pop %v1806
    %v1808 = vmul.f32 %v1463, 1.442695
    %v1809 = vpow.pop %v1808
    %v1810 = vmul.f32 %v1464, 1.442695
    %v1811 = vpow.pop %v1810
    %v1812 = vmul.f32 %v1465, 1.442695
    %v1813 = vpow.pop %v1812
    %v1814 = vmul.f32 %v1466, 1.442695
    %v1815 = vpow.pop %v1814
    %v1816 = vmul.f32 %v1467, 1.442695
    %v1817 = vpow.pop %v1816
    %v1818 = vmul.f32 %v1468, 1.442695
    %v1819 = vpow.pop %v1818
    %v1820 = vmul.f32 %v1469, 1.442695
    %v1821 = vpow.pop %v1820
    %v1822 = vmul.f32 %v1470, 1.442695
    %v1823 = vpow.pop %v1822
    %v1824 = vmul.f32 %v1471, 1.442695
    %v1825 = vpow.pop %v1824
    %v1826 = vmul.f32 %v1472, 1.442695
    %v1827 = vpow.pop %v1826
    %v1828 = vmul.f32 %v1473, 1.442695
    %v1829 = vpow.pop %v1828
    %v1830 = vmul.f32 %v1474, 1.442695
    %v1831 = vpow.pop %v1830
    %v1832 = vmul.f32 %v1475, 1.442695
    %v1833 = vpow.pop %v1832
    %v1834 = vmul.f32 %v1476, 1.442695
    %v1835 = vpow.pop %v1834
    %v1836 = vmul.f32 %v1477, 1.442695
    %v1837 = vpow.pop %v1836
    %v1838 = vmul.f32 %v1478, 1.442695
    %v1839 = vpow.pop %v1838
    %v1840 = vmul.f32 %v1479, 1.442695
    %v1841 = vpow.pop %v1840
    %v1842 = vmul.f32 %v1480, 1.442695
    %v1843 = vpow.pop %v1842
    %v1844 = vmul.f32 %v1481, 1.442695
    %v1845 = vpow.pop %v1844
    %v1846 = vmul.f32 %v1482, 1.442695
    %v1847 = vpow.pop %v1846
    %v1848 = vmul.f32 %v1483, 1.442695
    %v1849 = vpow.pop %v1848
    %v1850 = vmul.f32 %v1484, 1.442695
    %v1851 = vpow.pop %v1850
    %v1852 = vmul.f32 %v1485, 1.442695
    %v1853 = vpow.pop %v1852
    %v1854 = vmul.f32 %v1486, 1.442695
    %v1855 = vpow.pop %v1854
    %v1856 = vmul.f32 %v1487, 1.442695
    %v1857 = vpow.pop %v1856
    %v1858 = vmul.f32 %v1488, 1.442695
    %v1859 = vpow.pop %v1858
    %v1860 = vmul.f32 %v1489, 1.442695
    %v1861 = vpow.pop %v1860
    %v1862 = vmul.f32 %v1490, 1.442695
    %v1863 = vpow.pop %v1862
    %v1864 = vmul.f32 %v1491, 1.442695
    %v1865 = vpow.pop %v1864
    %v1866 = vmul.f32 %v1492, 1.442695
    %v1867 = vpow.pop %v1866
    %v1868 = vmul.f32 %v1493, 1.442695
    %v1869 = vpow.pop %v1868
    %v1870 = vmul.f32 %v1494, 1.442695
    %v1871 = vpow.pop %v1870
    %v1872 = vmul.f32 %v1495, 1.442695
    %v1873 = vpow.pop %v1872
    %v1874 = vmul.f32 %v1496, 1.442695
    %v1875 = vpow.pop %v1874
    %v1876 = vmul.f32 %v1497, 1.442695
    %v1877 = vpow.pop %v1876
    %v1878 = vmul.f32 %v1498, 1.442695
    %v1879 = vpow.pop %v1878
    %v1880 = vmul.f32 %v1499, 1.442695
    %v1881 = vpow.pop %v1880
    %v1882 = vmul.f32 %v1500, 1.442695
    %v1883 = vpow.pop %v1882
    %v1884 = vmul.f32 %v1501, 1.442695
    %v1885 = vpow.pop %v1884
    %v1886 = vmul.f32 %v1502, 1.442695
    %v1887 = vpow.pop %v1886
    %v1888 = vmul.f32 %v1503, 1.442695
    %v1889 = vpow.pop %v1888
    %v1890 = vmul.f32 %v1504, 1.442695
    %v1891 = vpow.pop %v1890
    %v1892 = vmul.f32 %v1505, 1.442695
    %v1893 = vpow.pop %v1892
    %v1894 = vmul.f32 %v1506, 1.442695
    %v1895 = vpow.pop %v1894
    %v1896 = vmul.f32 %v1507, 1.442695
    %v1897 = vpow.pop %v1896
    %v1898 = vmul.f32 %v1508, 1.442695
    %v1899 = vpow.pop %v1898
    %v1900 = vmul.f32 %v1509, 1.442695
    %v1901 = vpow.pop %v1900
    %v1902 = vmul.f32 %v1510, 1.442695
    %v1903 = vpow.pop %v1902
    %v1904 = vmul.f32 %v1511, 1.442695
    %v1905 = vpow.pop %v1904
    %v1906 = vmul.f32 %v1512, 1.442695
    %v1907 = vpow.pop %v1906
    %v1908 = vmul.f32 %v1513, 1.442695
    %v1909 = vpow.pop %v1908
    %v1910 = vmul.f32 %v1514, 1.442695
    %v1911 = vpow.pop %v1910
    %v1912 = vmul.f32 %v1515, 1.442695
    %v1913 = vpow.pop %v1912
    %v1914 = vmul.f32 %v1516, 1.442695
    %v1915 = vpow.pop %v1914
    %v1916 = vmul.f32 %v1517, 1.442695
    %v1917 = vpow.pop %v1916
    %v1918 = vmul.f32 %v1518, 1.442695
    %v1919 = vpow.pop %v1918
    %v1920 = vmul.f32 %v1519, 1.442695
    %v1921 = vpow.pop %v1920
    %v1922 = vmul.f32 %v1520, 1.442695
    %v1923 = vpow.pop %v1922
    %v1924 = vmul.f32 %v1521, 1.442695
    %v1925 = vpow.pop %v1924
    %v1926 = vmul.f32 %v1522, 1.442695
    %v1927 = vpow.pop %v1926
    %v1928 = vmul.f32 %v1523, 1.442695
    %v1929 = vpow.pop %v1928
    %v1930 = vmul.f32 %v1524, 1.442695
    %v1931 = vpow.pop %v1930
    %v1932 = vmul.f32 %v1525, 1.442695
    %v1933 = vpow.pop %v1932
    %v1934 = vmul.f32 %v1526, 1.442695
    %v1935 = vpow.pop %v1934
    %v1936 = vmul.f32 %v1527, 1.442695
    %v1937 = vpow.pop %v1936
    %v1938 = vmul.f32 %v1528, 1.442695
    %v1939 = vpow.pop %v1938
    %v1940 = vmul.f32 %v1529, 1.442695
    %v1941 = vpow.pop %v1940
    %v1942 = vmul.f32 %v1530, 1.442695
    %v1943 = vpow.pop %v1942
    %v1944 = vmul.f32 %v1531, 1.442695
    %v1945 = vpow.pop %v1944
    %v1946 = vmul.f32 %v1532, 1.442695
    %v1947 = vpow.pop %v1946
    %v1948 = vmul.f32 %v1533, 1.442695
    %v1949 = vpow.pop %v1948
    %v1950 = vmul.f32 %v1534, 1.442695
    %v1951 = vpow.pop %v1950
    %v1952 = vmul.f32 %v1535, 1.442695
    %v1953 = vpow.pop %v1952
    %v1954 = vmul.f32 %v1536, 1.442695
    %v1955 = vpow.pop %v1954
    %v1956 = vmul.f32 %v1537, 1.442695
    %v1957 = vpow.pop %v1956
    %v1958 = vmul.f32 %v1538, 1.442695
    %v1959 = vpow.pop %v1958
    %v1960 = vmul.f32 %v1539, 1.442695
    %v1961 = vpow.pop %v1960
    %v1962 = vmul.f32 %v1540, 1.442695
    %v1963 = vpow.pop %v1962
    %v1964 = vmul.f32 %v1541, 1.442695
    %v1965 = vpow.pop %v1964
    %v1966 = vmul.f32 %v1542, 1.442695
    %v1967 = vpow.pop %v1966
    %v1968 = vmul.f32 %v1543, 1.442695
    %v1969 = vpow.pop %v1968
    %v1970 = vmul.f32 %v1544, 1.442695
    %v1971 = vpow.pop %v1970
    %v1972 = vmul.f32 %v1545, 1.442695
    %v1973 = vpow.pop %v1972
    %v1974 = vmul.f32 %v1546, 1.442695
    %v1975 = vpow.pop %v1974
    %v1976 = vmul.f32 %v1547, 1.442695
    %v1977 = vpow.pop %v1976
    %v1978 = vmul.f32 %v1548, 1.442695
    %v1979 = vpow.pop %v1978
    %v1980 = vmul.f32 %v1549, 1.442695
    %v1981 = vpow.pop %v1980
    %v1982 = vmul.f32 %v1550, 1.442695
    %v1983 = vpow.pop %v1982
    %v1984 = vmul.f32 %v1551, 1.442695
    %v1985 = vpow.pop %v1984
    %v1986 = vmul.f32 %v1552, 1.442695
    %v1987 = vpow.pop %v1986
    %v1988 = vmul.f32 %v1553, 1.442695
    %v1989 = vpow.pop %v1988
    %v1990 = vmul.f32 %v1554, 1.442695
    %v1991 = vpow.pop %v1990
    %v1992 = vmul.f32 %v1555, 1.442695
    %v1993 = vpow.pop %v1992
    %v1994 = vmul.f32 %v1556, 1.442695
    %v1995 = vpow.pop %v1994
    %v1996 = vmul.f32 %v1557, 1.442695
    %v1997 = vpow.pop %v1996
    %v1998 = vmul.f32 %v1558, 1.442695
    %v1999 = vpow.pop %v1998
    %v2000 = vmul.f32 %v1559, 1.442695
    %v2001 = vpow.pop %v2000
    %v2002 = vmul.f32 %v1560, 1.442695
    %v2003 = vpow.pop %v2002
    %v2004 = vmul.f32 %v1561, 1.442695
    %v2005 = vpow.pop %v2004
    %v2006 = vmul.f32 %v1562, 1.442695
    %v2007 = vpow.pop %v2006
    %v2008 = vmul.f32 %v1563, 1.442695
    %v2009 = vpow.pop %v2008
    %v2010 = vmul.f32 %v1564, 1.442695
    %v2011 = vpow.pop %v2010
    %v2012 = vmul.f32 %v1565, 1.442695
    %v2013 = vpow.pop %v2012
    %v2014 = vmul.f32 %v1566, 1.442695
    %v2015 = vpow.pop %v2014
    %v2016 = vmul.f32 %v1567, 1.442695
    %v2017 = vpow.pop %v2016
    %v2018 = vmul.f32 %v1568, 1.442695
    %v2019 = vpow.pop %v2018
    %v2020 = vmul.f32 %v1569, 1.442695
    %v2021 = vpow.pop %v2020
    %v2022 = vmul.f32 %v1570, 1.442695
    %v2023 = vpow.pop %v2022
    %v2024 = vmul.f32 %v1571, 1.442695
    %v2025 = vpow.pop %v2024
    %v2026 = vmul.f32 %v1572, 1.442695
    %v2027 = vpow.pop %v2026
    %v2028 = vmul.f32 %v1573, 1.442695
    %v2029 = vpow.pop %v2028
    %v2030 = vmul.f32 %v1574, 1.442695
    %v2031 = vpow.pop %v2030
    %v2032 = vmul.f32 %v1575, 1.442695
    %v2033 = vpow.pop %v2032
    %v2034 = vmul.f32 %v1576, 1.442695
    %v2035 = vpow.pop %v2034
    %v2036 = vmul.f32 %v1577, 1.442695
    %v2037 = vpow.pop %v2036
    %v2038 = vmul.f32 %v1578, 1.442695
    %v2039 = vpow.pop %v2038
    %v2040 = vmul.f32 %v1579, 1.442695
    %v2041 = vpow.pop %v2040
    %v2042 = vmul.f32 %v1580, 1.442695
    %v2043 = vpow.pop %v2042
    %v2044 = vmul.f32 %v1581, 1.442695
    %v2045 = vpow.pop %v2044
    %v2046 = vmul.f32 %v1582, 1.442695
    %v2047 = vpow.pop %v2046
    %v2048 = vmul.f32 %v1583, 1.442695
    %v2049 = vpow.pop %v2048
    %v2050 = vmul.f32 %v1584, 1.442695
    %v2051 = vpow.pop %v2050
    %v2052 = vmul.f32 %v1585, 1.442695
    %v2053 = vpow.pop %v2052
    %v2054 = vmul.f32 %v1586, 1.442695
    %v2055 = vpow.pop %v2054
    %v2056 = vmul.f32 %v1587, 1.442695
    %v2057 = vpow.pop %v2056
    %v2058 = vmul.f32 %v1588, 1.442695
    %v2059 = vpow.pop %v2058
    %v2060 = vmul.f32 %v1589, 1.442695
    %v2061 = vpow.pop %v2060
    %v2062 = vmul.f32 %v1590, 1.442695
    %v2063 = vpow.pop %v2062
    %v2064 = vmul.f32 %v1591, 1.442695
    %v2065 = vpow.pop %v2064
    %v2066 = vmul.f32 %v1592, 1.442695
    %v2067 = vpow.pop %v2066
    %v2068 = vmul.f32 %v1593, 1.442695
    %v2069 = vpow.pop %v2068
    %v2070 = vmul.f32 %v1594, 1.442695
    %v2071 = vpow.pop %v2070
    %v2072 = vmul.f32 %v1595, 1.442695
    %v2073 = vpow.pop %v2072
    %v2074 = vmul.f32 %v1596, 1.442695
    %v2075 = vpow.pop %v2074
    %v2076 = vmul.f32 %v1597, 1.442695
    %v2077 = vpow.pop %v2076
    %v2078 = vmul.f32 %v1598, 1.442695
    %v2079 = vpow.pop %v2078
    %v2080 = vmul.f32 %v1599, 1.442695
    %v2081 = vpow.pop %v2080
    %v2082 = vmul.f32 %v1600, 1.442695
    %v2083 = vpow.pop %v2082
    %v2084 = vmul.f32 %v1601, 1.442695
    %v2085 = vpow.pop %v2084
    %v2086 = vmul.f32 %v1602, 1.442695
    %v2087 = vpow.pop %v2086
    %v2088 = vmul.f32 %v1603, 1.442695
    %v2089 = vpow.pop %v2088
    %v2090 = vmul.f32 %v1604, 1.442695
    %v2091 = vpow.pop %v2090
    %v2092 = vmul.f32 %v1605, 1.442695
    %v2093 = vpow.pop %v2092
    %v2094 = vmul.f32 %v1606, 1.442695
    %v2095 = vpow.pop %v2094
    %v2096 = vmul.f32 %v1607, 1.442695
    %v2097 = vpow.pop %v2096
    %v2098 = vmul.f32 %v1608, 1.442695
    %v2099 = vpow.pop %v2098
    %v2100 = vmul.f32 %v1609, 1.442695
    %v2101 = vpow.pop %v2100
    %v2102 = vmul.f32 %v1610, 1.442695
    %v2103 = vpow.pop %v2102
    %v2104 = vmul.f32 %v1611, 1.442695
    %v2105 = vpow.pop %v2104
    %v2106 = vmul.f32 %v1612, 1.442695
    %v2107 = vpow.pop %v2106
    %v2108 = vmul.f32 %v1613, 1.442695
    %v2109 = vpow.pop %v2108
    %v2110 = vmul.f32 %v1614, 1.442695
    %v2111 = vpow.pop %v2110
    %v2112 = vmul.f32 %v1615, 1.442695
    %v2113 = vpow.pop %v2112
    %v2114 = vmul.f32 %v1616, 1.442695
    %v2115 = vpow.pop %v2114
    %v2116 = vmul.f32 %v1617, 1.442695
    %v2117 = vpow.pop %v2116
    %v2118 = vmul.f32 %v1618, 1.442695
    %v2119 = vpow.pop %v2118
    %v2120 = vmul.f32 %v1619, 1.442695
    %v2121 = vpow.pop %v2120
    %v2122 = vmul.f32 %v1620, 1.442695
    %v2123 = vpow.pop %v2122
    %v2124 = vmul.f32 %v1621, 1.442695
    %v2125 = vpow.pop %v2124
    %v2126 = vmul.f32 %v1622, 1.442695
    %v2127 = vpow.pop %v2126
    %v2128 = vmul.f32 %v1623, 1.442695
    %v2129 = vpow.pop %v2128
    %v2130 = vmul.f32 %v1624, 1.442695
    %v2131 = vpow.pop %v2130
    %v2132 = vmul.f32 %v1625, 1.442695
    %v2133 = vpow.pop %v2132
    %v2134 = vmul.f32 %v1626, 1.442695
    %v2135 = vpow.pop %v2134
    %v2136 = vmul.f32 %v1627, 1.442695
    %v2137 = vpow.pop %v2136
    %v2138 = vmul.f32 %v1628, 1.442695
    %v2139 = vpow.pop %v2138
    %v2140 = vmul.f32 %v1629, 1.442695
    %v2141 = vpow.pop %v2140
    %v2142 = vadd.f32 %v1631, %v1635
    %v2143 = vadd.f32 %v2142, %v1639
    %v2144 = vadd.f32 %v2143, %v1643
    %v2145 = vadd.f32 %v2144, %v1647
    %v2146 = vadd.f32 %v2145, %v1651
    %v2147 = vadd.f32 %v2146, %v1655
    %v2148 = vadd.f32 %v2147, %v1659
    %v2149 = vadd.f32 %v2148, %v1663
    %v2150 = vadd.f32 %v2149, %v1667
    %v2151 = vadd.f32 %v2150, %v1671
    %v2152 = vadd.f32 %v2151, %v1675
    %v2153 = vadd.f32 %v2152, %v1679
    %v2154 = vadd.f32 %v2153, %v1683
    %v2155 = vadd.f32 %v2154, %v1687
    %v2156 = vadd.f32 %v2155, %v1691
    %v2157 = vrot.slane %v2156, 4
    %v2158 = vadd.f32 %v2156, %v2157
    %v2159 = vrot.slane %v2158, 2
    %v2160 = vadd.f32 %v2158, %v2159
    %v2161 = vrot.slane %v2160, 1
    %v2162 = vadd.f32 %v2160, %v2161
    %v2163 = vadd.f32 %v1633, %v1637
    %v2164 = vadd.f32 %v2163, %v1641
    %v2165 = vadd.f32 %v2164, %v1645
    %v2166 = vadd.f32 %v2165, %v1649
    %v2167 = vadd.f32 %v2166, %v1653
    %v2168 = vadd.f32 %v2167, %v1657
    %v2169 = vadd.f32 %v2168, %v1661
    %v2170 = vadd.f32 %v2169, %v1665
    %v2171 = vadd.f32 %v2170, %v1669
    %v2172 = vadd.f32 %v2171, %v1673
    %v2173 = vadd.f32 %v2172, %v1677
    %v2174 = vadd.f32 %v2173, %v1681
    %v2175 = vadd.f32 %v2174, %v1685
    %v2176 = vadd.f32 %v2175, %v1689
    %v2177 = vadd.f32 %v2176, %v1693
    %v2178 = vrot.slane %v2177, 4
    %v2179 = vadd.f32 %v2177, %v2178
    %v2180 = vrot.slane %v2179, 2
    %v2181 = vadd.f32 %v2179, %v2180
    %v2182 = vrot.slane %v2181, 1
    %v2183 = vadd.f32 %v2181, %v2182
    %v2184 = vadd.f32 %v1695, %v1699
    %v2185 = vadd.f32 %v2184, %v1703
    %v2186 = vadd.f32 %v2185, %v1707
    %v2187 = vadd.f32 %v2186, %v1711
    %v2188 = vadd.f32 %v2187, %v1715
    %v2189 = vadd.f32 %v2188, %v1719
    %v2190 = vadd.f32 %v2189, %v1723
    %v2191 = vadd.f32 %v2190, %v1727
    %v2192 = vadd.f32 %v2191, %v1731
    %v2193 = vadd.f32 %v2192, %v1735
    %v2194 = vadd.f32 %v2193, %v1739
    %v2195 = vadd.f32 %v2194, %v1743
    %v2196 = vadd.f32 %v2195, %v1747
    %v2197 = vadd.f32 %v2196, %v1751
    %v2198 = vadd.f32 %v2197, %v1755
    %v2199 = vrot.slane %v2198, 4
    %v2200 = vadd.f32 %v2198, %v2199
    %v2201 = vrot.slane %v2200, 2
    %v2202 = vadd.f32 %v2200, %v2201
    %v2203 = vrot.slane %v2202, 1
    %v2204 = vadd.f32 %v2202, %v2203
    %v2205 = vadd.f32 %v1697, %v1701
    %v2206 = vadd.f32 %v2205, %v1705
    %v2207 = vadd.f32 %v2206, %v1709
    %v2208 = vadd.f32 %v2207, %v1713
    %v2209 = vadd.f32 %v2208, %v1717
    %v2210 = vadd.f32 %v2209, %v1721
    %v2211 = vadd.f32 %v2210, %v1725
    %v2212 = vadd.f32 %v2211, %v1729
    %v2213 = vadd.f32 %v2212, %v1733
    %v2214 = vadd.f32 %v2213, %v1737
    %v2215 = vadd.f32 %v2214, %v1741
    %v2216 = vadd.f32 %v2215, %v1745
    %v2217 = vadd.f32 %v2216, %v1749
    %v2218 = vadd.f32 %v2217, %v1753
    %v2219 = vadd.f32 %v2218, %v1757
    %v2220 = vrot.slane %v2219, 4
    %v2221 = vadd.f32 %v2219, %v2220
    %v2222 = vrot.slane %v2221, 2
    %v2223 = vadd.f32 %v2221, %v2222
    %v2224 = vrot.slane %v2223, 1
    %v2225 = vadd.f32 %v2223, %v2224
    %v2226 = vadd.f32 %v1759, %v1763
    %v2227 = vadd.f32 %v2226, %v1767
    %v2228 = vadd.f32 %v2227, %v1771
    %v2229 = vadd.f32 %v2228, %v1775
    %v2230 = vadd.f32 %v2229, %v1779
    %v2231 = vadd.f32 %v2230, %v1783
    %v2232 = vadd.f32 %v2231, %v1787
    %v2233 = vadd.f32 %v2232, %v1791
    %v2234 = vadd.f32 %v2233, %v1795
    %v2235 = vadd.f32 %v2234, %v1799
    %v2236 = vadd.f32 %v2235, %v1803
    %v2237 = vadd.f32 %v2236, %v1807
    %v2238 = vadd.f32 %v2237, %v1811
    %v2239 = vadd.f32 %v2238, %v1815
    %v2240 = vadd.f32 %v2239, %v1819
    %v2241 = vrot.slane %v2240, 4
    %v2242 = vadd.f32 %v2240, %v2241
    %v2243 = vrot.slane %v2242, 2
    %v2244 = vadd.f32 %v2242, %v2243
    %v2245 = vrot.slane %v2244, 1
    %v2246 = vadd.f32 %v2244, %v2245
    %v2247 = vadd.f32 %v1761, %v1765
    %v2248 = vadd.f32 %v2247, %v1769
    %v2249 = vadd.f32 %v2248, %v1773
    %v2250 = vadd.f32 %v2249, %v1777
    %v2251 = vadd.f32 %v2250, %v1781
    %v2252 = vadd.f32 %v2251, %v1785
    %v2253 = vadd.f32 %v2252, %v1789
    %v2254 = vadd.f32 %v2253, %v1793
    %v2255 = vadd.f32 %v2254, %v1797
    %v2256 = vadd.f32 %v2255, %v1801
    %v2257 = vadd.f32 %v2256, %v1805
    %v2258 = vadd.f32 %v2257, %v1809
    %v2259 = vadd.f32 %v2258, %v1813
    %v2260 = vadd.f32 %v2259, %v1817
    %v2261 = vadd.f32 %v2260, %v1821
    %v2262 = vrot.slane %v2261, 4
    %v2263 = vadd.f32 %v2261, %v2262
    %v2264 = vrot.slane %v2263, 2
    %v2265 = vadd.f32 %v2263, %v2264
    %v2266 = vrot.slane %v2265, 1
    %v2267 = vadd.f32 %v2265, %v2266
    %v2268 = vadd.f32 %v1823, %v1827
    %v2269 = vadd.f32 %v2268, %v1831
    %v2270 = vadd.f32 %v2269, %v1835
    %v2271 = vadd.f32 %v2270, %v1839
    %v2272 = vadd.f32 %v2271, %v1843
    %v2273 = vadd.f32 %v2272, %v1847
    %v2274 = vadd.f32 %v2273, %v1851
    %v2275 = vadd.f32 %v2274, %v1855
    %v2276 = vadd.f32 %v2275, %v1859
    %v2277 = vadd.f32 %v2276, %v1863
    %v2278 = vadd.f32 %v2277, %v1867
    %v2279 = vadd.f32 %v2278, %v1871
    %v2280 = vadd.f32 %v2279, %v1875
    %v2281 = vadd.f32 %v2280, %v1879
    %v2282 = vadd.f32 %v2281, %v1883
    %v2283 = vrot.slane %v2282, 4
    %v2284 = vadd.f32 %v2282, %v2283
    %v2285 = vrot.slane %v2284, 2
    %v2286 = vadd.f32 %v2284, %v2285
    %v2287 = vrot.slane %v2286, 1
    %v2288 = vadd.f32 %v2286, %v2287
    %v2289 = vadd.f32 %v1825, %v1829
    %v2290 = vadd.f32 %v2289, %v1833
    %v2291 = vadd.f32 %v2290, %v1837
    %v2292 = vadd.f32 %v2291, %v1841
    %v2293 = vadd.f32 %v2292, %v1845
    %v2294 = vadd.f32 %v2293, %v1849
    %v2295 = vadd.f32 %v2294, %v1853
    %v2296 = vadd.f32 %v2295, %v1857
    %v2297 = vadd.f32 %v2296, %v1861
    %v2298 = vadd.f32 %v2297, %v1865
    %v2299 = vadd.f32 %v2298, %v1869
    %v2300 = vadd.f32 %v2299, %v1873
    %v2301 = vadd.f32 %v2300, %v1877
    %v2302 = vadd.f32 %v2301, %v1881
    %v2303 = vadd.f32 %v2302, %v1885
    %v2304 = vrot.slane %v2303, 4
    %v2305 = vadd.f32 %v2303, %v2304
    %v2306 = vrot.slane %v2305, 2
    %v2307 = vadd.f32 %v2305, %v2306
    %v2308 = vrot.slane %v2307, 1
    %v2309 = vadd.f32 %v2307, %v2308
    %v2310 = vadd.f32 %v1887, %v1891
    %v2311 = vadd.f32 %v2310, %v1895
    %v2312 = vadd.f32 %v2311, %v1899
    %v2313 = vadd.f32 %v2312, %v1903
    %v2314 = vadd.f32 %v2313, %v1907
    %v2315 = vadd.f32 %v2314, %v1911
    %v2316 = vadd.f32 %v2315, %v1915
    %v2317 = vadd.f32 %v2316, %v1919
    %v2318 = vadd.f32 %v2317, %v1923
    %v2319 = vadd.f32 %v2318, %v1927
    %v2320 = vadd.f32 %v2319, %v1931
    %v2321 = vadd.f32 %v2320, %v1935
    %v2322 = vadd.f32 %v2321, %v1939
    %v2323 = vadd.f32 %v2322, %v1943
    %v2324 = vadd.f32 %v2323, %v1947
    %v2325 = vrot.slane %v2324, 4
    %v2326 = vadd.f32 %v2324, %v2325
    %v2327 = vrot.slane %v2326, 2
    %v2328 = vadd.f32 %v2326, %v2327
    %v2329 = vrot.slane %v2328, 1
    %v2330 = vadd.f32 %v2328, %v2329
    %v2331 = vadd.f32 %v1889, %v1893
    %v2332 = vadd.f32 %v2331, %v1897
    %v2333 = vadd.f32 %v2332, %v1901
    %v2334 = vadd.f32 %v2333, %v1905
    %v2335 = vadd.f32 %v2334, %v1909
    %v2336 = vadd.f32 %v2335, %v1913
    %v2337 = vadd.f32 %v2336, %v1917
    %v2338 = vadd.f32 %v2337, %v1921
    %v2339 = vadd.f32 %v2338, %v1925
    %v2340 = vadd.f32 %v2339, %v1929
    %v2341 = vadd.f32 %v2340, %v1933
    %v2342 = vadd.f32 %v2341, %v1937
    %v2343 = vadd.f32 %v2342, %v1941
    %v2344 = vadd.f32 %v2343, %v1945
    %v2345 = vadd.f32 %v2344, %v1949
    %v2346 = vrot.slane %v2345, 4
    %v2347 = vadd.f32 %v2345, %v2346
    %v2348 = vrot.slane %v2347, 2
    %v2349 = vadd.f32 %v2347, %v2348
    %v2350 = vrot.slane %v2349, 1
    %v2351 = vadd.f32 %v2349, %v2350
    %v2352 = vadd.f32 %v1951, %v1955
    %v2353 = vadd.f32 %v2352, %v1959
    %v2354 = vadd.f32 %v2353, %v1963
    %v2355 = vadd.f32 %v2354, %v1967
    %v2356 = vadd.f32 %v2355, %v1971
    %v2357 = vadd.f32 %v2356, %v1975
    %v2358 = vadd.f32 %v2357, %v1979
    %v2359 = vadd.f32 %v2358, %v1983
    %v2360 = vadd.f32 %v2359, %v1987
    %v2361 = vadd.f32 %v2360, %v1991
    %v2362 = vadd.f32 %v2361, %v1995
    %v2363 = vadd.f32 %v2362, %v1999
    %v2364 = vadd.f32 %v2363, %v2003
    %v2365 = vadd.f32 %v2364, %v2007
    %v2366 = vadd.f32 %v2365, %v2011
    %v2367 = vrot.slane %v2366, 4
    %v2368 = vadd.f32 %v2366, %v2367
    %v2369 = vrot.slane %v2368, 2
    %v2370 = vadd.f32 %v2368, %v2369
    %v2371 = vrot.slane %v2370, 1
    %v2372 = vadd.f32 %v2370, %v2371
    %v2373 = vadd.f32 %v1953, %v1957
    %v2374 = vadd.f32 %v2373, %v1961
    %v2375 = vadd.f32 %v2374, %v1965
    %v2376 = vadd.f32 %v2375, %v1969
    %v2377 = vadd.f32 %v2376, %v1973
    %v2378 = vadd.f32 %v2377, %v1977
    %v2379 = vadd.f32 %v2378, %v1981
    %v2380 = vadd.f32 %v2379, %v1985
    %v2381 = vadd.f32 %v2380, %v1989
    %v2382 = vadd.f32 %v2381, %v1993
    %v2383 = vadd.f32 %v2382, %v1997
    %v2384 = vadd.f32 %v2383, %v2001
    %v2385 = vadd.f32 %v2384, %v2005
    %v2386 = vadd.f32 %v2385, %v2009
    %v2387 = vadd.f32 %v2386, %v2013
    %v2388 = vrot.slane %v2387, 4
    %v2389 = vadd.f32 %v2387, %v2388
    %v2390 = vrot.slane %v2389, 2
    %v2391 = vadd.f32 %v2389, %v2390
    %v2392 = vrot.slane %v2391, 1
    %v2393 = vadd.f32 %v2391, %v2392
    %v2394 = vadd.f32 %v2015, %v2019
    %v2395 = vadd.f32 %v2394, %v2023
    %v2396 = vadd.f32 %v2395, %v2027
    %v2397 = vadd.f32 %v2396, %v2031
    %v2398 = vadd.f32 %v2397, %v2035
    %v2399 = vadd.f32 %v2398, %v2039
    %v2400 = vadd.f32 %v2399, %v2043
    %v2401 = vadd.f32 %v2400, %v2047
    %v2402 = vadd.f32 %v2401, %v2051
    %v2403 = vadd.f32 %v2402, %v2055
    %v2404 = vadd.f32 %v2403, %v2059
    %v2405 = vadd.f32 %v2404, %v2063
    %v2406 = vadd.f32 %v2405, %v2067
    %v2407 = vadd.f32 %v2406, %v2071
    %v2408 = vadd.f32 %v2407, %v2075
    %v2409 = vrot.slane %v2408, 4
    %v2410 = vadd.f32 %v2408, %v2409
    %v2411 = vrot.slane %v2410, 2
    %v2412 = vadd.f32 %v2410, %v2411
    %v2413 = vrot.slane %v2412, 1
    %v2414 = vadd.f32 %v2412, %v2413
    %v2415 = vadd.f32 %v2017, %v2021
    %v2416 = vadd.f32 %v2415, %v2025
    %v2417 = vadd.f32 %v2416, %v2029
    %v2418 = vadd.f32 %v2417, %v2033
    %v2419 = vadd.f32 %v2418, %v2037
    %v2420 = vadd.f32 %v2419, %v2041
    %v2421 = vadd.f32 %v2420, %v2045
    %v2422 = vadd.f32 %v2421, %v2049
    %v2423 = vadd.f32 %v2422, %v2053
    %v2424 = vadd.f32 %v2423, %v2057
    %v2425 = vadd.f32 %v2424, %v2061
    %v2426 = vadd.f32 %v2425, %v2065
    %v2427 = vadd.f32 %v2426, %v2069
    %v2428 = vadd.f32 %v2427, %v2073
    %v2429 = vadd.f32 %v2428, %v2077
    %v2430 = vrot.slane %v2429, 4
    %v2431 = vadd.f32 %v2429, %v2430
    %v2432 = vrot.slane %v2431, 2
    %v2433 = vadd.f32 %v2431, %v2432
    %v2434 = vrot.slane %v2433, 1
    %v2435 = vadd.f32 %v2433, %v2434
    %v2436 = vadd.f32 %v2079, %v2083
    %v2437 = vadd.f32 %v2436, %v2087
    %v2438 = vadd.f32 %v2437, %v2091
    %v2439 = vadd.f32 %v2438, %v2095
    %v2440 = vadd.f32 %v2439, %v2099
    %v2441 = vadd.f32 %v2440, %v2103
    %v2442 = vadd.f32 %v2441, %v2107
    %v2443 = vadd.f32 %v2442, %v2111
    %v2444 = vadd.f32 %v2443, %v2115
    %v2445 = vadd.f32 %v2444, %v2119
    %v2446 = vadd.f32 %v2445, %v2123
    %v2447 = vadd.f32 %v2446, %v2127
    %v2448 = vadd.f32 %v2447, %v2131
    %v2449 = vadd.f32 %v2448, %v2135
    %v2450 = vadd.f32 %v2449, %v2139
    %v2451 = vrot.slane %v2450, 4
    %v2452 = vadd.f32 %v2450, %v2451
    %v2453 = vrot.slane %v2452, 2
    %v2454 = vadd.f32 %v2452, %v2453
    %v2455 = vrot.slane %v2454, 1
    %v2456 = vadd.f32 %v2454, %v2455
    %v2457 = vadd.f32 %v2081, %v2085
    %v2458 = vadd.f32 %v2457, %v2089
    %v2459 = vadd.f32 %v2458, %v2093
    %v2460 = vadd.f32 %v2459, %v2097
    %v2461 = vadd.f32 %v2460, %v2101
    %v2462 = vadd.f32 %v2461, %v2105
    %v2463 = vadd.f32 %v2462, %v2109
    %v2464 = vadd.f32 %v2463, %v2113
    %v2465 = vadd.f32 %v2464, %v2117
    %v2466 = vadd.f32 %v2465, %v2121
    %v2467 = vadd.f32 %v2466, %v2125
    %v2468 = vadd.f32 %v2467, %v2129
    %v2469 = vadd.f32 %v2468, %v2133
    %v2470 = vadd.f32 %v2469, %v2137
    %v2471 = vadd.f32 %v2470, %v2141
    %v2472 = vrot.slane %v2471, 4
    %v2473 = vadd.f32 %v2471, %v2472
    %v2474 = vrot.slane %v2473, 2
    %v2475 = vadd.f32 %v2473, %v2474
    %v2476 = vrot.slane %v2475, 1
    %v2477 = vadd.f32 %v2475, %v2476
    %v2478 = vadd.f32 %v2162, 0.0
    %v2479 = vadd.f32 %v2183, 0.0
    %v2480 = vadd.f32 %v2204, 0.0
    %v2481 = vadd.f32 %v2225, 0.0
    %v2482 = vadd.f32 %v2246, 0.0
    %v2483 = vadd.f32 %v2267, 0.0
    %v2484 = vadd.f32 %v2288, 0.0
    %v2485 = vadd.f32 %v2309, 0.0
    %v2486 = vadd.f32 %v2330, 0.0
    %v2487 = vadd.f32 %v2351, 0.0
    %v2488 = vadd.f32 %v2372, 0.0
    %v2489 = vadd.f32 %v2393, 0.0
    %v2490 = vadd.f32 %v2414, 0.0
    %v2491 = vadd.f32 %v2435, 0.0
    %v2492 = vadd.f32 %v2456, 0.0
    %v2493 = vadd.f32 %v2477, 0.0
    %v2494 = vperm.slane %v85, 0
    %v2495 = vlaneseq
    %v2496 = vshrl.u32 %v2495, 7
    %2498 = vset.pattern.permute.xlu0 %v2496
    %2499 = vperm.xlu0 %2498, %v2494
    %v2500 = vpop.permute.xlu0 %2499
    %v2501 = vlaneseq
    %v2502 = vshrl.u32 %v2501, 7
    %v2503 = vadd.s32 %v2502, 8
    %2504 = vset.pattern.permute.xlu0 %v2503
    %2505 = vperm.xlu0 %2504, %v2494
    %v2506 = vpop.permute.xlu0 %2505
    %v2507 = vlaneseq
    %v2508 = vshrl.u32 %v2507, 7
    %v2509 = vadd.s32 %v2508, 16
    %2510 = vset.pattern.permute.xlu0 %v2509
    %2511 = vperm.xlu0 %2510, %v2494
    %v2512 = vpop.permute.xlu0 %2511
    %v2513 = vlaneseq
    %v2514 = vshrl.u32 %v2513, 7
    %v2515 = vadd.s32 %v2514, 24
    %2516 = vset.pattern.permute.xlu0 %v2515
    %2517 = vperm.xlu0 %2516, %v2494
    %v2518 = vpop.permute.xlu0 %2517
    %v2519 = vlaneseq
    %v2520 = vshrl.u32 %v2519, 7
    %v2521 = vadd.s32 %v2520, 32
    %2522 = vset.pattern.permute.xlu0 %v2521
    %2523 = vperm.xlu0 %2522, %v2494
    %v2524 = vpop.permute.xlu0 %2523
    %v2525 = vlaneseq
    %v2526 = vshrl.u32 %v2525, 7
    %v2527 = vadd.s32 %v2526, 40
    %2528 = vset.pattern.permute.xlu0 %v2527
    %2529 = vperm.xlu0 %2528, %v2494
    %v2530 = vpop.permute.xlu0 %2529
    %v2531 = vlaneseq
    %v2532 = vshrl.u32 %v2531, 7
    %v2533 = vadd.s32 %v2532, 48
    %2534 = vset.pattern.permute.xlu0 %v2533
    %2535 = vperm.xlu0 %2534, %v2494
    %v2536 = vpop.permute.xlu0 %2535
    %v2537 = vlaneseq
    %v2538 = vshrl.u32 %v2537, 7
    %v2539 = vadd.s32 %v2538, 56
    %2540 = vset.pattern.permute.xlu0 %v2539
    %2541 = vperm.xlu0 %2540, %v2494
    %v2542 = vpop.permute.xlu0 %2541
    %v2543 = vlaneseq
    %v2544 = vshrl.u32 %v2543, 7
    %v2545 = vadd.s32 %v2544, 64
    %2546 = vset.pattern.permute.xlu0 %v2545
    %2547 = vperm.xlu0 %2546, %v2494
    %v2548 = vpop.permute.xlu0 %2547
    %v2549 = vlaneseq
    %v2550 = vshrl.u32 %v2549, 7
    %v2551 = vadd.s32 %v2550, 72
    %2552 = vset.pattern.permute.xlu0 %v2551
    %2553 = vperm.xlu0 %2552, %v2494
    %v2554 = vpop.permute.xlu0 %2553
    %v2555 = vlaneseq
    %v2556 = vshrl.u32 %v2555, 7
    %v2557 = vadd.s32 %v2556, 80
    %2558 = vset.pattern.permute.xlu0 %v2557
    %2559 = vperm.xlu0 %2558, %v2494
    %v2560 = vpop.permute.xlu0 %2559
    %v2561 = vlaneseq
    %v2562 = vshrl.u32 %v2561, 7
    %v2563 = vadd.s32 %v2562, 88
    %2564 = vset.pattern.permute.xlu0 %v2563
    %2565 = vperm.xlu0 %2564, %v2494
    %v2566 = vpop.permute.xlu0 %2565
    %v2567 = vlaneseq
    %v2568 = vshrl.u32 %v2567, 7
    %v2569 = vadd.s32 %v2568, 96
    %2570 = vset.pattern.permute.xlu0 %v2569
    %2571 = vperm.xlu0 %2570, %v2494
    %v2572 = vpop.permute.xlu0 %2571
    %v2573 = vlaneseq
    %v2574 = vshrl.u32 %v2573, 7
    %v2575 = vadd.s32 %v2574, 104
    %2576 = vset.pattern.permute.xlu0 %v2575
    %2577 = vperm.xlu0 %2576, %v2494
    %v2578 = vpop.permute.xlu0 %2577
    %v2579 = vlaneseq
    %v2580 = vshrl.u32 %v2579, 7
    %v2581 = vadd.s32 %v2580, 112
    %2582 = vset.pattern.permute.xlu0 %v2581
    %2583 = vperm.xlu0 %2582, %v2494
    %v2584 = vpop.permute.xlu0 %2583
    %v2585 = vlaneseq
    %v2586 = vshrl.u32 %v2585, 7
    %v2587 = vadd.s32 %v2586, 120
    %2588 = vset.pattern.permute.xlu0 %v2587
    %2589 = vperm.xlu0 %2588, %v2494
    %v2590 = vpop.permute.xlu0 %2589
    %v2591 = vperm.slane %v85, 1
    %v2592 = vlaneseq
    %v2593 = vshrl.u32 %v2592, 7
    %2595 = vset.pattern.permute.xlu0 %v2593
    %2596 = vperm.xlu0 %2595, %v2591
    %v2597 = vpop.permute.xlu0 %2596
    %v2598 = vlaneseq
    %v2599 = vshrl.u32 %v2598, 7
    %v2600 = vadd.s32 %v2599, 8
    %2601 = vset.pattern.permute.xlu0 %v2600
    %2602 = vperm.xlu0 %2601, %v2591
    %v2603 = vpop.permute.xlu0 %2602
    %v2604 = vlaneseq
    %v2605 = vshrl.u32 %v2604, 7
    %v2606 = vadd.s32 %v2605, 16
    %2607 = vset.pattern.permute.xlu0 %v2606
    %2608 = vperm.xlu0 %2607, %v2591
    %v2609 = vpop.permute.xlu0 %2608
    %v2610 = vlaneseq
    %v2611 = vshrl.u32 %v2610, 7
    %v2612 = vadd.s32 %v2611, 24
    %2613 = vset.pattern.permute.xlu0 %v2612
    %2614 = vperm.xlu0 %2613, %v2591
    %v2615 = vpop.permute.xlu0 %2614
    %v2616 = vlaneseq
    %v2617 = vshrl.u32 %v2616, 7
    %v2618 = vadd.s32 %v2617, 32
    %2619 = vset.pattern.permute.xlu0 %v2618
    %2620 = vperm.xlu0 %2619, %v2591
    %v2621 = vpop.permute.xlu0 %2620
    %v2622 = vlaneseq
    %v2623 = vshrl.u32 %v2622, 7
    %v2624 = vadd.s32 %v2623, 40
    %2625 = vset.pattern.permute.xlu0 %v2624
    %2626 = vperm.xlu0 %2625, %v2591
    %v2627 = vpop.permute.xlu0 %2626
    %v2628 = vlaneseq
    %v2629 = vshrl.u32 %v2628, 7
    %v2630 = vadd.s32 %v2629, 48
    %2631 = vset.pattern.permute.xlu0 %v2630
    %2632 = vperm.xlu0 %2631, %v2591
    %v2633 = vpop.permute.xlu0 %2632
    %v2634 = vlaneseq
    %v2635 = vshrl.u32 %v2634, 7
    %v2636 = vadd.s32 %v2635, 56
    %2637 = vset.pattern.permute.xlu0 %v2636
    %2638 = vperm.xlu0 %2637, %v2591
    %v2639 = vpop.permute.xlu0 %2638
    %v2640 = vlaneseq
    %v2641 = vshrl.u32 %v2640, 7
    %v2642 = vadd.s32 %v2641, 64
    %2643 = vset.pattern.permute.xlu0 %v2642
    %2644 = vperm.xlu0 %2643, %v2591
    %v2645 = vpop.permute.xlu0 %2644
    %v2646 = vlaneseq
    %v2647 = vshrl.u32 %v2646, 7
    %v2648 = vadd.s32 %v2647, 72
    %2649 = vset.pattern.permute.xlu0 %v2648
    %2650 = vperm.xlu0 %2649, %v2591
    %v2651 = vpop.permute.xlu0 %2650
    %v2652 = vlaneseq
    %v2653 = vshrl.u32 %v2652, 7
    %v2654 = vadd.s32 %v2653, 80
    %2655 = vset.pattern.permute.xlu0 %v2654
    %2656 = vperm.xlu0 %2655, %v2591
    %v2657 = vpop.permute.xlu0 %2656
    %v2658 = vlaneseq
    %v2659 = vshrl.u32 %v2658, 7
    %v2660 = vadd.s32 %v2659, 88
    %2661 = vset.pattern.permute.xlu0 %v2660
    %2662 = vperm.xlu0 %2661, %v2591
    %v2663 = vpop.permute.xlu0 %2662
    %v2664 = vlaneseq
    %v2665 = vshrl.u32 %v2664, 7
    %v2666 = vadd.s32 %v2665, 96
    %2667 = vset.pattern.permute.xlu0 %v2666
    %2668 = vperm.xlu0 %2667, %v2591
    %v2669 = vpop.permute.xlu0 %2668
    %v2670 = vlaneseq
    %v2671 = vshrl.u32 %v2670, 7
    %v2672 = vadd.s32 %v2671, 104
    %2673 = vset.pattern.permute.xlu0 %v2672
    %2674 = vperm.xlu0 %2673, %v2591
    %v2675 = vpop.permute.xlu0 %2674
    %v2676 = vlaneseq
    %v2677 = vshrl.u32 %v2676, 7
    %v2678 = vadd.s32 %v2677, 112
    %2679 = vset.pattern.permute.xlu0 %v2678
    %2680 = vperm.xlu0 %2679, %v2591
    %v2681 = vpop.permute.xlu0 %2680
    %v2682 = vlaneseq
    %v2683 = vshrl.u32 %v2682, 7
    %v2684 = vadd.s32 %v2683, 120
    %2685 = vset.pattern.permute.xlu0 %v2684
    %2686 = vperm.xlu0 %2685, %v2591
    %v2687 = vpop.permute.xlu0 %2686
    %v2688 = vperm.slane %v85, 2
    %v2689 = vlaneseq
    %v2690 = vshrl.u32 %v2689, 7
    %2692 = vset.pattern.permute.xlu0 %v2690
    %2693 = vperm.xlu0 %2692, %v2688
    %v2694 = vpop.permute.xlu0 %2693
    %v2695 = vlaneseq
    %v2696 = vshrl.u32 %v2695, 7
    %v2697 = vadd.s32 %v2696, 8
    %2698 = vset.pattern.permute.xlu0 %v2697
    %2699 = vperm.xlu0 %2698, %v2688
    %v2700 = vpop.permute.xlu0 %2699
    %v2701 = vlaneseq
    %v2702 = vshrl.u32 %v2701, 7
    %v2703 = vadd.s32 %v2702, 16
    %2704 = vset.pattern.permute.xlu0 %v2703
    %2705 = vperm.xlu0 %2704, %v2688
    %v2706 = vpop.permute.xlu0 %2705
    %v2707 = vlaneseq
    %v2708 = vshrl.u32 %v2707, 7
    %v2709 = vadd.s32 %v2708, 24
    %2710 = vset.pattern.permute.xlu0 %v2709
    %2711 = vperm.xlu0 %2710, %v2688
    %v2712 = vpop.permute.xlu0 %2711
    %v2713 = vlaneseq
    %v2714 = vshrl.u32 %v2713, 7
    %v2715 = vadd.s32 %v2714, 32
    %2716 = vset.pattern.permute.xlu0 %v2715
    %2717 = vperm.xlu0 %2716, %v2688
    %v2718 = vpop.permute.xlu0 %2717
    %v2719 = vlaneseq
    %v2720 = vshrl.u32 %v2719, 7
    %v2721 = vadd.s32 %v2720, 40
    %2722 = vset.pattern.permute.xlu0 %v2721
    %2723 = vperm.xlu0 %2722, %v2688
    %v2724 = vpop.permute.xlu0 %2723
    %v2725 = vlaneseq
    %v2726 = vshrl.u32 %v2725, 7
    %v2727 = vadd.s32 %v2726, 48
    %2728 = vset.pattern.permute.xlu0 %v2727
    %2729 = vperm.xlu0 %2728, %v2688
    %v2730 = vpop.permute.xlu0 %2729
    %v2731 = vlaneseq
    %v2732 = vshrl.u32 %v2731, 7
    %v2733 = vadd.s32 %v2732, 56
    %2734 = vset.pattern.permute.xlu0 %v2733
    %2735 = vperm.xlu0 %2734, %v2688
    %v2736 = vpop.permute.xlu0 %2735
    %v2737 = vlaneseq
    %v2738 = vshrl.u32 %v2737, 7
    %v2739 = vadd.s32 %v2738, 64
    %2740 = vset.pattern.permute.xlu0 %v2739
    %2741 = vperm.xlu0 %2740, %v2688
    %v2742 = vpop.permute.xlu0 %2741
    %v2743 = vlaneseq
    %v2744 = vshrl.u32 %v2743, 7
    %v2745 = vadd.s32 %v2744, 72
    %2746 = vset.pattern.permute.xlu0 %v2745
    %2747 = vperm.xlu0 %2746, %v2688
    %v2748 = vpop.permute.xlu0 %2747
    %v2749 = vlaneseq
    %v2750 = vshrl.u32 %v2749, 7
    %v2751 = vadd.s32 %v2750, 80
    %2752 = vset.pattern.permute.xlu0 %v2751
    %2753 = vperm.xlu0 %2752, %v2688
    %v2754 = vpop.permute.xlu0 %2753
    %v2755 = vlaneseq
    %v2756 = vshrl.u32 %v2755, 7
    %v2757 = vadd.s32 %v2756, 88
    %2758 = vset.pattern.permute.xlu0 %v2757
    %2759 = vperm.xlu0 %2758, %v2688
    %v2760 = vpop.permute.xlu0 %2759
    %v2761 = vlaneseq
    %v2762 = vshrl.u32 %v2761, 7
    %v2763 = vadd.s32 %v2762, 96
    %2764 = vset.pattern.permute.xlu0 %v2763
    %2765 = vperm.xlu0 %2764, %v2688
    %v2766 = vpop.permute.xlu0 %2765
    %v2767 = vlaneseq
    %v2768 = vshrl.u32 %v2767, 7
    %v2769 = vadd.s32 %v2768, 104
    %2770 = vset.pattern.permute.xlu0 %v2769
    %2771 = vperm.xlu0 %2770, %v2688
    %v2772 = vpop.permute.xlu0 %2771
    %v2773 = vlaneseq
    %v2774 = vshrl.u32 %v2773, 7
    %v2775 = vadd.s32 %v2774, 112
    %2776 = vset.pattern.permute.xlu0 %v2775
    %2777 = vperm.xlu0 %2776, %v2688
    %v2778 = vpop.permute.xlu0 %2777
    %v2779 = vlaneseq
    %v2780 = vshrl.u32 %v2779, 7
    %v2781 = vadd.s32 %v2780, 120
    %2782 = vset.pattern.permute.xlu0 %v2781
    %2783 = vperm.xlu0 %2782, %v2688
    %v2784 = vpop.permute.xlu0 %2783
    %v2785 = vperm.slane %v85, 3
    %v2786 = vlaneseq
    %v2787 = vshrl.u32 %v2786, 7
    %2789 = vset.pattern.permute.xlu0 %v2787
    %2790 = vperm.xlu0 %2789, %v2785
    %v2791 = vpop.permute.xlu0 %2790
    %v2792 = vlaneseq
    %v2793 = vshrl.u32 %v2792, 7
    %v2794 = vadd.s32 %v2793, 8
    %2795 = vset.pattern.permute.xlu0 %v2794
    %2796 = vperm.xlu0 %2795, %v2785
    %v2797 = vpop.permute.xlu0 %2796
    %v2798 = vlaneseq
    %v2799 = vshrl.u32 %v2798, 7
    %v2800 = vadd.s32 %v2799, 16
    %2801 = vset.pattern.permute.xlu0 %v2800
    %2802 = vperm.xlu0 %2801, %v2785
    %v2803 = vpop.permute.xlu0 %2802
    %v2804 = vlaneseq
    %v2805 = vshrl.u32 %v2804, 7
    %v2806 = vadd.s32 %v2805, 24
    %2807 = vset.pattern.permute.xlu0 %v2806
    %2808 = vperm.xlu0 %2807, %v2785
    %v2809 = vpop.permute.xlu0 %2808
    %v2810 = vlaneseq
    %v2811 = vshrl.u32 %v2810, 7
    %v2812 = vadd.s32 %v2811, 32
    %2813 = vset.pattern.permute.xlu0 %v2812
    %2814 = vperm.xlu0 %2813, %v2785
    %v2815 = vpop.permute.xlu0 %2814
    %v2816 = vlaneseq
    %v2817 = vshrl.u32 %v2816, 7
    %v2818 = vadd.s32 %v2817, 40
    %2819 = vset.pattern.permute.xlu0 %v2818
    %2820 = vperm.xlu0 %2819, %v2785
    %v2821 = vpop.permute.xlu0 %2820
    %v2822 = vlaneseq
    %v2823 = vshrl.u32 %v2822, 7
    %v2824 = vadd.s32 %v2823, 48
    %2825 = vset.pattern.permute.xlu0 %v2824
    %2826 = vperm.xlu0 %2825, %v2785
    %v2827 = vpop.permute.xlu0 %2826
    %v2828 = vlaneseq
    %v2829 = vshrl.u32 %v2828, 7
    %v2830 = vadd.s32 %v2829, 56
    %2831 = vset.pattern.permute.xlu0 %v2830
    %2832 = vperm.xlu0 %2831, %v2785
    %v2833 = vpop.permute.xlu0 %2832
    %v2834 = vlaneseq
    %v2835 = vshrl.u32 %v2834, 7
    %v2836 = vadd.s32 %v2835, 64
    %2837 = vset.pattern.permute.xlu0 %v2836
    %2838 = vperm.xlu0 %2837, %v2785
    %v2839 = vpop.permute.xlu0 %2838
    %v2840 = vlaneseq
    %v2841 = vshrl.u32 %v2840, 7
    %v2842 = vadd.s32 %v2841, 72
    %2843 = vset.pattern.permute.xlu0 %v2842
    %2844 = vperm.xlu0 %2843, %v2785
    %v2845 = vpop.permute.xlu0 %2844
    %v2846 = vlaneseq
    %v2847 = vshrl.u32 %v2846, 7
    %v2848 = vadd.s32 %v2847, 80
    %2849 = vset.pattern.permute.xlu0 %v2848
    %2850 = vperm.xlu0 %2849, %v2785
    %v2851 = vpop.permute.xlu0 %2850
    %v2852 = vlaneseq
    %v2853 = vshrl.u32 %v2852, 7
    %v2854 = vadd.s32 %v2853, 88
    %2855 = vset.pattern.permute.xlu0 %v2854
    %2856 = vperm.xlu0 %2855, %v2785
    %v2857 = vpop.permute.xlu0 %2856
    %v2858 = vlaneseq
    %v2859 = vshrl.u32 %v2858, 7
    %v2860 = vadd.s32 %v2859, 96
    %2861 = vset.pattern.permute.xlu0 %v2860
    %2862 = vperm.xlu0 %2861, %v2785
    %v2863 = vpop.permute.xlu0 %2862
    %v2864 = vlaneseq
    %v2865 = vshrl.u32 %v2864, 7
    %v2866 = vadd.s32 %v2865, 104
    %2867 = vset.pattern.permute.xlu0 %v2866
    %2868 = vperm.xlu0 %2867, %v2785
    %v2869 = vpop.permute.xlu0 %2868
    %v2870 = vlaneseq
    %v2871 = vshrl.u32 %v2870, 7
    %v2872 = vadd.s32 %v2871, 112
    %2873 = vset.pattern.permute.xlu0 %v2872
    %2874 = vperm.xlu0 %2873, %v2785
    %v2875 = vpop.permute.xlu0 %2874
    %v2876 = vlaneseq
    %v2877 = vshrl.u32 %v2876, 7
    %v2878 = vadd.s32 %v2877, 120
    %2879 = vset.pattern.permute.xlu0 %v2878
    %2880 = vperm.xlu0 %2879, %v2785
    %v2881 = vpop.permute.xlu0 %2880
    %v2882 = vperm.slane %v85, 4
    %v2883 = vlaneseq
    %v2884 = vshrl.u32 %v2883, 7
    %2886 = vset.pattern.permute.xlu0 %v2884
    %2887 = vperm.xlu0 %2886, %v2882
    %v2888 = vpop.permute.xlu0 %2887
    %v2889 = vlaneseq
    %v2890 = vshrl.u32 %v2889, 7
    %v2891 = vadd.s32 %v2890, 8
    %2892 = vset.pattern.permute.xlu0 %v2891
    %2893 = vperm.xlu0 %2892, %v2882
    %v2894 = vpop.permute.xlu0 %2893
    %v2895 = vlaneseq
    %v2896 = vshrl.u32 %v2895, 7
    %v2897 = vadd.s32 %v2896, 16
    %2898 = vset.pattern.permute.xlu0 %v2897
    %2899 = vperm.xlu0 %2898, %v2882
    %v2900 = vpop.permute.xlu0 %2899
    %v2901 = vlaneseq
    %v2902 = vshrl.u32 %v2901, 7
    %v2903 = vadd.s32 %v2902, 24
    %2904 = vset.pattern.permute.xlu0 %v2903
    %2905 = vperm.xlu0 %2904, %v2882
    %v2906 = vpop.permute.xlu0 %2905
    %v2907 = vlaneseq
    %v2908 = vshrl.u32 %v2907, 7
    %v2909 = vadd.s32 %v2908, 32
    %2910 = vset.pattern.permute.xlu0 %v2909
    %2911 = vperm.xlu0 %2910, %v2882
    %v2912 = vpop.permute.xlu0 %2911
    %v2913 = vlaneseq
    %v2914 = vshrl.u32 %v2913, 7
    %v2915 = vadd.s32 %v2914, 40
    %2916 = vset.pattern.permute.xlu0 %v2915
    %2917 = vperm.xlu0 %2916, %v2882
    %v2918 = vpop.permute.xlu0 %2917
    %v2919 = vlaneseq
    %v2920 = vshrl.u32 %v2919, 7
    %v2921 = vadd.s32 %v2920, 48
    %2922 = vset.pattern.permute.xlu0 %v2921
    %2923 = vperm.xlu0 %2922, %v2882
    %v2924 = vpop.permute.xlu0 %2923
    %v2925 = vlaneseq
    %v2926 = vshrl.u32 %v2925, 7
    %v2927 = vadd.s32 %v2926, 56
    %2928 = vset.pattern.permute.xlu0 %v2927
    %2929 = vperm.xlu0 %2928, %v2882
    %v2930 = vpop.permute.xlu0 %2929
    %v2931 = vlaneseq
    %v2932 = vshrl.u32 %v2931, 7
    %v2933 = vadd.s32 %v2932, 64
    %2934 = vset.pattern.permute.xlu0 %v2933
    %2935 = vperm.xlu0 %2934, %v2882
    %v2936 = vpop.permute.xlu0 %2935
    %v2937 = vlaneseq
    %v2938 = vshrl.u32 %v2937, 7
    %v2939 = vadd.s32 %v2938, 72
    %2940 = vset.pattern.permute.xlu0 %v2939
    %2941 = vperm.xlu0 %2940, %v2882
    %v2942 = vpop.permute.xlu0 %2941
    %v2943 = vlaneseq
    %v2944 = vshrl.u32 %v2943, 7
    %v2945 = vadd.s32 %v2944, 80
    %2946 = vset.pattern.permute.xlu0 %v2945
    %2947 = vperm.xlu0 %2946, %v2882
    %v2948 = vpop.permute.xlu0 %2947
    %v2949 = vlaneseq
    %v2950 = vshrl.u32 %v2949, 7
    %v2951 = vadd.s32 %v2950, 88
    %2952 = vset.pattern.permute.xlu0 %v2951
    %2953 = vperm.xlu0 %2952, %v2882
    %v2954 = vpop.permute.xlu0 %2953
    %v2955 = vlaneseq
    %v2956 = vshrl.u32 %v2955, 7
    %v2957 = vadd.s32 %v2956, 96
    %2958 = vset.pattern.permute.xlu0 %v2957
    %2959 = vperm.xlu0 %2958, %v2882
    %v2960 = vpop.permute.xlu0 %2959
    %v2961 = vlaneseq
    %v2962 = vshrl.u32 %v2961, 7
    %v2963 = vadd.s32 %v2962, 104
    %2964 = vset.pattern.permute.xlu0 %v2963
    %2965 = vperm.xlu0 %2964, %v2882
    %v2966 = vpop.permute.xlu0 %2965
    %v2967 = vlaneseq
    %v2968 = vshrl.u32 %v2967, 7
    %v2969 = vadd.s32 %v2968, 112
    %2970 = vset.pattern.permute.xlu0 %v2969
    %2971 = vperm.xlu0 %2970, %v2882
    %v2972 = vpop.permute.xlu0 %2971
    %v2973 = vlaneseq
    %v2974 = vshrl.u32 %v2973, 7
    %v2975 = vadd.s32 %v2974, 120
    %2976 = vset.pattern.permute.xlu0 %v2975
    %2977 = vperm.xlu0 %2976, %v2882
    %v2978 = vpop.permute.xlu0 %2977
    %v2979 = vperm.slane %v85, 5
    %v2980 = vlaneseq
    %v2981 = vshrl.u32 %v2980, 7
    %2983 = vset.pattern.permute.xlu0 %v2981
    %2984 = vperm.xlu0 %2983, %v2979
    %v2985 = vpop.permute.xlu0 %2984
    %v2986 = vlaneseq
    %v2987 = vshrl.u32 %v2986, 7
    %v2988 = vadd.s32 %v2987, 8
    %2989 = vset.pattern.permute.xlu0 %v2988
    %2990 = vperm.xlu0 %2989, %v2979
    %v2991 = vpop.permute.xlu0 %2990
    %v2992 = vlaneseq
    %v2993 = vshrl.u32 %v2992, 7
    %v2994 = vadd.s32 %v2993, 16
    %2995 = vset.pattern.permute.xlu0 %v2994
    %2996 = vperm.xlu0 %2995, %v2979
    %v2997 = vpop.permute.xlu0 %2996
    %v2998 = vlaneseq
    %v2999 = vshrl.u32 %v2998, 7
    %v3000 = vadd.s32 %v2999, 24
    %3001 = vset.pattern.permute.xlu0 %v3000
    %3002 = vperm.xlu0 %3001, %v2979
    %v3003 = vpop.permute.xlu0 %3002
    %v3004 = vlaneseq
    %v3005 = vshrl.u32 %v3004, 7
    %v3006 = vadd.s32 %v3005, 32
    %3007 = vset.pattern.permute.xlu0 %v3006
    %3008 = vperm.xlu0 %3007, %v2979
    %v3009 = vpop.permute.xlu0 %3008
    %v3010 = vlaneseq
    %v3011 = vshrl.u32 %v3010, 7
    %v3012 = vadd.s32 %v3011, 40
    %3013 = vset.pattern.permute.xlu0 %v3012
    %3014 = vperm.xlu0 %3013, %v2979
    %v3015 = vpop.permute.xlu0 %3014
    %v3016 = vlaneseq
    %v3017 = vshrl.u32 %v3016, 7
    %v3018 = vadd.s32 %v3017, 48
    %3019 = vset.pattern.permute.xlu0 %v3018
    %3020 = vperm.xlu0 %3019, %v2979
    %v3021 = vpop.permute.xlu0 %3020
    %v3022 = vlaneseq
    %v3023 = vshrl.u32 %v3022, 7
    %v3024 = vadd.s32 %v3023, 56
    %3025 = vset.pattern.permute.xlu0 %v3024
    %3026 = vperm.xlu0 %3025, %v2979
    %v3027 = vpop.permute.xlu0 %3026
    %v3028 = vlaneseq
    %v3029 = vshrl.u32 %v3028, 7
    %v3030 = vadd.s32 %v3029, 64
    %3031 = vset.pattern.permute.xlu0 %v3030
    %3032 = vperm.xlu0 %3031, %v2979
    %v3033 = vpop.permute.xlu0 %3032
    %v3034 = vlaneseq
    %v3035 = vshrl.u32 %v3034, 7
    %v3036 = vadd.s32 %v3035, 72
    %3037 = vset.pattern.permute.xlu0 %v3036
    %3038 = vperm.xlu0 %3037, %v2979
    %v3039 = vpop.permute.xlu0 %3038
    %v3040 = vlaneseq
    %v3041 = vshrl.u32 %v3040, 7
    %v3042 = vadd.s32 %v3041, 80
    %3043 = vset.pattern.permute.xlu0 %v3042
    %3044 = vperm.xlu0 %3043, %v2979
    %v3045 = vpop.permute.xlu0 %3044
    %v3046 = vlaneseq
    %v3047 = vshrl.u32 %v3046, 7
    %v3048 = vadd.s32 %v3047, 88
    %3049 = vset.pattern.permute.xlu0 %v3048
    %3050 = vperm.xlu0 %3049, %v2979
    %v3051 = vpop.permute.xlu0 %3050
    %v3052 = vlaneseq
    %v3053 = vshrl.u32 %v3052, 7
    %v3054 = vadd.s32 %v3053, 96
    %3055 = vset.pattern.permute.xlu0 %v3054
    %3056 = vperm.xlu0 %3055, %v2979
    %v3057 = vpop.permute.xlu0 %3056
    %v3058 = vlaneseq
    %v3059 = vshrl.u32 %v3058, 7
    %v3060 = vadd.s32 %v3059, 104
    %3061 = vset.pattern.permute.xlu0 %v3060
    %3062 = vperm.xlu0 %3061, %v2979
    %v3063 = vpop.permute.xlu0 %3062
    %v3064 = vlaneseq
    %v3065 = vshrl.u32 %v3064, 7
    %v3066 = vadd.s32 %v3065, 112
    %3067 = vset.pattern.permute.xlu0 %v3066
    %3068 = vperm.xlu0 %3067, %v2979
    %v3069 = vpop.permute.xlu0 %3068
    %v3070 = vlaneseq
    %v3071 = vshrl.u32 %v3070, 7
    %v3072 = vadd.s32 %v3071, 120
    %3073 = vset.pattern.permute.xlu0 %v3072
    %3074 = vperm.xlu0 %3073, %v2979
    %v3075 = vpop.permute.xlu0 %3074
    %v3076 = vperm.slane %v85, 6
    %v3077 = vlaneseq
    %v3078 = vshrl.u32 %v3077, 7
    %3080 = vset.pattern.permute.xlu0 %v3078
    %3081 = vperm.xlu0 %3080, %v3076
    %v3082 = vpop.permute.xlu0 %3081
    %v3083 = vlaneseq
    %v3084 = vshrl.u32 %v3083, 7
    %v3085 = vadd.s32 %v3084, 8
    %3086 = vset.pattern.permute.xlu0 %v3085
    %3087 = vperm.xlu0 %3086, %v3076
    %v3088 = vpop.permute.xlu0 %3087
    %v3089 = vlaneseq
    %v3090 = vshrl.u32 %v3089, 7
    %v3091 = vadd.s32 %v3090, 16
    %3092 = vset.pattern.permute.xlu0 %v3091
    %3093 = vperm.xlu0 %3092, %v3076
    %v3094 = vpop.permute.xlu0 %3093
    %v3095 = vlaneseq
    %v3096 = vshrl.u32 %v3095, 7
    %v3097 = vadd.s32 %v3096, 24
    %3098 = vset.pattern.permute.xlu0 %v3097
    %3099 = vperm.xlu0 %3098, %v3076
    %v3100 = vpop.permute.xlu0 %3099
    %v3101 = vlaneseq
    %v3102 = vshrl.u32 %v3101, 7
    %v3103 = vadd.s32 %v3102, 32
    %3104 = vset.pattern.permute.xlu0 %v3103
    %3105 = vperm.xlu0 %3104, %v3076
    %v3106 = vpop.permute.xlu0 %3105
    %v3107 = vlaneseq
    %v3108 = vshrl.u32 %v3107, 7
    %v3109 = vadd.s32 %v3108, 40
    %3110 = vset.pattern.permute.xlu0 %v3109
    %3111 = vperm.xlu0 %3110, %v3076
    %v3112 = vpop.permute.xlu0 %3111
    %v3113 = vlaneseq
    %v3114 = vshrl.u32 %v3113, 7
    %v3115 = vadd.s32 %v3114, 48
    %3116 = vset.pattern.permute.xlu0 %v3115
    %3117 = vperm.xlu0 %3116, %v3076
    %v3118 = vpop.permute.xlu0 %3117
    %v3119 = vlaneseq
    %v3120 = vshrl.u32 %v3119, 7
    %v3121 = vadd.s32 %v3120, 56
    %3122 = vset.pattern.permute.xlu0 %v3121
    %3123 = vperm.xlu0 %3122, %v3076
    %v3124 = vpop.permute.xlu0 %3123
    %v3125 = vlaneseq
    %v3126 = vshrl.u32 %v3125, 7
    %v3127 = vadd.s32 %v3126, 64
    %3128 = vset.pattern.permute.xlu0 %v3127
    %3129 = vperm.xlu0 %3128, %v3076
    %v3130 = vpop.permute.xlu0 %3129
    %v3131 = vlaneseq
    %v3132 = vshrl.u32 %v3131, 7
    %v3133 = vadd.s32 %v3132, 72
    %3134 = vset.pattern.permute.xlu0 %v3133
    %3135 = vperm.xlu0 %3134, %v3076
    %v3136 = vpop.permute.xlu0 %3135
    %v3137 = vlaneseq
    %v3138 = vshrl.u32 %v3137, 7
    %v3139 = vadd.s32 %v3138, 80
    %3140 = vset.pattern.permute.xlu0 %v3139
    %3141 = vperm.xlu0 %3140, %v3076
    %v3142 = vpop.permute.xlu0 %3141
    %v3143 = vlaneseq
    %v3144 = vshrl.u32 %v3143, 7
    %v3145 = vadd.s32 %v3144, 88
    %3146 = vset.pattern.permute.xlu0 %v3145
    %3147 = vperm.xlu0 %3146, %v3076
    %v3148 = vpop.permute.xlu0 %3147
    %v3149 = vlaneseq
    %v3150 = vshrl.u32 %v3149, 7
    %v3151 = vadd.s32 %v3150, 96
    %3152 = vset.pattern.permute.xlu0 %v3151
    %3153 = vperm.xlu0 %3152, %v3076
    %v3154 = vpop.permute.xlu0 %3153
    %v3155 = vlaneseq
    %v3156 = vshrl.u32 %v3155, 7
    %v3157 = vadd.s32 %v3156, 104
    %3158 = vset.pattern.permute.xlu0 %v3157
    %3159 = vperm.xlu0 %3158, %v3076
    %v3160 = vpop.permute.xlu0 %3159
    %v3161 = vlaneseq
    %v3162 = vshrl.u32 %v3161, 7
    %v3163 = vadd.s32 %v3162, 112
    %3164 = vset.pattern.permute.xlu0 %v3163
    %3165 = vperm.xlu0 %3164, %v3076
    %v3166 = vpop.permute.xlu0 %3165
    %v3167 = vlaneseq
    %v3168 = vshrl.u32 %v3167, 7
    %v3169 = vadd.s32 %v3168, 120
    %3170 = vset.pattern.permute.xlu0 %v3169
    %3171 = vperm.xlu0 %3170, %v3076
    %v3172 = vpop.permute.xlu0 %3171
    %v3173 = vperm.slane %v85, 7
    %v3174 = vlaneseq
    %v3175 = vshrl.u32 %v3174, 7
    %3177 = vset.pattern.permute.xlu0 %v3175
    %3178 = vperm.xlu0 %3177, %v3173
    %v3179 = vpop.permute.xlu0 %3178
    %v3180 = vlaneseq
    %v3181 = vshrl.u32 %v3180, 7
    %v3182 = vadd.s32 %v3181, 8
    %3183 = vset.pattern.permute.xlu0 %v3182
    %3184 = vperm.xlu0 %3183, %v3173
    %v3185 = vpop.permute.xlu0 %3184
    %v3186 = vlaneseq
    %v3187 = vshrl.u32 %v3186, 7
    %v3188 = vadd.s32 %v3187, 16
    %3189 = vset.pattern.permute.xlu0 %v3188
    %3190 = vperm.xlu0 %3189, %v3173
    %v3191 = vpop.permute.xlu0 %3190
    %v3192 = vlaneseq
    %v3193 = vshrl.u32 %v3192, 7
    %v3194 = vadd.s32 %v3193, 24
    %3195 = vset.pattern.permute.xlu0 %v3194
    %3196 = vperm.xlu0 %3195, %v3173
    %v3197 = vpop.permute.xlu0 %3196
    %v3198 = vlaneseq
    %v3199 = vshrl.u32 %v3198, 7
    %v3200 = vadd.s32 %v3199, 32
    %3201 = vset.pattern.permute.xlu0 %v3200
    %3202 = vperm.xlu0 %3201, %v3173
    %v3203 = vpop.permute.xlu0 %3202
    %v3204 = vlaneseq
    %v3205 = vshrl.u32 %v3204, 7
    %v3206 = vadd.s32 %v3205, 40
    %3207 = vset.pattern.permute.xlu0 %v3206
    %3208 = vperm.xlu0 %3207, %v3173
    %v3209 = vpop.permute.xlu0 %3208
    %v3210 = vlaneseq
    %v3211 = vshrl.u32 %v3210, 7
    %v3212 = vadd.s32 %v3211, 48
    %3213 = vset.pattern.permute.xlu0 %v3212
    %3214 = vperm.xlu0 %3213, %v3173
    %v3215 = vpop.permute.xlu0 %3214
    %v3216 = vlaneseq
    %v3217 = vshrl.u32 %v3216, 7
    %v3218 = vadd.s32 %v3217, 56
    %3219 = vset.pattern.permute.xlu0 %v3218
    %3220 = vperm.xlu0 %3219, %v3173
    %v3221 = vpop.permute.xlu0 %3220
    %v3222 = vlaneseq
    %v3223 = vshrl.u32 %v3222, 7
    %v3224 = vadd.s32 %v3223, 64
    %3225 = vset.pattern.permute.xlu0 %v3224
    %3226 = vperm.xlu0 %3225, %v3173
    %v3227 = vpop.permute.xlu0 %3226
    %v3228 = vlaneseq
    %v3229 = vshrl.u32 %v3228, 7
    %v3230 = vadd.s32 %v3229, 72
    %3231 = vset.pattern.permute.xlu0 %v3230
    %3232 = vperm.xlu0 %3231, %v3173
    %v3233 = vpop.permute.xlu0 %3232
    %v3234 = vlaneseq
    %v3235 = vshrl.u32 %v3234, 7
    %v3236 = vadd.s32 %v3235, 80
    %3237 = vset.pattern.permute.xlu0 %v3236
    %3238 = vperm.xlu0 %3237, %v3173
    %v3239 = vpop.permute.xlu0 %3238
    %v3240 = vlaneseq
    %v3241 = vshrl.u32 %v3240, 7
    %v3242 = vadd.s32 %v3241, 88
    %3243 = vset.pattern.permute.xlu0 %v3242
    %3244 = vperm.xlu0 %3243, %v3173
    %v3245 = vpop.permute.xlu0 %3244
    %v3246 = vlaneseq
    %v3247 = vshrl.u32 %v3246, 7
    %v3248 = vadd.s32 %v3247, 96
    %3249 = vset.pattern.permute.xlu0 %v3248
    %3250 = vperm.xlu0 %3249, %v3173
    %v3251 = vpop.permute.xlu0 %3250
    %v3252 = vlaneseq
    %v3253 = vshrl.u32 %v3252, 7
    %v3254 = vadd.s32 %v3253, 104
    %3255 = vset.pattern.permute.xlu0 %v3254
    %3256 = vperm.xlu0 %3255, %v3173
    %v3257 = vpop.permute.xlu0 %3256
    %v3258 = vlaneseq
    %v3259 = vshrl.u32 %v3258, 7
    %v3260 = vadd.s32 %v3259, 112
    %3261 = vset.pattern.permute.xlu0 %v3260
    %3262 = vperm.xlu0 %3261, %v3173
    %v3263 = vpop.permute.xlu0 %3262
    %v3264 = vlaneseq
    %v3265 = vshrl.u32 %v3264, 7
    %v3266 = vadd.s32 %v3265, 120
    %3267 = vset.pattern.permute.xlu0 %v3266
    %3268 = vperm.xlu0 %3267, %v3173
    %v3269 = vpop.permute.xlu0 %3268
    %v3270 = vsub.f32 %v2500, %v61
    %v3271 = vsub.f32 %v2500, %v62
    %v3272 = vsub.f32 %v2506, %v61
    %v3273 = vsub.f32 %v2506, %v62
    %v3274 = vsub.f32 %v2512, %v61
    %v3275 = vsub.f32 %v2512, %v62
    %v3276 = vsub.f32 %v2518, %v61
    %v3277 = vsub.f32 %v2518, %v62
    %v3278 = vsub.f32 %v2524, %v61
    %v3279 = vsub.f32 %v2524, %v62
    %v3280 = vsub.f32 %v2530, %v61
    %v3281 = vsub.f32 %v2530, %v62
    %v3282 = vsub.f32 %v2536, %v61
    %v3283 = vsub.f32 %v2536, %v62
    %v3284 = vsub.f32 %v2542, %v61
    %v3285 = vsub.f32 %v2542, %v62
    %v3286 = vsub.f32 %v2548, %v61
    %v3287 = vsub.f32 %v2548, %v62
    %v3288 = vsub.f32 %v2554, %v61
    %v3289 = vsub.f32 %v2554, %v62
    %v3290 = vsub.f32 %v2560, %v61
    %v3291 = vsub.f32 %v2560, %v62
    %v3292 = vsub.f32 %v2566, %v61
    %v3293 = vsub.f32 %v2566, %v62
    %v3294 = vsub.f32 %v2572, %v61
    %v3295 = vsub.f32 %v2572, %v62
    %v3296 = vsub.f32 %v2578, %v61
    %v3297 = vsub.f32 %v2578, %v62
    %v3298 = vsub.f32 %v2584, %v61
    %v3299 = vsub.f32 %v2584, %v62
    %v3300 = vsub.f32 %v2590, %v61
    %v3301 = vsub.f32 %v2590, %v62
    %v3302 = vsub.f32 %v2597, %v61
    %v3303 = vsub.f32 %v2597, %v62
    %v3304 = vsub.f32 %v2603, %v61
    %v3305 = vsub.f32 %v2603, %v62
    %v3306 = vsub.f32 %v2609, %v61
    %v3307 = vsub.f32 %v2609, %v62
    %v3308 = vsub.f32 %v2615, %v61
    %v3309 = vsub.f32 %v2615, %v62
    %v3310 = vsub.f32 %v2621, %v61
    %v3311 = vsub.f32 %v2621, %v62
    %v3312 = vsub.f32 %v2627, %v61
    %v3313 = vsub.f32 %v2627, %v62
    %v3314 = vsub.f32 %v2633, %v61
    %v3315 = vsub.f32 %v2633, %v62
    %v3316 = vsub.f32 %v2639, %v61
    %v3317 = vsub.f32 %v2639, %v62
    %v3318 = vsub.f32 %v2645, %v61
    %v3319 = vsub.f32 %v2645, %v62
    %v3320 = vsub.f32 %v2651, %v61
    %v3321 = vsub.f32 %v2651, %v62
    %v3322 = vsub.f32 %v2657, %v61
    %v3323 = vsub.f32 %v2657, %v62
    %v3324 = vsub.f32 %v2663, %v61
    %v3325 = vsub.f32 %v2663, %v62
    %v3326 = vsub.f32 %v2669, %v61
    %v3327 = vsub.f32 %v2669, %v62
    %v3328 = vsub.f32 %v2675, %v61
    %v3329 = vsub.f32 %v2675, %v62
    %v3330 = vsub.f32 %v2681, %v61
    %v3331 = vsub.f32 %v2681, %v62
    %v3332 = vsub.f32 %v2687, %v61
    %v3333 = vsub.f32 %v2687, %v62
    %v3334 = vsub.f32 %v2694, %v61
    %v3335 = vsub.f32 %v2694, %v62
    %v3336 = vsub.f32 %v2700, %v61
    %v3337 = vsub.f32 %v2700, %v62
    %v3338 = vsub.f32 %v2706, %v61
    %v3339 = vsub.f32 %v2706, %v62
    %v3340 = vsub.f32 %v2712, %v61
    %v3341 = vsub.f32 %v2712, %v62
    %v3342 = vsub.f32 %v2718, %v61
    %v3343 = vsub.f32 %v2718, %v62
    %v3344 = vsub.f32 %v2724, %v61
    %v3345 = vsub.f32 %v2724, %v62
    %v3346 = vsub.f32 %v2730, %v61
    %v3347 = vsub.f32 %v2730, %v62
    %v3348 = vsub.f32 %v2736, %v61
    %v3349 = vsub.f32 %v2736, %v62
    %v3350 = vsub.f32 %v2742, %v61
    %v3351 = vsub.f32 %v2742, %v62
    %v3352 = vsub.f32 %v2748, %v61
    %v3353 = vsub.f32 %v2748, %v62
    %v3354 = vsub.f32 %v2754, %v61
    %v3355 = vsub.f32 %v2754, %v62
    %v3356 = vsub.f32 %v2760, %v61
    %v3357 = vsub.f32 %v2760, %v62
    %v3358 = vsub.f32 %v2766, %v61
    %v3359 = vsub.f32 %v2766, %v62
    %v3360 = vsub.f32 %v2772, %v61
    %v3361 = vsub.f32 %v2772, %v62
    %v3362 = vsub.f32 %v2778, %v61
    %v3363 = vsub.f32 %v2778, %v62
    %v3364 = vsub.f32 %v2784, %v61
    %v3365 = vsub.f32 %v2784, %v62
    %v3366 = vsub.f32 %v2791, %v61
    %v3367 = vsub.f32 %v2791, %v62
    %v3368 = vsub.f32 %v2797, %v61
    %v3369 = vsub.f32 %v2797, %v62
    %v3370 = vsub.f32 %v2803, %v61
    %v3371 = vsub.f32 %v2803, %v62
    %v3372 = vsub.f32 %v2809, %v61
    %v3373 = vsub.f32 %v2809, %v62
    %v3374 = vsub.f32 %v2815, %v61
    %v3375 = vsub.f32 %v2815, %v62
    %v3376 = vsub.f32 %v2821, %v61
    %v3377 = vsub.f32 %v2821, %v62
    %v3378 = vsub.f32 %v2827, %v61
    %v3379 = vsub.f32 %v2827, %v62
    %v3380 = vsub.f32 %v2833, %v61
    %v3381 = vsub.f32 %v2833, %v62
    %v3382 = vsub.f32 %v2839, %v61
    %v3383 = vsub.f32 %v2839, %v62
    %v3384 = vsub.f32 %v2845, %v61
    %v3385 = vsub.f32 %v2845, %v62
    %v3386 = vsub.f32 %v2851, %v61
    %v3387 = vsub.f32 %v2851, %v62
    %v3388 = vsub.f32 %v2857, %v61
    %v3389 = vsub.f32 %v2857, %v62
    %v3390 = vsub.f32 %v2863, %v61
    %v3391 = vsub.f32 %v2863, %v62
    %v3392 = vsub.f32 %v2869, %v61
    %v3393 = vsub.f32 %v2869, %v62
    %v3394 = vsub.f32 %v2875, %v61
    %v3395 = vsub.f32 %v2875, %v62
    %v3396 = vsub.f32 %v2881, %v61
    %v3397 = vsub.f32 %v2881, %v62
    %v3398 = vsub.f32 %v2888, %v61
    %v3399 = vsub.f32 %v2888, %v62
    %v3400 = vsub.f32 %v2894, %v61
    %v3401 = vsub.f32 %v2894, %v62
    %v3402 = vsub.f32 %v2900, %v61
    %v3403 = vsub.f32 %v2900, %v62
    %v3404 = vsub.f32 %v2906, %v61
    %v3405 = vsub.f32 %v2906, %v62
    %v3406 = vsub.f32 %v2912, %v61
    %v3407 = vsub.f32 %v2912, %v62
    %v3408 = vsub.f32 %v2918, %v61
    %v3409 = vsub.f32 %v2918, %v62
    %v3410 = vsub.f32 %v2924, %v61
    %v3411 = vsub.f32 %v2924, %v62
    %v3412 = vsub.f32 %v2930, %v61
    %v3413 = vsub.f32 %v2930, %v62
    %v3414 = vsub.f32 %v2936, %v61
    %v3415 = vsub.f32 %v2936, %v62
    %v3416 = vsub.f32 %v2942, %v61
    %v3417 = vsub.f32 %v2942, %v62
    %v3418 = vsub.f32 %v2948, %v61
    %v3419 = vsub.f32 %v2948, %v62
    %v3420 = vsub.f32 %v2954, %v61
    %v3421 = vsub.f32 %v2954, %v62
    %v3422 = vsub.f32 %v2960, %v61
    %v3423 = vsub.f32 %v2960, %v62
    %v3424 = vsub.f32 %v2966, %v61
    %v3425 = vsub.f32 %v2966, %v62
    %v3426 = vsub.f32 %v2972, %v61
    %v3427 = vsub.f32 %v2972, %v62
    %v3428 = vsub.f32 %v2978, %v61
    %v3429 = vsub.f32 %v2978, %v62
    %v3430 = vsub.f32 %v2985, %v61
    %v3431 = vsub.f32 %v2985, %v62
    %v3432 = vsub.f32 %v2991, %v61
    %v3433 = vsub.f32 %v2991, %v62
    %v3434 = vsub.f32 %v2997, %v61
    %v3435 = vsub.f32 %v2997, %v62
    %v3436 = vsub.f32 %v3003, %v61
    %v3437 = vsub.f32 %v3003, %v62
    %v3438 = vsub.f32 %v3009, %v61
    %v3439 = vsub.f32 %v3009, %v62
    %v3440 = vsub.f32 %v3015, %v61
    %v3441 = vsub.f32 %v3015, %v62
    %v3442 = vsub.f32 %v3021, %v61
    %v3443 = vsub.f32 %v3021, %v62
    %v3444 = vsub.f32 %v3027, %v61
    %v3445 = vsub.f32 %v3027, %v62
    %v3446 = vsub.f32 %v3033, %v61
    %v3447 = vsub.f32 %v3033, %v62
    %v3448 = vsub.f32 %v3039, %v61
    %v3449 = vsub.f32 %v3039, %v62
    %v3450 = vsub.f32 %v3045, %v61
    %v3451 = vsub.f32 %v3045, %v62
    %v3452 = vsub.f32 %v3051, %v61
    %v3453 = vsub.f32 %v3051, %v62
    %v3454 = vsub.f32 %v3057, %v61
    %v3455 = vsub.f32 %v3057, %v62
    %v3456 = vsub.f32 %v3063, %v61
    %v3457 = vsub.f32 %v3063, %v62
    %v3458 = vsub.f32 %v3069, %v61
    %v3459 = vsub.f32 %v3069, %v62
    %v3460 = vsub.f32 %v3075, %v61
    %v3461 = vsub.f32 %v3075, %v62
    %v3462 = vsub.f32 %v3082, %v61
    %v3463 = vsub.f32 %v3082, %v62
    %v3464 = vsub.f32 %v3088, %v61
    %v3465 = vsub.f32 %v3088, %v62
    %v3466 = vsub.f32 %v3094, %v61
    %v3467 = vsub.f32 %v3094, %v62
    %v3468 = vsub.f32 %v3100, %v61
    %v3469 = vsub.f32 %v3100, %v62
    %v3470 = vsub.f32 %v3106, %v61
    %v3471 = vsub.f32 %v3106, %v62
    %v3472 = vsub.f32 %v3112, %v61
    %v3473 = vsub.f32 %v3112, %v62
    %v3474 = vsub.f32 %v3118, %v61
    %v3475 = vsub.f32 %v3118, %v62
    %v3476 = vsub.f32 %v3124, %v61
    %v3477 = vsub.f32 %v3124, %v62
    %v3478 = vsub.f32 %v3130, %v61
    %v3479 = vsub.f32 %v3130, %v62
    %v3480 = vsub.f32 %v3136, %v61
    %v3481 = vsub.f32 %v3136, %v62
    %v3482 = vsub.f32 %v3142, %v61
    %v3483 = vsub.f32 %v3142, %v62
    %v3484 = vsub.f32 %v3148, %v61
    %v3485 = vsub.f32 %v3148, %v62
    %v3486 = vsub.f32 %v3154, %v61
    %v3487 = vsub.f32 %v3154, %v62
    %v3488 = vsub.f32 %v3160, %v61
    %v3489 = vsub.f32 %v3160, %v62
    %v3490 = vsub.f32 %v3166, %v61
    %v3491 = vsub.f32 %v3166, %v62
    %v3492 = vsub.f32 %v3172, %v61
    %v3493 = vsub.f32 %v3172, %v62
    %v3494 = vsub.f32 %v3179, %v61
    %v3495 = vsub.f32 %v3179, %v62
    %v3496 = vsub.f32 %v3185, %v61
    %v3497 = vsub.f32 %v3185, %v62
    %v3498 = vsub.f32 %v3191, %v61
    %v3499 = vsub.f32 %v3191, %v62
    %v3500 = vsub.f32 %v3197, %v61
    %v3501 = vsub.f32 %v3197, %v62
    %v3502 = vsub.f32 %v3203, %v61
    %v3503 = vsub.f32 %v3203, %v62
    %v3504 = vsub.f32 %v3209, %v61
    %v3505 = vsub.f32 %v3209, %v62
    %v3506 = vsub.f32 %v3215, %v61
    %v3507 = vsub.f32 %v3215, %v62
    %v3508 = vsub.f32 %v3221, %v61
    %v3509 = vsub.f32 %v3221, %v62
    %v3510 = vsub.f32 %v3227, %v61
    %v3511 = vsub.f32 %v3227, %v62
    %v3512 = vsub.f32 %v3233, %v61
    %v3513 = vsub.f32 %v3233, %v62
    %v3514 = vsub.f32 %v3239, %v61
    %v3515 = vsub.f32 %v3239, %v62
    %v3516 = vsub.f32 %v3245, %v61
    %v3517 = vsub.f32 %v3245, %v62
    %v3518 = vsub.f32 %v3251, %v61
    %v3519 = vsub.f32 %v3251, %v62
    %v3520 = vsub.f32 %v3257, %v61
    %v3521 = vsub.f32 %v3257, %v62
    %v3522 = vsub.f32 %v3263, %v61
    %v3523 = vsub.f32 %v3263, %v62
    %v3524 = vsub.f32 %v3269, %v61
    %v3525 = vsub.f32 %v3269, %v62
    %v3526 = vmul.f32 %v3270, %v3270
    %v3527 = vmul.f32 %v3271, %v3271
    %v3528 = vmul.f32 %v3272, %v3272
    %v3529 = vmul.f32 %v3273, %v3273
    %v3530 = vmul.f32 %v3274, %v3274
    %v3531 = vmul.f32 %v3275, %v3275
    %v3532 = vmul.f32 %v3276, %v3276
    %v3533 = vmul.f32 %v3277, %v3277
    %v3534 = vmul.f32 %v3278, %v3278
    %v3535 = vmul.f32 %v3279, %v3279
    %v3536 = vmul.f32 %v3280, %v3280
    %v3537 = vmul.f32 %v3281, %v3281
    %v3538 = vmul.f32 %v3282, %v3282
    %v3539 = vmul.f32 %v3283, %v3283
    %v3540 = vmul.f32 %v3284, %v3284
    %v3541 = vmul.f32 %v3285, %v3285
    %v3542 = vmul.f32 %v3286, %v3286
    %v3543 = vmul.f32 %v3287, %v3287
    %v3544 = vmul.f32 %v3288, %v3288
    %v3545 = vmul.f32 %v3289, %v3289
    %v3546 = vmul.f32 %v3290, %v3290
    %v3547 = vmul.f32 %v3291, %v3291
    %v3548 = vmul.f32 %v3292, %v3292
    %v3549 = vmul.f32 %v3293, %v3293
    %v3550 = vmul.f32 %v3294, %v3294
    %v3551 = vmul.f32 %v3295, %v3295
    %v3552 = vmul.f32 %v3296, %v3296
    %v3553 = vmul.f32 %v3297, %v3297
    %v3554 = vmul.f32 %v3298, %v3298
    %v3555 = vmul.f32 %v3299, %v3299
    %v3556 = vmul.f32 %v3300, %v3300
    %v3557 = vmul.f32 %v3301, %v3301
    %v3558 = vmul.f32 %v3302, %v3302
    %v3559 = vmul.f32 %v3303, %v3303
    %v3560 = vmul.f32 %v3304, %v3304
    %v3561 = vmul.f32 %v3305, %v3305
    %v3562 = vmul.f32 %v3306, %v3306
    %v3563 = vmul.f32 %v3307, %v3307
    %v3564 = vmul.f32 %v3308, %v3308
    %v3565 = vmul.f32 %v3309, %v3309
    %v3566 = vmul.f32 %v3310, %v3310
    %v3567 = vmul.f32 %v3311, %v3311
    %v3568 = vmul.f32 %v3312, %v3312
    %v3569 = vmul.f32 %v3313, %v3313
    %v3570 = vmul.f32 %v3314, %v3314
    %v3571 = vmul.f32 %v3315, %v3315
    %v3572 = vmul.f32 %v3316, %v3316
    %v3573 = vmul.f32 %v3317, %v3317
    %v3574 = vmul.f32 %v3318, %v3318
    %v3575 = vmul.f32 %v3319, %v3319
    %v3576 = vmul.f32 %v3320, %v3320
    %v3577 = vmul.f32 %v3321, %v3321
    %v3578 = vmul.f32 %v3322, %v3322
    %v3579 = vmul.f32 %v3323, %v3323
    %v3580 = vmul.f32 %v3324, %v3324
    %v3581 = vmul.f32 %v3325, %v3325
    %v3582 = vmul.f32 %v3326, %v3326
    %v3583 = vmul.f32 %v3327, %v3327
    %v3584 = vmul.f32 %v3328, %v3328
    %v3585 = vmul.f32 %v3329, %v3329
    %v3586 = vmul.f32 %v3330, %v3330
    %v3587 = vmul.f32 %v3331, %v3331
    %v3588 = vmul.f32 %v3332, %v3332
    %v3589 = vmul.f32 %v3333, %v3333
    %v3590 = vmul.f32 %v3334, %v3334
    %v3591 = vmul.f32 %v3335, %v3335
    %v3592 = vmul.f32 %v3336, %v3336
    %v3593 = vmul.f32 %v3337, %v3337
    %v3594 = vmul.f32 %v3338, %v3338
    %v3595 = vmul.f32 %v3339, %v3339
    %v3596 = vmul.f32 %v3340, %v3340
    %v3597 = vmul.f32 %v3341, %v3341
    %v3598 = vmul.f32 %v3342, %v3342
    %v3599 = vmul.f32 %v3343, %v3343
    %v3600 = vmul.f32 %v3344, %v3344
    %v3601 = vmul.f32 %v3345, %v3345
    %v3602 = vmul.f32 %v3346, %v3346
    %v3603 = vmul.f32 %v3347, %v3347
    %v3604 = vmul.f32 %v3348, %v3348
    %v3605 = vmul.f32 %v3349, %v3349
    %v3606 = vmul.f32 %v3350, %v3350
    %v3607 = vmul.f32 %v3351, %v3351
    %v3608 = vmul.f32 %v3352, %v3352
    %v3609 = vmul.f32 %v3353, %v3353
    %v3610 = vmul.f32 %v3354, %v3354
    %v3611 = vmul.f32 %v3355, %v3355
    %v3612 = vmul.f32 %v3356, %v3356
    %v3613 = vmul.f32 %v3357, %v3357
    %v3614 = vmul.f32 %v3358, %v3358
    %v3615 = vmul.f32 %v3359, %v3359
    %v3616 = vmul.f32 %v3360, %v3360
    %v3617 = vmul.f32 %v3361, %v3361
    %v3618 = vmul.f32 %v3362, %v3362
    %v3619 = vmul.f32 %v3363, %v3363
    %v3620 = vmul.f32 %v3364, %v3364
    %v3621 = vmul.f32 %v3365, %v3365
    %v3622 = vmul.f32 %v3366, %v3366
    %v3623 = vmul.f32 %v3367, %v3367
    %v3624 = vmul.f32 %v3368, %v3368
    %v3625 = vmul.f32 %v3369, %v3369
    %v3626 = vmul.f32 %v3370, %v3370
    %v3627 = vmul.f32 %v3371, %v3371
    %v3628 = vmul.f32 %v3372, %v3372
    %v3629 = vmul.f32 %v3373, %v3373
    %v3630 = vmul.f32 %v3374, %v3374
    %v3631 = vmul.f32 %v3375, %v3375
    %v3632 = vmul.f32 %v3376, %v3376
    %v3633 = vmul.f32 %v3377, %v3377
    %v3634 = vmul.f32 %v3378, %v3378
    %v3635 = vmul.f32 %v3379, %v3379
    %v3636 = vmul.f32 %v3380, %v3380
    %v3637 = vmul.f32 %v3381, %v3381
    %v3638 = vmul.f32 %v3382, %v3382
    %v3639 = vmul.f32 %v3383, %v3383
    %v3640 = vmul.f32 %v3384, %v3384
    %v3641 = vmul.f32 %v3385, %v3385
    %v3642 = vmul.f32 %v3386, %v3386
    %v3643 = vmul.f32 %v3387, %v3387
    %v3644 = vmul.f32 %v3388, %v3388
    %v3645 = vmul.f32 %v3389, %v3389
    %v3646 = vmul.f32 %v3390, %v3390
    %v3647 = vmul.f32 %v3391, %v3391
    %v3648 = vmul.f32 %v3392, %v3392
    %v3649 = vmul.f32 %v3393, %v3393
    %v3650 = vmul.f32 %v3394, %v3394
    %v3651 = vmul.f32 %v3395, %v3395
    %v3652 = vmul.f32 %v3396, %v3396
    %v3653 = vmul.f32 %v3397, %v3397
    %v3654 = vmul.f32 %v3398, %v3398
    %v3655 = vmul.f32 %v3399, %v3399
    %v3656 = vmul.f32 %v3400, %v3400
    %v3657 = vmul.f32 %v3401, %v3401
    %v3658 = vmul.f32 %v3402, %v3402
    %v3659 = vmul.f32 %v3403, %v3403
    %v3660 = vmul.f32 %v3404, %v3404
    %v3661 = vmul.f32 %v3405, %v3405
    %v3662 = vmul.f32 %v3406, %v3406
    %v3663 = vmul.f32 %v3407, %v3407
    %v3664 = vmul.f32 %v3408, %v3408
    %v3665 = vmul.f32 %v3409, %v3409
    %v3666 = vmul.f32 %v3410, %v3410
    %v3667 = vmul.f32 %v3411, %v3411
    %v3668 = vmul.f32 %v3412, %v3412
    %v3669 = vmul.f32 %v3413, %v3413
    %v3670 = vmul.f32 %v3414, %v3414
    %v3671 = vmul.f32 %v3415, %v3415
    %v3672 = vmul.f32 %v3416, %v3416
    %v3673 = vmul.f32 %v3417, %v3417
    %v3674 = vmul.f32 %v3418, %v3418
    %v3675 = vmul.f32 %v3419, %v3419
    %v3676 = vmul.f32 %v3420, %v3420
    %v3677 = vmul.f32 %v3421, %v3421
    %v3678 = vmul.f32 %v3422, %v3422
    %v3679 = vmul.f32 %v3423, %v3423
    %v3680 = vmul.f32 %v3424, %v3424
    %v3681 = vmul.f32 %v3425, %v3425
    %v3682 = vmul.f32 %v3426, %v3426
    %v3683 = vmul.f32 %v3427, %v3427
    %v3684 = vmul.f32 %v3428, %v3428
    %v3685 = vmul.f32 %v3429, %v3429
    %v3686 = vmul.f32 %v3430, %v3430
    %v3687 = vmul.f32 %v3431, %v3431
    %v3688 = vmul.f32 %v3432, %v3432
    %v3689 = vmul.f32 %v3433, %v3433
    %v3690 = vmul.f32 %v3434, %v3434
    %v3691 = vmul.f32 %v3435, %v3435
    %v3692 = vmul.f32 %v3436, %v3436
    %v3693 = vmul.f32 %v3437, %v3437
    %v3694 = vmul.f32 %v3438, %v3438
    %v3695 = vmul.f32 %v3439, %v3439
    %v3696 = vmul.f32 %v3440, %v3440
    %v3697 = vmul.f32 %v3441, %v3441
    %v3698 = vmul.f32 %v3442, %v3442
    %v3699 = vmul.f32 %v3443, %v3443
    %v3700 = vmul.f32 %v3444, %v3444
    %v3701 = vmul.f32 %v3445, %v3445
    %v3702 = vmul.f32 %v3446, %v3446
    %v3703 = vmul.f32 %v3447, %v3447
    %v3704 = vmul.f32 %v3448, %v3448
    %v3705 = vmul.f32 %v3449, %v3449
    %v3706 = vmul.f32 %v3450, %v3450
    %v3707 = vmul.f32 %v3451, %v3451
    %v3708 = vmul.f32 %v3452, %v3452
    %v3709 = vmul.f32 %v3453, %v3453
    %v3710 = vmul.f32 %v3454, %v3454
    %v3711 = vmul.f32 %v3455, %v3455
    %v3712 = vmul.f32 %v3456, %v3456
    %v3713 = vmul.f32 %v3457, %v3457
    %v3714 = vmul.f32 %v3458, %v3458
    %v3715 = vmul.f32 %v3459, %v3459
    %v3716 = vmul.f32 %v3460, %v3460
    %v3717 = vmul.f32 %v3461, %v3461
    %v3718 = vmul.f32 %v3462, %v3462
    %v3719 = vmul.f32 %v3463, %v3463
    %v3720 = vmul.f32 %v3464, %v3464
    %v3721 = vmul.f32 %v3465, %v3465
    %v3722 = vmul.f32 %v3466, %v3466
    %v3723 = vmul.f32 %v3467, %v3467
    %v3724 = vmul.f32 %v3468, %v3468
    %v3725 = vmul.f32 %v3469, %v3469
    %v3726 = vmul.f32 %v3470, %v3470
    %v3727 = vmul.f32 %v3471, %v3471
    %v3728 = vmul.f32 %v3472, %v3472
    %v3729 = vmul.f32 %v3473, %v3473
    %v3730 = vmul.f32 %v3474, %v3474
    %v3731 = vmul.f32 %v3475, %v3475
    %v3732 = vmul.f32 %v3476, %v3476
    %v3733 = vmul.f32 %v3477, %v3477
    %v3734 = vmul.f32 %v3478, %v3478
    %v3735 = vmul.f32 %v3479, %v3479
    %v3736 = vmul.f32 %v3480, %v3480
    %v3737 = vmul.f32 %v3481, %v3481
    %v3738 = vmul.f32 %v3482, %v3482
    %v3739 = vmul.f32 %v3483, %v3483
    %v3740 = vmul.f32 %v3484, %v3484
    %v3741 = vmul.f32 %v3485, %v3485
    %v3742 = vmul.f32 %v3486, %v3486
    %v3743 = vmul.f32 %v3487, %v3487
    %v3744 = vmul.f32 %v3488, %v3488
    %v3745 = vmul.f32 %v3489, %v3489
    %v3746 = vmul.f32 %v3490, %v3490
    %v3747 = vmul.f32 %v3491, %v3491
    %v3748 = vmul.f32 %v3492, %v3492
    %v3749 = vmul.f32 %v3493, %v3493
    %v3750 = vmul.f32 %v3494, %v3494
    %v3751 = vmul.f32 %v3495, %v3495
    %v3752 = vmul.f32 %v3496, %v3496
    %v3753 = vmul.f32 %v3497, %v3497
    %v3754 = vmul.f32 %v3498, %v3498
    %v3755 = vmul.f32 %v3499, %v3499
    %v3756 = vmul.f32 %v3500, %v3500
    %v3757 = vmul.f32 %v3501, %v3501
    %v3758 = vmul.f32 %v3502, %v3502
    %v3759 = vmul.f32 %v3503, %v3503
    %v3760 = vmul.f32 %v3504, %v3504
    %v3761 = vmul.f32 %v3505, %v3505
    %v3762 = vmul.f32 %v3506, %v3506
    %v3763 = vmul.f32 %v3507, %v3507
    %v3764 = vmul.f32 %v3508, %v3508
    %v3765 = vmul.f32 %v3509, %v3509
    %v3766 = vmul.f32 %v3510, %v3510
    %v3767 = vmul.f32 %v3511, %v3511
    %v3768 = vmul.f32 %v3512, %v3512
    %v3769 = vmul.f32 %v3513, %v3513
    %v3770 = vmul.f32 %v3514, %v3514
    %v3771 = vmul.f32 %v3515, %v3515
    %v3772 = vmul.f32 %v3516, %v3516
    %v3773 = vmul.f32 %v3517, %v3517
    %v3774 = vmul.f32 %v3518, %v3518
    %v3775 = vmul.f32 %v3519, %v3519
    %v3776 = vmul.f32 %v3520, %v3520
    %v3777 = vmul.f32 %v3521, %v3521
    %v3778 = vmul.f32 %v3522, %v3522
    %v3779 = vmul.f32 %v3523, %v3523
    %v3780 = vmul.f32 %v3524, %v3524
    %v3781 = vmul.f32 %v3525, %v3525
    %v3782 = vmul.f32 %v3526, -100.0
    %v3783 = vmul.f32 %v3527, -100.0
    %v3784 = vmul.f32 %v3528, -100.0
    %v3785 = vmul.f32 %v3529, -100.0
    %v3786 = vmul.f32 %v3530, -100.0
    %v3787 = vmul.f32 %v3531, -100.0
    %v3788 = vmul.f32 %v3532, -100.0
    %v3789 = vmul.f32 %v3533, -100.0
    %v3790 = vmul.f32 %v3534, -100.0
    %v3791 = vmul.f32 %v3535, -100.0
    %v3792 = vmul.f32 %v3536, -100.0
    %v3793 = vmul.f32 %v3537, -100.0
    %v3794 = vmul.f32 %v3538, -100.0
    %v3795 = vmul.f32 %v3539, -100.0
    %v3796 = vmul.f32 %v3540, -100.0
    %v3797 = vmul.f32 %v3541, -100.0
    %v3798 = vmul.f32 %v3542, -100.0
    %v3799 = vmul.f32 %v3543, -100.0
    %v3800 = vmul.f32 %v3544, -100.0
    %v3801 = vmul.f32 %v3545, -100.0
    %v3802 = vmul.f32 %v3546, -100.0
    %v3803 = vmul.f32 %v3547, -100.0
    %v3804 = vmul.f32 %v3548, -100.0
    %v3805 = vmul.f32 %v3549, -100.0
    %v3806 = vmul.f32 %v3550, -100.0
    %v3807 = vmul.f32 %v3551, -100.0
    %v3808 = vmul.f32 %v3552, -100.0
    %v3809 = vmul.f32 %v3553, -100.0
    %v3810 = vmul.f32 %v3554, -100.0
    %v3811 = vmul.f32 %v3555, -100.0
    %v3812 = vmul.f32 %v3556, -100.0
    %v3813 = vmul.f32 %v3557, -100.0
    %v3814 = vmul.f32 %v3558, -100.0
    %v3815 = vmul.f32 %v3559, -100.0
    %v3816 = vmul.f32 %v3560, -100.0
    %v3817 = vmul.f32 %v3561, -100.0
    %v3818 = vmul.f32 %v3562, -100.0
    %v3819 = vmul.f32 %v3563, -100.0
    %v3820 = vmul.f32 %v3564, -100.0
    %v3821 = vmul.f32 %v3565, -100.0
    %v3822 = vmul.f32 %v3566, -100.0
    %v3823 = vmul.f32 %v3567, -100.0
    %v3824 = vmul.f32 %v3568, -100.0
    %v3825 = vmul.f32 %v3569, -100.0
    %v3826 = vmul.f32 %v3570, -100.0
    %v3827 = vmul.f32 %v3571, -100.0
    %v3828 = vmul.f32 %v3572, -100.0
    %v3829 = vmul.f32 %v3573, -100.0
    %v3830 = vmul.f32 %v3574, -100.0
    %v3831 = vmul.f32 %v3575, -100.0
    %v3832 = vmul.f32 %v3576, -100.0
    %v3833 = vmul.f32 %v3577, -100.0
    %v3834 = vmul.f32 %v3578, -100.0
    %v3835 = vmul.f32 %v3579, -100.0
    %v3836 = vmul.f32 %v3580, -100.0
    %v3837 = vmul.f32 %v3581, -100.0
    %v3838 = vmul.f32 %v3582, -100.0
    %v3839 = vmul.f32 %v3583, -100.0
    %v3840 = vmul.f32 %v3584, -100.0
    %v3841 = vmul.f32 %v3585, -100.0
    %v3842 = vmul.f32 %v3586, -100.0
    %v3843 = vmul.f32 %v3587, -100.0
    %v3844 = vmul.f32 %v3588, -100.0
    %v3845 = vmul.f32 %v3589, -100.0
    %v3846 = vmul.f32 %v3590, -100.0
    %v3847 = vmul.f32 %v3591, -100.0
    %v3848 = vmul.f32 %v3592, -100.0
    %v3849 = vmul.f32 %v3593, -100.0
    %v3850 = vmul.f32 %v3594, -100.0
    %v3851 = vmul.f32 %v3595, -100.0
    %v3852 = vmul.f32 %v3596, -100.0
    %v3853 = vmul.f32 %v3597, -100.0
    %v3854 = vmul.f32 %v3598, -100.0
    %v3855 = vmul.f32 %v3599, -100.0
    %v3856 = vmul.f32 %v3600, -100.0
    %v3857 = vmul.f32 %v3601, -100.0
    %v3858 = vmul.f32 %v3602, -100.0
    %v3859 = vmul.f32 %v3603, -100.0
    %v3860 = vmul.f32 %v3604, -100.0
    %v3861 = vmul.f32 %v3605, -100.0
    %v3862 = vmul.f32 %v3606, -100.0
    %v3863 = vmul.f32 %v3607, -100.0
    %v3864 = vmul.f32 %v3608, -100.0
    %v3865 = vmul.f32 %v3609, -100.0
    %v3866 = vmul.f32 %v3610, -100.0
    %v3867 = vmul.f32 %v3611, -100.0
    %v3868 = vmul.f32 %v3612, -100.0
    %v3869 = vmul.f32 %v3613, -100.0
    %v3870 = vmul.f32 %v3614, -100.0
    %v3871 = vmul.f32 %v3615, -100.0
    %v3872 = vmul.f32 %v3616, -100.0
    %v3873 = vmul.f32 %v3617, -100.0
    %v3874 = vmul.f32 %v3618, -100.0
    %v3875 = vmul.f32 %v3619, -100.0
    %v3876 = vmul.f32 %v3620, -100.0
    %v3877 = vmul.f32 %v3621, -100.0
    %v3878 = vmul.f32 %v3622, -100.0
    %v3879 = vmul.f32 %v3623, -100.0
    %v3880 = vmul.f32 %v3624, -100.0
    %v3881 = vmul.f32 %v3625, -100.0
    %v3882 = vmul.f32 %v3626, -100.0
    %v3883 = vmul.f32 %v3627, -100.0
    %v3884 = vmul.f32 %v3628, -100.0
    %v3885 = vmul.f32 %v3629, -100.0
    %v3886 = vmul.f32 %v3630, -100.0
    %v3887 = vmul.f32 %v3631, -100.0
    %v3888 = vmul.f32 %v3632, -100.0
    %v3889 = vmul.f32 %v3633, -100.0
    %v3890 = vmul.f32 %v3634, -100.0
    %v3891 = vmul.f32 %v3635, -100.0
    %v3892 = vmul.f32 %v3636, -100.0
    %v3893 = vmul.f32 %v3637, -100.0
    %v3894 = vmul.f32 %v3638, -100.0
    %v3895 = vmul.f32 %v3639, -100.0
    %v3896 = vmul.f32 %v3640, -100.0
    %v3897 = vmul.f32 %v3641, -100.0
    %v3898 = vmul.f32 %v3642, -100.0
    %v3899 = vmul.f32 %v3643, -100.0
    %v3900 = vmul.f32 %v3644, -100.0
    %v3901 = vmul.f32 %v3645, -100.0
    %v3902 = vmul.f32 %v3646, -100.0
    %v3903 = vmul.f32 %v3647, -100.0
    %v3904 = vmul.f32 %v3648, -100.0
    %v3905 = vmul.f32 %v3649, -100.0
    %v3906 = vmul.f32 %v3650, -100.0
    %v3907 = vmul.f32 %v3651, -100.0
    %v3908 = vmul.f32 %v3652, -100.0
    %v3909 = vmul.f32 %v3653, -100.0
    %v3910 = vmul.f32 %v3654, -100.0
    %v3911 = vmul.f32 %v3655, -100.0
    %v3912 = vmul.f32 %v3656, -100.0
    %v3913 = vmul.f32 %v3657, -100.0
    %v3914 = vmul.f32 %v3658, -100.0
    %v3915 = vmul.f32 %v3659, -100.0
    %v3916 = vmul.f32 %v3660, -100.0
    %v3917 = vmul.f32 %v3661, -100.0
    %v3918 = vmul.f32 %v3662, -100.0
    %v3919 = vmul.f32 %v3663, -100.0
    %v3920 = vmul.f32 %v3664, -100.0
    %v3921 = vmul.f32 %v3665, -100.0
    %v3922 = vmul.f32 %v3666, -100.0
    %v3923 = vmul.f32 %v3667, -100.0
    %v3924 = vmul.f32 %v3668, -100.0
    %v3925 = vmul.f32 %v3669, -100.0
    %v3926 = vmul.f32 %v3670, -100.0
    %v3927 = vmul.f32 %v3671, -100.0
    %v3928 = vmul.f32 %v3672, -100.0
    %v3929 = vmul.f32 %v3673, -100.0
    %v3930 = vmul.f32 %v3674, -100.0
    %v3931 = vmul.f32 %v3675, -100.0
    %v3932 = vmul.f32 %v3676, -100.0
    %v3933 = vmul.f32 %v3677, -100.0
    %v3934 = vmul.f32 %v3678, -100.0
    %v3935 = vmul.f32 %v3679, -100.0
    %v3936 = vmul.f32 %v3680, -100.0
    %v3937 = vmul.f32 %v3681, -100.0
    %v3938 = vmul.f32 %v3682, -100.0
    %v3939 = vmul.f32 %v3683, -100.0
    %v3940 = vmul.f32 %v3684, -100.0
    %v3941 = vmul.f32 %v3685, -100.0
    %v3942 = vmul.f32 %v3686, -100.0
    %v3943 = vmul.f32 %v3687, -100.0
    %v3944 = vmul.f32 %v3688, -100.0
    %v3945 = vmul.f32 %v3689, -100.0
    %v3946 = vmul.f32 %v3690, -100.0
    %v3947 = vmul.f32 %v3691, -100.0
    %v3948 = vmul.f32 %v3692, -100.0
    %v3949 = vmul.f32 %v3693, -100.0
    %v3950 = vmul.f32 %v3694, -100.0
    %v3951 = vmul.f32 %v3695, -100.0
    %v3952 = vmul.f32 %v3696, -100.0
    %v3953 = vmul.f32 %v3697, -100.0
    %v3954 = vmul.f32 %v3698, -100.0
    %v3955 = vmul.f32 %v3699, -100.0
    %v3956 = vmul.f32 %v3700, -100.0
    %v3957 = vmul.f32 %v3701, -100.0
    %v3958 = vmul.f32 %v3702, -100.0
    %v3959 = vmul.f32 %v3703, -100.0
    %v3960 = vmul.f32 %v3704, -100.0
    %v3961 = vmul.f32 %v3705, -100.0
    %v3962 = vmul.f32 %v3706, -100.0
    %v3963 = vmul.f32 %v3707, -100.0
    %v3964 = vmul.f32 %v3708, -100.0
    %v3965 = vmul.f32 %v3709, -100.0
    %v3966 = vmul.f32 %v3710, -100.0
    %v3967 = vmul.f32 %v3711, -100.0
    %v3968 = vmul.f32 %v3712, -100.0
    %v3969 = vmul.f32 %v3713, -100.0
    %v3970 = vmul.f32 %v3714, -100.0
    %v3971 = vmul.f32 %v3715, -100.0
    %v3972 = vmul.f32 %v3716, -100.0
    %v3973 = vmul.f32 %v3717, -100.0
    %v3974 = vmul.f32 %v3718, -100.0
    %v3975 = vmul.f32 %v3719, -100.0
    %v3976 = vmul.f32 %v3720, -100.0
    %v3977 = vmul.f32 %v3721, -100.0
    %v3978 = vmul.f32 %v3722, -100.0
    %v3979 = vmul.f32 %v3723, -100.0
    %v3980 = vmul.f32 %v3724, -100.0
    %v3981 = vmul.f32 %v3725, -100.0
    %v3982 = vmul.f32 %v3726, -100.0
    %v3983 = vmul.f32 %v3727, -100.0
    %v3984 = vmul.f32 %v3728, -100.0
    %v3985 = vmul.f32 %v3729, -100.0
    %v3986 = vmul.f32 %v3730, -100.0
    %v3987 = vmul.f32 %v3731, -100.0
    %v3988 = vmul.f32 %v3732, -100.0
    %v3989 = vmul.f32 %v3733, -100.0
    %v3990 = vmul.f32 %v3734, -100.0
    %v3991 = vmul.f32 %v3735, -100.0
    %v3992 = vmul.f32 %v3736, -100.0
    %v3993 = vmul.f32 %v3737, -100.0
    %v3994 = vmul.f32 %v3738, -100.0
    %v3995 = vmul.f32 %v3739, -100.0
    %v3996 = vmul.f32 %v3740, -100.0
    %v3997 = vmul.f32 %v3741, -100.0
    %v3998 = vmul.f32 %v3742, -100.0
    %v3999 = vmul.f32 %v3743, -100.0
    %v4000 = vmul.f32 %v3744, -100.0
    %v4001 = vmul.f32 %v3745, -100.0
    %v4002 = vmul.f32 %v3746, -100.0
    %v4003 = vmul.f32 %v3747, -100.0
    %v4004 = vmul.f32 %v3748, -100.0
    %v4005 = vmul.f32 %v3749, -100.0
    %v4006 = vmul.f32 %v3750, -100.0
    %v4007 = vmul.f32 %v3751, -100.0
    %v4008 = vmul.f32 %v3752, -100.0
    %v4009 = vmul.f32 %v3753, -100.0
    %v4010 = vmul.f32 %v3754, -100.0
    %v4011 = vmul.f32 %v3755, -100.0
    %v4012 = vmul.f32 %v3756, -100.0
    %v4013 = vmul.f32 %v3757, -100.0
    %v4014 = vmul.f32 %v3758, -100.0
    %v4015 = vmul.f32 %v3759, -100.0
    %v4016 = vmul.f32 %v3760, -100.0
    %v4017 = vmul.f32 %v3761, -100.0
    %v4018 = vmul.f32 %v3762, -100.0
    %v4019 = vmul.f32 %v3763, -100.0
    %v4020 = vmul.f32 %v3764, -100.0
    %v4021 = vmul.f32 %v3765, -100.0
    %v4022 = vmul.f32 %v3766, -100.0
    %v4023 = vmul.f32 %v3767, -100.0
    %v4024 = vmul.f32 %v3768, -100.0
    %v4025 = vmul.f32 %v3769, -100.0
    %v4026 = vmul.f32 %v3770, -100.0
    %v4027 = vmul.f32 %v3771, -100.0
    %v4028 = vmul.f32 %v3772, -100.0
    %v4029 = vmul.f32 %v3773, -100.0
    %v4030 = vmul.f32 %v3774, -100.0
    %v4031 = vmul.f32 %v3775, -100.0
    %v4032 = vmul.f32 %v3776, -100.0
    %v4033 = vmul.f32 %v3777, -100.0
    %v4034 = vmul.f32 %v3778, -100.0
    %v4035 = vmul.f32 %v3779, -100.0
    %v4036 = vmul.f32 %v3780, -100.0
    %v4037 = vmul.f32 %v3781, -100.0
    %v4038 = vmul.f32 %v3782, 1.442695
    %v4039 = vpow.pop %v4038
    %v4040 = vmul.f32 %v3783, 1.442695
    %v4041 = vpow.pop %v4040
    %v4042 = vmul.f32 %v3784, 1.442695
    %v4043 = vpow.pop %v4042
    %v4044 = vmul.f32 %v3785, 1.442695
    %v4045 = vpow.pop %v4044
    %v4046 = vmul.f32 %v3786, 1.442695
    %v4047 = vpow.pop %v4046
    %v4048 = vmul.f32 %v3787, 1.442695
    %v4049 = vpow.pop %v4048
    %v4050 = vmul.f32 %v3788, 1.442695
    %v4051 = vpow.pop %v4050
    %v4052 = vmul.f32 %v3789, 1.442695
    %v4053 = vpow.pop %v4052
    %v4054 = vmul.f32 %v3790, 1.442695
    %v4055 = vpow.pop %v4054
    %v4056 = vmul.f32 %v3791, 1.442695
    %v4057 = vpow.pop %v4056
    %v4058 = vmul.f32 %v3792, 1.442695
    %v4059 = vpow.pop %v4058
    %v4060 = vmul.f32 %v3793, 1.442695
    %v4061 = vpow.pop %v4060
    %v4062 = vmul.f32 %v3794, 1.442695
    %v4063 = vpow.pop %v4062
    %v4064 = vmul.f32 %v3795, 1.442695
    %v4065 = vpow.pop %v4064
    %v4066 = vmul.f32 %v3796, 1.442695
    %v4067 = vpow.pop %v4066
    %v4068 = vmul.f32 %v3797, 1.442695
    %v4069 = vpow.pop %v4068
    %v4070 = vmul.f32 %v3798, 1.442695
    %v4071 = vpow.pop %v4070
    %v4072 = vmul.f32 %v3799, 1.442695
    %v4073 = vpow.pop %v4072
    %v4074 = vmul.f32 %v3800, 1.442695
    %v4075 = vpow.pop %v4074
    %v4076 = vmul.f32 %v3801, 1.442695
    %v4077 = vpow.pop %v4076
    %v4078 = vmul.f32 %v3802, 1.442695
    %v4079 = vpow.pop %v4078
    %v4080 = vmul.f32 %v3803, 1.442695
    %v4081 = vpow.pop %v4080
    %v4082 = vmul.f32 %v3804, 1.442695
    %v4083 = vpow.pop %v4082
    %v4084 = vmul.f32 %v3805, 1.442695
    %v4085 = vpow.pop %v4084
    %v4086 = vmul.f32 %v3806, 1.442695
    %v4087 = vpow.pop %v4086
    %v4088 = vmul.f32 %v3807, 1.442695
    %v4089 = vpow.pop %v4088
    %v4090 = vmul.f32 %v3808, 1.442695
    %v4091 = vpow.pop %v4090
    %v4092 = vmul.f32 %v3809, 1.442695
    %v4093 = vpow.pop %v4092
    %v4094 = vmul.f32 %v3810, 1.442695
    %v4095 = vpow.pop %v4094
    %v4096 = vmul.f32 %v3811, 1.442695
    %v4097 = vpow.pop %v4096
    %v4098 = vmul.f32 %v3812, 1.442695
    %v4099 = vpow.pop %v4098
    %v4100 = vmul.f32 %v3813, 1.442695
    %v4101 = vpow.pop %v4100
    %v4102 = vmul.f32 %v3814, 1.442695
    %v4103 = vpow.pop %v4102
    %v4104 = vmul.f32 %v3815, 1.442695
    %v4105 = vpow.pop %v4104
    %v4106 = vmul.f32 %v3816, 1.442695
    %v4107 = vpow.pop %v4106
    %v4108 = vmul.f32 %v3817, 1.442695
    %v4109 = vpow.pop %v4108
    %v4110 = vmul.f32 %v3818, 1.442695
    %v4111 = vpow.pop %v4110
    %v4112 = vmul.f32 %v3819, 1.442695
    %v4113 = vpow.pop %v4112
    %v4114 = vmul.f32 %v3820, 1.442695
    %v4115 = vpow.pop %v4114
    %v4116 = vmul.f32 %v3821, 1.442695
    %v4117 = vpow.pop %v4116
    %v4118 = vmul.f32 %v3822, 1.442695
    %v4119 = vpow.pop %v4118
    %v4120 = vmul.f32 %v3823, 1.442695
    %v4121 = vpow.pop %v4120
    %v4122 = vmul.f32 %v3824, 1.442695
    %v4123 = vpow.pop %v4122
    %v4124 = vmul.f32 %v3825, 1.442695
    %v4125 = vpow.pop %v4124
    %v4126 = vmul.f32 %v3826, 1.442695
    %v4127 = vpow.pop %v4126
    %v4128 = vmul.f32 %v3827, 1.442695
    %v4129 = vpow.pop %v4128
    %v4130 = vmul.f32 %v3828, 1.442695
    %v4131 = vpow.pop %v4130
    %v4132 = vmul.f32 %v3829, 1.442695
    %v4133 = vpow.pop %v4132
    %v4134 = vmul.f32 %v3830, 1.442695
    %v4135 = vpow.pop %v4134
    %v4136 = vmul.f32 %v3831, 1.442695
    %v4137 = vpow.pop %v4136
    %v4138 = vmul.f32 %v3832, 1.442695
    %v4139 = vpow.pop %v4138
    %v4140 = vmul.f32 %v3833, 1.442695
    %v4141 = vpow.pop %v4140
    %v4142 = vmul.f32 %v3834, 1.442695
    %v4143 = vpow.pop %v4142
    %v4144 = vmul.f32 %v3835, 1.442695
    %v4145 = vpow.pop %v4144
    %v4146 = vmul.f32 %v3836, 1.442695
    %v4147 = vpow.pop %v4146
    %v4148 = vmul.f32 %v3837, 1.442695
    %v4149 = vpow.pop %v4148
    %v4150 = vmul.f32 %v3838, 1.442695
    %v4151 = vpow.pop %v4150
    %v4152 = vmul.f32 %v3839, 1.442695
    %v4153 = vpow.pop %v4152
    %v4154 = vmul.f32 %v3840, 1.442695
    %v4155 = vpow.pop %v4154
    %v4156 = vmul.f32 %v3841, 1.442695
    %v4157 = vpow.pop %v4156
    %v4158 = vmul.f32 %v3842, 1.442695
    %v4159 = vpow.pop %v4158
    %v4160 = vmul.f32 %v3843, 1.442695
    %v4161 = vpow.pop %v4160
    %v4162 = vmul.f32 %v3844, 1.442695
    %v4163 = vpow.pop %v4162
    %v4164 = vmul.f32 %v3845, 1.442695
    %v4165 = vpow.pop %v4164
    %v4166 = vmul.f32 %v3846, 1.442695
    %v4167 = vpow.pop %v4166
    %v4168 = vmul.f32 %v3847, 1.442695
    %v4169 = vpow.pop %v4168
    %v4170 = vmul.f32 %v3848, 1.442695
    %v4171 = vpow.pop %v4170
    %v4172 = vmul.f32 %v3849, 1.442695
    %v4173 = vpow.pop %v4172
    %v4174 = vmul.f32 %v3850, 1.442695
    %v4175 = vpow.pop %v4174
    %v4176 = vmul.f32 %v3851, 1.442695
    %v4177 = vpow.pop %v4176
    %v4178 = vmul.f32 %v3852, 1.442695
    %v4179 = vpow.pop %v4178
    %v4180 = vmul.f32 %v3853, 1.442695
    %v4181 = vpow.pop %v4180
    %v4182 = vmul.f32 %v3854, 1.442695
    %v4183 = vpow.pop %v4182
    %v4184 = vmul.f32 %v3855, 1.442695
    %v4185 = vpow.pop %v4184
    %v4186 = vmul.f32 %v3856, 1.442695
    %v4187 = vpow.pop %v4186
    %v4188 = vmul.f32 %v3857, 1.442695
    %v4189 = vpow.pop %v4188
    %v4190 = vmul.f32 %v3858, 1.442695
    %v4191 = vpow.pop %v4190
    %v4192 = vmul.f32 %v3859, 1.442695
    %v4193 = vpow.pop %v4192
    %v4194 = vmul.f32 %v3860, 1.442695
    %v4195 = vpow.pop %v4194
    %v4196 = vmul.f32 %v3861, 1.442695
    %v4197 = vpow.pop %v4196
    %v4198 = vmul.f32 %v3862, 1.442695
    %v4199 = vpow.pop %v4198
    %v4200 = vmul.f32 %v3863, 1.442695
    %v4201 = vpow.pop %v4200
    %v4202 = vmul.f32 %v3864, 1.442695
    %v4203 = vpow.pop %v4202
    %v4204 = vmul.f32 %v3865, 1.442695
    %v4205 = vpow.pop %v4204
    %v4206 = vmul.f32 %v3866, 1.442695
    %v4207 = vpow.pop %v4206
    %v4208 = vmul.f32 %v3867, 1.442695
    %v4209 = vpow.pop %v4208
    %v4210 = vmul.f32 %v3868, 1.442695
    %v4211 = vpow.pop %v4210
    %v4212 = vmul.f32 %v3869, 1.442695
    %v4213 = vpow.pop %v4212
    %v4214 = vmul.f32 %v3870, 1.442695
    %v4215 = vpow.pop %v4214
    %v4216 = vmul.f32 %v3871, 1.442695
    %v4217 = vpow.pop %v4216
    %v4218 = vmul.f32 %v3872, 1.442695
    %v4219 = vpow.pop %v4218
    %v4220 = vmul.f32 %v3873, 1.442695
    %v4221 = vpow.pop %v4220
    %v4222 = vmul.f32 %v3874, 1.442695
    %v4223 = vpow.pop %v4222
    %v4224 = vmul.f32 %v3875, 1.442695
    %v4225 = vpow.pop %v4224
    %v4226 = vmul.f32 %v3876, 1.442695
    %v4227 = vpow.pop %v4226
    %v4228 = vmul.f32 %v3877, 1.442695
    %v4229 = vpow.pop %v4228
    %v4230 = vmul.f32 %v3878, 1.442695
    %v4231 = vpow.pop %v4230
    %v4232 = vmul.f32 %v3879, 1.442695
    %v4233 = vpow.pop %v4232
    %v4234 = vmul.f32 %v3880, 1.442695
    %v4235 = vpow.pop %v4234
    %v4236 = vmul.f32 %v3881, 1.442695
    %v4237 = vpow.pop %v4236
    %v4238 = vmul.f32 %v3882, 1.442695
    %v4239 = vpow.pop %v4238
    %v4240 = vmul.f32 %v3883, 1.442695
    %v4241 = vpow.pop %v4240
    %v4242 = vmul.f32 %v3884, 1.442695
    %v4243 = vpow.pop %v4242
    %v4244 = vmul.f32 %v3885, 1.442695
    %v4245 = vpow.pop %v4244
    %v4246 = vmul.f32 %v3886, 1.442695
    %v4247 = vpow.pop %v4246
    %v4248 = vmul.f32 %v3887, 1.442695
    %v4249 = vpow.pop %v4248
    %v4250 = vmul.f32 %v3888, 1.442695
    %v4251 = vpow.pop %v4250
    %v4252 = vmul.f32 %v3889, 1.442695
    %v4253 = vpow.pop %v4252
    %v4254 = vmul.f32 %v3890, 1.442695
    %v4255 = vpow.pop %v4254
    %v4256 = vmul.f32 %v3891, 1.442695
    %v4257 = vpow.pop %v4256
    %v4258 = vmul.f32 %v3892, 1.442695
    %v4259 = vpow.pop %v4258
    %v4260 = vmul.f32 %v3893, 1.442695
    %v4261 = vpow.pop %v4260
    %v4262 = vmul.f32 %v3894, 1.442695
    %v4263 = vpow.pop %v4262
    %v4264 = vmul.f32 %v3895, 1.442695
    %v4265 = vpow.pop %v4264
    %v4266 = vmul.f32 %v3896, 1.442695
    %v4267 = vpow.pop %v4266
    %v4268 = vmul.f32 %v3897, 1.442695
    %v4269 = vpow.pop %v4268
    %v4270 = vmul.f32 %v3898, 1.442695
    %v4271 = vpow.pop %v4270
    %v4272 = vmul.f32 %v3899, 1.442695
    %v4273 = vpow.pop %v4272
    %v4274 = vmul.f32 %v3900, 1.442695
    %v4275 = vpow.pop %v4274
    %v4276 = vmul.f32 %v3901, 1.442695
    %v4277 = vpow.pop %v4276
    %v4278 = vmul.f32 %v3902, 1.442695
    %v4279 = vpow.pop %v4278
    %v4280 = vmul.f32 %v3903, 1.442695
    %v4281 = vpow.pop %v4280
    %v4282 = vmul.f32 %v3904, 1.442695
    %v4283 = vpow.pop %v4282
    %v4284 = vmul.f32 %v3905, 1.442695
    %v4285 = vpow.pop %v4284
    %v4286 = vmul.f32 %v3906, 1.442695
    %v4287 = vpow.pop %v4286
    %v4288 = vmul.f32 %v3907, 1.442695
    %v4289 = vpow.pop %v4288
    %v4290 = vmul.f32 %v3908, 1.442695
    %v4291 = vpow.pop %v4290
    %v4292 = vmul.f32 %v3909, 1.442695
    %v4293 = vpow.pop %v4292
    %v4294 = vmul.f32 %v3910, 1.442695
    %v4295 = vpow.pop %v4294
    %v4296 = vmul.f32 %v3911, 1.442695
    %v4297 = vpow.pop %v4296
    %v4298 = vmul.f32 %v3912, 1.442695
    %v4299 = vpow.pop %v4298
    %v4300 = vmul.f32 %v3913, 1.442695
    %v4301 = vpow.pop %v4300
    %v4302 = vmul.f32 %v3914, 1.442695
    %v4303 = vpow.pop %v4302
    %v4304 = vmul.f32 %v3915, 1.442695
    %v4305 = vpow.pop %v4304
    %v4306 = vmul.f32 %v3916, 1.442695
    %v4307 = vpow.pop %v4306
    %v4308 = vmul.f32 %v3917, 1.442695
    %v4309 = vpow.pop %v4308
    %v4310 = vmul.f32 %v3918, 1.442695
    %v4311 = vpow.pop %v4310
    %v4312 = vmul.f32 %v3919, 1.442695
    %v4313 = vpow.pop %v4312
    %v4314 = vmul.f32 %v3920, 1.442695
    %v4315 = vpow.pop %v4314
    %v4316 = vmul.f32 %v3921, 1.442695
    %v4317 = vpow.pop %v4316
    %v4318 = vmul.f32 %v3922, 1.442695
    %v4319 = vpow.pop %v4318
    %v4320 = vmul.f32 %v3923, 1.442695
    %v4321 = vpow.pop %v4320
    %v4322 = vmul.f32 %v3924, 1.442695
    %v4323 = vpow.pop %v4322
    %v4324 = vmul.f32 %v3925, 1.442695
    %v4325 = vpow.pop %v4324
    %v4326 = vmul.f32 %v3926, 1.442695
    %v4327 = vpow.pop %v4326
    %v4328 = vmul.f32 %v3927, 1.442695
    %v4329 = vpow.pop %v4328
    %v4330 = vmul.f32 %v3928, 1.442695
    %v4331 = vpow.pop %v4330
    %v4332 = vmul.f32 %v3929, 1.442695
    %v4333 = vpow.pop %v4332
    %v4334 = vmul.f32 %v3930, 1.442695
    %v4335 = vpow.pop %v4334
    %v4336 = vmul.f32 %v3931, 1.442695
    %v4337 = vpow.pop %v4336
    %v4338 = vmul.f32 %v3932, 1.442695
    %v4339 = vpow.pop %v4338
    %v4340 = vmul.f32 %v3933, 1.442695
    %v4341 = vpow.pop %v4340
    %v4342 = vmul.f32 %v3934, 1.442695
    %v4343 = vpow.pop %v4342
    %v4344 = vmul.f32 %v3935, 1.442695
    %v4345 = vpow.pop %v4344
    %v4346 = vmul.f32 %v3936, 1.442695
    %v4347 = vpow.pop %v4346
    %v4348 = vmul.f32 %v3937, 1.442695
    %v4349 = vpow.pop %v4348
    %v4350 = vmul.f32 %v3938, 1.442695
    %v4351 = vpow.pop %v4350
    %v4352 = vmul.f32 %v3939, 1.442695
    %v4353 = vpow.pop %v4352
    %v4354 = vmul.f32 %v3940, 1.442695
    %v4355 = vpow.pop %v4354
    %v4356 = vmul.f32 %v3941, 1.442695
    %v4357 = vpow.pop %v4356
    %v4358 = vmul.f32 %v3942, 1.442695
    %v4359 = vpow.pop %v4358
    %v4360 = vmul.f32 %v3943, 1.442695
    %v4361 = vpow.pop %v4360
    %v4362 = vmul.f32 %v3944, 1.442695
    %v4363 = vpow.pop %v4362
    %v4364 = vmul.f32 %v3945, 1.442695
    %v4365 = vpow.pop %v4364
    %v4366 = vmul.f32 %v3946, 1.442695
    %v4367 = vpow.pop %v4366
    %v4368 = vmul.f32 %v3947, 1.442695
    %v4369 = vpow.pop %v4368
    %v4370 = vmul.f32 %v3948, 1.442695
    %v4371 = vpow.pop %v4370
    %v4372 = vmul.f32 %v3949, 1.442695
    %v4373 = vpow.pop %v4372
    %v4374 = vmul.f32 %v3950, 1.442695
    %v4375 = vpow.pop %v4374
    %v4376 = vmul.f32 %v3951, 1.442695
    %v4377 = vpow.pop %v4376
    %v4378 = vmul.f32 %v3952, 1.442695
    %v4379 = vpow.pop %v4378
    %v4380 = vmul.f32 %v3953, 1.442695
    %v4381 = vpow.pop %v4380
    %v4382 = vmul.f32 %v3954, 1.442695
    %v4383 = vpow.pop %v4382
    %v4384 = vmul.f32 %v3955, 1.442695
    %v4385 = vpow.pop %v4384
    %v4386 = vmul.f32 %v3956, 1.442695
    %v4387 = vpow.pop %v4386
    %v4388 = vmul.f32 %v3957, 1.442695
    %v4389 = vpow.pop %v4388
    %v4390 = vmul.f32 %v3958, 1.442695
    %v4391 = vpow.pop %v4390
    %v4392 = vmul.f32 %v3959, 1.442695
    %v4393 = vpow.pop %v4392
    %v4394 = vmul.f32 %v3960, 1.442695
    %v4395 = vpow.pop %v4394
    %v4396 = vmul.f32 %v3961, 1.442695
    %v4397 = vpow.pop %v4396
    %v4398 = vmul.f32 %v3962, 1.442695
    %v4399 = vpow.pop %v4398
    %v4400 = vmul.f32 %v3963, 1.442695
    %v4401 = vpow.pop %v4400
    %v4402 = vmul.f32 %v3964, 1.442695
    %v4403 = vpow.pop %v4402
    %v4404 = vmul.f32 %v3965, 1.442695
    %v4405 = vpow.pop %v4404
    %v4406 = vmul.f32 %v3966, 1.442695
    %v4407 = vpow.pop %v4406
    %v4408 = vmul.f32 %v3967, 1.442695
    %v4409 = vpow.pop %v4408
    %v4410 = vmul.f32 %v3968, 1.442695
    %v4411 = vpow.pop %v4410
    %v4412 = vmul.f32 %v3969, 1.442695
    %v4413 = vpow.pop %v4412
    %v4414 = vmul.f32 %v3970, 1.442695
    %v4415 = vpow.pop %v4414
    %v4416 = vmul.f32 %v3971, 1.442695
    %v4417 = vpow.pop %v4416
    %v4418 = vmul.f32 %v3972, 1.442695
    %v4419 = vpow.pop %v4418
    %v4420 = vmul.f32 %v3973, 1.442695
    %v4421 = vpow.pop %v4420
    %v4422 = vmul.f32 %v3974, 1.442695
    %v4423 = vpow.pop %v4422
    %v4424 = vmul.f32 %v3975, 1.442695
    %v4425 = vpow.pop %v4424
    %v4426 = vmul.f32 %v3976, 1.442695
    %v4427 = vpow.pop %v4426
    %v4428 = vmul.f32 %v3977, 1.442695
    %v4429 = vpow.pop %v4428
    %v4430 = vmul.f32 %v3978, 1.442695
    %v4431 = vpow.pop %v4430
    %v4432 = vmul.f32 %v3979, 1.442695
    %v4433 = vpow.pop %v4432
    %v4434 = vmul.f32 %v3980, 1.442695
    %v4435 = vpow.pop %v4434
    %v4436 = vmul.f32 %v3981, 1.442695
    %v4437 = vpow.pop %v4436
    %v4438 = vmul.f32 %v3982, 1.442695
    %v4439 = vpow.pop %v4438
    %v4440 = vmul.f32 %v3983, 1.442695
    %v4441 = vpow.pop %v4440
    %v4442 = vmul.f32 %v3984, 1.442695
    %v4443 = vpow.pop %v4442
    %v4444 = vmul.f32 %v3985, 1.442695
    %v4445 = vpow.pop %v4444
    %v4446 = vmul.f32 %v3986, 1.442695
    %v4447 = vpow.pop %v4446
    %v4448 = vmul.f32 %v3987, 1.442695
    %v4449 = vpow.pop %v4448
    %v4450 = vmul.f32 %v3988, 1.442695
    %v4451 = vpow.pop %v4450
    %v4452 = vmul.f32 %v3989, 1.442695
    %v4453 = vpow.pop %v4452
    %v4454 = vmul.f32 %v3990, 1.442695
    %v4455 = vpow.pop %v4454
    %v4456 = vmul.f32 %v3991, 1.442695
    %v4457 = vpow.pop %v4456
    %v4458 = vmul.f32 %v3992, 1.442695
    %v4459 = vpow.pop %v4458
    %v4460 = vmul.f32 %v3993, 1.442695
    %v4461 = vpow.pop %v4460
    %v4462 = vmul.f32 %v3994, 1.442695
    %v4463 = vpow.pop %v4462
    %v4464 = vmul.f32 %v3995, 1.442695
    %v4465 = vpow.pop %v4464
    %v4466 = vmul.f32 %v3996, 1.442695
    %v4467 = vpow.pop %v4466
    %v4468 = vmul.f32 %v3997, 1.442695
    %v4469 = vpow.pop %v4468
    %v4470 = vmul.f32 %v3998, 1.442695
    %v4471 = vpow.pop %v4470
    %v4472 = vmul.f32 %v3999, 1.442695
    %v4473 = vpow.pop %v4472
    %v4474 = vmul.f32 %v4000, 1.442695
    %v4475 = vpow.pop %v4474
    %v4476 = vmul.f32 %v4001, 1.442695
    %v4477 = vpow.pop %v4476
    %v4478 = vmul.f32 %v4002, 1.442695
    %v4479 = vpow.pop %v4478
    %v4480 = vmul.f32 %v4003, 1.442695
    %v4481 = vpow.pop %v4480
    %v4482 = vmul.f32 %v4004, 1.442695
    %v4483 = vpow.pop %v4482
    %v4484 = vmul.f32 %v4005, 1.442695
    %v4485 = vpow.pop %v4484
    %v4486 = vmul.f32 %v4006, 1.442695
    %v4487 = vpow.pop %v4486
    %v4488 = vmul.f32 %v4007, 1.442695
    %v4489 = vpow.pop %v4488
    %v4490 = vmul.f32 %v4008, 1.442695
    %v4491 = vpow.pop %v4490
    %v4492 = vmul.f32 %v4009, 1.442695
    %v4493 = vpow.pop %v4492
    %v4494 = vmul.f32 %v4010, 1.442695
    %v4495 = vpow.pop %v4494
    %v4496 = vmul.f32 %v4011, 1.442695
    %v4497 = vpow.pop %v4496
    %v4498 = vmul.f32 %v4012, 1.442695
    %v4499 = vpow.pop %v4498
    %v4500 = vmul.f32 %v4013, 1.442695
    %v4501 = vpow.pop %v4500
    %v4502 = vmul.f32 %v4014, 1.442695
    %v4503 = vpow.pop %v4502
    %v4504 = vmul.f32 %v4015, 1.442695
    %v4505 = vpow.pop %v4504
    %v4506 = vmul.f32 %v4016, 1.442695
    %v4507 = vpow.pop %v4506
    %v4508 = vmul.f32 %v4017, 1.442695
    %v4509 = vpow.pop %v4508
    %v4510 = vmul.f32 %v4018, 1.442695
    %v4511 = vpow.pop %v4510
    %v4512 = vmul.f32 %v4019, 1.442695
    %v4513 = vpow.pop %v4512
    %v4514 = vmul.f32 %v4020, 1.442695
    %v4515 = vpow.pop %v4514
    %v4516 = vmul.f32 %v4021, 1.442695
    %v4517 = vpow.pop %v4516
    %v4518 = vmul.f32 %v4022, 1.442695
    %v4519 = vpow.pop %v4518
    %v4520 = vmul.f32 %v4023, 1.442695
    %v4521 = vpow.pop %v4520
    %v4522 = vmul.f32 %v4024, 1.442695
    %v4523 = vpow.pop %v4522
    %v4524 = vmul.f32 %v4025, 1.442695
    %v4525 = vpow.pop %v4524
    %v4526 = vmul.f32 %v4026, 1.442695
    %v4527 = vpow.pop %v4526
    %v4528 = vmul.f32 %v4027, 1.442695
    %v4529 = vpow.pop %v4528
    %v4530 = vmul.f32 %v4028, 1.442695
    %v4531 = vpow.pop %v4530
    %v4532 = vmul.f32 %v4029, 1.442695
    %v4533 = vpow.pop %v4532
    %v4534 = vmul.f32 %v4030, 1.442695
    %v4535 = vpow.pop %v4534
    %v4536 = vmul.f32 %v4031, 1.442695
    %v4537 = vpow.pop %v4536
    %v4538 = vmul.f32 %v4032, 1.442695
    %v4539 = vpow.pop %v4538
    %v4540 = vmul.f32 %v4033, 1.442695
    %v4541 = vpow.pop %v4540
    %v4542 = vmul.f32 %v4034, 1.442695
    %v4543 = vpow.pop %v4542
    %v4544 = vmul.f32 %v4035, 1.442695
    %v4545 = vpow.pop %v4544
    %v4546 = vmul.f32 %v4036, 1.442695
    %v4547 = vpow.pop %v4546
    %v4548 = vmul.f32 %v4037, 1.442695
    %v4549 = vpow.pop %v4548
    %v4550 = vadd.f32 %v4039, %v4043
    %v4551 = vadd.f32 %v4550, %v4047
    %v4552 = vadd.f32 %v4551, %v4051
    %v4553 = vadd.f32 %v4552, %v4055
    %v4554 = vadd.f32 %v4553, %v4059
    %v4555 = vadd.f32 %v4554, %v4063
    %v4556 = vadd.f32 %v4555, %v4067
    %v4557 = vadd.f32 %v4556, %v4071
    %v4558 = vadd.f32 %v4557, %v4075
    %v4559 = vadd.f32 %v4558, %v4079
    %v4560 = vadd.f32 %v4559, %v4083
    %v4561 = vadd.f32 %v4560, %v4087
    %v4562 = vadd.f32 %v4561, %v4091
    %v4563 = vadd.f32 %v4562, %v4095
    %v4564 = vadd.f32 %v4563, %v4099
    %v4565 = vrot.slane %v4564, 4
    %v4566 = vadd.f32 %v4564, %v4565
    %v4567 = vrot.slane %v4566, 2
    %v4568 = vadd.f32 %v4566, %v4567
    %v4569 = vrot.slane %v4568, 1
    %v4570 = vadd.f32 %v4568, %v4569
    %v4571 = vadd.f32 %v4041, %v4045
    %v4572 = vadd.f32 %v4571, %v4049
    %v4573 = vadd.f32 %v4572, %v4053
    %v4574 = vadd.f32 %v4573, %v4057
    %v4575 = vadd.f32 %v4574, %v4061
    %v4576 = vadd.f32 %v4575, %v4065
    %v4577 = vadd.f32 %v4576, %v4069
    %v4578 = vadd.f32 %v4577, %v4073
    %v4579 = vadd.f32 %v4578, %v4077
    %v4580 = vadd.f32 %v4579, %v4081
    %v4581 = vadd.f32 %v4580, %v4085
    %v4582 = vadd.f32 %v4581, %v4089
    %v4583 = vadd.f32 %v4582, %v4093
    %v4584 = vadd.f32 %v4583, %v4097
    %v4585 = vadd.f32 %v4584, %v4101
    %v4586 = vrot.slane %v4585, 4
    %v4587 = vadd.f32 %v4585, %v4586
    %v4588 = vrot.slane %v4587, 2
    %v4589 = vadd.f32 %v4587, %v4588
    %v4590 = vrot.slane %v4589, 1
    %v4591 = vadd.f32 %v4589, %v4590
    %v4592 = vadd.f32 %v4103, %v4107
    %v4593 = vadd.f32 %v4592, %v4111
    %v4594 = vadd.f32 %v4593, %v4115
    %v4595 = vadd.f32 %v4594, %v4119
    %v4596 = vadd.f32 %v4595, %v4123
    %v4597 = vadd.f32 %v4596, %v4127
    %v4598 = vadd.f32 %v4597, %v4131
    %v4599 = vadd.f32 %v4598, %v4135
    %v4600 = vadd.f32 %v4599, %v4139
    %v4601 = vadd.f32 %v4600, %v4143
    %v4602 = vadd.f32 %v4601, %v4147
    %v4603 = vadd.f32 %v4602, %v4151
    %v4604 = vadd.f32 %v4603, %v4155
    %v4605 = vadd.f32 %v4604, %v4159
    %v4606 = vadd.f32 %v4605, %v4163
    %v4607 = vrot.slane %v4606, 4
    %v4608 = vadd.f32 %v4606, %v4607
    %v4609 = vrot.slane %v4608, 2
    %v4610 = vadd.f32 %v4608, %v4609
    %v4611 = vrot.slane %v4610, 1
    %v4612 = vadd.f32 %v4610, %v4611
    %v4613 = vadd.f32 %v4105, %v4109
    %v4614 = vadd.f32 %v4613, %v4113
    %v4615 = vadd.f32 %v4614, %v4117
    %v4616 = vadd.f32 %v4615, %v4121
    %v4617 = vadd.f32 %v4616, %v4125
    %v4618 = vadd.f32 %v4617, %v4129
    %v4619 = vadd.f32 %v4618, %v4133
    %v4620 = vadd.f32 %v4619, %v4137
    %v4621 = vadd.f32 %v4620, %v4141
    %v4622 = vadd.f32 %v4621, %v4145
    %v4623 = vadd.f32 %v4622, %v4149
    %v4624 = vadd.f32 %v4623, %v4153
    %v4625 = vadd.f32 %v4624, %v4157
    %v4626 = vadd.f32 %v4625, %v4161
    %v4627 = vadd.f32 %v4626, %v4165
    %v4628 = vrot.slane %v4627, 4
    %v4629 = vadd.f32 %v4627, %v4628
    %v4630 = vrot.slane %v4629, 2
    %v4631 = vadd.f32 %v4629, %v4630
    %v4632 = vrot.slane %v4631, 1
    %v4633 = vadd.f32 %v4631, %v4632
    %v4634 = vadd.f32 %v4167, %v4171
    %v4635 = vadd.f32 %v4634, %v4175
    %v4636 = vadd.f32 %v4635, %v4179
    %v4637 = vadd.f32 %v4636, %v4183
    %v4638 = vadd.f32 %v4637, %v4187
    %v4639 = vadd.f32 %v4638, %v4191
    %v4640 = vadd.f32 %v4639, %v4195
    %v4641 = vadd.f32 %v4640, %v4199
    %v4642 = vadd.f32 %v4641, %v4203
    %v4643 = vadd.f32 %v4642, %v4207
    %v4644 = vadd.f32 %v4643, %v4211
    %v4645 = vadd.f32 %v4644, %v4215
    %v4646 = vadd.f32 %v4645, %v4219
    %v4647 = vadd.f32 %v4646, %v4223
    %v4648 = vadd.f32 %v4647, %v4227
    %v4649 = vrot.slane %v4648, 4
    %v4650 = vadd.f32 %v4648, %v4649
    %v4651 = vrot.slane %v4650, 2
    %v4652 = vadd.f32 %v4650, %v4651
    %v4653 = vrot.slane %v4652, 1
    %v4654 = vadd.f32 %v4652, %v4653
    %v4655 = vadd.f32 %v4169, %v4173
    %v4656 = vadd.f32 %v4655, %v4177
    %v4657 = vadd.f32 %v4656, %v4181
    %v4658 = vadd.f32 %v4657, %v4185
    %v4659 = vadd.f32 %v4658, %v4189
    %v4660 = vadd.f32 %v4659, %v4193
    %v4661 = vadd.f32 %v4660, %v4197
    %v4662 = vadd.f32 %v4661, %v4201
    %v4663 = vadd.f32 %v4662, %v4205
    %v4664 = vadd.f32 %v4663, %v4209
    %v4665 = vadd.f32 %v4664, %v4213
    %v4666 = vadd.f32 %v4665, %v4217
    %v4667 = vadd.f32 %v4666, %v4221
    %v4668 = vadd.f32 %v4667, %v4225
    %v4669 = vadd.f32 %v4668, %v4229
    %v4670 = vrot.slane %v4669, 4
    %v4671 = vadd.f32 %v4669, %v4670
    %v4672 = vrot.slane %v4671, 2
    %v4673 = vadd.f32 %v4671, %v4672
    %v4674 = vrot.slane %v4673, 1
    %v4675 = vadd.f32 %v4673, %v4674
    %v4676 = vadd.f32 %v4231, %v4235
    %v4677 = vadd.f32 %v4676, %v4239
    %v4678 = vadd.f32 %v4677, %v4243
    %v4679 = vadd.f32 %v4678, %v4247
    %v4680 = vadd.f32 %v4679, %v4251
    %v4681 = vadd.f32 %v4680, %v4255
    %v4682 = vadd.f32 %v4681, %v4259
    %v4683 = vadd.f32 %v4682, %v4263
    %v4684 = vadd.f32 %v4683, %v4267
    %v4685 = vadd.f32 %v4684, %v4271
    %v4686 = vadd.f32 %v4685, %v4275
    %v4687 = vadd.f32 %v4686, %v4279
    %v4688 = vadd.f32 %v4687, %v4283
    %v4689 = vadd.f32 %v4688, %v4287
    %v4690 = vadd.f32 %v4689, %v4291
    %v4691 = vrot.slane %v4690, 4
    %v4692 = vadd.f32 %v4690, %v4691
    %v4693 = vrot.slane %v4692, 2
    %v4694 = vadd.f32 %v4692, %v4693
    %v4695 = vrot.slane %v4694, 1
    %v4696 = vadd.f32 %v4694, %v4695
    %v4697 = vadd.f32 %v4233, %v4237
    %v4698 = vadd.f32 %v4697, %v4241
    %v4699 = vadd.f32 %v4698, %v4245
    %v4700 = vadd.f32 %v4699, %v4249
    %v4701 = vadd.f32 %v4700, %v4253
    %v4702 = vadd.f32 %v4701, %v4257
    %v4703 = vadd.f32 %v4702, %v4261
    %v4704 = vadd.f32 %v4703, %v4265
    %v4705 = vadd.f32 %v4704, %v4269
    %v4706 = vadd.f32 %v4705, %v4273
    %v4707 = vadd.f32 %v4706, %v4277
    %v4708 = vadd.f32 %v4707, %v4281
    %v4709 = vadd.f32 %v4708, %v4285
    %v4710 = vadd.f32 %v4709, %v4289
    %v4711 = vadd.f32 %v4710, %v4293
    %v4712 = vrot.slane %v4711, 4
    %v4713 = vadd.f32 %v4711, %v4712
    %v4714 = vrot.slane %v4713, 2
    %v4715 = vadd.f32 %v4713, %v4714
    %v4716 = vrot.slane %v4715, 1
    %v4717 = vadd.f32 %v4715, %v4716
    %v4718 = vadd.f32 %v4295, %v4299
    %v4719 = vadd.f32 %v4718, %v4303
    %v4720 = vadd.f32 %v4719, %v4307
    %v4721 = vadd.f32 %v4720, %v4311
    %v4722 = vadd.f32 %v4721, %v4315
    %v4723 = vadd.f32 %v4722, %v4319
    %v4724 = vadd.f32 %v4723, %v4323
    %v4725 = vadd.f32 %v4724, %v4327
    %v4726 = vadd.f32 %v4725, %v4331
    %v4727 = vadd.f32 %v4726, %v4335
    %v4728 = vadd.f32 %v4727, %v4339
    %v4729 = vadd.f32 %v4728, %v4343
    %v4730 = vadd.f32 %v4729, %v4347
    %v4731 = vadd.f32 %v4730, %v4351
    %v4732 = vadd.f32 %v4731, %v4355
    %v4733 = vrot.slane %v4732, 4
    %v4734 = vadd.f32 %v4732, %v4733
    %v4735 = vrot.slane %v4734, 2
    %v4736 = vadd.f32 %v4734, %v4735
    %v4737 = vrot.slane %v4736, 1
    %v4738 = vadd.f32 %v4736, %v4737
    %v4739 = vadd.f32 %v4297, %v4301
    %v4740 = vadd.f32 %v4739, %v4305
    %v4741 = vadd.f32 %v4740, %v4309
    %v4742 = vadd.f32 %v4741, %v4313
    %v4743 = vadd.f32 %v4742, %v4317
    %v4744 = vadd.f32 %v4743, %v4321
    %v4745 = vadd.f32 %v4744, %v4325
    %v4746 = vadd.f32 %v4745, %v4329
    %v4747 = vadd.f32 %v4746, %v4333
    %v4748 = vadd.f32 %v4747, %v4337
    %v4749 = vadd.f32 %v4748, %v4341
    %v4750 = vadd.f32 %v4749, %v4345
    %v4751 = vadd.f32 %v4750, %v4349
    %v4752 = vadd.f32 %v4751, %v4353
    %v4753 = vadd.f32 %v4752, %v4357
    %v4754 = vrot.slane %v4753, 4
    %v4755 = vadd.f32 %v4753, %v4754
    %v4756 = vrot.slane %v4755, 2
    %v4757 = vadd.f32 %v4755, %v4756
    %v4758 = vrot.slane %v4757, 1
    %v4759 = vadd.f32 %v4757, %v4758
    %v4760 = vadd.f32 %v4359, %v4363
    %v4761 = vadd.f32 %v4760, %v4367
    %v4762 = vadd.f32 %v4761, %v4371
    %v4763 = vadd.f32 %v4762, %v4375
    %v4764 = vadd.f32 %v4763, %v4379
    %v4765 = vadd.f32 %v4764, %v4383
    %v4766 = vadd.f32 %v4765, %v4387
    %v4767 = vadd.f32 %v4766, %v4391
    %v4768 = vadd.f32 %v4767, %v4395
    %v4769 = vadd.f32 %v4768, %v4399
    %v4770 = vadd.f32 %v4769, %v4403
    %v4771 = vadd.f32 %v4770, %v4407
    %v4772 = vadd.f32 %v4771, %v4411
    %v4773 = vadd.f32 %v4772, %v4415
    %v4774 = vadd.f32 %v4773, %v4419
    %v4775 = vrot.slane %v4774, 4
    %v4776 = vadd.f32 %v4774, %v4775
    %v4777 = vrot.slane %v4776, 2
    %v4778 = vadd.f32 %v4776, %v4777
    %v4779 = vrot.slane %v4778, 1
    %v4780 = vadd.f32 %v4778, %v4779
    %v4781 = vadd.f32 %v4361, %v4365
    %v4782 = vadd.f32 %v4781, %v4369
    %v4783 = vadd.f32 %v4782, %v4373
    %v4784 = vadd.f32 %v4783, %v4377
    %v4785 = vadd.f32 %v4784, %v4381
    %v4786 = vadd.f32 %v4785, %v4385
    %v4787 = vadd.f32 %v4786, %v4389
    %v4788 = vadd.f32 %v4787, %v4393
    %v4789 = vadd.f32 %v4788, %v4397
    %v4790 = vadd.f32 %v4789, %v4401
    %v4791 = vadd.f32 %v4790, %v4405
    %v4792 = vadd.f32 %v4791, %v4409
    %v4793 = vadd.f32 %v4792, %v4413
    %v4794 = vadd.f32 %v4793, %v4417
    %v4795 = vadd.f32 %v4794, %v4421
    %v4796 = vrot.slane %v4795, 4
    %v4797 = vadd.f32 %v4795, %v4796
    %v4798 = vrot.slane %v4797, 2
    %v4799 = vadd.f32 %v4797, %v4798
    %v4800 = vrot.slane %v4799, 1
    %v4801 = vadd.f32 %v4799, %v4800
    %v4802 = vadd.f32 %v4423, %v4427
    %v4803 = vadd.f32 %v4802, %v4431
    %v4804 = vadd.f32 %v4803, %v4435
    %v4805 = vadd.f32 %v4804, %v4439
    %v4806 = vadd.f32 %v4805, %v4443
    %v4807 = vadd.f32 %v4806, %v4447
    %v4808 = vadd.f32 %v4807, %v4451
    %v4809 = vadd.f32 %v4808, %v4455
    %v4810 = vadd.f32 %v4809, %v4459
    %v4811 = vadd.f32 %v4810, %v4463
    %v4812 = vadd.f32 %v4811, %v4467
    %v4813 = vadd.f32 %v4812, %v4471
    %v4814 = vadd.f32 %v4813, %v4475
    %v4815 = vadd.f32 %v4814, %v4479
    %v4816 = vadd.f32 %v4815, %v4483
    %v4817 = vrot.slane %v4816, 4
    %v4818 = vadd.f32 %v4816, %v4817
    %v4819 = vrot.slane %v4818, 2
    %v4820 = vadd.f32 %v4818, %v4819
    %v4821 = vrot.slane %v4820, 1
    %v4822 = vadd.f32 %v4820, %v4821
    %v4823 = vadd.f32 %v4425, %v4429
    %v4824 = vadd.f32 %v4823, %v4433
    %v4825 = vadd.f32 %v4824, %v4437
    %v4826 = vadd.f32 %v4825, %v4441
    %v4827 = vadd.f32 %v4826, %v4445
    %v4828 = vadd.f32 %v4827, %v4449
    %v4829 = vadd.f32 %v4828, %v4453
    %v4830 = vadd.f32 %v4829, %v4457
    %v4831 = vadd.f32 %v4830, %v4461
    %v4832 = vadd.f32 %v4831, %v4465
    %v4833 = vadd.f32 %v4832, %v4469
    %v4834 = vadd.f32 %v4833, %v4473
    %v4835 = vadd.f32 %v4834, %v4477
    %v4836 = vadd.f32 %v4835, %v4481
    %v4837 = vadd.f32 %v4836, %v4485
    %v4838 = vrot.slane %v4837, 4
    %v4839 = vadd.f32 %v4837, %v4838
    %v4840 = vrot.slane %v4839, 2
    %v4841 = vadd.f32 %v4839, %v4840
    %v4842 = vrot.slane %v4841, 1
    %v4843 = vadd.f32 %v4841, %v4842
    %v4844 = vadd.f32 %v4487, %v4491
    %v4845 = vadd.f32 %v4844, %v4495
    %v4846 = vadd.f32 %v4845, %v4499
    %v4847 = vadd.f32 %v4846, %v4503
    %v4848 = vadd.f32 %v4847, %v4507
    %v4849 = vadd.f32 %v4848, %v4511
    %v4850 = vadd.f32 %v4849, %v4515
    %v4851 = vadd.f32 %v4850, %v4519
    %v4852 = vadd.f32 %v4851, %v4523
    %v4853 = vadd.f32 %v4852, %v4527
    %v4854 = vadd.f32 %v4853, %v4531
    %v4855 = vadd.f32 %v4854, %v4535
    %v4856 = vadd.f32 %v4855, %v4539
    %v4857 = vadd.f32 %v4856, %v4543
    %v4858 = vadd.f32 %v4857, %v4547
    %v4859 = vrot.slane %v4858, 4
    %v4860 = vadd.f32 %v4858, %v4859
    %v4861 = vrot.slane %v4860, 2
    %v4862 = vadd.f32 %v4860, %v4861
    %v4863 = vrot.slane %v4862, 1
    %v4864 = vadd.f32 %v4862, %v4863
    %v4865 = vadd.f32 %v4489, %v4493
    %v4866 = vadd.f32 %v4865, %v4497
    %v4867 = vadd.f32 %v4866, %v4501
    %v4868 = vadd.f32 %v4867, %v4505
    %v4869 = vadd.f32 %v4868, %v4509
    %v4870 = vadd.f32 %v4869, %v4513
    %v4871 = vadd.f32 %v4870, %v4517
    %v4872 = vadd.f32 %v4871, %v4521
    %v4873 = vadd.f32 %v4872, %v4525
    %v4874 = vadd.f32 %v4873, %v4529
    %v4875 = vadd.f32 %v4874, %v4533
    %v4876 = vadd.f32 %v4875, %v4537
    %v4877 = vadd.f32 %v4876, %v4541
    %v4878 = vadd.f32 %v4877, %v4545
    %v4879 = vadd.f32 %v4878, %v4549
    %v4880 = vrot.slane %v4879, 4
    %v4881 = vadd.f32 %v4879, %v4880
    %v4882 = vrot.slane %v4881, 2
    %v4883 = vadd.f32 %v4881, %v4882
    %v4884 = vrot.slane %v4883, 1
    %v4885 = vadd.f32 %v4883, %v4884
    %v4886 = vadd.f32 %v4570, 0.0
    %v4887 = vadd.f32 %v4591, 0.0
    %v4888 = vadd.f32 %v4612, 0.0
    %v4889 = vadd.f32 %v4633, 0.0
    %v4890 = vadd.f32 %v4654, 0.0
    %v4891 = vadd.f32 %v4675, 0.0
    %v4892 = vadd.f32 %v4696, 0.0
    %v4893 = vadd.f32 %v4717, 0.0
    %v4894 = vadd.f32 %v4738, 0.0
    %v4895 = vadd.f32 %v4759, 0.0
    %v4896 = vadd.f32 %v4780, 0.0
    %v4897 = vadd.f32 %v4801, 0.0
    %v4898 = vadd.f32 %v4822, 0.0
    %v4899 = vadd.f32 %v4843, 0.0
    %v4900 = vadd.f32 %v4864, 0.0
    %v4901 = vadd.f32 %v4885, 0.0
    %v4902 = vld [vmem:[#allocation2 + $0x8] sm:$0xff]
    %v4903 = vld [vmem:[#allocation5 + $0x8] sm:$0xff]
    %v4904 = vround.ne.pseudo %v4903
    %v4905 = vsub.f32 222.5, %v4904
    %v4906 = vmul.f32 %v4905, -50.0
    %v4907 = vmul.f32 %v4906, 1.442695
    %v4908 = vpow.pop %v4907
    %v4909 = vadd.f32 %v4908, 1.0
    %v4910 = vrcp.pop %v4909
    %v4911 = vmul.f32 %v4909, %v4910
    %v4912 = vsub.f32 1.0, %v4911
    %v4913 = vmul.f32 %v4910, %v4912
    %v4914 = vadd.f32 %v4910, %v4913
    %vm4915 = vweird.f32 %v4909
    %vm4916 = vweird.f32 %v4910
    %vm4917 = vmor %vm4915, %vm4916
    %v4918 = vsel %vm4917, %v4910, %v4914
    %v4919 = vand.u32 2147483647, %v4909
    %vm4920 = vcmp.eq.f32.partialorder %v4919, 8.507059e+37
    %v4921 = vand.u32 %v4909, 2147483648
    %v4922 = vor.u32 1.1754944e-38, %v4921
    %v4923 = vsel %vm4920, %v4922, %v4918
    %v4924 = vmul.f32 %v4904, %v4923
    %v4925 = vperm.slane %v4902, 0
    %v4926 = vlaneseq
    %v4927 = vshrl.u32 %v4926, 7
    %4929 = vset.pattern.permute.xlu0 %v4927
    %4930 = vperm.xlu0 %4929, %v4925
    %v4931 = vpop.permute.xlu0 %4930
    %v4932 = vlaneseq
    %v4933 = vshrl.u32 %v4932, 7
    %v4934 = vadd.s32 %v4933, 8
    %4935 = vset.pattern.permute.xlu0 %v4934
    %4936 = vperm.xlu0 %4935, %v4925
    %v4937 = vpop.permute.xlu0 %4936
    %v4938 = vlaneseq
    %v4939 = vshrl.u32 %v4938, 7
    %v4940 = vadd.s32 %v4939, 16
    %4941 = vset.pattern.permute.xlu0 %v4940
    %4942 = vperm.xlu0 %4941, %v4925
    %v4943 = vpop.permute.xlu0 %4942
    %v4944 = vlaneseq
    %v4945 = vshrl.u32 %v4944, 7
    %v4946 = vadd.s32 %v4945, 24
    %4947 = vset.pattern.permute.xlu0 %v4946
    %4948 = vperm.xlu0 %4947, %v4925
    %v4949 = vpop.permute.xlu0 %4948
    %v4950 = vlaneseq
    %v4951 = vshrl.u32 %v4950, 7
    %v4952 = vadd.s32 %v4951, 32
    %4953 = vset.pattern.permute.xlu0 %v4952
    %4954 = vperm.xlu0 %4953, %v4925
    %v4955 = vpop.permute.xlu0 %4954
    %v4956 = vlaneseq
    %v4957 = vshrl.u32 %v4956, 7
    %v4958 = vadd.s32 %v4957, 40
    %4959 = vset.pattern.permute.xlu0 %v4958
    %4960 = vperm.xlu0 %4959, %v4925
    %v4961 = vpop.permute.xlu0 %4960
    %v4962 = vlaneseq
    %v4963 = vshrl.u32 %v4962, 7
    %v4964 = vadd.s32 %v4963, 48
    %4965 = vset.pattern.permute.xlu0 %v4964
    %4966 = vperm.xlu0 %4965, %v4925
    %v4967 = vpop.permute.xlu0 %4966
    %v4968 = vlaneseq
    %v4969 = vshrl.u32 %v4968, 7
    %v4970 = vadd.s32 %v4969, 56
    %4971 = vset.pattern.permute.xlu0 %v4970
    %4972 = vperm.xlu0 %4971, %v4925
    %v4973 = vpop.permute.xlu0 %4972
    %v4974 = vlaneseq
    %v4975 = vshrl.u32 %v4974, 7
    %v4976 = vadd.s32 %v4975, 64
    %4977 = vset.pattern.permute.xlu0 %v4976
    %4978 = vperm.xlu0 %4977, %v4925
    %v4979 = vpop.permute.xlu0 %4978
    %v4980 = vlaneseq
    %v4981 = vshrl.u32 %v4980, 7
    %v4982 = vadd.s32 %v4981, 72
    %4983 = vset.pattern.permute.xlu0 %v4982
    %4984 = vperm.xlu0 %4983, %v4925
    %v4985 = vpop.permute.xlu0 %4984
    %v4986 = vlaneseq
    %v4987 = vshrl.u32 %v4986, 7
    %v4988 = vadd.s32 %v4987, 80
    %4989 = vset.pattern.permute.xlu0 %v4988
    %4990 = vperm.xlu0 %4989, %v4925
    %v4991 = vpop.permute.xlu0 %4990
    %v4992 = vlaneseq
    %v4993 = vshrl.u32 %v4992, 7
    %v4994 = vadd.s32 %v4993, 88
    %4995 = vset.pattern.permute.xlu0 %v4994
    %4996 = vperm.xlu0 %4995, %v4925
    %v4997 = vpop.permute.xlu0 %4996
    %v4998 = vlaneseq
    %v4999 = vshrl.u32 %v4998, 7
    %v5000 = vadd.s32 %v4999, 96
    %5001 = vset.pattern.permute.xlu0 %v5000
    %5002 = vperm.xlu0 %5001, %v4925
    %v5003 = vpop.permute.xlu0 %5002
    %v5004 = vlaneseq
    %v5005 = vshrl.u32 %v5004, 7
    %v5006 = vadd.s32 %v5005, 104
    %5007 = vset.pattern.permute.xlu0 %v5006
    %5008 = vperm.xlu0 %5007, %v4925
    %v5009 = vpop.permute.xlu0 %5008
    %v5010 = vlaneseq
    %v5011 = vshrl.u32 %v5010, 7
    %v5012 = vadd.s32 %v5011, 112
    %5013 = vset.pattern.permute.xlu0 %v5012
    %5014 = vperm.xlu0 %5013, %v4925
    %v5015 = vpop.permute.xlu0 %5014
    %v5016 = vlaneseq
    %v5017 = vshrl.u32 %v5016, 7
    %v5018 = vadd.s32 %v5017, 120
    %5019 = vset.pattern.permute.xlu0 %v5018
    %5020 = vperm.xlu0 %5019, %v4925
    %v5021 = vpop.permute.xlu0 %5020
    %v5022 = vperm.slane %v4902, 1
    %v5023 = vlaneseq
    %v5024 = vshrl.u32 %v5023, 7
    %5026 = vset.pattern.permute.xlu0 %v5024
    %5027 = vperm.xlu0 %5026, %v5022
    %v5028 = vpop.permute.xlu0 %5027
    %v5029 = vlaneseq
    %v5030 = vshrl.u32 %v5029, 7
    %v5031 = vadd.s32 %v5030, 8
    %5032 = vset.pattern.permute.xlu0 %v5031
    %5033 = vperm.xlu0 %5032, %v5022
    %v5034 = vpop.permute.xlu0 %5033
    %v5035 = vlaneseq
    %v5036 = vshrl.u32 %v5035, 7
    %v5037 = vadd.s32 %v5036, 16
    %5038 = vset.pattern.permute.xlu0 %v5037
    %5039 = vperm.xlu0 %5038, %v5022
    %v5040 = vpop.permute.xlu0 %5039
    %v5041 = vlaneseq
    %v5042 = vshrl.u32 %v5041, 7
    %v5043 = vadd.s32 %v5042, 24
    %5044 = vset.pattern.permute.xlu0 %v5043
    %5045 = vperm.xlu0 %5044, %v5022
    %v5046 = vpop.permute.xlu0 %5045
    %v5047 = vlaneseq
    %v5048 = vshrl.u32 %v5047, 7
    %v5049 = vadd.s32 %v5048, 32
    %5050 = vset.pattern.permute.xlu0 %v5049
    %5051 = vperm.xlu0 %5050, %v5022
    %v5052 = vpop.permute.xlu0 %5051
    %v5053 = vlaneseq
    %v5054 = vshrl.u32 %v5053, 7
    %v5055 = vadd.s32 %v5054, 40
    %5056 = vset.pattern.permute.xlu0 %v5055
    %5057 = vperm.xlu0 %5056, %v5022
    %v5058 = vpop.permute.xlu0 %5057
    %v5059 = vlaneseq
    %v5060 = vshrl.u32 %v5059, 7
    %v5061 = vadd.s32 %v5060, 48
    %5062 = vset.pattern.permute.xlu0 %v5061
    %5063 = vperm.xlu0 %5062, %v5022
    %v5064 = vpop.permute.xlu0 %5063
    %v5065 = vlaneseq
    %v5066 = vshrl.u32 %v5065, 7
    %v5067 = vadd.s32 %v5066, 56
    %5068 = vset.pattern.permute.xlu0 %v5067
    %5069 = vperm.xlu0 %5068, %v5022
    %v5070 = vpop.permute.xlu0 %5069
    %v5071 = vlaneseq
    %v5072 = vshrl.u32 %v5071, 7
    %v5073 = vadd.s32 %v5072, 64
    %5074 = vset.pattern.permute.xlu0 %v5073
    %5075 = vperm.xlu0 %5074, %v5022
    %v5076 = vpop.permute.xlu0 %5075
    %v5077 = vlaneseq
    %v5078 = vshrl.u32 %v5077, 7
    %v5079 = vadd.s32 %v5078, 72
    %5080 = vset.pattern.permute.xlu0 %v5079
    %5081 = vperm.xlu0 %5080, %v5022
    %v5082 = vpop.permute.xlu0 %5081
    %v5083 = vlaneseq
    %v5084 = vshrl.u32 %v5083, 7
    %v5085 = vadd.s32 %v5084, 80
    %5086 = vset.pattern.permute.xlu0 %v5085
    %5087 = vperm.xlu0 %5086, %v5022
    %v5088 = vpop.permute.xlu0 %5087
    %v5089 = vlaneseq
    %v5090 = vshrl.u32 %v5089, 7
    %v5091 = vadd.s32 %v5090, 88
    %5092 = vset.pattern.permute.xlu0 %v5091
    %5093 = vperm.xlu0 %5092, %v5022
    %v5094 = vpop.permute.xlu0 %5093
    %v5095 = vlaneseq
    %v5096 = vshrl.u32 %v5095, 7
    %v5097 = vadd.s32 %v5096, 96
    %5098 = vset.pattern.permute.xlu0 %v5097
    %5099 = vperm.xlu0 %5098, %v5022
    %v5100 = vpop.permute.xlu0 %5099
    %v5101 = vlaneseq
    %v5102 = vshrl.u32 %v5101, 7
    %v5103 = vadd.s32 %v5102, 104
    %5104 = vset.pattern.permute.xlu0 %v5103
    %5105 = vperm.xlu0 %5104, %v5022
    %v5106 = vpop.permute.xlu0 %5105
    %v5107 = vlaneseq
    %v5108 = vshrl.u32 %v5107, 7
    %v5109 = vadd.s32 %v5108, 112
    %5110 = vset.pattern.permute.xlu0 %v5109
    %5111 = vperm.xlu0 %5110, %v5022
    %v5112 = vpop.permute.xlu0 %5111
    %v5113 = vlaneseq
    %v5114 = vshrl.u32 %v5113, 7
    %v5115 = vadd.s32 %v5114, 120
    %5116 = vset.pattern.permute.xlu0 %v5115
    %5117 = vperm.xlu0 %5116, %v5022
    %v5118 = vpop.permute.xlu0 %5117
    %v5119 = vperm.slane %v4902, 2
    %v5120 = vlaneseq
    %v5121 = vshrl.u32 %v5120, 7
    %5123 = vset.pattern.permute.xlu0 %v5121
    %5124 = vperm.xlu0 %5123, %v5119
    %v5125 = vpop.permute.xlu0 %5124
    %v5126 = vlaneseq
    %v5127 = vshrl.u32 %v5126, 7
    %v5128 = vadd.s32 %v5127, 8
    %5129 = vset.pattern.permute.xlu0 %v5128
    %5130 = vperm.xlu0 %5129, %v5119
    %v5131 = vpop.permute.xlu0 %5130
    %v5132 = vlaneseq
    %v5133 = vshrl.u32 %v5132, 7
    %v5134 = vadd.s32 %v5133, 16
    %5135 = vset.pattern.permute.xlu0 %v5134
    %5136 = vperm.xlu0 %5135, %v5119
    %v5137 = vpop.permute.xlu0 %5136
    %v5138 = vlaneseq
    %v5139 = vshrl.u32 %v5138, 7
    %v5140 = vadd.s32 %v5139, 24
    %5141 = vset.pattern.permute.xlu0 %v5140
    %5142 = vperm.xlu0 %5141, %v5119
    %v5143 = vpop.permute.xlu0 %5142
    %v5144 = vlaneseq
    %v5145 = vshrl.u32 %v5144, 7
    %v5146 = vadd.s32 %v5145, 32
    %5147 = vset.pattern.permute.xlu0 %v5146
    %5148 = vperm.xlu0 %5147, %v5119
    %v5149 = vpop.permute.xlu0 %5148
    %v5150 = vlaneseq
    %v5151 = vshrl.u32 %v5150, 7
    %v5152 = vadd.s32 %v5151, 40
    %5153 = vset.pattern.permute.xlu0 %v5152
    %5154 = vperm.xlu0 %5153, %v5119
    %v5155 = vpop.permute.xlu0 %5154
    %v5156 = vlaneseq
    %v5157 = vshrl.u32 %v5156, 7
    %v5158 = vadd.s32 %v5157, 48
    %5159 = vset.pattern.permute.xlu0 %v5158
    %5160 = vperm.xlu0 %5159, %v5119
    %v5161 = vpop.permute.xlu0 %5160
    %v5162 = vlaneseq
    %v5163 = vshrl.u32 %v5162, 7
    %v5164 = vadd.s32 %v5163, 56
    %5165 = vset.pattern.permute.xlu0 %v5164
    %5166 = vperm.xlu0 %5165, %v5119
    %v5167 = vpop.permute.xlu0 %5166
    %v5168 = vlaneseq
    %v5169 = vshrl.u32 %v5168, 7
    %v5170 = vadd.s32 %v5169, 64
    %5171 = vset.pattern.permute.xlu0 %v5170
    %5172 = vperm.xlu0 %5171, %v5119
    %v5173 = vpop.permute.xlu0 %5172
    %v5174 = vlaneseq
    %v5175 = vshrl.u32 %v5174, 7
    %v5176 = vadd.s32 %v5175, 72
    %5177 = vset.pattern.permute.xlu0 %v5176
    %5178 = vperm.xlu0 %5177, %v5119
    %v5179 = vpop.permute.xlu0 %5178
    %v5180 = vlaneseq
    %v5181 = vshrl.u32 %v5180, 7
    %v5182 = vadd.s32 %v5181, 80
    %5183 = vset.pattern.permute.xlu0 %v5182
    %5184 = vperm.xlu0 %5183, %v5119
    %v5185 = vpop.permute.xlu0 %5184
    %v5186 = vlaneseq
    %v5187 = vshrl.u32 %v5186, 7
    %v5188 = vadd.s32 %v5187, 88
    %5189 = vset.pattern.permute.xlu0 %v5188
    %5190 = vperm.xlu0 %5189, %v5119
    %v5191 = vpop.permute.xlu0 %5190
    %v5192 = vlaneseq
    %v5193 = vshrl.u32 %v5192, 7
    %v5194 = vadd.s32 %v5193, 96
    %5195 = vset.pattern.permute.xlu0 %v5194
    %5196 = vperm.xlu0 %5195, %v5119
    %v5197 = vpop.permute.xlu0 %5196
    %v5198 = vlaneseq
    %v5199 = vshrl.u32 %v5198, 7
    %v5200 = vadd.s32 %v5199, 104
    %5201 = vset.pattern.permute.xlu0 %v5200
    %5202 = vperm.xlu0 %5201, %v5119
    %v5203 = vpop.permute.xlu0 %5202
    %v5204 = vlaneseq
    %v5205 = vshrl.u32 %v5204, 7
    %v5206 = vadd.s32 %v5205, 112
    %5207 = vset.pattern.permute.xlu0 %v5206
    %5208 = vperm.xlu0 %5207, %v5119
    %v5209 = vpop.permute.xlu0 %5208
    %v5210 = vlaneseq
    %v5211 = vshrl.u32 %v5210, 7
    %v5212 = vadd.s32 %v5211, 120
    %5213 = vset.pattern.permute.xlu0 %v5212
    %5214 = vperm.xlu0 %5213, %v5119
    %v5215 = vpop.permute.xlu0 %5214
    %v5216 = vperm.slane %v4902, 3
    %v5217 = vlaneseq
    %v5218 = vshrl.u32 %v5217, 7
    %5220 = vset.pattern.permute.xlu0 %v5218
    %5221 = vperm.xlu0 %5220, %v5216
    %v5222 = vpop.permute.xlu0 %5221
    %v5223 = vlaneseq
    %v5224 = vshrl.u32 %v5223, 7
    %v5225 = vadd.s32 %v5224, 8
    %5226 = vset.pattern.permute.xlu0 %v5225
    %5227 = vperm.xlu0 %5226, %v5216
    %v5228 = vpop.permute.xlu0 %5227
    %v5229 = vlaneseq
    %v5230 = vshrl.u32 %v5229, 7
    %v5231 = vadd.s32 %v5230, 16
    %5232 = vset.pattern.permute.xlu0 %v5231
    %5233 = vperm.xlu0 %5232, %v5216
    %v5234 = vpop.permute.xlu0 %5233
    %v5235 = vlaneseq
    %v5236 = vshrl.u32 %v5235, 7
    %v5237 = vadd.s32 %v5236, 24
    %5238 = vset.pattern.permute.xlu0 %v5237
    %5239 = vperm.xlu0 %5238, %v5216
    %v5240 = vpop.permute.xlu0 %5239
    %v5241 = vlaneseq
    %v5242 = vshrl.u32 %v5241, 7
    %v5243 = vadd.s32 %v5242, 32
    %5244 = vset.pattern.permute.xlu0 %v5243
    %5245 = vperm.xlu0 %5244, %v5216
    %v5246 = vpop.permute.xlu0 %5245
    %v5247 = vlaneseq
    %v5248 = vshrl.u32 %v5247, 7
    %v5249 = vadd.s32 %v5248, 40
    %5250 = vset.pattern.permute.xlu0 %v5249
    %5251 = vperm.xlu0 %5250, %v5216
    %v5252 = vpop.permute.xlu0 %5251
    %v5253 = vlaneseq
    %v5254 = vshrl.u32 %v5253, 7
    %v5255 = vadd.s32 %v5254, 48
    %5256 = vset.pattern.permute.xlu0 %v5255
    %5257 = vperm.xlu0 %5256, %v5216
    %v5258 = vpop.permute.xlu0 %5257
    %v5259 = vlaneseq
    %v5260 = vshrl.u32 %v5259, 7
    %v5261 = vadd.s32 %v5260, 56
    %5262 = vset.pattern.permute.xlu0 %v5261
    %5263 = vperm.xlu0 %5262, %v5216
    %v5264 = vpop.permute.xlu0 %5263
    %v5265 = vlaneseq
    %v5266 = vshrl.u32 %v5265, 7
    %v5267 = vadd.s32 %v5266, 64
    %5268 = vset.pattern.permute.xlu0 %v5267
    %5269 = vperm.xlu0 %5268, %v5216
    %v5270 = vpop.permute.xlu0 %5269
    %v5271 = vlaneseq
    %v5272 = vshrl.u32 %v5271, 7
    %v5273 = vadd.s32 %v5272, 72
    %5274 = vset.pattern.permute.xlu0 %v5273
    %5275 = vperm.xlu0 %5274, %v5216
    %v5276 = vpop.permute.xlu0 %5275
    %v5277 = vlaneseq
    %v5278 = vshrl.u32 %v5277, 7
    %v5279 = vadd.s32 %v5278, 80
    %5280 = vset.pattern.permute.xlu0 %v5279
    %5281 = vperm.xlu0 %5280, %v5216
    %v5282 = vpop.permute.xlu0 %5281
    %v5283 = vlaneseq
    %v5284 = vshrl.u32 %v5283, 7
    %v5285 = vadd.s32 %v5284, 88
    %5286 = vset.pattern.permute.xlu0 %v5285
    %5287 = vperm.xlu0 %5286, %v5216
    %v5288 = vpop.permute.xlu0 %5287
    %v5289 = vlaneseq
    %v5290 = vshrl.u32 %v5289, 7
    %v5291 = vadd.s32 %v5290, 96
    %5292 = vset.pattern.permute.xlu0 %v5291
    %5293 = vperm.xlu0 %5292, %v5216
    %v5294 = vpop.permute.xlu0 %5293
    %v5295 = vlaneseq
    %v5296 = vshrl.u32 %v5295, 7
    %v5297 = vadd.s32 %v5296, 104
    %5298 = vset.pattern.permute.xlu0 %v5297
    %5299 = vperm.xlu0 %5298, %v5216
    %v5300 = vpop.permute.xlu0 %5299
    %v5301 = vlaneseq
    %v5302 = vshrl.u32 %v5301, 7
    %v5303 = vadd.s32 %v5302, 112
    %5304 = vset.pattern.permute.xlu0 %v5303
    %5305 = vperm.xlu0 %5304, %v5216
    %v5306 = vpop.permute.xlu0 %5305
    %v5307 = vlaneseq
    %v5308 = vshrl.u32 %v5307, 7
    %v5309 = vadd.s32 %v5308, 120
    %5310 = vset.pattern.permute.xlu0 %v5309
    %5311 = vperm.xlu0 %5310, %v5216
    %v5312 = vpop.permute.xlu0 %5311
    %v5313 = vperm.slane %v4902, 4
    %v5314 = vlaneseq
    %v5315 = vshrl.u32 %v5314, 7
    %5317 = vset.pattern.permute.xlu0 %v5315
    %5318 = vperm.xlu0 %5317, %v5313
    %v5319 = vpop.permute.xlu0 %5318
    %v5320 = vlaneseq
    %v5321 = vshrl.u32 %v5320, 7
    %v5322 = vadd.s32 %v5321, 8
    %5323 = vset.pattern.permute.xlu0 %v5322
    %5324 = vperm.xlu0 %5323, %v5313
    %v5325 = vpop.permute.xlu0 %5324
    %v5326 = vlaneseq
    %v5327 = vshrl.u32 %v5326, 7
    %v5328 = vadd.s32 %v5327, 16
    %5329 = vset.pattern.permute.xlu0 %v5328
    %5330 = vperm.xlu0 %5329, %v5313
    %v5331 = vpop.permute.xlu0 %5330
    %v5332 = vlaneseq
    %v5333 = vshrl.u32 %v5332, 7
    %v5334 = vadd.s32 %v5333, 24
    %5335 = vset.pattern.permute.xlu0 %v5334
    %5336 = vperm.xlu0 %5335, %v5313
    %v5337 = vpop.permute.xlu0 %5336
    %v5338 = vlaneseq
    %v5339 = vshrl.u32 %v5338, 7
    %v5340 = vadd.s32 %v5339, 32
    %5341 = vset.pattern.permute.xlu0 %v5340
    %5342 = vperm.xlu0 %5341, %v5313
    %v5343 = vpop.permute.xlu0 %5342
    %v5344 = vlaneseq
    %v5345 = vshrl.u32 %v5344, 7
    %v5346 = vadd.s32 %v5345, 40
    %5347 = vset.pattern.permute.xlu0 %v5346
    %5348 = vperm.xlu0 %5347, %v5313
    %v5349 = vpop.permute.xlu0 %5348
    %v5350 = vlaneseq
    %v5351 = vshrl.u32 %v5350, 7
    %v5352 = vadd.s32 %v5351, 48
    %5353 = vset.pattern.permute.xlu0 %v5352
    %5354 = vperm.xlu0 %5353, %v5313
    %v5355 = vpop.permute.xlu0 %5354
    %v5356 = vlaneseq
    %v5357 = vshrl.u32 %v5356, 7
    %v5358 = vadd.s32 %v5357, 56
    %5359 = vset.pattern.permute.xlu0 %v5358
    %5360 = vperm.xlu0 %5359, %v5313
    %v5361 = vpop.permute.xlu0 %5360
    %v5362 = vlaneseq
    %v5363 = vshrl.u32 %v5362, 7
    %v5364 = vadd.s32 %v5363, 64
    %5365 = vset.pattern.permute.xlu0 %v5364
    %5366 = vperm.xlu0 %5365, %v5313
    %v5367 = vpop.permute.xlu0 %5366
    %v5368 = vlaneseq
    %v5369 = vshrl.u32 %v5368, 7
    %v5370 = vadd.s32 %v5369, 72
    %5371 = vset.pattern.permute.xlu0 %v5370
    %5372 = vperm.xlu0 %5371, %v5313
    %v5373 = vpop.permute.xlu0 %5372
    %v5374 = vlaneseq
    %v5375 = vshrl.u32 %v5374, 7
    %v5376 = vadd.s32 %v5375, 80
    %5377 = vset.pattern.permute.xlu0 %v5376
    %5378 = vperm.xlu0 %5377, %v5313
    %v5379 = vpop.permute.xlu0 %5378
    %v5380 = vlaneseq
    %v5381 = vshrl.u32 %v5380, 7
    %v5382 = vadd.s32 %v5381, 88
    %5383 = vset.pattern.permute.xlu0 %v5382
    %5384 = vperm.xlu0 %5383, %v5313
    %v5385 = vpop.permute.xlu0 %5384
    %v5386 = vlaneseq
    %v5387 = vshrl.u32 %v5386, 7
    %v5388 = vadd.s32 %v5387, 96
    %5389 = vset.pattern.permute.xlu0 %v5388
    %5390 = vperm.xlu0 %5389, %v5313
    %v5391 = vpop.permute.xlu0 %5390
    %v5392 = vlaneseq
    %v5393 = vshrl.u32 %v5392, 7
    %v5394 = vadd.s32 %v5393, 104
    %5395 = vset.pattern.permute.xlu0 %v5394
    %5396 = vperm.xlu0 %5395, %v5313
    %v5397 = vpop.permute.xlu0 %5396
    %v5398 = vlaneseq
    %v5399 = vshrl.u32 %v5398, 7
    %v5400 = vadd.s32 %v5399, 112
    %5401 = vset.pattern.permute.xlu0 %v5400
    %5402 = vperm.xlu0 %5401, %v5313
    %v5403 = vpop.permute.xlu0 %5402
    %v5404 = vlaneseq
    %v5405 = vshrl.u32 %v5404, 7
    %v5406 = vadd.s32 %v5405, 120
    %5407 = vset.pattern.permute.xlu0 %v5406
    %5408 = vperm.xlu0 %5407, %v5313
    %v5409 = vpop.permute.xlu0 %5408
    %v5410 = vperm.slane %v4902, 5
    %v5411 = vlaneseq
    %v5412 = vshrl.u32 %v5411, 7
    %5414 = vset.pattern.permute.xlu0 %v5412
    %5415 = vperm.xlu0 %5414, %v5410
    %v5416 = vpop.permute.xlu0 %5415
    %v5417 = vlaneseq
    %v5418 = vshrl.u32 %v5417, 7
    %v5419 = vadd.s32 %v5418, 8
    %5420 = vset.pattern.permute.xlu0 %v5419
    %5421 = vperm.xlu0 %5420, %v5410
    %v5422 = vpop.permute.xlu0 %5421
    %v5423 = vlaneseq
    %v5424 = vshrl.u32 %v5423, 7
    %v5425 = vadd.s32 %v5424, 16
    %5426 = vset.pattern.permute.xlu0 %v5425
    %5427 = vperm.xlu0 %5426, %v5410
    %v5428 = vpop.permute.xlu0 %5427
    %v5429 = vlaneseq
    %v5430 = vshrl.u32 %v5429, 7
    %v5431 = vadd.s32 %v5430, 24
    %5432 = vset.pattern.permute.xlu0 %v5431
    %5433 = vperm.xlu0 %5432, %v5410
    %v5434 = vpop.permute.xlu0 %5433
    %v5435 = vlaneseq
    %v5436 = vshrl.u32 %v5435, 7
    %v5437 = vadd.s32 %v5436, 32
    %5438 = vset.pattern.permute.xlu0 %v5437
    %5439 = vperm.xlu0 %5438, %v5410
    %v5440 = vpop.permute.xlu0 %5439
    %v5441 = vlaneseq
    %v5442 = vshrl.u32 %v5441, 7
    %v5443 = vadd.s32 %v5442, 40
    %5444 = vset.pattern.permute.xlu0 %v5443
    %5445 = vperm.xlu0 %5444, %v5410
    %v5446 = vpop.permute.xlu0 %5445
    %v5447 = vlaneseq
    %v5448 = vshrl.u32 %v5447, 7
    %v5449 = vadd.s32 %v5448, 48
    %5450 = vset.pattern.permute.xlu0 %v5449
    %5451 = vperm.xlu0 %5450, %v5410
    %v5452 = vpop.permute.xlu0 %5451
    %v5453 = vlaneseq
    %v5454 = vshrl.u32 %v5453, 7
    %v5455 = vadd.s32 %v5454, 56
    %5456 = vset.pattern.permute.xlu0 %v5455
    %5457 = vperm.xlu0 %5456, %v5410
    %v5458 = vpop.permute.xlu0 %5457
    %v5459 = vlaneseq
    %v5460 = vshrl.u32 %v5459, 7
    %v5461 = vadd.s32 %v5460, 64
    %5462 = vset.pattern.permute.xlu0 %v5461
    %5463 = vperm.xlu0 %5462, %v5410
    %v5464 = vpop.permute.xlu0 %5463
    %v5465 = vlaneseq
    %v5466 = vshrl.u32 %v5465, 7
    %v5467 = vadd.s32 %v5466, 72
    %5468 = vset.pattern.permute.xlu0 %v5467
    %5469 = vperm.xlu0 %5468, %v5410
    %v5470 = vpop.permute.xlu0 %5469
    %v5471 = vlaneseq
    %v5472 = vshrl.u32 %v5471, 7
    %v5473 = vadd.s32 %v5472, 80
    %5474 = vset.pattern.permute.xlu0 %v5473
    %5475 = vperm.xlu0 %5474, %v5410
    %v5476 = vpop.permute.xlu0 %5475
    %v5477 = vlaneseq
    %v5478 = vshrl.u32 %v5477, 7
    %v5479 = vadd.s32 %v5478, 88
    %5480 = vset.pattern.permute.xlu0 %v5479
    %5481 = vperm.xlu0 %5480, %v5410
    %v5482 = vpop.permute.xlu0 %5481
    %v5483 = vlaneseq
    %v5484 = vshrl.u32 %v5483, 7
    %v5485 = vadd.s32 %v5484, 96
    %5486 = vset.pattern.permute.xlu0 %v5485
    %5487 = vperm.xlu0 %5486, %v5410
    %v5488 = vpop.permute.xlu0 %5487
    %v5489 = vlaneseq
    %v5490 = vshrl.u32 %v5489, 7
    %v5491 = vadd.s32 %v5490, 104
    %5492 = vset.pattern.permute.xlu0 %v5491
    %5493 = vperm.xlu0 %5492, %v5410
    %v5494 = vpop.permute.xlu0 %5493
    %v5495 = vlaneseq
    %v5496 = vshrl.u32 %v5495, 7
    %v5497 = vadd.s32 %v5496, 112
    %5498 = vset.pattern.permute.xlu0 %v5497
    %5499 = vperm.xlu0 %5498, %v5410
    %v5500 = vpop.permute.xlu0 %5499
    %v5501 = vlaneseq
    %v5502 = vshrl.u32 %v5501, 7
    %v5503 = vadd.s32 %v5502, 120
    %5504 = vset.pattern.permute.xlu0 %v5503
    %5505 = vperm.xlu0 %5504, %v5410
    %v5506 = vpop.permute.xlu0 %5505
    %v5507 = vperm.slane %v4902, 6
    %v5508 = vlaneseq
    %v5509 = vshrl.u32 %v5508, 7
    %5511 = vset.pattern.permute.xlu0 %v5509
    %5512 = vperm.xlu0 %5511, %v5507
    %v5513 = vpop.permute.xlu0 %5512
    %v5514 = vlaneseq
    %v5515 = vshrl.u32 %v5514, 7
    %v5516 = vadd.s32 %v5515, 8
    %5517 = vset.pattern.permute.xlu0 %v5516
    %5518 = vperm.xlu0 %5517, %v5507
    %v5519 = vpop.permute.xlu0 %5518
    %v5520 = vlaneseq
    %v5521 = vshrl.u32 %v5520, 7
    %v5522 = vadd.s32 %v5521, 16
    %5523 = vset.pattern.permute.xlu0 %v5522
    %5524 = vperm.xlu0 %5523, %v5507
    %v5525 = vpop.permute.xlu0 %5524
    %v5526 = vlaneseq
    %v5527 = vshrl.u32 %v5526, 7
    %v5528 = vadd.s32 %v5527, 24
    %5529 = vset.pattern.permute.xlu0 %v5528
    %5530 = vperm.xlu0 %5529, %v5507
    %v5531 = vpop.permute.xlu0 %5530
    %v5532 = vlaneseq
    %v5533 = vshrl.u32 %v5532, 7
    %v5534 = vadd.s32 %v5533, 32
    %5535 = vset.pattern.permute.xlu0 %v5534
    %5536 = vperm.xlu0 %5535, %v5507
    %v5537 = vpop.permute.xlu0 %5536
    %v5538 = vlaneseq
    %v5539 = vshrl.u32 %v5538, 7
    %v5540 = vadd.s32 %v5539, 40
    %5541 = vset.pattern.permute.xlu0 %v5540
    %5542 = vperm.xlu0 %5541, %v5507
    %v5543 = vpop.permute.xlu0 %5542
    %v5544 = vlaneseq
    %v5545 = vshrl.u32 %v5544, 7
    %v5546 = vadd.s32 %v5545, 48
    %5547 = vset.pattern.permute.xlu0 %v5546
    %5548 = vperm.xlu0 %5547, %v5507
    %v5549 = vpop.permute.xlu0 %5548
    %v5550 = vlaneseq
    %v5551 = vshrl.u32 %v5550, 7
    %v5552 = vadd.s32 %v5551, 56
    %5553 = vset.pattern.permute.xlu0 %v5552
    %5554 = vperm.xlu0 %5553, %v5507
    %v5555 = vpop.permute.xlu0 %5554
    %v5556 = vlaneseq
    %v5557 = vshrl.u32 %v5556, 7
    %v5558 = vadd.s32 %v5557, 64
    %5559 = vset.pattern.permute.xlu0 %v5558
    %5560 = vperm.xlu0 %5559, %v5507
    %v5561 = vpop.permute.xlu0 %5560
    %v5562 = vlaneseq
    %v5563 = vshrl.u32 %v5562, 7
    %v5564 = vadd.s32 %v5563, 72
    %5565 = vset.pattern.permute.xlu0 %v5564
    %5566 = vperm.xlu0 %5565, %v5507
    %v5567 = vpop.permute.xlu0 %5566
    %v5568 = vlaneseq
    %v5569 = vshrl.u32 %v5568, 7
    %v5570 = vadd.s32 %v5569, 80
    %5571 = vset.pattern.permute.xlu0 %v5570
    %5572 = vperm.xlu0 %5571, %v5507
    %v5573 = vpop.permute.xlu0 %5572
    %v5574 = vlaneseq
    %v5575 = vshrl.u32 %v5574, 7
    %v5576 = vadd.s32 %v5575, 88
    %5577 = vset.pattern.permute.xlu0 %v5576
    %5578 = vperm.xlu0 %5577, %v5507
    %v5579 = vpop.permute.xlu0 %5578
    %v5580 = vlaneseq
    %v5581 = vshrl.u32 %v5580, 7
    %v5582 = vadd.s32 %v5581, 96
    %5583 = vset.pattern.permute.xlu0 %v5582
    %5584 = vperm.xlu0 %5583, %v5507
    %v5585 = vpop.permute.xlu0 %5584
    %v5586 = vlaneseq
    %v5587 = vshrl.u32 %v5586, 7
    %v5588 = vadd.s32 %v5587, 104
    %5589 = vset.pattern.permute.xlu0 %v5588
    %5590 = vperm.xlu0 %5589, %v5507
    %v5591 = vpop.permute.xlu0 %5590
    %v5592 = vlaneseq
    %v5593 = vshrl.u32 %v5592, 7
    %v5594 = vadd.s32 %v5593, 112
    %5595 = vset.pattern.permute.xlu0 %v5594
    %5596 = vperm.xlu0 %5595, %v5507
    %v5597 = vpop.permute.xlu0 %5596
    %v5598 = vlaneseq
    %v5599 = vshrl.u32 %v5598, 7
    %v5600 = vadd.s32 %v5599, 120
    %5601 = vset.pattern.permute.xlu0 %v5600
    %5602 = vperm.xlu0 %5601, %v5507
    %v5603 = vpop.permute.xlu0 %5602
    %v5604 = vperm.slane %v4902, 7
    %v5605 = vlaneseq
    %v5606 = vshrl.u32 %v5605, 7
    %5608 = vset.pattern.permute.xlu0 %v5606
    %5609 = vperm.xlu0 %5608, %v5604
    %v5610 = vpop.permute.xlu0 %5609
    %v5611 = vlaneseq
    %v5612 = vshrl.u32 %v5611, 7
    %v5613 = vadd.s32 %v5612, 8
    %5614 = vset.pattern.permute.xlu0 %v5613
    %5615 = vperm.xlu0 %5614, %v5604
    %v5616 = vpop.permute.xlu0 %5615
    %v5617 = vlaneseq
    %v5618 = vshrl.u32 %v5617, 7
    %v5619 = vadd.s32 %v5618, 16
    %5620 = vset.pattern.permute.xlu0 %v5619
    %5621 = vperm.xlu0 %5620, %v5604
    %v5622 = vpop.permute.xlu0 %5621
    %v5623 = vlaneseq
    %v5624 = vshrl.u32 %v5623, 7
    %v5625 = vadd.s32 %v5624, 24
    %5626 = vset.pattern.permute.xlu0 %v5625
    %5627 = vperm.xlu0 %5626, %v5604
    %v5628 = vpop.permute.xlu0 %5627
    %v5629 = vlaneseq
    %v5630 = vshrl.u32 %v5629, 7
    %v5631 = vadd.s32 %v5630, 32
    %5632 = vset.pattern.permute.xlu0 %v5631
    %5633 = vperm.xlu0 %5632, %v5604
    %v5634 = vpop.permute.xlu0 %5633
    %v5635 = vlaneseq
    %v5636 = vshrl.u32 %v5635, 7
    %v5637 = vadd.s32 %v5636, 40
    %5638 = vset.pattern.permute.xlu0 %v5637
    %5639 = vperm.xlu0 %5638, %v5604
    %v5640 = vpop.permute.xlu0 %5639
    %v5641 = vlaneseq
    %v5642 = vshrl.u32 %v5641, 7
    %v5643 = vadd.s32 %v5642, 48
    %5644 = vset.pattern.permute.xlu0 %v5643
    %5645 = vperm.xlu0 %5644, %v5604
    %v5646 = vpop.permute.xlu0 %5645
    %v5647 = vlaneseq
    %v5648 = vshrl.u32 %v5647, 7
    %v5649 = vadd.s32 %v5648, 56
    %5650 = vset.pattern.permute.xlu0 %v5649
    %5651 = vperm.xlu0 %5650, %v5604
    %v5652 = vpop.permute.xlu0 %5651
    %v5653 = vlaneseq
    %v5654 = vshrl.u32 %v5653, 7
    %v5655 = vadd.s32 %v5654, 64
    %5656 = vset.pattern.permute.xlu0 %v5655
    %5657 = vperm.xlu0 %5656, %v5604
    %v5658 = vpop.permute.xlu0 %5657
    %v5659 = vlaneseq
    %v5660 = vshrl.u32 %v5659, 7
    %v5661 = vadd.s32 %v5660, 72
    %5662 = vset.pattern.permute.xlu0 %v5661
    %5663 = vperm.xlu0 %5662, %v5604
    %v5664 = vpop.permute.xlu0 %5663
    %v5665 = vlaneseq
    %v5666 = vshrl.u32 %v5665, 7
    %v5667 = vadd.s32 %v5666, 80
    %5668 = vset.pattern.permute.xlu0 %v5667
    %5669 = vperm.xlu0 %5668, %v5604
    %v5670 = vpop.permute.xlu0 %5669
    %v5671 = vlaneseq
    %v5672 = vshrl.u32 %v5671, 7
    %v5673 = vadd.s32 %v5672, 88
    %5674 = vset.pattern.permute.xlu0 %v5673
    %5675 = vperm.xlu0 %5674, %v5604
    %v5676 = vpop.permute.xlu0 %5675
    %v5677 = vlaneseq
    %v5678 = vshrl.u32 %v5677, 7
    %v5679 = vadd.s32 %v5678, 96
    %5680 = vset.pattern.permute.xlu0 %v5679
    %5681 = vperm.xlu0 %5680, %v5604
    %v5682 = vpop.permute.xlu0 %5681
    %v5683 = vlaneseq
    %v5684 = vshrl.u32 %v5683, 7
    %v5685 = vadd.s32 %v5684, 104
    %5686 = vset.pattern.permute.xlu0 %v5685
    %5687 = vperm.xlu0 %5686, %v5604
    %v5688 = vpop.permute.xlu0 %5687
    %v5689 = vlaneseq
    %v5690 = vshrl.u32 %v5689, 7
    %v5691 = vadd.s32 %v5690, 112
    %5692 = vset.pattern.permute.xlu0 %v5691
    %5693 = vperm.xlu0 %5692, %v5604
    %v5694 = vpop.permute.xlu0 %5693
    %v5695 = vlaneseq
    %v5696 = vshrl.u32 %v5695, 7
    %v5697 = vadd.s32 %v5696, 120
    %5698 = vset.pattern.permute.xlu0 %v5697
    %5699 = vperm.xlu0 %5698, %v5604
    %v5700 = vpop.permute.xlu0 %5699
    %v5701 = vsub.f32 %v4931, %v61
    %v5702 = vsub.f32 %v4931, %v62
    %v5703 = vsub.f32 %v4937, %v61
    %v5704 = vsub.f32 %v4937, %v62
    %v5705 = vsub.f32 %v4943, %v61
    %v5706 = vsub.f32 %v4943, %v62
    %v5707 = vsub.f32 %v4949, %v61
    %v5708 = vsub.f32 %v4949, %v62
    %v5709 = vsub.f32 %v4955, %v61
    %v5710 = vsub.f32 %v4955, %v62
    %v5711 = vsub.f32 %v4961, %v61
    %v5712 = vsub.f32 %v4961, %v62
    %v5713 = vsub.f32 %v4967, %v61
    %v5714 = vsub.f32 %v4967, %v62
    %v5715 = vsub.f32 %v4973, %v61
    %v5716 = vsub.f32 %v4973, %v62
    %v5717 = vsub.f32 %v4979, %v61
    %v5718 = vsub.f32 %v4979, %v62
    %v5719 = vsub.f32 %v4985, %v61
    %v5720 = vsub.f32 %v4985, %v62
    %v5721 = vsub.f32 %v4991, %v61
    %v5722 = vsub.f32 %v4991, %v62
    %v5723 = vsub.f32 %v4997, %v61
    %v5724 = vsub.f32 %v4997, %v62
    %v5725 = vsub.f32 %v5003, %v61
    %v5726 = vsub.f32 %v5003, %v62
    %v5727 = vsub.f32 %v5009, %v61
    %v5728 = vsub.f32 %v5009, %v62
    %v5729 = vsub.f32 %v5015, %v61
    %v5730 = vsub.f32 %v5015, %v62
    %v5731 = vsub.f32 %v5021, %v61
    %v5732 = vsub.f32 %v5021, %v62
    %v5733 = vsub.f32 %v5028, %v61
    %v5734 = vsub.f32 %v5028, %v62
    %v5735 = vsub.f32 %v5034, %v61
    %v5736 = vsub.f32 %v5034, %v62
    %v5737 = vsub.f32 %v5040, %v61
    %v5738 = vsub.f32 %v5040, %v62
    %v5739 = vsub.f32 %v5046, %v61
    %v5740 = vsub.f32 %v5046, %v62
    %v5741 = vsub.f32 %v5052, %v61
    %v5742 = vsub.f32 %v5052, %v62
    %v5743 = vsub.f32 %v5058, %v61
    %v5744 = vsub.f32 %v5058, %v62
    %v5745 = vsub.f32 %v5064, %v61
    %v5746 = vsub.f32 %v5064, %v62
    %v5747 = vsub.f32 %v5070, %v61
    %v5748 = vsub.f32 %v5070, %v62
    %v5749 = vsub.f32 %v5076, %v61
    %v5750 = vsub.f32 %v5076, %v62
    %v5751 = vsub.f32 %v5082, %v61
    %v5752 = vsub.f32 %v5082, %v62
    %v5753 = vsub.f32 %v5088, %v61
    %v5754 = vsub.f32 %v5088, %v62
    %v5755 = vsub.f32 %v5094, %v61
    %v5756 = vsub.f32 %v5094, %v62
    %v5757 = vsub.f32 %v5100, %v61
    %v5758 = vsub.f32 %v5100, %v62
    %v5759 = vsub.f32 %v5106, %v61
    %v5760 = vsub.f32 %v5106, %v62
    %v5761 = vsub.f32 %v5112, %v61
    %v5762 = vsub.f32 %v5112, %v62
    %v5763 = vsub.f32 %v5118, %v61
    %v5764 = vsub.f32 %v5118, %v62
    %v5765 = vsub.f32 %v5125, %v61
    %v5766 = vsub.f32 %v5125, %v62
    %v5767 = vsub.f32 %v5131, %v61
    %v5768 = vsub.f32 %v5131, %v62
    %v5769 = vsub.f32 %v5137, %v61
    %v5770 = vsub.f32 %v5137, %v62
    %v5771 = vsub.f32 %v5143, %v61
    %v5772 = vsub.f32 %v5143, %v62
    %v5773 = vsub.f32 %v5149, %v61
    %v5774 = vsub.f32 %v5149, %v62
    %v5775 = vsub.f32 %v5155, %v61
    %v5776 = vsub.f32 %v5155, %v62
    %v5777 = vsub.f32 %v5161, %v61
    %v5778 = vsub.f32 %v5161, %v62
    %v5779 = vsub.f32 %v5167, %v61
    %v5780 = vsub.f32 %v5167, %v62
    %v5781 = vsub.f32 %v5173, %v61
    %v5782 = vsub.f32 %v5173, %v62
    %v5783 = vsub.f32 %v5179, %v61
    %v5784 = vsub.f32 %v5179, %v62
    %v5785 = vsub.f32 %v5185, %v61
    %v5786 = vsub.f32 %v5185, %v62
    %v5787 = vsub.f32 %v5191, %v61
    %v5788 = vsub.f32 %v5191, %v62
    %v5789 = vsub.f32 %v5197, %v61
    %v5790 = vsub.f32 %v5197, %v62
    %v5791 = vsub.f32 %v5203, %v61
    %v5792 = vsub.f32 %v5203, %v62
    %v5793 = vsub.f32 %v5209, %v61
    %v5794 = vsub.f32 %v5209, %v62
    %v5795 = vsub.f32 %v5215, %v61
    %v5796 = vsub.f32 %v5215, %v62
    %v5797 = vsub.f32 %v5222, %v61
    %v5798 = vsub.f32 %v5222, %v62
    %v5799 = vsub.f32 %v5228, %v61
    %v5800 = vsub.f32 %v5228, %v62
    %v5801 = vsub.f32 %v5234, %v61
    %v5802 = vsub.f32 %v5234, %v62
    %v5803 = vsub.f32 %v5240, %v61
    %v5804 = vsub.f32 %v5240, %v62
    %v5805 = vsub.f32 %v5246, %v61
    %v5806 = vsub.f32 %v5246, %v62
    %v5807 = vsub.f32 %v5252, %v61
    %v5808 = vsub.f32 %v5252, %v62
    %v5809 = vsub.f32 %v5258, %v61
    %v5810 = vsub.f32 %v5258, %v62
    %v5811 = vsub.f32 %v5264, %v61
    %v5812 = vsub.f32 %v5264, %v62
    %v5813 = vsub.f32 %v5270, %v61
    %v5814 = vsub.f32 %v5270, %v62
    %v5815 = vsub.f32 %v5276, %v61
    %v5816 = vsub.f32 %v5276, %v62
    %v5817 = vsub.f32 %v5282, %v61
    %v5818 = vsub.f32 %v5282, %v62
    %v5819 = vsub.f32 %v5288, %v61
    %v5820 = vsub.f32 %v5288, %v62
    %v5821 = vsub.f32 %v5294, %v61
    %v5822 = vsub.f32 %v5294, %v62
    %v5823 = vsub.f32 %v5300, %v61
    %v5824 = vsub.f32 %v5300, %v62
    %v5825 = vsub.f32 %v5306, %v61
    %v5826 = vsub.f32 %v5306, %v62
    %v5827 = vsub.f32 %v5312, %v61
    %v5828 = vsub.f32 %v5312, %v62
    %v5829 = vsub.f32 %v5319, %v61
    %v5830 = vsub.f32 %v5319, %v62
    %v5831 = vsub.f32 %v5325, %v61
    %v5832 = vsub.f32 %v5325, %v62
    %v5833 = vsub.f32 %v5331, %v61
    %v5834 = vsub.f32 %v5331, %v62
    %v5835 = vsub.f32 %v5337, %v61
    %v5836 = vsub.f32 %v5337, %v62
    %v5837 = vsub.f32 %v5343, %v61
    %v5838 = vsub.f32 %v5343, %v62
    %v5839 = vsub.f32 %v5349, %v61
    %v5840 = vsub.f32 %v5349, %v62
    %v5841 = vsub.f32 %v5355, %v61
    %v5842 = vsub.f32 %v5355, %v62
    %v5843 = vsub.f32 %v5361, %v61
    %v5844 = vsub.f32 %v5361, %v62
    %v5845 = vsub.f32 %v5367, %v61
    %v5846 = vsub.f32 %v5367, %v62
    %v5847 = vsub.f32 %v5373, %v61
    %v5848 = vsub.f32 %v5373, %v62
    %v5849 = vsub.f32 %v5379, %v61
    %v5850 = vsub.f32 %v5379, %v62
    %v5851 = vsub.f32 %v5385, %v61
    %v5852 = vsub.f32 %v5385, %v62
    %v5853 = vsub.f32 %v5391, %v61
    %v5854 = vsub.f32 %v5391, %v62
    %v5855 = vsub.f32 %v5397, %v61
    %v5856 = vsub.f32 %v5397, %v62
    %v5857 = vsub.f32 %v5403, %v61
    %v5858 = vsub.f32 %v5403, %v62
    %v5859 = vsub.f32 %v5409, %v61
    %v5860 = vsub.f32 %v5409, %v62
    %v5861 = vsub.f32 %v5416, %v61
    %v5862 = vsub.f32 %v5416, %v62
    %v5863 = vsub.f32 %v5422, %v61
    %v5864 = vsub.f32 %v5422, %v62
    %v5865 = vsub.f32 %v5428, %v61
    %v5866 = vsub.f32 %v5428, %v62
    %v5867 = vsub.f32 %v5434, %v61
    %v5868 = vsub.f32 %v5434, %v62
    %v5869 = vsub.f32 %v5440, %v61
    %v5870 = vsub.f32 %v5440, %v62
    %v5871 = vsub.f32 %v5446, %v61
    %v5872 = vsub.f32 %v5446, %v62
    %v5873 = vsub.f32 %v5452, %v61
    %v5874 = vsub.f32 %v5452, %v62
    %v5875 = vsub.f32 %v5458, %v61
    %v5876 = vsub.f32 %v5458, %v62
    %v5877 = vsub.f32 %v5464, %v61
    %v5878 = vsub.f32 %v5464, %v62
    %v5879 = vsub.f32 %v5470, %v61
    %v5880 = vsub.f32 %v5470, %v62
    %v5881 = vsub.f32 %v5476, %v61
    %v5882 = vsub.f32 %v5476, %v62
    %v5883 = vsub.f32 %v5482, %v61
    %v5884 = vsub.f32 %v5482, %v62
    %v5885 = vsub.f32 %v5488, %v61
    %v5886 = vsub.f32 %v5488, %v62
    %v5887 = vsub.f32 %v5494, %v61
    %v5888 = vsub.f32 %v5494, %v62
    %v5889 = vsub.f32 %v5500, %v61
    %v5890 = vsub.f32 %v5500, %v62
    %v5891 = vsub.f32 %v5506, %v61
    %v5892 = vsub.f32 %v5506, %v62
    %v5893 = vsub.f32 %v5513, %v61
    %v5894 = vsub.f32 %v5513, %v62
    %v5895 = vsub.f32 %v5519, %v61
    %v5896 = vsub.f32 %v5519, %v62
    %v5897 = vsub.f32 %v5525, %v61
    %v5898 = vsub.f32 %v5525, %v62
    %v5899 = vsub.f32 %v5531, %v61
    %v5900 = vsub.f32 %v5531, %v62
    %v5901 = vsub.f32 %v5537, %v61
    %v5902 = vsub.f32 %v5537, %v62
    %v5903 = vsub.f32 %v5543, %v61
    %v5904 = vsub.f32 %v5543, %v62
    %v5905 = vsub.f32 %v5549, %v61
    %v5906 = vsub.f32 %v5549, %v62
    %v5907 = vsub.f32 %v5555, %v61
    %v5908 = vsub.f32 %v5555, %v62
    %v5909 = vsub.f32 %v5561, %v61
    %v5910 = vsub.f32 %v5561, %v62
    %v5911 = vsub.f32 %v5567, %v61
    %v5912 = vsub.f32 %v5567, %v62
    %v5913 = vsub.f32 %v5573, %v61
    %v5914 = vsub.f32 %v5573, %v62
    %v5915 = vsub.f32 %v5579, %v61
    %v5916 = vsub.f32 %v5579, %v62
    %v5917 = vsub.f32 %v5585, %v61
    %v5918 = vsub.f32 %v5585, %v62
    %v5919 = vsub.f32 %v5591, %v61
    %v5920 = vsub.f32 %v5591, %v62
    %v5921 = vsub.f32 %v5597, %v61
    %v5922 = vsub.f32 %v5597, %v62
    %v5923 = vsub.f32 %v5603, %v61
    %v5924 = vsub.f32 %v5603, %v62
    %v5925 = vsub.f32 %v5610, %v61
    %v5926 = vsub.f32 %v5610, %v62
    %v5927 = vsub.f32 %v5616, %v61
    %v5928 = vsub.f32 %v5616, %v62
    %v5929 = vsub.f32 %v5622, %v61
    %v5930 = vsub.f32 %v5622, %v62
    %v5931 = vsub.f32 %v5628, %v61
    %v5932 = vsub.f32 %v5628, %v62
    %v5933 = vsub.f32 %v5634, %v61
    %v5934 = vsub.f32 %v5634, %v62
    %v5935 = vsub.f32 %v5640, %v61
    %v5936 = vsub.f32 %v5640, %v62
    %v5937 = vsub.f32 %v5646, %v61
    %v5938 = vsub.f32 %v5646, %v62
    %v5939 = vsub.f32 %v5652, %v61
    %v5940 = vsub.f32 %v5652, %v62
    %v5941 = vsub.f32 %v5658, %v61
    %v5942 = vsub.f32 %v5658, %v62
    %v5943 = vsub.f32 %v5664, %v61
    %v5944 = vsub.f32 %v5664, %v62
    %v5945 = vsub.f32 %v5670, %v61
    %v5946 = vsub.f32 %v5670, %v62
    %v5947 = vsub.f32 %v5676, %v61
    %v5948 = vsub.f32 %v5676, %v62
    %v5949 = vsub.f32 %v5682, %v61
    %v5950 = vsub.f32 %v5682, %v62
    %v5951 = vsub.f32 %v5688, %v61
    %v5952 = vsub.f32 %v5688, %v62
    %v5953 = vsub.f32 %v5694, %v61
    %v5954 = vsub.f32 %v5694, %v62
    %v5955 = vsub.f32 %v5700, %v61
    %v5956 = vsub.f32 %v5700, %v62
    %v5957 = vmul.f32 %v5701, %v5701
    %v5958 = vmul.f32 %v5702, %v5702
    %v5959 = vmul.f32 %v5703, %v5703
    %v5960 = vmul.f32 %v5704, %v5704
    %v5961 = vmul.f32 %v5705, %v5705
    %v5962 = vmul.f32 %v5706, %v5706
    %v5963 = vmul.f32 %v5707, %v5707
    %v5964 = vmul.f32 %v5708, %v5708
    %v5965 = vmul.f32 %v5709, %v5709
    %v5966 = vmul.f32 %v5710, %v5710
    %v5967 = vmul.f32 %v5711, %v5711
    %v5968 = vmul.f32 %v5712, %v5712
    %v5969 = vmul.f32 %v5713, %v5713
    %v5970 = vmul.f32 %v5714, %v5714
    %v5971 = vmul.f32 %v5715, %v5715
    %v5972 = vmul.f32 %v5716, %v5716
    %v5973 = vmul.f32 %v5717, %v5717
    %v5974 = vmul.f32 %v5718, %v5718
    %v5975 = vmul.f32 %v5719, %v5719
    %v5976 = vmul.f32 %v5720, %v5720
    %v5977 = vmul.f32 %v5721, %v5721
    %v5978 = vmul.f32 %v5722, %v5722
    %v5979 = vmul.f32 %v5723, %v5723
    %v5980 = vmul.f32 %v5724, %v5724
    %v5981 = vmul.f32 %v5725, %v5725
    %v5982 = vmul.f32 %v5726, %v5726
    %v5983 = vmul.f32 %v5727, %v5727
    %v5984 = vmul.f32 %v5728, %v5728
    %v5985 = vmul.f32 %v5729, %v5729
    %v5986 = vmul.f32 %v5730, %v5730
    %v5987 = vmul.f32 %v5731, %v5731
    %v5988 = vmul.f32 %v5732, %v5732
    %v5989 = vmul.f32 %v5733, %v5733
    %v5990 = vmul.f32 %v5734, %v5734
    %v5991 = vmul.f32 %v5735, %v5735
    %v5992 = vmul.f32 %v5736, %v5736
    %v5993 = vmul.f32 %v5737, %v5737
    %v5994 = vmul.f32 %v5738, %v5738
    %v5995 = vmul.f32 %v5739, %v5739
    %v5996 = vmul.f32 %v5740, %v5740
    %v5997 = vmul.f32 %v5741, %v5741
    %v5998 = vmul.f32 %v5742, %v5742
    %v5999 = vmul.f32 %v5743, %v5743
    %v6000 = vmul.f32 %v5744, %v5744
    %v6001 = vmul.f32 %v5745, %v5745
    %v6002 = vmul.f32 %v5746, %v5746
    %v6003 = vmul.f32 %v5747, %v5747
    %v6004 = vmul.f32 %v5748, %v5748
    %v6005 = vmul.f32 %v5749, %v5749
    %v6006 = vmul.f32 %v5750, %v5750
    %v6007 = vmul.f32 %v5751, %v5751
    %v6008 = vmul.f32 %v5752, %v5752
    %v6009 = vmul.f32 %v5753, %v5753
    %v6010 = vmul.f32 %v5754, %v5754
    %v6011 = vmul.f32 %v5755, %v5755
    %v6012 = vmul.f32 %v5756, %v5756
    %v6013 = vmul.f32 %v5757, %v5757
    %v6014 = vmul.f32 %v5758, %v5758
    %v6015 = vmul.f32 %v5759, %v5759
    %v6016 = vmul.f32 %v5760, %v5760
    %v6017 = vmul.f32 %v5761, %v5761
    %v6018 = vmul.f32 %v5762, %v5762
    %v6019 = vmul.f32 %v5763, %v5763
    %v6020 = vmul.f32 %v5764, %v5764
    %v6021 = vmul.f32 %v5765, %v5765
    %v6022 = vmul.f32 %v5766, %v5766
    %v6023 = vmul.f32 %v5767, %v5767
    %v6024 = vmul.f32 %v5768, %v5768
    %v6025 = vmul.f32 %v5769, %v5769
    %v6026 = vmul.f32 %v5770, %v5770
    %v6027 = vmul.f32 %v5771, %v5771
    %v6028 = vmul.f32 %v5772, %v5772
    %v6029 = vmul.f32 %v5773, %v5773
    %v6030 = vmul.f32 %v5774, %v5774
    %v6031 = vmul.f32 %v5775, %v5775
    %v6032 = vmul.f32 %v5776, %v5776
    %v6033 = vmul.f32 %v5777, %v5777
    %v6034 = vmul.f32 %v5778, %v5778
    %v6035 = vmul.f32 %v5779, %v5779
    %v6036 = vmul.f32 %v5780, %v5780
    %v6037 = vmul.f32 %v5781, %v5781
    %v6038 = vmul.f32 %v5782, %v5782
    %v6039 = vmul.f32 %v5783, %v5783
    %v6040 = vmul.f32 %v5784, %v5784
    %v6041 = vmul.f32 %v5785, %v5785
    %v6042 = vmul.f32 %v5786, %v5786
    %v6043 = vmul.f32 %v5787, %v5787
    %v6044 = vmul.f32 %v5788, %v5788
    %v6045 = vmul.f32 %v5789, %v5789
    %v6046 = vmul.f32 %v5790, %v5790
    %v6047 = vmul.f32 %v5791, %v5791
    %v6048 = vmul.f32 %v5792, %v5792
    %v6049 = vmul.f32 %v5793, %v5793
    %v6050 = vmul.f32 %v5794, %v5794
    %v6051 = vmul.f32 %v5795, %v5795
    %v6052 = vmul.f32 %v5796, %v5796
    %v6053 = vmul.f32 %v5797, %v5797
    %v6054 = vmul.f32 %v5798, %v5798
    %v6055 = vmul.f32 %v5799, %v5799
    %v6056 = vmul.f32 %v5800, %v5800
    %v6057 = vmul.f32 %v5801, %v5801
    %v6058 = vmul.f32 %v5802, %v5802
    %v6059 = vmul.f32 %v5803, %v5803
    %v6060 = vmul.f32 %v5804, %v5804
    %v6061 = vmul.f32 %v5805, %v5805
    %v6062 = vmul.f32 %v5806, %v5806
    %v6063 = vmul.f32 %v5807, %v5807
    %v6064 = vmul.f32 %v5808, %v5808
    %v6065 = vmul.f32 %v5809, %v5809
    %v6066 = vmul.f32 %v5810, %v5810
    %v6067 = vmul.f32 %v5811, %v5811
    %v6068 = vmul.f32 %v5812, %v5812
    %v6069 = vmul.f32 %v5813, %v5813
    %v6070 = vmul.f32 %v5814, %v5814
    %v6071 = vmul.f32 %v5815, %v5815
    %v6072 = vmul.f32 %v5816, %v5816
    %v6073 = vmul.f32 %v5817, %v5817
    %v6074 = vmul.f32 %v5818, %v5818
    %v6075 = vmul.f32 %v5819, %v5819
    %v6076 = vmul.f32 %v5820, %v5820
    %v6077 = vmul.f32 %v5821, %v5821
    %v6078 = vmul.f32 %v5822, %v5822
    %v6079 = vmul.f32 %v5823, %v5823
    %v6080 = vmul.f32 %v5824, %v5824
    %v6081 = vmul.f32 %v5825, %v5825
    %v6082 = vmul.f32 %v5826, %v5826
    %v6083 = vmul.f32 %v5827, %v5827
    %v6084 = vmul.f32 %v5828, %v5828
    %v6085 = vmul.f32 %v5829, %v5829
    %v6086 = vmul.f32 %v5830, %v5830
    %v6087 = vmul.f32 %v5831, %v5831
    %v6088 = vmul.f32 %v5832, %v5832
    %v6089 = vmul.f32 %v5833, %v5833
    %v6090 = vmul.f32 %v5834, %v5834
    %v6091 = vmul.f32 %v5835, %v5835
    %v6092 = vmul.f32 %v5836, %v5836
    %v6093 = vmul.f32 %v5837, %v5837
    %v6094 = vmul.f32 %v5838, %v5838
    %v6095 = vmul.f32 %v5839, %v5839
    %v6096 = vmul.f32 %v5840, %v5840
    %v6097 = vmul.f32 %v5841, %v5841
    %v6098 = vmul.f32 %v5842, %v5842
    %v6099 = vmul.f32 %v5843, %v5843
    %v6100 = vmul.f32 %v5844, %v5844
    %v6101 = vmul.f32 %v5845, %v5845
    %v6102 = vmul.f32 %v5846, %v5846
    %v6103 = vmul.f32 %v5847, %v5847
    %v6104 = vmul.f32 %v5848, %v5848
    %v6105 = vmul.f32 %v5849, %v5849
    %v6106 = vmul.f32 %v5850, %v5850
    %v6107 = vmul.f32 %v5851, %v5851
    %v6108 = vmul.f32 %v5852, %v5852
    %v6109 = vmul.f32 %v5853, %v5853
    %v6110 = vmul.f32 %v5854, %v5854
    %v6111 = vmul.f32 %v5855, %v5855
    %v6112 = vmul.f32 %v5856, %v5856
    %v6113 = vmul.f32 %v5857, %v5857
    %v6114 = vmul.f32 %v5858, %v5858
    %v6115 = vmul.f32 %v5859, %v5859
    %v6116 = vmul.f32 %v5860, %v5860
    %v6117 = vmul.f32 %v5861, %v5861
    %v6118 = vmul.f32 %v5862, %v5862
    %v6119 = vmul.f32 %v5863, %v5863
    %v6120 = vmul.f32 %v5864, %v5864
    %v6121 = vmul.f32 %v5865, %v5865
    %v6122 = vmul.f32 %v5866, %v5866
    %v6123 = vmul.f32 %v5867, %v5867
    %v6124 = vmul.f32 %v5868, %v5868
    %v6125 = vmul.f32 %v5869, %v5869
    %v6126 = vmul.f32 %v5870, %v5870
    %v6127 = vmul.f32 %v5871, %v5871
    %v6128 = vmul.f32 %v5872, %v5872
    %v6129 = vmul.f32 %v5873, %v5873
    %v6130 = vmul.f32 %v5874, %v5874
    %v6131 = vmul.f32 %v5875, %v5875
    %v6132 = vmul.f32 %v5876, %v5876
    %v6133 = vmul.f32 %v5877, %v5877
    %v6134 = vmul.f32 %v5878, %v5878
    %v6135 = vmul.f32 %v5879, %v5879
    %v6136 = vmul.f32 %v5880, %v5880
    %v6137 = vmul.f32 %v5881, %v5881
    %v6138 = vmul.f32 %v5882, %v5882
    %v6139 = vmul.f32 %v5883, %v5883
    %v6140 = vmul.f32 %v5884, %v5884
    %v6141 = vmul.f32 %v5885, %v5885
    %v6142 = vmul.f32 %v5886, %v5886
    %v6143 = vmul.f32 %v5887, %v5887
    %v6144 = vmul.f32 %v5888, %v5888
    %v6145 = vmul.f32 %v5889, %v5889
    %v6146 = vmul.f32 %v5890, %v5890
    %v6147 = vmul.f32 %v5891, %v5891
    %v6148 = vmul.f32 %v5892, %v5892
    %v6149 = vmul.f32 %v5893, %v5893
    %v6150 = vmul.f32 %v5894, %v5894
    %v6151 = vmul.f32 %v5895, %v5895
    %v6152 = vmul.f32 %v5896, %v5896
    %v6153 = vmul.f32 %v5897, %v5897
    %v6154 = vmul.f32 %v5898, %v5898
    %v6155 = vmul.f32 %v5899, %v5899
    %v6156 = vmul.f32 %v5900, %v5900
    %v6157 = vmul.f32 %v5901, %v5901
    %v6158 = vmul.f32 %v5902, %v5902
    %v6159 = vmul.f32 %v5903, %v5903
    %v6160 = vmul.f32 %v5904, %v5904
    %v6161 = vmul.f32 %v5905, %v5905
    %v6162 = vmul.f32 %v5906, %v5906
    %v6163 = vmul.f32 %v5907, %v5907
    %v6164 = vmul.f32 %v5908, %v5908
    %v6165 = vmul.f32 %v5909, %v5909
    %v6166 = vmul.f32 %v5910, %v5910
    %v6167 = vmul.f32 %v5911, %v5911
    %v6168 = vmul.f32 %v5912, %v5912
    %v6169 = vmul.f32 %v5913, %v5913
    %v6170 = vmul.f32 %v5914, %v5914
    %v6171 = vmul.f32 %v5915, %v5915
    %v6172 = vmul.f32 %v5916, %v5916
    %v6173 = vmul.f32 %v5917, %v5917
    %v6174 = vmul.f32 %v5918, %v5918
    %v6175 = vmul.f32 %v5919, %v5919
    %v6176 = vmul.f32 %v5920, %v5920
    %v6177 = vmul.f32 %v5921, %v5921
    %v6178 = vmul.f32 %v5922, %v5922
    %v6179 = vmul.f32 %v5923, %v5923
    %v6180 = vmul.f32 %v5924, %v5924
    %v6181 = vmul.f32 %v5925, %v5925
    %v6182 = vmul.f32 %v5926, %v5926
    %v6183 = vmul.f32 %v5927, %v5927
    %v6184 = vmul.f32 %v5928, %v5928
    %v6185 = vmul.f32 %v5929, %v5929
    %v6186 = vmul.f32 %v5930, %v5930
    %v6187 = vmul.f32 %v5931, %v5931
    %v6188 = vmul.f32 %v5932, %v5932
    %v6189 = vmul.f32 %v5933, %v5933
    %v6190 = vmul.f32 %v5934, %v5934
    %v6191 = vmul.f32 %v5935, %v5935
    %v6192 = vmul.f32 %v5936, %v5936
    %v6193 = vmul.f32 %v5937, %v5937
    %v6194 = vmul.f32 %v5938, %v5938
    %v6195 = vmul.f32 %v5939, %v5939
    %v6196 = vmul.f32 %v5940, %v5940
    %v6197 = vmul.f32 %v5941, %v5941
    %v6198 = vmul.f32 %v5942, %v5942
    %v6199 = vmul.f32 %v5943, %v5943
    %v6200 = vmul.f32 %v5944, %v5944
    %v6201 = vmul.f32 %v5945, %v5945
    %v6202 = vmul.f32 %v5946, %v5946
    %v6203 = vmul.f32 %v5947, %v5947
    %v6204 = vmul.f32 %v5948, %v5948
    %v6205 = vmul.f32 %v5949, %v5949
    %v6206 = vmul.f32 %v5950, %v5950
    %v6207 = vmul.f32 %v5951, %v5951
    %v6208 = vmul.f32 %v5952, %v5952
    %v6209 = vmul.f32 %v5953, %v5953
    %v6210 = vmul.f32 %v5954, %v5954
    %v6211 = vmul.f32 %v5955, %v5955
    %v6212 = vmul.f32 %v5956, %v5956
    %v6213 = vmul.f32 %v5957, -100.0
    %v6214 = vmul.f32 %v5958, -100.0
    %v6215 = vmul.f32 %v5959, -100.0
    %v6216 = vmul.f32 %v5960, -100.0
    %v6217 = vmul.f32 %v5961, -100.0
    %v6218 = vmul.f32 %v5962, -100.0
    %v6219 = vmul.f32 %v5963, -100.0
    %v6220 = vmul.f32 %v5964, -100.0
    %v6221 = vmul.f32 %v5965, -100.0
    %v6222 = vmul.f32 %v5966, -100.0
    %v6223 = vmul.f32 %v5967, -100.0
    %v6224 = vmul.f32 %v5968, -100.0
    %v6225 = vmul.f32 %v5969, -100.0
    %v6226 = vmul.f32 %v5970, -100.0
    %v6227 = vmul.f32 %v5971, -100.0
    %v6228 = vmul.f32 %v5972, -100.0
    %v6229 = vmul.f32 %v5973, -100.0
    %v6230 = vmul.f32 %v5974, -100.0
    %v6231 = vmul.f32 %v5975, -100.0
    %v6232 = vmul.f32 %v5976, -100.0
    %v6233 = vmul.f32 %v5977, -100.0
    %v6234 = vmul.f32 %v5978, -100.0
    %v6235 = vmul.f32 %v5979, -100.0
    %v6236 = vmul.f32 %v5980, -100.0
    %v6237 = vmul.f32 %v5981, -100.0
    %v6238 = vmul.f32 %v5982, -100.0
    %v6239 = vmul.f32 %v5983, -100.0
    %v6240 = vmul.f32 %v5984, -100.0
    %v6241 = vmul.f32 %v5985, -100.0
    %v6242 = vmul.f32 %v5986, -100.0
    %v6243 = vmul.f32 %v5987, -100.0
    %v6244 = vmul.f32 %v5988, -100.0
    %v6245 = vmul.f32 %v5989, -100.0
    %v6246 = vmul.f32 %v5990, -100.0
    %v6247 = vmul.f32 %v5991, -100.0
    %v6248 = vmul.f32 %v5992, -100.0
    %v6249 = vmul.f32 %v5993, -100.0
    %v6250 = vmul.f32 %v5994, -100.0
    %v6251 = vmul.f32 %v5995, -100.0
    %v6252 = vmul.f32 %v5996, -100.0
    %v6253 = vmul.f32 %v5997, -100.0
    %v6254 = vmul.f32 %v5998, -100.0
    %v6255 = vmul.f32 %v5999, -100.0
    %v6256 = vmul.f32 %v6000, -100.0
    %v6257 = vmul.f32 %v6001, -100.0
    %v6258 = vmul.f32 %v6002, -100.0
    %v6259 = vmul.f32 %v6003, -100.0
    %v6260 = vmul.f32 %v6004, -100.0
    %v6261 = vmul.f32 %v6005, -100.0
    %v6262 = vmul.f32 %v6006, -100.0
    %v6263 = vmul.f32 %v6007, -100.0
    %v6264 = vmul.f32 %v6008, -100.0
    %v6265 = vmul.f32 %v6009, -100.0
    %v6266 = vmul.f32 %v6010, -100.0
    %v6267 = vmul.f32 %v6011, -100.0
    %v6268 = vmul.f32 %v6012, -100.0
    %v6269 = vmul.f32 %v6013, -100.0
    %v6270 = vmul.f32 %v6014, -100.0
    %v6271 = vmul.f32 %v6015, -100.0
    %v6272 = vmul.f32 %v6016, -100.0
    %v6273 = vmul.f32 %v6017, -100.0
    %v6274 = vmul.f32 %v6018, -100.0
    %v6275 = vmul.f32 %v6019, -100.0
    %v6276 = vmul.f32 %v6020, -100.0
    %v6277 = vmul.f32 %v6021, -100.0
    %v6278 = vmul.f32 %v6022, -100.0
    %v6279 = vmul.f32 %v6023, -100.0
    %v6280 = vmul.f32 %v6024, -100.0
    %v6281 = vmul.f32 %v6025, -100.0
    %v6282 = vmul.f32 %v6026, -100.0
    %v6283 = vmul.f32 %v6027, -100.0
    %v6284 = vmul.f32 %v6028, -100.0
    %v6285 = vmul.f32 %v6029, -100.0
    %v6286 = vmul.f32 %v6030, -100.0
    %v6287 = vmul.f32 %v6031, -100.0
    %v6288 = vmul.f32 %v6032, -100.0
    %v6289 = vmul.f32 %v6033, -100.0
    %v6290 = vmul.f32 %v6034, -100.0
    %v6291 = vmul.f32 %v6035, -100.0
    %v6292 = vmul.f32 %v6036, -100.0
    %v6293 = vmul.f32 %v6037, -100.0
    %v6294 = vmul.f32 %v6038, -100.0
    %v6295 = vmul.f32 %v6039, -100.0
    %v6296 = vmul.f32 %v6040, -100.0
    %v6297 = vmul.f32 %v6041, -100.0
    %v6298 = vmul.f32 %v6042, -100.0
    %v6299 = vmul.f32 %v6043, -100.0
    %v6300 = vmul.f32 %v6044, -100.0
    %v6301 = vmul.f32 %v6045, -100.0
    %v6302 = vmul.f32 %v6046, -100.0
    %v6303 = vmul.f32 %v6047, -100.0
    %v6304 = vmul.f32 %v6048, -100.0
    %v6305 = vmul.f32 %v6049, -100.0
    %v6306 = vmul.f32 %v6050, -100.0
    %v6307 = vmul.f32 %v6051, -100.0
    %v6308 = vmul.f32 %v6052, -100.0
    %v6309 = vmul.f32 %v6053, -100.0
    %v6310 = vmul.f32 %v6054, -100.0
    %v6311 = vmul.f32 %v6055, -100.0
    %v6312 = vmul.f32 %v6056, -100.0
    %v6313 = vmul.f32 %v6057, -100.0
    %v6314 = vmul.f32 %v6058, -100.0
    %v6315 = vmul.f32 %v6059, -100.0
    %v6316 = vmul.f32 %v6060, -100.0
    %v6317 = vmul.f32 %v6061, -100.0
    %v6318 = vmul.f32 %v6062, -100.0
    %v6319 = vmul.f32 %v6063, -100.0
    %v6320 = vmul.f32 %v6064, -100.0
    %v6321 = vmul.f32 %v6065, -100.0
    %v6322 = vmul.f32 %v6066, -100.0
    %v6323 = vmul.f32 %v6067, -100.0
    %v6324 = vmul.f32 %v6068, -100.0
    %v6325 = vmul.f32 %v6069, -100.0
    %v6326 = vmul.f32 %v6070, -100.0
    %v6327 = vmul.f32 %v6071, -100.0
    %v6328 = vmul.f32 %v6072, -100.0
    %v6329 = vmul.f32 %v6073, -100.0
    %v6330 = vmul.f32 %v6074, -100.0
    %v6331 = vmul.f32 %v6075, -100.0
    %v6332 = vmul.f32 %v6076, -100.0
    %v6333 = vmul.f32 %v6077, -100.0
    %v6334 = vmul.f32 %v6078, -100.0
    %v6335 = vmul.f32 %v6079, -100.0
    %v6336 = vmul.f32 %v6080, -100.0
    %v6337 = vmul.f32 %v6081, -100.0
    %v6338 = vmul.f32 %v6082, -100.0
    %v6339 = vmul.f32 %v6083, -100.0
    %v6340 = vmul.f32 %v6084, -100.0
    %v6341 = vmul.f32 %v6085, -100.0
    %v6342 = vmul.f32 %v6086, -100.0
    %v6343 = vmul.f32 %v6087, -100.0
    %v6344 = vmul.f32 %v6088, -100.0
    %v6345 = vmul.f32 %v6089, -100.0
    %v6346 = vmul.f32 %v6090, -100.0
    %v6347 = vmul.f32 %v6091, -100.0
    %v6348 = vmul.f32 %v6092, -100.0
    %v6349 = vmul.f32 %v6093, -100.0
    %v6350 = vmul.f32 %v6094, -100.0
    %v6351 = vmul.f32 %v6095, -100.0
    %v6352 = vmul.f32 %v6096, -100.0
    %v6353 = vmul.f32 %v6097, -100.0
    %v6354 = vmul.f32 %v6098, -100.0
    %v6355 = vmul.f32 %v6099, -100.0
    %v6356 = vmul.f32 %v6100, -100.0
    %v6357 = vmul.f32 %v6101, -100.0
    %v6358 = vmul.f32 %v6102, -100.0
    %v6359 = vmul.f32 %v6103, -100.0
    %v6360 = vmul.f32 %v6104, -100.0
    %v6361 = vmul.f32 %v6105, -100.0
    %v6362 = vmul.f32 %v6106, -100.0
    %v6363 = vmul.f32 %v6107, -100.0
    %v6364 = vmul.f32 %v6108, -100.0
    %v6365 = vmul.f32 %v6109, -100.0
    %v6366 = vmul.f32 %v6110, -100.0
    %v6367 = vmul.f32 %v6111, -100.0
    %v6368 = vmul.f32 %v6112, -100.0
    %v6369 = vmul.f32 %v6113, -100.0
    %v6370 = vmul.f32 %v6114, -100.0
    %v6371 = vmul.f32 %v6115, -100.0
    %v6372 = vmul.f32 %v6116, -100.0
    %v6373 = vmul.f32 %v6117, -100.0
    %v6374 = vmul.f32 %v6118, -100.0
    %v6375 = vmul.f32 %v6119, -100.0
    %v6376 = vmul.f32 %v6120, -100.0
    %v6377 = vmul.f32 %v6121, -100.0
    %v6378 = vmul.f32 %v6122, -100.0
    %v6379 = vmul.f32 %v6123, -100.0
    %v6380 = vmul.f32 %v6124, -100.0
    %v6381 = vmul.f32 %v6125, -100.0
    %v6382 = vmul.f32 %v6126, -100.0
    %v6383 = vmul.f32 %v6127, -100.0
    %v6384 = vmul.f32 %v6128, -100.0
    %v6385 = vmul.f32 %v6129, -100.0
    %v6386 = vmul.f32 %v6130, -100.0
    %v6387 = vmul.f32 %v6131, -100.0
    %v6388 = vmul.f32 %v6132, -100.0
    %v6389 = vmul.f32 %v6133, -100.0
    %v6390 = vmul.f32 %v6134, -100.0
    %v6391 = vmul.f32 %v6135, -100.0
    %v6392 = vmul.f32 %v6136, -100.0
    %v6393 = vmul.f32 %v6137, -100.0
    %v6394 = vmul.f32 %v6138, -100.0
    %v6395 = vmul.f32 %v6139, -100.0
    %v6396 = vmul.f32 %v6140, -100.0
    %v6397 = vmul.f32 %v6141, -100.0
    %v6398 = vmul.f32 %v6142, -100.0
    %v6399 = vmul.f32 %v6143, -100.0
    %v6400 = vmul.f32 %v6144, -100.0
    %v6401 = vmul.f32 %v6145, -100.0
    %v6402 = vmul.f32 %v6146, -100.0
    %v6403 = vmul.f32 %v6147, -100.0
    %v6404 = vmul.f32 %v6148, -100.0
    %v6405 = vmul.f32 %v6149, -100.0
    %v6406 = vmul.f32 %v6150, -100.0
    %v6407 = vmul.f32 %v6151, -100.0
    %v6408 = vmul.f32 %v6152, -100.0
    %v6409 = vmul.f32 %v6153, -100.0
    %v6410 = vmul.f32 %v6154, -100.0
    %v6411 = vmul.f32 %v6155, -100.0
    %v6412 = vmul.f32 %v6156, -100.0
    %v6413 = vmul.f32 %v6157, -100.0
    %v6414 = vmul.f32 %v6158, -100.0
    %v6415 = vmul.f32 %v6159, -100.0
    %v6416 = vmul.f32 %v6160, -100.0
    %v6417 = vmul.f32 %v6161, -100.0
    %v6418 = vmul.f32 %v6162, -100.0
    %v6419 = vmul.f32 %v6163, -100.0
    %v6420 = vmul.f32 %v6164, -100.0
    %v6421 = vmul.f32 %v6165, -100.0
    %v6422 = vmul.f32 %v6166, -100.0
    %v6423 = vmul.f32 %v6167, -100.0
    %v6424 = vmul.f32 %v6168, -100.0
    %v6425 = vmul.f32 %v6169, -100.0
    %v6426 = vmul.f32 %v6170, -100.0
    %v6427 = vmul.f32 %v6171, -100.0
    %v6428 = vmul.f32 %v6172, -100.0
    %v6429 = vmul.f32 %v6173, -100.0
    %v6430 = vmul.f32 %v6174, -100.0
    %v6431 = vmul.f32 %v6175, -100.0
    %v6432 = vmul.f32 %v6176, -100.0
    %v6433 = vmul.f32 %v6177, -100.0
    %v6434 = vmul.f32 %v6178, -100.0
    %v6435 = vmul.f32 %v6179, -100.0
    %v6436 = vmul.f32 %v6180, -100.0
    %v6437 = vmul.f32 %v6181, -100.0
    %v6438 = vmul.f32 %v6182, -100.0
    %v6439 = vmul.f32 %v6183, -100.0
    %v6440 = vmul.f32 %v6184, -100.0
    %v6441 = vmul.f32 %v6185, -100.0
    %v6442 = vmul.f32 %v6186, -100.0
    %v6443 = vmul.f32 %v6187, -100.0
    %v6444 = vmul.f32 %v6188, -100.0
    %v6445 = vmul.f32 %v6189, -100.0
    %v6446 = vmul.f32 %v6190, -100.0
    %v6447 = vmul.f32 %v6191, -100.0
    %v6448 = vmul.f32 %v6192, -100.0
    %v6449 = vmul.f32 %v6193, -100.0
    %v6450 = vmul.f32 %v6194, -100.0
    %v6451 = vmul.f32 %v6195, -100.0
    %v6452 = vmul.f32 %v6196, -100.0
    %v6453 = vmul.f32 %v6197, -100.0
    %v6454 = vmul.f32 %v6198, -100.0
    %v6455 = vmul.f32 %v6199, -100.0
    %v6456 = vmul.f32 %v6200, -100.0
    %v6457 = vmul.f32 %v6201, -100.0
    %v6458 = vmul.f32 %v6202, -100.0
    %v6459 = vmul.f32 %v6203, -100.0
    %v6460 = vmul.f32 %v6204, -100.0
    %v6461 = vmul.f32 %v6205, -100.0
    %v6462 = vmul.f32 %v6206, -100.0
    %v6463 = vmul.f32 %v6207, -100.0
    %v6464 = vmul.f32 %v6208, -100.0
    %v6465 = vmul.f32 %v6209, -100.0
    %v6466 = vmul.f32 %v6210, -100.0
    %v6467 = vmul.f32 %v6211, -100.0
    %v6468 = vmul.f32 %v6212, -100.0
    %v6469 = vmul.f32 %v6213, 1.442695
    %v6470 = vpow.pop %v6469
    %v6471 = vmul.f32 %v6214, 1.442695
    %v6472 = vpow.pop %v6471
    %v6473 = vmul.f32 %v6215, 1.442695
    %v6474 = vpow.pop %v6473
    %v6475 = vmul.f32 %v6216, 1.442695
    %v6476 = vpow.pop %v6475
    %v6477 = vmul.f32 %v6217, 1.442695
    %v6478 = vpow.pop %v6477
    %v6479 = vmul.f32 %v6218, 1.442695
    %v6480 = vpow.pop %v6479
    %v6481 = vmul.f32 %v6219, 1.442695
    %v6482 = vpow.pop %v6481
    %v6483 = vmul.f32 %v6220, 1.442695
    %v6484 = vpow.pop %v6483
    %v6485 = vmul.f32 %v6221, 1.442695
    %v6486 = vpow.pop %v6485
    %v6487 = vmul.f32 %v6222, 1.442695
    %v6488 = vpow.pop %v6487
    %v6489 = vmul.f32 %v6223, 1.442695
    %v6490 = vpow.pop %v6489
    %v6491 = vmul.f32 %v6224, 1.442695
    %v6492 = vpow.pop %v6491
    %v6493 = vmul.f32 %v6225, 1.442695
    %v6494 = vpow.pop %v6493
    %v6495 = vmul.f32 %v6226, 1.442695
    %v6496 = vpow.pop %v6495
    %v6497 = vmul.f32 %v6227, 1.442695
    %v6498 = vpow.pop %v6497
    %v6499 = vmul.f32 %v6228, 1.442695
    %v6500 = vpow.pop %v6499
    %v6501 = vmul.f32 %v6229, 1.442695
    %v6502 = vpow.pop %v6501
    %v6503 = vmul.f32 %v6230, 1.442695
    %v6504 = vpow.pop %v6503
    %v6505 = vmul.f32 %v6231, 1.442695
    %v6506 = vpow.pop %v6505
    %v6507 = vmul.f32 %v6232, 1.442695
    %v6508 = vpow.pop %v6507
    %v6509 = vmul.f32 %v6233, 1.442695
    %v6510 = vpow.pop %v6509
    %v6511 = vmul.f32 %v6234, 1.442695
    %v6512 = vpow.pop %v6511
    %v6513 = vmul.f32 %v6235, 1.442695
    %v6514 = vpow.pop %v6513
    %v6515 = vmul.f32 %v6236, 1.442695
    %v6516 = vpow.pop %v6515
    %v6517 = vmul.f32 %v6237, 1.442695
    %v6518 = vpow.pop %v6517
    %v6519 = vmul.f32 %v6238, 1.442695
    %v6520 = vpow.pop %v6519
    %v6521 = vmul.f32 %v6239, 1.442695
    %v6522 = vpow.pop %v6521
    %v6523 = vmul.f32 %v6240, 1.442695
    %v6524 = vpow.pop %v6523
    %v6525 = vmul.f32 %v6241, 1.442695
    %v6526 = vpow.pop %v6525
    %v6527 = vmul.f32 %v6242, 1.442695
    %v6528 = vpow.pop %v6527
    %v6529 = vmul.f32 %v6243, 1.442695
    %v6530 = vpow.pop %v6529
    %v6531 = vmul.f32 %v6244, 1.442695
    %v6532 = vpow.pop %v6531
    %v6533 = vmul.f32 %v6245, 1.442695
    %v6534 = vpow.pop %v6533
    %v6535 = vmul.f32 %v6246, 1.442695
    %v6536 = vpow.pop %v6535
    %v6537 = vmul.f32 %v6247, 1.442695
    %v6538 = vpow.pop %v6537
    %v6539 = vmul.f32 %v6248, 1.442695
    %v6540 = vpow.pop %v6539
    %v6541 = vmul.f32 %v6249, 1.442695
    %v6542 = vpow.pop %v6541
    %v6543 = vmul.f32 %v6250, 1.442695
    %v6544 = vpow.pop %v6543
    %v6545 = vmul.f32 %v6251, 1.442695
    %v6546 = vpow.pop %v6545
    %v6547 = vmul.f32 %v6252, 1.442695
    %v6548 = vpow.pop %v6547
    %v6549 = vmul.f32 %v6253, 1.442695
    %v6550 = vpow.pop %v6549
    %v6551 = vmul.f32 %v6254, 1.442695
    %v6552 = vpow.pop %v6551
    %v6553 = vmul.f32 %v6255, 1.442695
    %v6554 = vpow.pop %v6553
    %v6555 = vmul.f32 %v6256, 1.442695
    %v6556 = vpow.pop %v6555
    %v6557 = vmul.f32 %v6257, 1.442695
    %v6558 = vpow.pop %v6557
    %v6559 = vmul.f32 %v6258, 1.442695
    %v6560 = vpow.pop %v6559
    %v6561 = vmul.f32 %v6259, 1.442695
    %v6562 = vpow.pop %v6561
    %v6563 = vmul.f32 %v6260, 1.442695
    %v6564 = vpow.pop %v6563
    %v6565 = vmul.f32 %v6261, 1.442695
    %v6566 = vpow.pop %v6565
    %v6567 = vmul.f32 %v6262, 1.442695
    %v6568 = vpow.pop %v6567
    %v6569 = vmul.f32 %v6263, 1.442695
    %v6570 = vpow.pop %v6569
    %v6571 = vmul.f32 %v6264, 1.442695
    %v6572 = vpow.pop %v6571
    %v6573 = vmul.f32 %v6265, 1.442695
    %v6574 = vpow.pop %v6573
    %v6575 = vmul.f32 %v6266, 1.442695
    %v6576 = vpow.pop %v6575
    %v6577 = vmul.f32 %v6267, 1.442695
    %v6578 = vpow.pop %v6577
    %v6579 = vmul.f32 %v6268, 1.442695
    %v6580 = vpow.pop %v6579
    %v6581 = vmul.f32 %v6269, 1.442695
    %v6582 = vpow.pop %v6581
    %v6583 = vmul.f32 %v6270, 1.442695
    %v6584 = vpow.pop %v6583
    %v6585 = vmul.f32 %v6271, 1.442695
    %v6586 = vpow.pop %v6585
    %v6587 = vmul.f32 %v6272, 1.442695
    %v6588 = vpow.pop %v6587
    %v6589 = vmul.f32 %v6273, 1.442695
    %v6590 = vpow.pop %v6589
    %v6591 = vmul.f32 %v6274, 1.442695
    %v6592 = vpow.pop %v6591
    %v6593 = vmul.f32 %v6275, 1.442695
    %v6594 = vpow.pop %v6593
    %v6595 = vmul.f32 %v6276, 1.442695
    %v6596 = vpow.pop %v6595
    %v6597 = vmul.f32 %v6277, 1.442695
    %v6598 = vpow.pop %v6597
    %v6599 = vmul.f32 %v6278, 1.442695
    %v6600 = vpow.pop %v6599
    %v6601 = vmul.f32 %v6279, 1.442695
    %v6602 = vpow.pop %v6601
    %v6603 = vmul.f32 %v6280, 1.442695
    %v6604 = vpow.pop %v6603
    %v6605 = vmul.f32 %v6281, 1.442695
    %v6606 = vpow.pop %v6605
    %v6607 = vmul.f32 %v6282, 1.442695
    %v6608 = vpow.pop %v6607
    %v6609 = vmul.f32 %v6283, 1.442695
    %v6610 = vpow.pop %v6609
    %v6611 = vmul.f32 %v6284, 1.442695
    %v6612 = vpow.pop %v6611
    %v6613 = vmul.f32 %v6285, 1.442695
    %v6614 = vpow.pop %v6613
    %v6615 = vmul.f32 %v6286, 1.442695
    %v6616 = vpow.pop %v6615
    %v6617 = vmul.f32 %v6287, 1.442695
    %v6618 = vpow.pop %v6617
    %v6619 = vmul.f32 %v6288, 1.442695
    %v6620 = vpow.pop %v6619
    %v6621 = vmul.f32 %v6289, 1.442695
    %v6622 = vpow.pop %v6621
    %v6623 = vmul.f32 %v6290, 1.442695
    %v6624 = vpow.pop %v6623
    %v6625 = vmul.f32 %v6291, 1.442695
    %v6626 = vpow.pop %v6625
    %v6627 = vmul.f32 %v6292, 1.442695
    %v6628 = vpow.pop %v6627
    %v6629 = vmul.f32 %v6293, 1.442695
    %v6630 = vpow.pop %v6629
    %v6631 = vmul.f32 %v6294, 1.442695
    %v6632 = vpow.pop %v6631
    %v6633 = vmul.f32 %v6295, 1.442695
    %v6634 = vpow.pop %v6633
    %v6635 = vmul.f32 %v6296, 1.442695
    %v6636 = vpow.pop %v6635
    %v6637 = vmul.f32 %v6297, 1.442695
    %v6638 = vpow.pop %v6637
    %v6639 = vmul.f32 %v6298, 1.442695
    %v6640 = vpow.pop %v6639
    %v6641 = vmul.f32 %v6299, 1.442695
    %v6642 = vpow.pop %v6641
    %v6643 = vmul.f32 %v6300, 1.442695
    %v6644 = vpow.pop %v6643
    %v6645 = vmul.f32 %v6301, 1.442695
    %v6646 = vpow.pop %v6645
    %v6647 = vmul.f32 %v6302, 1.442695
    %v6648 = vpow.pop %v6647
    %v6649 = vmul.f32 %v6303, 1.442695
    %v6650 = vpow.pop %v6649
    %v6651 = vmul.f32 %v6304, 1.442695
    %v6652 = vpow.pop %v6651
    %v6653 = vmul.f32 %v6305, 1.442695
    %v6654 = vpow.pop %v6653
    %v6655 = vmul.f32 %v6306, 1.442695
    %v6656 = vpow.pop %v6655
    %v6657 = vmul.f32 %v6307, 1.442695
    %v6658 = vpow.pop %v6657
    %v6659 = vmul.f32 %v6308, 1.442695
    %v6660 = vpow.pop %v6659
    %v6661 = vmul.f32 %v6309, 1.442695
    %v6662 = vpow.pop %v6661
    %v6663 = vmul.f32 %v6310, 1.442695
    %v6664 = vpow.pop %v6663
    %v6665 = vmul.f32 %v6311, 1.442695
    %v6666 = vpow.pop %v6665
    %v6667 = vmul.f32 %v6312, 1.442695
    %v6668 = vpow.pop %v6667
    %v6669 = vmul.f32 %v6313, 1.442695
    %v6670 = vpow.pop %v6669
    %v6671 = vmul.f32 %v6314, 1.442695
    %v6672 = vpow.pop %v6671
    %v6673 = vmul.f32 %v6315, 1.442695
    %v6674 = vpow.pop %v6673
    %v6675 = vmul.f32 %v6316, 1.442695
    %v6676 = vpow.pop %v6675
    %v6677 = vmul.f32 %v6317, 1.442695
    %v6678 = vpow.pop %v6677
    %v6679 = vmul.f32 %v6318, 1.442695
    %v6680 = vpow.pop %v6679
    %v6681 = vmul.f32 %v6319, 1.442695
    %v6682 = vpow.pop %v6681
    %v6683 = vmul.f32 %v6320, 1.442695
    %v6684 = vpow.pop %v6683
    %v6685 = vmul.f32 %v6321, 1.442695
    %v6686 = vpow.pop %v6685
    %v6687 = vmul.f32 %v6322, 1.442695
    %v6688 = vpow.pop %v6687
    %v6689 = vmul.f32 %v6323, 1.442695
    %v6690 = vpow.pop %v6689
    %v6691 = vmul.f32 %v6324, 1.442695
    %v6692 = vpow.pop %v6691
    %v6693 = vmul.f32 %v6325, 1.442695
    %v6694 = vpow.pop %v6693
    %v6695 = vmul.f32 %v6326, 1.442695
    %v6696 = vpow.pop %v6695
    %v6697 = vmul.f32 %v6327, 1.442695
    %v6698 = vpow.pop %v6697
    %v6699 = vmul.f32 %v6328, 1.442695
    %v6700 = vpow.pop %v6699
    %v6701 = vmul.f32 %v6329, 1.442695
    %v6702 = vpow.pop %v6701
    %v6703 = vmul.f32 %v6330, 1.442695
    %v6704 = vpow.pop %v6703
    %v6705 = vmul.f32 %v6331, 1.442695
    %v6706 = vpow.pop %v6705
    %v6707 = vmul.f32 %v6332, 1.442695
    %v6708 = vpow.pop %v6707
    %v6709 = vmul.f32 %v6333, 1.442695
    %v6710 = vpow.pop %v6709
    %v6711 = vmul.f32 %v6334, 1.442695
    %v6712 = vpow.pop %v6711
    %v6713 = vmul.f32 %v6335, 1.442695
    %v6714 = vpow.pop %v6713
    %v6715 = vmul.f32 %v6336, 1.442695
    %v6716 = vpow.pop %v6715
    %v6717 = vmul.f32 %v6337, 1.442695
    %v6718 = vpow.pop %v6717
    %v6719 = vmul.f32 %v6338, 1.442695
    %v6720 = vpow.pop %v6719
    %v6721 = vmul.f32 %v6339, 1.442695
    %v6722 = vpow.pop %v6721
    %v6723 = vmul.f32 %v6340, 1.442695
    %v6724 = vpow.pop %v6723
    %v6725 = vmul.f32 %v6341, 1.442695
    %v6726 = vpow.pop %v6725
    %v6727 = vmul.f32 %v6342, 1.442695
    %v6728 = vpow.pop %v6727
    %v6729 = vmul.f32 %v6343, 1.442695
    %v6730 = vpow.pop %v6729
    %v6731 = vmul.f32 %v6344, 1.442695
    %v6732 = vpow.pop %v6731
    %v6733 = vmul.f32 %v6345, 1.442695
    %v6734 = vpow.pop %v6733
    %v6735 = vmul.f32 %v6346, 1.442695
    %v6736 = vpow.pop %v6735
    %v6737 = vmul.f32 %v6347, 1.442695
    %v6738 = vpow.pop %v6737
    %v6739 = vmul.f32 %v6348, 1.442695
    %v6740 = vpow.pop %v6739
    %v6741 = vmul.f32 %v6349, 1.442695
    %v6742 = vpow.pop %v6741
    %v6743 = vmul.f32 %v6350, 1.442695
    %v6744 = vpow.pop %v6743
    %v6745 = vmul.f32 %v6351, 1.442695
    %v6746 = vpow.pop %v6745
    %v6747 = vmul.f32 %v6352, 1.442695
    %v6748 = vpow.pop %v6747
    %v6749 = vmul.f32 %v6353, 1.442695
    %v6750 = vpow.pop %v6749
    %v6751 = vmul.f32 %v6354, 1.442695
    %v6752 = vpow.pop %v6751
    %v6753 = vmul.f32 %v6355, 1.442695
    %v6754 = vpow.pop %v6753
    %v6755 = vmul.f32 %v6356, 1.442695
    %v6756 = vpow.pop %v6755
    %v6757 = vmul.f32 %v6357, 1.442695
    %v6758 = vpow.pop %v6757
    %v6759 = vmul.f32 %v6358, 1.442695
    %v6760 = vpow.pop %v6759
    %v6761 = vmul.f32 %v6359, 1.442695
    %v6762 = vpow.pop %v6761
    %v6763 = vmul.f32 %v6360, 1.442695
    %v6764 = vpow.pop %v6763
    %v6765 = vmul.f32 %v6361, 1.442695
    %v6766 = vpow.pop %v6765
    %v6767 = vmul.f32 %v6362, 1.442695
    %v6768 = vpow.pop %v6767
    %v6769 = vmul.f32 %v6363, 1.442695
    %v6770 = vpow.pop %v6769
    %v6771 = vmul.f32 %v6364, 1.442695
    %v6772 = vpow.pop %v6771
    %v6773 = vmul.f32 %v6365, 1.442695
    %v6774 = vpow.pop %v6773
    %v6775 = vmul.f32 %v6366, 1.442695
    %v6776 = vpow.pop %v6775
    %v6777 = vmul.f32 %v6367, 1.442695
    %v6778 = vpow.pop %v6777
    %v6779 = vmul.f32 %v6368, 1.442695
    %v6780 = vpow.pop %v6779
    %v6781 = vmul.f32 %v6369, 1.442695
    %v6782 = vpow.pop %v6781
    %v6783 = vmul.f32 %v6370, 1.442695
    %v6784 = vpow.pop %v6783
    %v6785 = vmul.f32 %v6371, 1.442695
    %v6786 = vpow.pop %v6785
    %v6787 = vmul.f32 %v6372, 1.442695
    %v6788 = vpow.pop %v6787
    %v6789 = vmul.f32 %v6373, 1.442695
    %v6790 = vpow.pop %v6789
    %v6791 = vmul.f32 %v6374, 1.442695
    %v6792 = vpow.pop %v6791
    %v6793 = vmul.f32 %v6375, 1.442695
    %v6794 = vpow.pop %v6793
    %v6795 = vmul.f32 %v6376, 1.442695
    %v6796 = vpow.pop %v6795
    %v6797 = vmul.f32 %v6377, 1.442695
    %v6798 = vpow.pop %v6797
    %v6799 = vmul.f32 %v6378, 1.442695
    %v6800 = vpow.pop %v6799
    %v6801 = vmul.f32 %v6379, 1.442695
    %v6802 = vpow.pop %v6801
    %v6803 = vmul.f32 %v6380, 1.442695
    %v6804 = vpow.pop %v6803
    %v6805 = vmul.f32 %v6381, 1.442695
    %v6806 = vpow.pop %v6805
    %v6807 = vmul.f32 %v6382, 1.442695
    %v6808 = vpow.pop %v6807
    %v6809 = vmul.f32 %v6383, 1.442695
    %v6810 = vpow.pop %v6809
    %v6811 = vmul.f32 %v6384, 1.442695
    %v6812 = vpow.pop %v6811
    %v6813 = vmul.f32 %v6385, 1.442695
    %v6814 = vpow.pop %v6813
    %v6815 = vmul.f32 %v6386, 1.442695
    %v6816 = vpow.pop %v6815
    %v6817 = vmul.f32 %v6387, 1.442695
    %v6818 = vpow.pop %v6817
    %v6819 = vmul.f32 %v6388, 1.442695
    %v6820 = vpow.pop %v6819
    %v6821 = vmul.f32 %v6389, 1.442695
    %v6822 = vpow.pop %v6821
    %v6823 = vmul.f32 %v6390, 1.442695
    %v6824 = vpow.pop %v6823
    %v6825 = vmul.f32 %v6391, 1.442695
    %v6826 = vpow.pop %v6825
    %v6827 = vmul.f32 %v6392, 1.442695
    %v6828 = vpow.pop %v6827
    %v6829 = vmul.f32 %v6393, 1.442695
    %v6830 = vpow.pop %v6829
    %v6831 = vmul.f32 %v6394, 1.442695
    %v6832 = vpow.pop %v6831
    %v6833 = vmul.f32 %v6395, 1.442695
    %v6834 = vpow.pop %v6833
    %v6835 = vmul.f32 %v6396, 1.442695
    %v6836 = vpow.pop %v6835
    %v6837 = vmul.f32 %v6397, 1.442695
    %v6838 = vpow.pop %v6837
    %v6839 = vmul.f32 %v6398, 1.442695
    %v6840 = vpow.pop %v6839
    %v6841 = vmul.f32 %v6399, 1.442695
    %v6842 = vpow.pop %v6841
    %v6843 = vmul.f32 %v6400, 1.442695
    %v6844 = vpow.pop %v6843
    %v6845 = vmul.f32 %v6401, 1.442695
    %v6846 = vpow.pop %v6845
    %v6847 = vmul.f32 %v6402, 1.442695
    %v6848 = vpow.pop %v6847
    %v6849 = vmul.f32 %v6403, 1.442695
    %v6850 = vpow.pop %v6849
    %v6851 = vmul.f32 %v6404, 1.442695
    %v6852 = vpow.pop %v6851
    %v6853 = vmul.f32 %v6405, 1.442695
    %v6854 = vpow.pop %v6853
    %v6855 = vmul.f32 %v6406, 1.442695
    %v6856 = vpow.pop %v6855
    %v6857 = vmul.f32 %v6407, 1.442695
    %v6858 = vpow.pop %v6857
    %v6859 = vmul.f32 %v6408, 1.442695
    %v6860 = vpow.pop %v6859
    %v6861 = vmul.f32 %v6409, 1.442695
    %v6862 = vpow.pop %v6861
    %v6863 = vmul.f32 %v6410, 1.442695
    %v6864 = vpow.pop %v6863
    %v6865 = vmul.f32 %v6411, 1.442695
    %v6866 = vpow.pop %v6865
    %v6867 = vmul.f32 %v6412, 1.442695
    %v6868 = vpow.pop %v6867
    %v6869 = vmul.f32 %v6413, 1.442695
    %v6870 = vpow.pop %v6869
    %v6871 = vmul.f32 %v6414, 1.442695
    %v6872 = vpow.pop %v6871
    %v6873 = vmul.f32 %v6415, 1.442695
    %v6874 = vpow.pop %v6873
    %v6875 = vmul.f32 %v6416, 1.442695
    %v6876 = vpow.pop %v6875
    %v6877 = vmul.f32 %v6417, 1.442695
    %v6878 = vpow.pop %v6877
    %v6879 = vmul.f32 %v6418, 1.442695
    %v6880 = vpow.pop %v6879
    %v6881 = vmul.f32 %v6419, 1.442695
    %v6882 = vpow.pop %v6881
    %v6883 = vmul.f32 %v6420, 1.442695
    %v6884 = vpow.pop %v6883
    %v6885 = vmul.f32 %v6421, 1.442695
    %v6886 = vpow.pop %v6885
    %v6887 = vmul.f32 %v6422, 1.442695
    %v6888 = vpow.pop %v6887
    %v6889 = vmul.f32 %v6423, 1.442695
    %v6890 = vpow.pop %v6889
    %v6891 = vmul.f32 %v6424, 1.442695
    %v6892 = vpow.pop %v6891
    %v6893 = vmul.f32 %v6425, 1.442695
    %v6894 = vpow.pop %v6893
    %v6895 = vmul.f32 %v6426, 1.442695
    %v6896 = vpow.pop %v6895
    %v6897 = vmul.f32 %v6427, 1.442695
    %v6898 = vpow.pop %v6897
    %v6899 = vmul.f32 %v6428, 1.442695
    %v6900 = vpow.pop %v6899
    %v6901 = vmul.f32 %v6429, 1.442695
    %v6902 = vpow.pop %v6901
    %v6903 = vmul.f32 %v6430, 1.442695
    %v6904 = vpow.pop %v6903
    %v6905 = vmul.f32 %v6431, 1.442695
    %v6906 = vpow.pop %v6905
    %v6907 = vmul.f32 %v6432, 1.442695
    %v6908 = vpow.pop %v6907
    %v6909 = vmul.f32 %v6433, 1.442695
    %v6910 = vpow.pop %v6909
    %v6911 = vmul.f32 %v6434, 1.442695
    %v6912 = vpow.pop %v6911
    %v6913 = vmul.f32 %v6435, 1.442695
    %v6914 = vpow.pop %v6913
    %v6915 = vmul.f32 %v6436, 1.442695
    %v6916 = vpow.pop %v6915
    %v6917 = vmul.f32 %v6437, 1.442695
    %v6918 = vpow.pop %v6917
    %v6919 = vmul.f32 %v6438, 1.442695
    %v6920 = vpow.pop %v6919
    %v6921 = vmul.f32 %v6439, 1.442695
    %v6922 = vpow.pop %v6921
    %v6923 = vmul.f32 %v6440, 1.442695
    %v6924 = vpow.pop %v6923
    %v6925 = vmul.f32 %v6441, 1.442695
    %v6926 = vpow.pop %v6925
    %v6927 = vmul.f32 %v6442, 1.442695
    %v6928 = vpow.pop %v6927
    %v6929 = vmul.f32 %v6443, 1.442695
    %v6930 = vpow.pop %v6929
    %v6931 = vmul.f32 %v6444, 1.442695
    %v6932 = vpow.pop %v6931
    %v6933 = vmul.f32 %v6445, 1.442695
    %v6934 = vpow.pop %v6933
    %v6935 = vmul.f32 %v6446, 1.442695
    %v6936 = vpow.pop %v6935
    %v6937 = vmul.f32 %v6447, 1.442695
    %v6938 = vpow.pop %v6937
    %v6939 = vmul.f32 %v6448, 1.442695
    %v6940 = vpow.pop %v6939
    %v6941 = vmul.f32 %v6449, 1.442695
    %v6942 = vpow.pop %v6941
    %v6943 = vmul.f32 %v6450, 1.442695
    %v6944 = vpow.pop %v6943
    %v6945 = vmul.f32 %v6451, 1.442695
    %v6946 = vpow.pop %v6945
    %v6947 = vmul.f32 %v6452, 1.442695
    %v6948 = vpow.pop %v6947
    %v6949 = vmul.f32 %v6453, 1.442695
    %v6950 = vpow.pop %v6949
    %v6951 = vmul.f32 %v6454, 1.442695
    %v6952 = vpow.pop %v6951
    %v6953 = vmul.f32 %v6455, 1.442695
    %v6954 = vpow.pop %v6953
    %v6955 = vmul.f32 %v6456, 1.442695
    %v6956 = vpow.pop %v6955
    %v6957 = vmul.f32 %v6457, 1.442695
    %v6958 = vpow.pop %v6957
    %v6959 = vmul.f32 %v6458, 1.442695
    %v6960 = vpow.pop %v6959
    %v6961 = vmul.f32 %v6459, 1.442695
    %v6962 = vpow.pop %v6961
    %v6963 = vmul.f32 %v6460, 1.442695
    %v6964 = vpow.pop %v6963
    %v6965 = vmul.f32 %v6461, 1.442695
    %v6966 = vpow.pop %v6965
    %v6967 = vmul.f32 %v6462, 1.442695
    %v6968 = vpow.pop %v6967
    %v6969 = vmul.f32 %v6463, 1.442695
    %v6970 = vpow.pop %v6969
    %v6971 = vmul.f32 %v6464, 1.442695
    %v6972 = vpow.pop %v6971
    %v6973 = vmul.f32 %v6465, 1.442695
    %v6974 = vpow.pop %v6973
    %v6975 = vmul.f32 %v6466, 1.442695
    %v6976 = vpow.pop %v6975
    %v6977 = vmul.f32 %v6467, 1.442695
    %v6978 = vpow.pop %v6977
    %v6979 = vmul.f32 %v6468, 1.442695
    %v6980 = vpow.pop %v6979
    %v6981 = vadd.f32 %v6470, %v6474
    %v6982 = vadd.f32 %v6981, %v6478
    %v6983 = vadd.f32 %v6982, %v6482
    %v6984 = vadd.f32 %v6983, %v6486
    %v6985 = vadd.f32 %v6984, %v6490
    %v6986 = vadd.f32 %v6985, %v6494
    %v6987 = vadd.f32 %v6986, %v6498
    %v6988 = vadd.f32 %v6987, %v6502
    %v6989 = vadd.f32 %v6988, %v6506
    %v6990 = vadd.f32 %v6989, %v6510
    %v6991 = vadd.f32 %v6990, %v6514
    %v6992 = vadd.f32 %v6991, %v6518
    %v6993 = vadd.f32 %v6992, %v6522
    %v6994 = vadd.f32 %v6993, %v6526
    %v6995 = vadd.f32 %v6994, %v6530
    %v6996 = vrot.slane %v6995, 4
    %v6997 = vadd.f32 %v6995, %v6996
    %v6998 = vrot.slane %v6997, 2
    %v6999 = vadd.f32 %v6997, %v6998
    %v7000 = vrot.slane %v6999, 1
    %v7001 = vadd.f32 %v6999, %v7000
    %v7002 = vadd.f32 %v6472, %v6476
    %v7003 = vadd.f32 %v7002, %v6480
    %v7004 = vadd.f32 %v7003, %v6484
    %v7005 = vadd.f32 %v7004, %v6488
    %v7006 = vadd.f32 %v7005, %v6492
    %v7007 = vadd.f32 %v7006, %v6496
    %v7008 = vadd.f32 %v7007, %v6500
    %v7009 = vadd.f32 %v7008, %v6504
    %v7010 = vadd.f32 %v7009, %v6508
    %v7011 = vadd.f32 %v7010, %v6512
    %v7012 = vadd.f32 %v7011, %v6516
    %v7013 = vadd.f32 %v7012, %v6520
    %v7014 = vadd.f32 %v7013, %v6524
    %v7015 = vadd.f32 %v7014, %v6528
    %v7016 = vadd.f32 %v7015, %v6532
    %v7017 = vrot.slane %v7016, 4
    %v7018 = vadd.f32 %v7016, %v7017
    %v7019 = vrot.slane %v7018, 2
    %v7020 = vadd.f32 %v7018, %v7019
    %v7021 = vrot.slane %v7020, 1
    %v7022 = vadd.f32 %v7020, %v7021
    %v7023 = vadd.f32 %v6534, %v6538
    %v7024 = vadd.f32 %v7023, %v6542
    %v7025 = vadd.f32 %v7024, %v6546
    %v7026 = vadd.f32 %v7025, %v6550
    %v7027 = vadd.f32 %v7026, %v6554
    %v7028 = vadd.f32 %v7027, %v6558
    %v7029 = vadd.f32 %v7028, %v6562
    %v7030 = vadd.f32 %v7029, %v6566
    %v7031 = vadd.f32 %v7030, %v6570
    %v7032 = vadd.f32 %v7031, %v6574
    %v7033 = vadd.f32 %v7032, %v6578
    %v7034 = vadd.f32 %v7033, %v6582
    %v7035 = vadd.f32 %v7034, %v6586
    %v7036 = vadd.f32 %v7035, %v6590
    %v7037 = vadd.f32 %v7036, %v6594
    %v7038 = vrot.slane %v7037, 4
    %v7039 = vadd.f32 %v7037, %v7038
    %v7040 = vrot.slane %v7039, 2
    %v7041 = vadd.f32 %v7039, %v7040
    %v7042 = vrot.slane %v7041, 1
    %v7043 = vadd.f32 %v7041, %v7042
    %v7044 = vadd.f32 %v6536, %v6540
    %v7045 = vadd.f32 %v7044, %v6544
    %v7046 = vadd.f32 %v7045, %v6548
    %v7047 = vadd.f32 %v7046, %v6552
    %v7048 = vadd.f32 %v7047, %v6556
    %v7049 = vadd.f32 %v7048, %v6560
    %v7050 = vadd.f32 %v7049, %v6564
    %v7051 = vadd.f32 %v7050, %v6568
    %v7052 = vadd.f32 %v7051, %v6572
    %v7053 = vadd.f32 %v7052, %v6576
    %v7054 = vadd.f32 %v7053, %v6580
    %v7055 = vadd.f32 %v7054, %v6584
    %v7056 = vadd.f32 %v7055, %v6588
    %v7057 = vadd.f32 %v7056, %v6592
    %v7058 = vadd.f32 %v7057, %v6596
    %v7059 = vrot.slane %v7058, 4
    %v7060 = vadd.f32 %v7058, %v7059
    %v7061 = vrot.slane %v7060, 2
    %v7062 = vadd.f32 %v7060, %v7061
    %v7063 = vrot.slane %v7062, 1
    %v7064 = vadd.f32 %v7062, %v7063
    %v7065 = vadd.f32 %v6598, %v6602
    %v7066 = vadd.f32 %v7065, %v6606
    %v7067 = vadd.f32 %v7066, %v6610
    %v7068 = vadd.f32 %v7067, %v6614
    %v7069 = vadd.f32 %v7068, %v6618
    %v7070 = vadd.f32 %v7069, %v6622
    %v7071 = vadd.f32 %v7070, %v6626
    %v7072 = vadd.f32 %v7071, %v6630
    %v7073 = vadd.f32 %v7072, %v6634
    %v7074 = vadd.f32 %v7073, %v6638
    %v7075 = vadd.f32 %v7074, %v6642
    %v7076 = vadd.f32 %v7075, %v6646
    %v7077 = vadd.f32 %v7076, %v6650
    %v7078 = vadd.f32 %v7077, %v6654
    %v7079 = vadd.f32 %v7078, %v6658
    %v7080 = vrot.slane %v7079, 4
    %v7081 = vadd.f32 %v7079, %v7080
    %v7082 = vrot.slane %v7081, 2
    %v7083 = vadd.f32 %v7081, %v7082
    %v7084 = vrot.slane %v7083, 1
    %v7085 = vadd.f32 %v7083, %v7084
    %v7086 = vadd.f32 %v6600, %v6604
    %v7087 = vadd.f32 %v7086, %v6608
    %v7088 = vadd.f32 %v7087, %v6612
    %v7089 = vadd.f32 %v7088, %v6616
    %v7090 = vadd.f32 %v7089, %v6620
    %v7091 = vadd.f32 %v7090, %v6624
    %v7092 = vadd.f32 %v7091, %v6628
    %v7093 = vadd.f32 %v7092, %v6632
    %v7094 = vadd.f32 %v7093, %v6636
    %v7095 = vadd.f32 %v7094, %v6640
    %v7096 = vadd.f32 %v7095, %v6644
    %v7097 = vadd.f32 %v7096, %v6648
    %v7098 = vadd.f32 %v7097, %v6652
    %v7099 = vadd.f32 %v7098, %v6656
    %v7100 = vadd.f32 %v7099, %v6660
    %v7101 = vrot.slane %v7100, 4
    %v7102 = vadd.f32 %v7100, %v7101
    %v7103 = vrot.slane %v7102, 2
    %v7104 = vadd.f32 %v7102, %v7103
    %v7105 = vrot.slane %v7104, 1
    %v7106 = vadd.f32 %v7104, %v7105
    %v7107 = vadd.f32 %v6662, %v6666
    %v7108 = vadd.f32 %v7107, %v6670
    %v7109 = vadd.f32 %v7108, %v6674
    %v7110 = vadd.f32 %v7109, %v6678
    %v7111 = vadd.f32 %v7110, %v6682
    %v7112 = vadd.f32 %v7111, %v6686
    %v7113 = vadd.f32 %v7112, %v6690
    %v7114 = vadd.f32 %v7113, %v6694
    %v7115 = vadd.f32 %v7114, %v6698
    %v7116 = vadd.f32 %v7115, %v6702
    %v7117 = vadd.f32 %v7116, %v6706
    %v7118 = vadd.f32 %v7117, %v6710
    %v7119 = vadd.f32 %v7118, %v6714
    %v7120 = vadd.f32 %v7119, %v6718
    %v7121 = vadd.f32 %v7120, %v6722
    %v7122 = vrot.slane %v7121, 4
    %v7123 = vadd.f32 %v7121, %v7122
    %v7124 = vrot.slane %v7123, 2
    %v7125 = vadd.f32 %v7123, %v7124
    %v7126 = vrot.slane %v7125, 1
    %v7127 = vadd.f32 %v7125, %v7126
    %v7128 = vadd.f32 %v6664, %v6668
    %v7129 = vadd.f32 %v7128, %v6672
    %v7130 = vadd.f32 %v7129, %v6676
    %v7131 = vadd.f32 %v7130, %v6680
    %v7132 = vadd.f32 %v7131, %v6684
    %v7133 = vadd.f32 %v7132, %v6688
    %v7134 = vadd.f32 %v7133, %v6692
    %v7135 = vadd.f32 %v7134, %v6696
    %v7136 = vadd.f32 %v7135, %v6700
    %v7137 = vadd.f32 %v7136, %v6704
    %v7138 = vadd.f32 %v7137, %v6708
    %v7139 = vadd.f32 %v7138, %v6712
    %v7140 = vadd.f32 %v7139, %v6716
    %v7141 = vadd.f32 %v7140, %v6720
    %v7142 = vadd.f32 %v7141, %v6724
    %v7143 = vrot.slane %v7142, 4
    %v7144 = vadd.f32 %v7142, %v7143
    %v7145 = vrot.slane %v7144, 2
    %v7146 = vadd.f32 %v7144, %v7145
    %v7147 = vrot.slane %v7146, 1
    %v7148 = vadd.f32 %v7146, %v7147
    %v7149 = vadd.f32 %v6726, %v6730
    %v7150 = vadd.f32 %v7149, %v6734
    %v7151 = vadd.f32 %v7150, %v6738
    %v7152 = vadd.f32 %v7151, %v6742
    %v7153 = vadd.f32 %v7152, %v6746
    %v7154 = vadd.f32 %v7153, %v6750
    %v7155 = vadd.f32 %v7154, %v6754
    %v7156 = vadd.f32 %v7155, %v6758
    %v7157 = vadd.f32 %v7156, %v6762
    %v7158 = vadd.f32 %v7157, %v6766
    %v7159 = vadd.f32 %v7158, %v6770
    %v7160 = vadd.f32 %v7159, %v6774
    %v7161 = vadd.f32 %v7160, %v6778
    %v7162 = vadd.f32 %v7161, %v6782
    %v7163 = vadd.f32 %v7162, %v6786
    %v7164 = vrot.slane %v7163, 4
    %v7165 = vadd.f32 %v7163, %v7164
    %v7166 = vrot.slane %v7165, 2
    %v7167 = vadd.f32 %v7165, %v7166
    %v7168 = vrot.slane %v7167, 1
    %v7169 = vadd.f32 %v7167, %v7168
    %v7170 = vadd.f32 %v6728, %v6732
    %v7171 = vadd.f32 %v7170, %v6736
    %v7172 = vadd.f32 %v7171, %v6740
    %v7173 = vadd.f32 %v7172, %v6744
    %v7174 = vadd.f32 %v7173, %v6748
    %v7175 = vadd.f32 %v7174, %v6752
    %v7176 = vadd.f32 %v7175, %v6756
    %v7177 = vadd.f32 %v7176, %v6760
    %v7178 = vadd.f32 %v7177, %v6764
    %v7179 = vadd.f32 %v7178, %v6768
    %v7180 = vadd.f32 %v7179, %v6772
    %v7181 = vadd.f32 %v7180, %v6776
    %v7182 = vadd.f32 %v7181, %v6780
    %v7183 = vadd.f32 %v7182, %v6784
    %v7184 = vadd.f32 %v7183, %v6788
    %v7185 = vrot.slane %v7184, 4
    %v7186 = vadd.f32 %v7184, %v7185
    %v7187 = vrot.slane %v7186, 2
    %v7188 = vadd.f32 %v7186, %v7187
    %v7189 = vrot.slane %v7188, 1
    %v7190 = vadd.f32 %v7188, %v7189
    %v7191 = vadd.f32 %v6790, %v6794
    %v7192 = vadd.f32 %v7191, %v6798
    %v7193 = vadd.f32 %v7192, %v6802
    %v7194 = vadd.f32 %v7193, %v6806
    %v7195 = vadd.f32 %v7194, %v6810
    %v7196 = vadd.f32 %v7195, %v6814
    %v7197 = vadd.f32 %v7196, %v6818
    %v7198 = vadd.f32 %v7197, %v6822
    %v7199 = vadd.f32 %v7198, %v6826
    %v7200 = vadd.f32 %v7199, %v6830
    %v7201 = vadd.f32 %v7200, %v6834
    %v7202 = vadd.f32 %v7201, %v6838
    %v7203 = vadd.f32 %v7202, %v6842
    %v7204 = vadd.f32 %v7203, %v6846
    %v7205 = vadd.f32 %v7204, %v6850
    %v7206 = vrot.slane %v7205, 4
    %v7207 = vadd.f32 %v7205, %v7206
    %v7208 = vrot.slane %v7207, 2
    %v7209 = vadd.f32 %v7207, %v7208
    %v7210 = vrot.slane %v7209, 1
    %v7211 = vadd.f32 %v7209, %v7210
    %v7212 = vadd.f32 %v6792, %v6796
    %v7213 = vadd.f32 %v7212, %v6800
    %v7214 = vadd.f32 %v7213, %v6804
    %v7215 = vadd.f32 %v7214, %v6808
    %v7216 = vadd.f32 %v7215, %v6812
    %v7217 = vadd.f32 %v7216, %v6816
    %v7218 = vadd.f32 %v7217, %v6820
    %v7219 = vadd.f32 %v7218, %v6824
    %v7220 = vadd.f32 %v7219, %v6828
    %v7221 = vadd.f32 %v7220, %v6832
    %v7222 = vadd.f32 %v7221, %v6836
    %v7223 = vadd.f32 %v7222, %v6840
    %v7224 = vadd.f32 %v7223, %v6844
    %v7225 = vadd.f32 %v7224, %v6848
    %v7226 = vadd.f32 %v7225, %v6852
    %v7227 = vrot.slane %v7226, 4
    %v7228 = vadd.f32 %v7226, %v7227
    %v7229 = vrot.slane %v7228, 2
    %v7230 = vadd.f32 %v7228, %v7229
    %v7231 = vrot.slane %v7230, 1
    %v7232 = vadd.f32 %v7230, %v7231
    %v7233 = vadd.f32 %v6854, %v6858
    %v7234 = vadd.f32 %v7233, %v6862
    %v7235 = vadd.f32 %v7234, %v6866
    %v7236 = vadd.f32 %v7235, %v6870
    %v7237 = vadd.f32 %v7236, %v6874
    %v7238 = vadd.f32 %v7237, %v6878
    %v7239 = vadd.f32 %v7238, %v6882
    %v7240 = vadd.f32 %v7239, %v6886
    %v7241 = vadd.f32 %v7240, %v6890
    %v7242 = vadd.f32 %v7241, %v6894
    %v7243 = vadd.f32 %v7242, %v6898
    %v7244 = vadd.f32 %v7243, %v6902
    %v7245 = vadd.f32 %v7244, %v6906
    %v7246 = vadd.f32 %v7245, %v6910
    %v7247 = vadd.f32 %v7246, %v6914
    %v7248 = vrot.slane %v7247, 4
    %v7249 = vadd.f32 %v7247, %v7248
    %v7250 = vrot.slane %v7249, 2
    %v7251 = vadd.f32 %v7249, %v7250
    %v7252 = vrot.slane %v7251, 1
    %v7253 = vadd.f32 %v7251, %v7252
    %v7254 = vadd.f32 %v6856, %v6860
    %v7255 = vadd.f32 %v7254, %v6864
    %v7256 = vadd.f32 %v7255, %v6868
    %v7257 = vadd.f32 %v7256, %v6872
    %v7258 = vadd.f32 %v7257, %v6876
    %v7259 = vadd.f32 %v7258, %v6880
    %v7260 = vadd.f32 %v7259, %v6884
    %v7261 = vadd.f32 %v7260, %v6888
    %v7262 = vadd.f32 %v7261, %v6892
    %v7263 = vadd.f32 %v7262, %v6896
    %v7264 = vadd.f32 %v7263, %v6900
    %v7265 = vadd.f32 %v7264, %v6904
    %v7266 = vadd.f32 %v7265, %v6908
    %v7267 = vadd.f32 %v7266, %v6912
    %v7268 = vadd.f32 %v7267, %v6916
    %v7269 = vrot.slane %v7268, 4
    %v7270 = vadd.f32 %v7268, %v7269
    %v7271 = vrot.slane %v7270, 2
    %v7272 = vadd.f32 %v7270, %v7271
    %v7273 = vrot.slane %v7272, 1
    %v7274 = vadd.f32 %v7272, %v7273
    %v7275 = vadd.f32 %v6918, %v6922
    %v7276 = vadd.f32 %v7275, %v6926
    %v7277 = vadd.f32 %v7276, %v6930
    %v7278 = vadd.f32 %v7277, %v6934
    %v7279 = vadd.f32 %v7278, %v6938
    %v7280 = vadd.f32 %v7279, %v6942
    %v7281 = vadd.f32 %v7280, %v6946
    %v7282 = vadd.f32 %v7281, %v6950
    %v7283 = vadd.f32 %v7282, %v6954
    %v7284 = vadd.f32 %v7283, %v6958
    %v7285 = vadd.f32 %v7284, %v6962
    %v7286 = vadd.f32 %v7285, %v6966
    %v7287 = vadd.f32 %v7286, %v6970
    %v7288 = vadd.f32 %v7287, %v6974
    %v7289 = vadd.f32 %v7288, %v6978
    %v7290 = vrot.slane %v7289, 4
    %v7291 = vadd.f32 %v7289, %v7290
    %v7292 = vrot.slane %v7291, 2
    %v7293 = vadd.f32 %v7291, %v7292
    %v7294 = vrot.slane %v7293, 1
    %v7295 = vadd.f32 %v7293, %v7294
    %v7296 = vadd.f32 %v6920, %v6924
    %v7297 = vadd.f32 %v7296, %v6928
    %v7298 = vadd.f32 %v7297, %v6932
    %v7299 = vadd.f32 %v7298, %v6936
    %v7300 = vadd.f32 %v7299, %v6940
    %v7301 = vadd.f32 %v7300, %v6944
    %v7302 = vadd.f32 %v7301, %v6948
    %v7303 = vadd.f32 %v7302, %v6952
    %v7304 = vadd.f32 %v7303, %v6956
    %v7305 = vadd.f32 %v7304, %v6960
    %v7306 = vadd.f32 %v7305, %v6964
    %v7307 = vadd.f32 %v7306, %v6968
    %v7308 = vadd.f32 %v7307, %v6972
    %v7309 = vadd.f32 %v7308, %v6976
    %v7310 = vadd.f32 %v7309, %v6980
    %v7311 = vrot.slane %v7310, 4
    %v7312 = vadd.f32 %v7310, %v7311
    %v7313 = vrot.slane %v7312, 2
    %v7314 = vadd.f32 %v7312, %v7313
    %v7315 = vrot.slane %v7314, 1
    %v7316 = vadd.f32 %v7314, %v7315
    %v7317 = vadd.f32 %v2478, %v7001
    %v7318 = vadd.f32 %v2479, %v7022
    %v7319 = vadd.f32 %v2480, %v7043
    %v7320 = vadd.f32 %v2481, %v7064
    %v7321 = vadd.f32 %v2482, %v7085
    %v7322 = vadd.f32 %v2483, %v7106
    %v7323 = vadd.f32 %v2484, %v7127
    %v7324 = vadd.f32 %v2485, %v7148
    %v7325 = vadd.f32 %v2486, %v7169
    %v7326 = vadd.f32 %v2487, %v7190
    %v7327 = vadd.f32 %v2488, %v7211
    %v7328 = vadd.f32 %v2489, %v7232
    %v7329 = vadd.f32 %v2490, %v7253
    %v7330 = vadd.f32 %v2491, %v7274
    %v7331 = vadd.f32 %v2492, %v7295
    %v7332 = vadd.f32 %v2493, %v7316
    %v7333 = vperm.slane %v4924, 0
    %v7334 = vlaneseq
    %v7335 = vshrl.u32 %v7334, 7
    %7337 = vset.pattern.permute.xlu0 %v7335
    %7338 = vperm.xlu0 %7337, %v7333
    %v7339 = vpop.permute.xlu0 %7338
    %v7340 = vlaneseq
    %v7341 = vshrl.u32 %v7340, 7
    %v7342 = vadd.s32 %v7341, 8
    %7343 = vset.pattern.permute.xlu0 %v7342
    %7344 = vperm.xlu0 %7343, %v7333
    %v7345 = vpop.permute.xlu0 %7344
    %v7346 = vlaneseq
    %v7347 = vshrl.u32 %v7346, 7
    %v7348 = vadd.s32 %v7347, 16
    %7349 = vset.pattern.permute.xlu0 %v7348
    %7350 = vperm.xlu0 %7349, %v7333
    %v7351 = vpop.permute.xlu0 %7350
    %v7352 = vlaneseq
    %v7353 = vshrl.u32 %v7352, 7
    %v7354 = vadd.s32 %v7353, 24
    %7355 = vset.pattern.permute.xlu0 %v7354
    %7356 = vperm.xlu0 %7355, %v7333
    %v7357 = vpop.permute.xlu0 %7356
    %v7358 = vlaneseq
    %v7359 = vshrl.u32 %v7358, 7
    %v7360 = vadd.s32 %v7359, 32
    %7361 = vset.pattern.permute.xlu0 %v7360
    %7362 = vperm.xlu0 %7361, %v7333
    %v7363 = vpop.permute.xlu0 %7362
    %v7364 = vlaneseq
    %v7365 = vshrl.u32 %v7364, 7
    %v7366 = vadd.s32 %v7365, 40
    %7367 = vset.pattern.permute.xlu0 %v7366
    %7368 = vperm.xlu0 %7367, %v7333
    %v7369 = vpop.permute.xlu0 %7368
    %v7370 = vlaneseq
    %v7371 = vshrl.u32 %v7370, 7
    %v7372 = vadd.s32 %v7371, 48
    %7373 = vset.pattern.permute.xlu0 %v7372
    %7374 = vperm.xlu0 %7373, %v7333
    %v7375 = vpop.permute.xlu0 %7374
    %v7376 = vlaneseq
    %v7377 = vshrl.u32 %v7376, 7
    %v7378 = vadd.s32 %v7377, 56
    %7379 = vset.pattern.permute.xlu0 %v7378
    %7380 = vperm.xlu0 %7379, %v7333
    %v7381 = vpop.permute.xlu0 %7380
    %v7382 = vlaneseq
    %v7383 = vshrl.u32 %v7382, 7
    %v7384 = vadd.s32 %v7383, 64
    %7385 = vset.pattern.permute.xlu0 %v7384
    %7386 = vperm.xlu0 %7385, %v7333
    %v7387 = vpop.permute.xlu0 %7386
    %v7388 = vlaneseq
    %v7389 = vshrl.u32 %v7388, 7
    %v7390 = vadd.s32 %v7389, 72
    %7391 = vset.pattern.permute.xlu0 %v7390
    %7392 = vperm.xlu0 %7391, %v7333
    %v7393 = vpop.permute.xlu0 %7392
    %v7394 = vlaneseq
    %v7395 = vshrl.u32 %v7394, 7
    %v7396 = vadd.s32 %v7395, 80
    %7397 = vset.pattern.permute.xlu0 %v7396
    %7398 = vperm.xlu0 %7397, %v7333
    %v7399 = vpop.permute.xlu0 %7398
    %v7400 = vlaneseq
    %v7401 = vshrl.u32 %v7400, 7
    %v7402 = vadd.s32 %v7401, 88
    %7403 = vset.pattern.permute.xlu0 %v7402
    %7404 = vperm.xlu0 %7403, %v7333
    %v7405 = vpop.permute.xlu0 %7404
    %v7406 = vlaneseq
    %v7407 = vshrl.u32 %v7406, 7
    %v7408 = vadd.s32 %v7407, 96
    %7409 = vset.pattern.permute.xlu0 %v7408
    %7410 = vperm.xlu0 %7409, %v7333
    %v7411 = vpop.permute.xlu0 %7410
    %v7412 = vlaneseq
    %v7413 = vshrl.u32 %v7412, 7
    %v7414 = vadd.s32 %v7413, 104
    %7415 = vset.pattern.permute.xlu0 %v7414
    %7416 = vperm.xlu0 %7415, %v7333
    %v7417 = vpop.permute.xlu0 %7416
    %v7418 = vlaneseq
    %v7419 = vshrl.u32 %v7418, 7
    %v7420 = vadd.s32 %v7419, 112
    %7421 = vset.pattern.permute.xlu0 %v7420
    %7422 = vperm.xlu0 %7421, %v7333
    %v7423 = vpop.permute.xlu0 %7422
    %v7424 = vlaneseq
    %v7425 = vshrl.u32 %v7424, 7
    %v7426 = vadd.s32 %v7425, 120
    %7427 = vset.pattern.permute.xlu0 %v7426
    %7428 = vperm.xlu0 %7427, %v7333
    %v7429 = vpop.permute.xlu0 %7428
    %v7430 = vperm.slane %v4924, 1
    %v7431 = vlaneseq
    %v7432 = vshrl.u32 %v7431, 7
    %7434 = vset.pattern.permute.xlu0 %v7432
    %7435 = vperm.xlu0 %7434, %v7430
    %v7436 = vpop.permute.xlu0 %7435
    %v7437 = vlaneseq
    %v7438 = vshrl.u32 %v7437, 7
    %v7439 = vadd.s32 %v7438, 8
    %7440 = vset.pattern.permute.xlu0 %v7439
    %7441 = vperm.xlu0 %7440, %v7430
    %v7442 = vpop.permute.xlu0 %7441
    %v7443 = vlaneseq
    %v7444 = vshrl.u32 %v7443, 7
    %v7445 = vadd.s32 %v7444, 16
    %7446 = vset.pattern.permute.xlu0 %v7445
    %7447 = vperm.xlu0 %7446, %v7430
    %v7448 = vpop.permute.xlu0 %7447
    %v7449 = vlaneseq
    %v7450 = vshrl.u32 %v7449, 7
    %v7451 = vadd.s32 %v7450, 24
    %7452 = vset.pattern.permute.xlu0 %v7451
    %7453 = vperm.xlu0 %7452, %v7430
    %v7454 = vpop.permute.xlu0 %7453
    %v7455 = vlaneseq
    %v7456 = vshrl.u32 %v7455, 7
    %v7457 = vadd.s32 %v7456, 32
    %7458 = vset.pattern.permute.xlu0 %v7457
    %7459 = vperm.xlu0 %7458, %v7430
    %v7460 = vpop.permute.xlu0 %7459
    %v7461 = vlaneseq
    %v7462 = vshrl.u32 %v7461, 7
    %v7463 = vadd.s32 %v7462, 40
    %7464 = vset.pattern.permute.xlu0 %v7463
    %7465 = vperm.xlu0 %7464, %v7430
    %v7466 = vpop.permute.xlu0 %7465
    %v7467 = vlaneseq
    %v7468 = vshrl.u32 %v7467, 7
    %v7469 = vadd.s32 %v7468, 48
    %7470 = vset.pattern.permute.xlu0 %v7469
    %7471 = vperm.xlu0 %7470, %v7430
    %v7472 = vpop.permute.xlu0 %7471
    %v7473 = vlaneseq
    %v7474 = vshrl.u32 %v7473, 7
    %v7475 = vadd.s32 %v7474, 56
    %7476 = vset.pattern.permute.xlu0 %v7475
    %7477 = vperm.xlu0 %7476, %v7430
    %v7478 = vpop.permute.xlu0 %7477
    %v7479 = vlaneseq
    %v7480 = vshrl.u32 %v7479, 7
    %v7481 = vadd.s32 %v7480, 64
    %7482 = vset.pattern.permute.xlu0 %v7481
    %7483 = vperm.xlu0 %7482, %v7430
    %v7484 = vpop.permute.xlu0 %7483
    %v7485 = vlaneseq
    %v7486 = vshrl.u32 %v7485, 7
    %v7487 = vadd.s32 %v7486, 72
    %7488 = vset.pattern.permute.xlu0 %v7487
    %7489 = vperm.xlu0 %7488, %v7430
    %v7490 = vpop.permute.xlu0 %7489
    %v7491 = vlaneseq
    %v7492 = vshrl.u32 %v7491, 7
    %v7493 = vadd.s32 %v7492, 80
    %7494 = vset.pattern.permute.xlu0 %v7493
    %7495 = vperm.xlu0 %7494, %v7430
    %v7496 = vpop.permute.xlu0 %7495
    %v7497 = vlaneseq
    %v7498 = vshrl.u32 %v7497, 7
    %v7499 = vadd.s32 %v7498, 88
    %7500 = vset.pattern.permute.xlu0 %v7499
    %7501 = vperm.xlu0 %7500, %v7430
    %v7502 = vpop.permute.xlu0 %7501
    %v7503 = vlaneseq
    %v7504 = vshrl.u32 %v7503, 7
    %v7505 = vadd.s32 %v7504, 96
    %7506 = vset.pattern.permute.xlu0 %v7505
    %7507 = vperm.xlu0 %7506, %v7430
    %v7508 = vpop.permute.xlu0 %7507
    %v7509 = vlaneseq
    %v7510 = vshrl.u32 %v7509, 7
    %v7511 = vadd.s32 %v7510, 104
    %7512 = vset.pattern.permute.xlu0 %v7511
    %7513 = vperm.xlu0 %7512, %v7430
    %v7514 = vpop.permute.xlu0 %7513
    %v7515 = vlaneseq
    %v7516 = vshrl.u32 %v7515, 7
    %v7517 = vadd.s32 %v7516, 112
    %7518 = vset.pattern.permute.xlu0 %v7517
    %7519 = vperm.xlu0 %7518, %v7430
    %v7520 = vpop.permute.xlu0 %7519
    %v7521 = vlaneseq
    %v7522 = vshrl.u32 %v7521, 7
    %v7523 = vadd.s32 %v7522, 120
    %7524 = vset.pattern.permute.xlu0 %v7523
    %7525 = vperm.xlu0 %7524, %v7430
    %v7526 = vpop.permute.xlu0 %7525
    %v7527 = vperm.slane %v4924, 2
    %v7528 = vlaneseq
    %v7529 = vshrl.u32 %v7528, 7
    %7531 = vset.pattern.permute.xlu0 %v7529
    %7532 = vperm.xlu0 %7531, %v7527
    %v7533 = vpop.permute.xlu0 %7532
    %v7534 = vlaneseq
    %v7535 = vshrl.u32 %v7534, 7
    %v7536 = vadd.s32 %v7535, 8
    %7537 = vset.pattern.permute.xlu0 %v7536
    %7538 = vperm.xlu0 %7537, %v7527
    %v7539 = vpop.permute.xlu0 %7538
    %v7540 = vlaneseq
    %v7541 = vshrl.u32 %v7540, 7
    %v7542 = vadd.s32 %v7541, 16
    %7543 = vset.pattern.permute.xlu0 %v7542
    %7544 = vperm.xlu0 %7543, %v7527
    %v7545 = vpop.permute.xlu0 %7544
    %v7546 = vlaneseq
    %v7547 = vshrl.u32 %v7546, 7
    %v7548 = vadd.s32 %v7547, 24
    %7549 = vset.pattern.permute.xlu0 %v7548
    %7550 = vperm.xlu0 %7549, %v7527
    %v7551 = vpop.permute.xlu0 %7550
    %v7552 = vlaneseq
    %v7553 = vshrl.u32 %v7552, 7
    %v7554 = vadd.s32 %v7553, 32
    %7555 = vset.pattern.permute.xlu0 %v7554
    %7556 = vperm.xlu0 %7555, %v7527
    %v7557 = vpop.permute.xlu0 %7556
    %v7558 = vlaneseq
    %v7559 = vshrl.u32 %v7558, 7
    %v7560 = vadd.s32 %v7559, 40
    %7561 = vset.pattern.permute.xlu0 %v7560
    %7562 = vperm.xlu0 %7561, %v7527
    %v7563 = vpop.permute.xlu0 %7562
    %v7564 = vlaneseq
    %v7565 = vshrl.u32 %v7564, 7
    %v7566 = vadd.s32 %v7565, 48
    %7567 = vset.pattern.permute.xlu0 %v7566
    %7568 = vperm.xlu0 %7567, %v7527
    %v7569 = vpop.permute.xlu0 %7568
    %v7570 = vlaneseq
    %v7571 = vshrl.u32 %v7570, 7
    %v7572 = vadd.s32 %v7571, 56
    %7573 = vset.pattern.permute.xlu0 %v7572
    %7574 = vperm.xlu0 %7573, %v7527
    %v7575 = vpop.permute.xlu0 %7574
    %v7576 = vlaneseq
    %v7577 = vshrl.u32 %v7576, 7
    %v7578 = vadd.s32 %v7577, 64
    %7579 = vset.pattern.permute.xlu0 %v7578
    %7580 = vperm.xlu0 %7579, %v7527
    %v7581 = vpop.permute.xlu0 %7580
    %v7582 = vlaneseq
    %v7583 = vshrl.u32 %v7582, 7
    %v7584 = vadd.s32 %v7583, 72
    %7585 = vset.pattern.permute.xlu0 %v7584
    %7586 = vperm.xlu0 %7585, %v7527
    %v7587 = vpop.permute.xlu0 %7586
    %v7588 = vlaneseq
    %v7589 = vshrl.u32 %v7588, 7
    %v7590 = vadd.s32 %v7589, 80
    %7591 = vset.pattern.permute.xlu0 %v7590
    %7592 = vperm.xlu0 %7591, %v7527
    %v7593 = vpop.permute.xlu0 %7592
    %v7594 = vlaneseq
    %v7595 = vshrl.u32 %v7594, 7
    %v7596 = vadd.s32 %v7595, 88
    %7597 = vset.pattern.permute.xlu0 %v7596
    %7598 = vperm.xlu0 %7597, %v7527
    %v7599 = vpop.permute.xlu0 %7598
    %v7600 = vlaneseq
    %v7601 = vshrl.u32 %v7600, 7
    %v7602 = vadd.s32 %v7601, 96
    %7603 = vset.pattern.permute.xlu0 %v7602
    %7604 = vperm.xlu0 %7603, %v7527
    %v7605 = vpop.permute.xlu0 %7604
    %v7606 = vlaneseq
    %v7607 = vshrl.u32 %v7606, 7
    %v7608 = vadd.s32 %v7607, 104
    %7609 = vset.pattern.permute.xlu0 %v7608
    %7610 = vperm.xlu0 %7609, %v7527
    %v7611 = vpop.permute.xlu0 %7610
    %v7612 = vlaneseq
    %v7613 = vshrl.u32 %v7612, 7
    %v7614 = vadd.s32 %v7613, 112
    %7615 = vset.pattern.permute.xlu0 %v7614
    %7616 = vperm.xlu0 %7615, %v7527
    %v7617 = vpop.permute.xlu0 %7616
    %v7618 = vlaneseq
    %v7619 = vshrl.u32 %v7618, 7
    %v7620 = vadd.s32 %v7619, 120
    %7621 = vset.pattern.permute.xlu0 %v7620
    %7622 = vperm.xlu0 %7621, %v7527
    %v7623 = vpop.permute.xlu0 %7622
    %v7624 = vperm.slane %v4924, 3
    %v7625 = vlaneseq
    %v7626 = vshrl.u32 %v7625, 7
    %7628 = vset.pattern.permute.xlu0 %v7626
    %7629 = vperm.xlu0 %7628, %v7624
    %v7630 = vpop.permute.xlu0 %7629
    %v7631 = vlaneseq
    %v7632 = vshrl.u32 %v7631, 7
    %v7633 = vadd.s32 %v7632, 8
    %7634 = vset.pattern.permute.xlu0 %v7633
    %7635 = vperm.xlu0 %7634, %v7624
    %v7636 = vpop.permute.xlu0 %7635
    %v7637 = vlaneseq
    %v7638 = vshrl.u32 %v7637, 7
    %v7639 = vadd.s32 %v7638, 16
    %7640 = vset.pattern.permute.xlu0 %v7639
    %7641 = vperm.xlu0 %7640, %v7624
    %v7642 = vpop.permute.xlu0 %7641
    %v7643 = vlaneseq
    %v7644 = vshrl.u32 %v7643, 7
    %v7645 = vadd.s32 %v7644, 24
    %7646 = vset.pattern.permute.xlu0 %v7645
    %7647 = vperm.xlu0 %7646, %v7624
    %v7648 = vpop.permute.xlu0 %7647
    %v7649 = vlaneseq
    %v7650 = vshrl.u32 %v7649, 7
    %v7651 = vadd.s32 %v7650, 32
    %7652 = vset.pattern.permute.xlu0 %v7651
    %7653 = vperm.xlu0 %7652, %v7624
    %v7654 = vpop.permute.xlu0 %7653
    %v7655 = vlaneseq
    %v7656 = vshrl.u32 %v7655, 7
    %v7657 = vadd.s32 %v7656, 40
    %7658 = vset.pattern.permute.xlu0 %v7657
    %7659 = vperm.xlu0 %7658, %v7624
    %v7660 = vpop.permute.xlu0 %7659
    %v7661 = vlaneseq
    %v7662 = vshrl.u32 %v7661, 7
    %v7663 = vadd.s32 %v7662, 48
    %7664 = vset.pattern.permute.xlu0 %v7663
    %7665 = vperm.xlu0 %7664, %v7624
    %v7666 = vpop.permute.xlu0 %7665
    %v7667 = vlaneseq
    %v7668 = vshrl.u32 %v7667, 7
    %v7669 = vadd.s32 %v7668, 56
    %7670 = vset.pattern.permute.xlu0 %v7669
    %7671 = vperm.xlu0 %7670, %v7624
    %v7672 = vpop.permute.xlu0 %7671
    %v7673 = vlaneseq
    %v7674 = vshrl.u32 %v7673, 7
    %v7675 = vadd.s32 %v7674, 64
    %7676 = vset.pattern.permute.xlu0 %v7675
    %7677 = vperm.xlu0 %7676, %v7624
    %v7678 = vpop.permute.xlu0 %7677
    %v7679 = vlaneseq
    %v7680 = vshrl.u32 %v7679, 7
    %v7681 = vadd.s32 %v7680, 72
    %7682 = vset.pattern.permute.xlu0 %v7681
    %7683 = vperm.xlu0 %7682, %v7624
    %v7684 = vpop.permute.xlu0 %7683
    %v7685 = vlaneseq
    %v7686 = vshrl.u32 %v7685, 7
    %v7687 = vadd.s32 %v7686, 80
    %7688 = vset.pattern.permute.xlu0 %v7687
    %7689 = vperm.xlu0 %7688, %v7624
    %v7690 = vpop.permute.xlu0 %7689
    %v7691 = vlaneseq
    %v7692 = vshrl.u32 %v7691, 7
    %v7693 = vadd.s32 %v7692, 88
    %7694 = vset.pattern.permute.xlu0 %v7693
    %7695 = vperm.xlu0 %7694, %v7624
    %v7696 = vpop.permute.xlu0 %7695
    %v7697 = vlaneseq
    %v7698 = vshrl.u32 %v7697, 7
    %v7699 = vadd.s32 %v7698, 96
    %7700 = vset.pattern.permute.xlu0 %v7699
    %7701 = vperm.xlu0 %7700, %v7624
    %v7702 = vpop.permute.xlu0 %7701
    %v7703 = vlaneseq
    %v7704 = vshrl.u32 %v7703, 7
    %v7705 = vadd.s32 %v7704, 104
    %7706 = vset.pattern.permute.xlu0 %v7705
    %7707 = vperm.xlu0 %7706, %v7624
    %v7708 = vpop.permute.xlu0 %7707
    %v7709 = vlaneseq
    %v7710 = vshrl.u32 %v7709, 7
    %v7711 = vadd.s32 %v7710, 112
    %7712 = vset.pattern.permute.xlu0 %v7711
    %7713 = vperm.xlu0 %7712, %v7624
    %v7714 = vpop.permute.xlu0 %7713
    %v7715 = vlaneseq
    %v7716 = vshrl.u32 %v7715, 7
    %v7717 = vadd.s32 %v7716, 120
    %7718 = vset.pattern.permute.xlu0 %v7717
    %7719 = vperm.xlu0 %7718, %v7624
    %v7720 = vpop.permute.xlu0 %7719
    %v7721 = vperm.slane %v4924, 4
    %v7722 = vlaneseq
    %v7723 = vshrl.u32 %v7722, 7
    %7725 = vset.pattern.permute.xlu0 %v7723
    %7726 = vperm.xlu0 %7725, %v7721
    %v7727 = vpop.permute.xlu0 %7726
    %v7728 = vlaneseq
    %v7729 = vshrl.u32 %v7728, 7
    %v7730 = vadd.s32 %v7729, 8
    %7731 = vset.pattern.permute.xlu0 %v7730
    %7732 = vperm.xlu0 %7731, %v7721
    %v7733 = vpop.permute.xlu0 %7732
    %v7734 = vlaneseq
    %v7735 = vshrl.u32 %v7734, 7
    %v7736 = vadd.s32 %v7735, 16
    %7737 = vset.pattern.permute.xlu0 %v7736
    %7738 = vperm.xlu0 %7737, %v7721
    %v7739 = vpop.permute.xlu0 %7738
    %v7740 = vlaneseq
    %v7741 = vshrl.u32 %v7740, 7
    %v7742 = vadd.s32 %v7741, 24
    %7743 = vset.pattern.permute.xlu0 %v7742
    %7744 = vperm.xlu0 %7743, %v7721
    %v7745 = vpop.permute.xlu0 %7744
    %v7746 = vlaneseq
    %v7747 = vshrl.u32 %v7746, 7
    %v7748 = vadd.s32 %v7747, 32
    %7749 = vset.pattern.permute.xlu0 %v7748
    %7750 = vperm.xlu0 %7749, %v7721
    %v7751 = vpop.permute.xlu0 %7750
    %v7752 = vlaneseq
    %v7753 = vshrl.u32 %v7752, 7
    %v7754 = vadd.s32 %v7753, 40
    %7755 = vset.pattern.permute.xlu0 %v7754
    %7756 = vperm.xlu0 %7755, %v7721
    %v7757 = vpop.permute.xlu0 %7756
    %v7758 = vlaneseq
    %v7759 = vshrl.u32 %v7758, 7
    %v7760 = vadd.s32 %v7759, 48
    %7761 = vset.pattern.permute.xlu0 %v7760
    %7762 = vperm.xlu0 %7761, %v7721
    %v7763 = vpop.permute.xlu0 %7762
    %v7764 = vlaneseq
    %v7765 = vshrl.u32 %v7764, 7
    %v7766 = vadd.s32 %v7765, 56
    %7767 = vset.pattern.permute.xlu0 %v7766
    %7768 = vperm.xlu0 %7767, %v7721
    %v7769 = vpop.permute.xlu0 %7768
    %v7770 = vlaneseq
    %v7771 = vshrl.u32 %v7770, 7
    %v7772 = vadd.s32 %v7771, 64
    %7773 = vset.pattern.permute.xlu0 %v7772
    %7774 = vperm.xlu0 %7773, %v7721
    %v7775 = vpop.permute.xlu0 %7774
    %v7776 = vlaneseq
    %v7777 = vshrl.u32 %v7776, 7
    %v7778 = vadd.s32 %v7777, 72
    %7779 = vset.pattern.permute.xlu0 %v7778
    %7780 = vperm.xlu0 %7779, %v7721
    %v7781 = vpop.permute.xlu0 %7780
    %v7782 = vlaneseq
    %v7783 = vshrl.u32 %v7782, 7
    %v7784 = vadd.s32 %v7783, 80
    %7785 = vset.pattern.permute.xlu0 %v7784
    %7786 = vperm.xlu0 %7785, %v7721
    %v7787 = vpop.permute.xlu0 %7786
    %v7788 = vlaneseq
    %v7789 = vshrl.u32 %v7788, 7
    %v7790 = vadd.s32 %v7789, 88
    %7791 = vset.pattern.permute.xlu0 %v7790
    %7792 = vperm.xlu0 %7791, %v7721
    %v7793 = vpop.permute.xlu0 %7792
    %v7794 = vlaneseq
    %v7795 = vshrl.u32 %v7794, 7
    %v7796 = vadd.s32 %v7795, 96
    %7797 = vset.pattern.permute.xlu0 %v7796
    %7798 = vperm.xlu0 %7797, %v7721
    %v7799 = vpop.permute.xlu0 %7798
    %v7800 = vlaneseq
    %v7801 = vshrl.u32 %v7800, 7
    %v7802 = vadd.s32 %v7801, 104
    %7803 = vset.pattern.permute.xlu0 %v7802
    %7804 = vperm.xlu0 %7803, %v7721
    %v7805 = vpop.permute.xlu0 %7804
    %v7806 = vlaneseq
    %v7807 = vshrl.u32 %v7806, 7
    %v7808 = vadd.s32 %v7807, 112
    %7809 = vset.pattern.permute.xlu0 %v7808
    %7810 = vperm.xlu0 %7809, %v7721
    %v7811 = vpop.permute.xlu0 %7810
    %v7812 = vlaneseq
    %v7813 = vshrl.u32 %v7812, 7
    %v7814 = vadd.s32 %v7813, 120
    %7815 = vset.pattern.permute.xlu0 %v7814
    %7816 = vperm.xlu0 %7815, %v7721
    %v7817 = vpop.permute.xlu0 %7816
    %v7818 = vperm.slane %v4924, 5
    %v7819 = vlaneseq
    %v7820 = vshrl.u32 %v7819, 7
    %7822 = vset.pattern.permute.xlu0 %v7820
    %7823 = vperm.xlu0 %7822, %v7818
    %v7824 = vpop.permute.xlu0 %7823
    %v7825 = vlaneseq
    %v7826 = vshrl.u32 %v7825, 7
    %v7827 = vadd.s32 %v7826, 8
    %7828 = vset.pattern.permute.xlu0 %v7827
    %7829 = vperm.xlu0 %7828, %v7818
    %v7830 = vpop.permute.xlu0 %7829
    %v7831 = vlaneseq
    %v7832 = vshrl.u32 %v7831, 7
    %v7833 = vadd.s32 %v7832, 16
    %7834 = vset.pattern.permute.xlu0 %v7833
    %7835 = vperm.xlu0 %7834, %v7818
    %v7836 = vpop.permute.xlu0 %7835
    %v7837 = vlaneseq
    %v7838 = vshrl.u32 %v7837, 7
    %v7839 = vadd.s32 %v7838, 24
    %7840 = vset.pattern.permute.xlu0 %v7839
    %7841 = vperm.xlu0 %7840, %v7818
    %v7842 = vpop.permute.xlu0 %7841
    %v7843 = vlaneseq
    %v7844 = vshrl.u32 %v7843, 7
    %v7845 = vadd.s32 %v7844, 32
    %7846 = vset.pattern.permute.xlu0 %v7845
    %7847 = vperm.xlu0 %7846, %v7818
    %v7848 = vpop.permute.xlu0 %7847
    %v7849 = vlaneseq
    %v7850 = vshrl.u32 %v7849, 7
    %v7851 = vadd.s32 %v7850, 40
    %7852 = vset.pattern.permute.xlu0 %v7851
    %7853 = vperm.xlu0 %7852, %v7818
    %v7854 = vpop.permute.xlu0 %7853
    %v7855 = vlaneseq
    %v7856 = vshrl.u32 %v7855, 7
    %v7857 = vadd.s32 %v7856, 48
    %7858 = vset.pattern.permute.xlu0 %v7857
    %7859 = vperm.xlu0 %7858, %v7818
    %v7860 = vpop.permute.xlu0 %7859
    %v7861 = vlaneseq
    %v7862 = vshrl.u32 %v7861, 7
    %v7863 = vadd.s32 %v7862, 56
    %7864 = vset.pattern.permute.xlu0 %v7863
    %7865 = vperm.xlu0 %7864, %v7818
    %v7866 = vpop.permute.xlu0 %7865
    %v7867 = vlaneseq
    %v7868 = vshrl.u32 %v7867, 7
    %v7869 = vadd.s32 %v7868, 64
    %7870 = vset.pattern.permute.xlu0 %v7869
    %7871 = vperm.xlu0 %7870, %v7818
    %v7872 = vpop.permute.xlu0 %7871
    %v7873 = vlaneseq
    %v7874 = vshrl.u32 %v7873, 7
    %v7875 = vadd.s32 %v7874, 72
    %7876 = vset.pattern.permute.xlu0 %v7875
    %7877 = vperm.xlu0 %7876, %v7818
    %v7878 = vpop.permute.xlu0 %7877
    %v7879 = vlaneseq
    %v7880 = vshrl.u32 %v7879, 7
    %v7881 = vadd.s32 %v7880, 80
    %7882 = vset.pattern.permute.xlu0 %v7881
    %7883 = vperm.xlu0 %7882, %v7818
    %v7884 = vpop.permute.xlu0 %7883
    %v7885 = vlaneseq
    %v7886 = vshrl.u32 %v7885, 7
    %v7887 = vadd.s32 %v7886, 88
    %7888 = vset.pattern.permute.xlu0 %v7887
    %7889 = vperm.xlu0 %7888, %v7818
    %v7890 = vpop.permute.xlu0 %7889
    %v7891 = vlaneseq
    %v7892 = vshrl.u32 %v7891, 7
    %v7893 = vadd.s32 %v7892, 96
    %7894 = vset.pattern.permute.xlu0 %v7893
    %7895 = vperm.xlu0 %7894, %v7818
    %v7896 = vpop.permute.xlu0 %7895
    %v7897 = vlaneseq
    %v7898 = vshrl.u32 %v7897, 7
    %v7899 = vadd.s32 %v7898, 104
    %7900 = vset.pattern.permute.xlu0 %v7899
    %7901 = vperm.xlu0 %7900, %v7818
    %v7902 = vpop.permute.xlu0 %7901
    %v7903 = vlaneseq
    %v7904 = vshrl.u32 %v7903, 7
    %v7905 = vadd.s32 %v7904, 112
    %7906 = vset.pattern.permute.xlu0 %v7905
    %7907 = vperm.xlu0 %7906, %v7818
    %v7908 = vpop.permute.xlu0 %7907
    %v7909 = vlaneseq
    %v7910 = vshrl.u32 %v7909, 7
    %v7911 = vadd.s32 %v7910, 120
    %7912 = vset.pattern.permute.xlu0 %v7911
    %7913 = vperm.xlu0 %7912, %v7818
    %v7914 = vpop.permute.xlu0 %7913
    %v7915 = vperm.slane %v4924, 6
    %v7916 = vlaneseq
    %v7917 = vshrl.u32 %v7916, 7
    %7919 = vset.pattern.permute.xlu0 %v7917
    %7920 = vperm.xlu0 %7919, %v7915
    %v7921 = vpop.permute.xlu0 %7920
    %v7922 = vlaneseq
    %v7923 = vshrl.u32 %v7922, 7
    %v7924 = vadd.s32 %v7923, 8
    %7925 = vset.pattern.permute.xlu0 %v7924
    %7926 = vperm.xlu0 %7925, %v7915
    %v7927 = vpop.permute.xlu0 %7926
    %v7928 = vlaneseq
    %v7929 = vshrl.u32 %v7928, 7
    %v7930 = vadd.s32 %v7929, 16
    %7931 = vset.pattern.permute.xlu0 %v7930
    %7932 = vperm.xlu0 %7931, %v7915
    %v7933 = vpop.permute.xlu0 %7932
    %v7934 = vlaneseq
    %v7935 = vshrl.u32 %v7934, 7
    %v7936 = vadd.s32 %v7935, 24
    %7937 = vset.pattern.permute.xlu0 %v7936
    %7938 = vperm.xlu0 %7937, %v7915
    %v7939 = vpop.permute.xlu0 %7938
    %v7940 = vlaneseq
    %v7941 = vshrl.u32 %v7940, 7
    %v7942 = vadd.s32 %v7941, 32
    %7943 = vset.pattern.permute.xlu0 %v7942
    %7944 = vperm.xlu0 %7943, %v7915
    %v7945 = vpop.permute.xlu0 %7944
    %v7946 = vlaneseq
    %v7947 = vshrl.u32 %v7946, 7
    %v7948 = vadd.s32 %v7947, 40
    %7949 = vset.pattern.permute.xlu0 %v7948
    %7950 = vperm.xlu0 %7949, %v7915
    %v7951 = vpop.permute.xlu0 %7950
    %v7952 = vlaneseq
    %v7953 = vshrl.u32 %v7952, 7
    %v7954 = vadd.s32 %v7953, 48
    %7955 = vset.pattern.permute.xlu0 %v7954
    %7956 = vperm.xlu0 %7955, %v7915
    %v7957 = vpop.permute.xlu0 %7956
    %v7958 = vlaneseq
    %v7959 = vshrl.u32 %v7958, 7
    %v7960 = vadd.s32 %v7959, 56
    %7961 = vset.pattern.permute.xlu0 %v7960
    %7962 = vperm.xlu0 %7961, %v7915
    %v7963 = vpop.permute.xlu0 %7962
    %v7964 = vlaneseq
    %v7965 = vshrl.u32 %v7964, 7
    %v7966 = vadd.s32 %v7965, 64
    %7967 = vset.pattern.permute.xlu0 %v7966
    %7968 = vperm.xlu0 %7967, %v7915
    %v7969 = vpop.permute.xlu0 %7968
    %v7970 = vlaneseq
    %v7971 = vshrl.u32 %v7970, 7
    %v7972 = vadd.s32 %v7971, 72
    %7973 = vset.pattern.permute.xlu0 %v7972
    %7974 = vperm.xlu0 %7973, %v7915
    %v7975 = vpop.permute.xlu0 %7974
    %v7976 = vlaneseq
    %v7977 = vshrl.u32 %v7976, 7
    %v7978 = vadd.s32 %v7977, 80
    %7979 = vset.pattern.permute.xlu0 %v7978
    %7980 = vperm.xlu0 %7979, %v7915
    %v7981 = vpop.permute.xlu0 %7980
    %v7982 = vlaneseq
    %v7983 = vshrl.u32 %v7982, 7
    %v7984 = vadd.s32 %v7983, 88
    %7985 = vset.pattern.permute.xlu0 %v7984
    %7986 = vperm.xlu0 %7985, %v7915
    %v7987 = vpop.permute.xlu0 %7986
    %v7988 = vlaneseq
    %v7989 = vshrl.u32 %v7988, 7
    %v7990 = vadd.s32 %v7989, 96
    %7991 = vset.pattern.permute.xlu0 %v7990
    %7992 = vperm.xlu0 %7991, %v7915
    %v7993 = vpop.permute.xlu0 %7992
    %v7994 = vlaneseq
    %v7995 = vshrl.u32 %v7994, 7
    %v7996 = vadd.s32 %v7995, 104
    %7997 = vset.pattern.permute.xlu0 %v7996
    %7998 = vperm.xlu0 %7997, %v7915
    %v7999 = vpop.permute.xlu0 %7998
    %v8000 = vlaneseq
    %v8001 = vshrl.u32 %v8000, 7
    %v8002 = vadd.s32 %v8001, 112
    %8003 = vset.pattern.permute.xlu0 %v8002
    %8004 = vperm.xlu0 %8003, %v7915
    %v8005 = vpop.permute.xlu0 %8004
    %v8006 = vlaneseq
    %v8007 = vshrl.u32 %v8006, 7
    %v8008 = vadd.s32 %v8007, 120
    %8009 = vset.pattern.permute.xlu0 %v8008
    %8010 = vperm.xlu0 %8009, %v7915
    %v8011 = vpop.permute.xlu0 %8010
    %v8012 = vperm.slane %v4924, 7
    %v8013 = vlaneseq
    %v8014 = vshrl.u32 %v8013, 7
    %8016 = vset.pattern.permute.xlu0 %v8014
    %8017 = vperm.xlu0 %8016, %v8012
    %v8018 = vpop.permute.xlu0 %8017
    %v8019 = vlaneseq
    %v8020 = vshrl.u32 %v8019, 7
    %v8021 = vadd.s32 %v8020, 8
    %8022 = vset.pattern.permute.xlu0 %v8021
    %8023 = vperm.xlu0 %8022, %v8012
    %v8024 = vpop.permute.xlu0 %8023
    %v8025 = vlaneseq
    %v8026 = vshrl.u32 %v8025, 7
    %v8027 = vadd.s32 %v8026, 16
    %8028 = vset.pattern.permute.xlu0 %v8027
    %8029 = vperm.xlu0 %8028, %v8012
    %v8030 = vpop.permute.xlu0 %8029
    %v8031 = vlaneseq
    %v8032 = vshrl.u32 %v8031, 7
    %v8033 = vadd.s32 %v8032, 24
    %8034 = vset.pattern.permute.xlu0 %v8033
    %8035 = vperm.xlu0 %8034, %v8012
    %v8036 = vpop.permute.xlu0 %8035
    %v8037 = vlaneseq
    %v8038 = vshrl.u32 %v8037, 7
    %v8039 = vadd.s32 %v8038, 32
    %8040 = vset.pattern.permute.xlu0 %v8039
    %8041 = vperm.xlu0 %8040, %v8012
    %v8042 = vpop.permute.xlu0 %8041
    %v8043 = vlaneseq
    %v8044 = vshrl.u32 %v8043, 7
    %v8045 = vadd.s32 %v8044, 40
    %8046 = vset.pattern.permute.xlu0 %v8045
    %8047 = vperm.xlu0 %8046, %v8012
    %v8048 = vpop.permute.xlu0 %8047
    %v8049 = vlaneseq
    %v8050 = vshrl.u32 %v8049, 7
    %v8051 = vadd.s32 %v8050, 48
    %8052 = vset.pattern.permute.xlu0 %v8051
    %8053 = vperm.xlu0 %8052, %v8012
    %v8054 = vpop.permute.xlu0 %8053
    %v8055 = vlaneseq
    %v8056 = vshrl.u32 %v8055, 7
    %v8057 = vadd.s32 %v8056, 56
    %8058 = vset.pattern.permute.xlu0 %v8057
    %8059 = vperm.xlu0 %8058, %v8012
    %v8060 = vpop.permute.xlu0 %8059
    %v8061 = vlaneseq
    %v8062 = vshrl.u32 %v8061, 7
    %v8063 = vadd.s32 %v8062, 64
    %8064 = vset.pattern.permute.xlu0 %v8063
    %8065 = vperm.xlu0 %8064, %v8012
    %v8066 = vpop.permute.xlu0 %8065
    %v8067 = vlaneseq
    %v8068 = vshrl.u32 %v8067, 7
    %v8069 = vadd.s32 %v8068, 72
    %8070 = vset.pattern.permute.xlu0 %v8069
    %8071 = vperm.xlu0 %8070, %v8012
    %v8072 = vpop.permute.xlu0 %8071
    %v8073 = vlaneseq
    %v8074 = vshrl.u32 %v8073, 7
    %v8075 = vadd.s32 %v8074, 80
    %8076 = vset.pattern.permute.xlu0 %v8075
    %8077 = vperm.xlu0 %8076, %v8012
    %v8078 = vpop.permute.xlu0 %8077
    %v8079 = vlaneseq
    %v8080 = vshrl.u32 %v8079, 7
    %v8081 = vadd.s32 %v8080, 88
    %8082 = vset.pattern.permute.xlu0 %v8081
    %8083 = vperm.xlu0 %8082, %v8012
    %v8084 = vpop.permute.xlu0 %8083
    %v8085 = vlaneseq
    %v8086 = vshrl.u32 %v8085, 7
    %v8087 = vadd.s32 %v8086, 96
    %8088 = vset.pattern.permute.xlu0 %v8087
    %8089 = vperm.xlu0 %8088, %v8012
    %v8090 = vpop.permute.xlu0 %8089
    %v8091 = vlaneseq
    %v8092 = vshrl.u32 %v8091, 7
    %v8093 = vadd.s32 %v8092, 104
    %8094 = vset.pattern.permute.xlu0 %v8093
    %8095 = vperm.xlu0 %8094, %v8012
    %v8096 = vpop.permute.xlu0 %8095
    %v8097 = vlaneseq
    %v8098 = vshrl.u32 %v8097, 7
    %v8099 = vadd.s32 %v8098, 112
    %8100 = vset.pattern.permute.xlu0 %v8099
    %8101 = vperm.xlu0 %8100, %v8012
    %v8102 = vpop.permute.xlu0 %8101
    %v8103 = vlaneseq
    %v8104 = vshrl.u32 %v8103, 7
    %v8105 = vadd.s32 %v8104, 120
    %8106 = vset.pattern.permute.xlu0 %v8105
    %8107 = vperm.xlu0 %8106, %v8012
    %v8108 = vpop.permute.xlu0 %8107
    %v8109 = vsub.f32 %v7339, %v61
    %v8110 = vsub.f32 %v7339, %v62
    %v8111 = vsub.f32 %v7345, %v61
    %v8112 = vsub.f32 %v7345, %v62
    %v8113 = vsub.f32 %v7351, %v61
    %v8114 = vsub.f32 %v7351, %v62
    %v8115 = vsub.f32 %v7357, %v61
    %v8116 = vsub.f32 %v7357, %v62
    %v8117 = vsub.f32 %v7363, %v61
    %v8118 = vsub.f32 %v7363, %v62
    %v8119 = vsub.f32 %v7369, %v61
    %v8120 = vsub.f32 %v7369, %v62
    %v8121 = vsub.f32 %v7375, %v61
    %v8122 = vsub.f32 %v7375, %v62
    %v8123 = vsub.f32 %v7381, %v61
    %v8124 = vsub.f32 %v7381, %v62
    %v8125 = vsub.f32 %v7387, %v61
    %v8126 = vsub.f32 %v7387, %v62
    %v8127 = vsub.f32 %v7393, %v61
    %v8128 = vsub.f32 %v7393, %v62
    %v8129 = vsub.f32 %v7399, %v61
    %v8130 = vsub.f32 %v7399, %v62
    %v8131 = vsub.f32 %v7405, %v61
    %v8132 = vsub.f32 %v7405, %v62
    %v8133 = vsub.f32 %v7411, %v61
    %v8134 = vsub.f32 %v7411, %v62
    %v8135 = vsub.f32 %v7417, %v61
    %v8136 = vsub.f32 %v7417, %v62
    %v8137 = vsub.f32 %v7423, %v61
    %v8138 = vsub.f32 %v7423, %v62
    %v8139 = vsub.f32 %v7429, %v61
    %v8140 = vsub.f32 %v7429, %v62
    %v8141 = vsub.f32 %v7436, %v61
    %v8142 = vsub.f32 %v7436, %v62
    %v8143 = vsub.f32 %v7442, %v61
    %v8144 = vsub.f32 %v7442, %v62
    %v8145 = vsub.f32 %v7448, %v61
    %v8146 = vsub.f32 %v7448, %v62
    %v8147 = vsub.f32 %v7454, %v61
    %v8148 = vsub.f32 %v7454, %v62
    %v8149 = vsub.f32 %v7460, %v61
    %v8150 = vsub.f32 %v7460, %v62
    %v8151 = vsub.f32 %v7466, %v61
    %v8152 = vsub.f32 %v7466, %v62
    %v8153 = vsub.f32 %v7472, %v61
    %v8154 = vsub.f32 %v7472, %v62
    %v8155 = vsub.f32 %v7478, %v61
    %v8156 = vsub.f32 %v7478, %v62
    %v8157 = vsub.f32 %v7484, %v61
    %v8158 = vsub.f32 %v7484, %v62
    %v8159 = vsub.f32 %v7490, %v61
    %v8160 = vsub.f32 %v7490, %v62
    %v8161 = vsub.f32 %v7496, %v61
    %v8162 = vsub.f32 %v7496, %v62
    %v8163 = vsub.f32 %v7502, %v61
    %v8164 = vsub.f32 %v7502, %v62
    %v8165 = vsub.f32 %v7508, %v61
    %v8166 = vsub.f32 %v7508, %v62
    %v8167 = vsub.f32 %v7514, %v61
    %v8168 = vsub.f32 %v7514, %v62
    %v8169 = vsub.f32 %v7520, %v61
    %v8170 = vsub.f32 %v7520, %v62
    %v8171 = vsub.f32 %v7526, %v61
    %v8172 = vsub.f32 %v7526, %v62
    %v8173 = vsub.f32 %v7533, %v61
    %v8174 = vsub.f32 %v7533, %v62
    %v8175 = vsub.f32 %v7539, %v61
    %v8176 = vsub.f32 %v7539, %v62
    %v8177 = vsub.f32 %v7545, %v61
    %v8178 = vsub.f32 %v7545, %v62
    %v8179 = vsub.f32 %v7551, %v61
    %v8180 = vsub.f32 %v7551, %v62
    %v8181 = vsub.f32 %v7557, %v61
    %v8182 = vsub.f32 %v7557, %v62
    %v8183 = vsub.f32 %v7563, %v61
    %v8184 = vsub.f32 %v7563, %v62
    %v8185 = vsub.f32 %v7569, %v61
    %v8186 = vsub.f32 %v7569, %v62
    %v8187 = vsub.f32 %v7575, %v61
    %v8188 = vsub.f32 %v7575, %v62
    %v8189 = vsub.f32 %v7581, %v61
    %v8190 = vsub.f32 %v7581, %v62
    %v8191 = vsub.f32 %v7587, %v61
    %v8192 = vsub.f32 %v7587, %v62
    %v8193 = vsub.f32 %v7593, %v61
    %v8194 = vsub.f32 %v7593, %v62
    %v8195 = vsub.f32 %v7599, %v61
    %v8196 = vsub.f32 %v7599, %v62
    %v8197 = vsub.f32 %v7605, %v61
    %v8198 = vsub.f32 %v7605, %v62
    %v8199 = vsub.f32 %v7611, %v61
    %v8200 = vsub.f32 %v7611, %v62
    %v8201 = vsub.f32 %v7617, %v61
    %v8202 = vsub.f32 %v7617, %v62
    %v8203 = vsub.f32 %v7623, %v61
    %v8204 = vsub.f32 %v7623, %v62
    %v8205 = vsub.f32 %v7630, %v61
    %v8206 = vsub.f32 %v7630, %v62
    %v8207 = vsub.f32 %v7636, %v61
    %v8208 = vsub.f32 %v7636, %v62
    %v8209 = vsub.f32 %v7642, %v61
    %v8210 = vsub.f32 %v7642, %v62
    %v8211 = vsub.f32 %v7648, %v61
    %v8212 = vsub.f32 %v7648, %v62
    %v8213 = vsub.f32 %v7654, %v61
    %v8214 = vsub.f32 %v7654, %v62
    %v8215 = vsub.f32 %v7660, %v61
    %v8216 = vsub.f32 %v7660, %v62
    %v8217 = vsub.f32 %v7666, %v61
    %v8218 = vsub.f32 %v7666, %v62
    %v8219 = vsub.f32 %v7672, %v61
    %v8220 = vsub.f32 %v7672, %v62
    %v8221 = vsub.f32 %v7678, %v61
    %v8222 = vsub.f32 %v7678, %v62
    %v8223 = vsub.f32 %v7684, %v61
    %v8224 = vsub.f32 %v7684, %v62
    %v8225 = vsub.f32 %v7690, %v61
    %v8226 = vsub.f32 %v7690, %v62
    %v8227 = vsub.f32 %v7696, %v61
    %v8228 = vsub.f32 %v7696, %v62
    %v8229 = vsub.f32 %v7702, %v61
    %v8230 = vsub.f32 %v7702, %v62
    %v8231 = vsub.f32 %v7708, %v61
    %v8232 = vsub.f32 %v7708, %v62
    %v8233 = vsub.f32 %v7714, %v61
    %v8234 = vsub.f32 %v7714, %v62
    %v8235 = vsub.f32 %v7720, %v61
    %v8236 = vsub.f32 %v7720, %v62
    %v8237 = vsub.f32 %v7727, %v61
    %v8238 = vsub.f32 %v7727, %v62
    %v8239 = vsub.f32 %v7733, %v61
    %v8240 = vsub.f32 %v7733, %v62
    %v8241 = vsub.f32 %v7739, %v61
    %v8242 = vsub.f32 %v7739, %v62
    %v8243 = vsub.f32 %v7745, %v61
    %v8244 = vsub.f32 %v7745, %v62
    %v8245 = vsub.f32 %v7751, %v61
    %v8246 = vsub.f32 %v7751, %v62
    %v8247 = vsub.f32 %v7757, %v61
    %v8248 = vsub.f32 %v7757, %v62
    %v8249 = vsub.f32 %v7763, %v61
    %v8250 = vsub.f32 %v7763, %v62
    %v8251 = vsub.f32 %v7769, %v61
    %v8252 = vsub.f32 %v7769, %v62
    %v8253 = vsub.f32 %v7775, %v61
    %v8254 = vsub.f32 %v7775, %v62
    %v8255 = vsub.f32 %v7781, %v61
    %v8256 = vsub.f32 %v7781, %v62
    %v8257 = vsub.f32 %v7787, %v61
    %v8258 = vsub.f32 %v7787, %v62
    %v8259 = vsub.f32 %v7793, %v61
    %v8260 = vsub.f32 %v7793, %v62
    %v8261 = vsub.f32 %v7799, %v61
    %v8262 = vsub.f32 %v7799, %v62
    %v8263 = vsub.f32 %v7805, %v61
    %v8264 = vsub.f32 %v7805, %v62
    %v8265 = vsub.f32 %v7811, %v61
    %v8266 = vsub.f32 %v7811, %v62
    %v8267 = vsub.f32 %v7817, %v61
    %v8268 = vsub.f32 %v7817, %v62
    %v8269 = vsub.f32 %v7824, %v61
    %v8270 = vsub.f32 %v7824, %v62
    %v8271 = vsub.f32 %v7830, %v61
    %v8272 = vsub.f32 %v7830, %v62
    %v8273 = vsub.f32 %v7836, %v61
    %v8274 = vsub.f32 %v7836, %v62
    %v8275 = vsub.f32 %v7842, %v61
    %v8276 = vsub.f32 %v7842, %v62
    %v8277 = vsub.f32 %v7848, %v61
    %v8278 = vsub.f32 %v7848, %v62
    %v8279 = vsub.f32 %v7854, %v61
    %v8280 = vsub.f32 %v7854, %v62
    %v8281 = vsub.f32 %v7860, %v61
    %v8282 = vsub.f32 %v7860, %v62
    %v8283 = vsub.f32 %v7866, %v61
    %v8284 = vsub.f32 %v7866, %v62
    %v8285 = vsub.f32 %v7872, %v61
    %v8286 = vsub.f32 %v7872, %v62
    %v8287 = vsub.f32 %v7878, %v61
    %v8288 = vsub.f32 %v7878, %v62
    %v8289 = vsub.f32 %v7884, %v61
    %v8290 = vsub.f32 %v7884, %v62
    %v8291 = vsub.f32 %v7890, %v61
    %v8292 = vsub.f32 %v7890, %v62
    %v8293 = vsub.f32 %v7896, %v61
    %v8294 = vsub.f32 %v7896, %v62
    %v8295 = vsub.f32 %v7902, %v61
    %v8296 = vsub.f32 %v7902, %v62
    %v8297 = vsub.f32 %v7908, %v61
    %v8298 = vsub.f32 %v7908, %v62
    %v8299 = vsub.f32 %v7914, %v61
    %v8300 = vsub.f32 %v7914, %v62
    %v8301 = vsub.f32 %v7921, %v61
    %v8302 = vsub.f32 %v7921, %v62
    %v8303 = vsub.f32 %v7927, %v61
    %v8304 = vsub.f32 %v7927, %v62
    %v8305 = vsub.f32 %v7933, %v61
    %v8306 = vsub.f32 %v7933, %v62
    %v8307 = vsub.f32 %v7939, %v61
    %v8308 = vsub.f32 %v7939, %v62
    %v8309 = vsub.f32 %v7945, %v61
    %v8310 = vsub.f32 %v7945, %v62
    %v8311 = vsub.f32 %v7951, %v61
    %v8312 = vsub.f32 %v7951, %v62
    %v8313 = vsub.f32 %v7957, %v61
    %v8314 = vsub.f32 %v7957, %v62
    %v8315 = vsub.f32 %v7963, %v61
    %v8316 = vsub.f32 %v7963, %v62
    %v8317 = vsub.f32 %v7969, %v61
    %v8318 = vsub.f32 %v7969, %v62
    %v8319 = vsub.f32 %v7975, %v61
    %v8320 = vsub.f32 %v7975, %v62
    %v8321 = vsub.f32 %v7981, %v61
    %v8322 = vsub.f32 %v7981, %v62
    %v8323 = vsub.f32 %v7987, %v61
    %v8324 = vsub.f32 %v7987, %v62
    %v8325 = vsub.f32 %v7993, %v61
    %v8326 = vsub.f32 %v7993, %v62
    %v8327 = vsub.f32 %v7999, %v61
    %v8328 = vsub.f32 %v7999, %v62
    %v8329 = vsub.f32 %v8005, %v61
    %v8330 = vsub.f32 %v8005, %v62
    %v8331 = vsub.f32 %v8011, %v61
    %v8332 = vsub.f32 %v8011, %v62
    %v8333 = vsub.f32 %v8018, %v61
    %v8334 = vsub.f32 %v8018, %v62
    %v8335 = vsub.f32 %v8024, %v61
    %v8336 = vsub.f32 %v8024, %v62
    %v8337 = vsub.f32 %v8030, %v61
    %v8338 = vsub.f32 %v8030, %v62
    %v8339 = vsub.f32 %v8036, %v61
    %v8340 = vsub.f32 %v8036, %v62
    %v8341 = vsub.f32 %v8042, %v61
    %v8342 = vsub.f32 %v8042, %v62
    %v8343 = vsub.f32 %v8048, %v61
    %v8344 = vsub.f32 %v8048, %v62
    %v8345 = vsub.f32 %v8054, %v61
    %v8346 = vsub.f32 %v8054, %v62
    %v8347 = vsub.f32 %v8060, %v61
    %v8348 = vsub.f32 %v8060, %v62
    %v8349 = vsub.f32 %v8066, %v61
    %v8350 = vsub.f32 %v8066, %v62
    %v8351 = vsub.f32 %v8072, %v61
    %v8352 = vsub.f32 %v8072, %v62
    %v8353 = vsub.f32 %v8078, %v61
    %v8354 = vsub.f32 %v8078, %v62
    %v8355 = vsub.f32 %v8084, %v61
    %v8356 = vsub.f32 %v8084, %v62
    %v8357 = vsub.f32 %v8090, %v61
    %v8358 = vsub.f32 %v8090, %v62
    %v8359 = vsub.f32 %v8096, %v61
    %v8360 = vsub.f32 %v8096, %v62
    %v8361 = vsub.f32 %v8102, %v61
    %v8362 = vsub.f32 %v8102, %v62
    %v8363 = vsub.f32 %v8108, %v61
    %v8364 = vsub.f32 %v8108, %v62
    %v8365 = vmul.f32 %v8109, %v8109
    %v8366 = vmul.f32 %v8110, %v8110
    %v8367 = vmul.f32 %v8111, %v8111
    %v8368 = vmul.f32 %v8112, %v8112
    %v8369 = vmul.f32 %v8113, %v8113
    %v8370 = vmul.f32 %v8114, %v8114
    %v8371 = vmul.f32 %v8115, %v8115
    %v8372 = vmul.f32 %v8116, %v8116
    %v8373 = vmul.f32 %v8117, %v8117
    %v8374 = vmul.f32 %v8118, %v8118
    %v8375 = vmul.f32 %v8119, %v8119
    %v8376 = vmul.f32 %v8120, %v8120
    %v8377 = vmul.f32 %v8121, %v8121
    %v8378 = vmul.f32 %v8122, %v8122
    %v8379 = vmul.f32 %v8123, %v8123
    %v8380 = vmul.f32 %v8124, %v8124
    %v8381 = vmul.f32 %v8125, %v8125
    %v8382 = vmul.f32 %v8126, %v8126
    %v8383 = vmul.f32 %v8127, %v8127
    %v8384 = vmul.f32 %v8128, %v8128
    %v8385 = vmul.f32 %v8129, %v8129
    %v8386 = vmul.f32 %v8130, %v8130
    %v8387 = vmul.f32 %v8131, %v8131
    %v8388 = vmul.f32 %v8132, %v8132
    %v8389 = vmul.f32 %v8133, %v8133
    %v8390 = vmul.f32 %v8134, %v8134
    %v8391 = vmul.f32 %v8135, %v8135
    %v8392 = vmul.f32 %v8136, %v8136
    %v8393 = vmul.f32 %v8137, %v8137
    %v8394 = vmul.f32 %v8138, %v8138
    %v8395 = vmul.f32 %v8139, %v8139
    %v8396 = vmul.f32 %v8140, %v8140
    %v8397 = vmul.f32 %v8141, %v8141
    %v8398 = vmul.f32 %v8142, %v8142
    %v8399 = vmul.f32 %v8143, %v8143
    %v8400 = vmul.f32 %v8144, %v8144
    %v8401 = vmul.f32 %v8145, %v8145
    %v8402 = vmul.f32 %v8146, %v8146
    %v8403 = vmul.f32 %v8147, %v8147
    %v8404 = vmul.f32 %v8148, %v8148
    %v8405 = vmul.f32 %v8149, %v8149
    %v8406 = vmul.f32 %v8150, %v8150
    %v8407 = vmul.f32 %v8151, %v8151
    %v8408 = vmul.f32 %v8152, %v8152
    %v8409 = vmul.f32 %v8153, %v8153
    %v8410 = vmul.f32 %v8154, %v8154
    %v8411 = vmul.f32 %v8155, %v8155
    %v8412 = vmul.f32 %v8156, %v8156
    %v8413 = vmul.f32 %v8157, %v8157
    %v8414 = vmul.f32 %v8158, %v8158
    %v8415 = vmul.f32 %v8159, %v8159
    %v8416 = vmul.f32 %v8160, %v8160
    %v8417 = vmul.f32 %v8161, %v8161
    %v8418 = vmul.f32 %v8162, %v8162
    %v8419 = vmul.f32 %v8163, %v8163
    %v8420 = vmul.f32 %v8164, %v8164
    %v8421 = vmul.f32 %v8165, %v8165
    %v8422 = vmul.f32 %v8166, %v8166
    %v8423 = vmul.f32 %v8167, %v8167
    %v8424 = vmul.f32 %v8168, %v8168
    %v8425 = vmul.f32 %v8169, %v8169
    %v8426 = vmul.f32 %v8170, %v8170
    %v8427 = vmul.f32 %v8171, %v8171
    %v8428 = vmul.f32 %v8172, %v8172
    %v8429 = vmul.f32 %v8173, %v8173
    %v8430 = vmul.f32 %v8174, %v8174
    %v8431 = vmul.f32 %v8175, %v8175
    %v8432 = vmul.f32 %v8176, %v8176
    %v8433 = vmul.f32 %v8177, %v8177
    %v8434 = vmul.f32 %v8178, %v8178
    %v8435 = vmul.f32 %v8179, %v8179
    %v8436 = vmul.f32 %v8180, %v8180
    %v8437 = vmul.f32 %v8181, %v8181
    %v8438 = vmul.f32 %v8182, %v8182
    %v8439 = vmul.f32 %v8183, %v8183
    %v8440 = vmul.f32 %v8184, %v8184
    %v8441 = vmul.f32 %v8185, %v8185
    %v8442 = vmul.f32 %v8186, %v8186
    %v8443 = vmul.f32 %v8187, %v8187
    %v8444 = vmul.f32 %v8188, %v8188
    %v8445 = vmul.f32 %v8189, %v8189
    %v8446 = vmul.f32 %v8190, %v8190
    %v8447 = vmul.f32 %v8191, %v8191
    %v8448 = vmul.f32 %v8192, %v8192
    %v8449 = vmul.f32 %v8193, %v8193
    %v8450 = vmul.f32 %v8194, %v8194
    %v8451 = vmul.f32 %v8195, %v8195
    %v8452 = vmul.f32 %v8196, %v8196
    %v8453 = vmul.f32 %v8197, %v8197
    %v8454 = vmul.f32 %v8198, %v8198
    %v8455 = vmul.f32 %v8199, %v8199
    %v8456 = vmul.f32 %v8200, %v8200
    %v8457 = vmul.f32 %v8201, %v8201
    %v8458 = vmul.f32 %v8202, %v8202
    %v8459 = vmul.f32 %v8203, %v8203
    %v8460 = vmul.f32 %v8204, %v8204
    %v8461 = vmul.f32 %v8205, %v8205
    %v8462 = vmul.f32 %v8206, %v8206
    %v8463 = vmul.f32 %v8207, %v8207
    %v8464 = vmul.f32 %v8208, %v8208
    %v8465 = vmul.f32 %v8209, %v8209
    %v8466 = vmul.f32 %v8210, %v8210
    %v8467 = vmul.f32 %v8211, %v8211
    %v8468 = vmul.f32 %v8212, %v8212
    %v8469 = vmul.f32 %v8213, %v8213
    %v8470 = vmul.f32 %v8214, %v8214
    %v8471 = vmul.f32 %v8215, %v8215
    %v8472 = vmul.f32 %v8216, %v8216
    %v8473 = vmul.f32 %v8217, %v8217
    %v8474 = vmul.f32 %v8218, %v8218
    %v8475 = vmul.f32 %v8219, %v8219
    %v8476 = vmul.f32 %v8220, %v8220
    %v8477 = vmul.f32 %v8221, %v8221
    %v8478 = vmul.f32 %v8222, %v8222
    %v8479 = vmul.f32 %v8223, %v8223
    %v8480 = vmul.f32 %v8224, %v8224
    %v8481 = vmul.f32 %v8225, %v8225
    %v8482 = vmul.f32 %v8226, %v8226
    %v8483 = vmul.f32 %v8227, %v8227
    %v8484 = vmul.f32 %v8228, %v8228
    %v8485 = vmul.f32 %v8229, %v8229
    %v8486 = vmul.f32 %v8230, %v8230
    %v8487 = vmul.f32 %v8231, %v8231
    %v8488 = vmul.f32 %v8232, %v8232
    %v8489 = vmul.f32 %v8233, %v8233
    %v8490 = vmul.f32 %v8234, %v8234
    %v8491 = vmul.f32 %v8235, %v8235
    %v8492 = vmul.f32 %v8236, %v8236
    %v8493 = vmul.f32 %v8237, %v8237
    %v8494 = vmul.f32 %v8238, %v8238
    %v8495 = vmul.f32 %v8239, %v8239
    %v8496 = vmul.f32 %v8240, %v8240
    %v8497 = vmul.f32 %v8241, %v8241
    %v8498 = vmul.f32 %v8242, %v8242
    %v8499 = vmul.f32 %v8243, %v8243
    %v8500 = vmul.f32 %v8244, %v8244
    %v8501 = vmul.f32 %v8245, %v8245
    %v8502 = vmul.f32 %v8246, %v8246
    %v8503 = vmul.f32 %v8247, %v8247
    %v8504 = vmul.f32 %v8248, %v8248
    %v8505 = vmul.f32 %v8249, %v8249
    %v8506 = vmul.f32 %v8250, %v8250
    %v8507 = vmul.f32 %v8251, %v8251
    %v8508 = vmul.f32 %v8252, %v8252
    %v8509 = vmul.f32 %v8253, %v8253
    %v8510 = vmul.f32 %v8254, %v8254
    %v8511 = vmul.f32 %v8255, %v8255
    %v8512 = vmul.f32 %v8256, %v8256
    %v8513 = vmul.f32 %v8257, %v8257
    %v8514 = vmul.f32 %v8258, %v8258
    %v8515 = vmul.f32 %v8259, %v8259
    %v8516 = vmul.f32 %v8260, %v8260
    %v8517 = vmul.f32 %v8261, %v8261
    %v8518 = vmul.f32 %v8262, %v8262
    %v8519 = vmul.f32 %v8263, %v8263
    %v8520 = vmul.f32 %v8264, %v8264
    %v8521 = vmul.f32 %v8265, %v8265
    %v8522 = vmul.f32 %v8266, %v8266
    %v8523 = vmul.f32 %v8267, %v8267
    %v8524 = vmul.f32 %v8268, %v8268
    %v8525 = vmul.f32 %v8269, %v8269
    %v8526 = vmul.f32 %v8270, %v8270
    %v8527 = vmul.f32 %v8271, %v8271
    %v8528 = vmul.f32 %v8272, %v8272
    %v8529 = vmul.f32 %v8273, %v8273
    %v8530 = vmul.f32 %v8274, %v8274
    %v8531 = vmul.f32 %v8275, %v8275
    %v8532 = vmul.f32 %v8276, %v8276
    %v8533 = vmul.f32 %v8277, %v8277
    %v8534 = vmul.f32 %v8278, %v8278
    %v8535 = vmul.f32 %v8279, %v8279
    %v8536 = vmul.f32 %v8280, %v8280
    %v8537 = vmul.f32 %v8281, %v8281
    %v8538 = vmul.f32 %v8282, %v8282
    %v8539 = vmul.f32 %v8283, %v8283
    %v8540 = vmul.f32 %v8284, %v8284
    %v8541 = vmul.f32 %v8285, %v8285
    %v8542 = vmul.f32 %v8286, %v8286
    %v8543 = vmul.f32 %v8287, %v8287
    %v8544 = vmul.f32 %v8288, %v8288
    %v8545 = vmul.f32 %v8289, %v8289
    %v8546 = vmul.f32 %v8290, %v8290
    %v8547 = vmul.f32 %v8291, %v8291
    %v8548 = vmul.f32 %v8292, %v8292
    %v8549 = vmul.f32 %v8293, %v8293
    %v8550 = vmul.f32 %v8294, %v8294
    %v8551 = vmul.f32 %v8295, %v8295
    %v8552 = vmul.f32 %v8296, %v8296
    %v8553 = vmul.f32 %v8297, %v8297
    %v8554 = vmul.f32 %v8298, %v8298
    %v8555 = vmul.f32 %v8299, %v8299
    %v8556 = vmul.f32 %v8300, %v8300
    %v8557 = vmul.f32 %v8301, %v8301
    %v8558 = vmul.f32 %v8302, %v8302
    %v8559 = vmul.f32 %v8303, %v8303
    %v8560 = vmul.f32 %v8304, %v8304
    %v8561 = vmul.f32 %v8305, %v8305
    %v8562 = vmul.f32 %v8306, %v8306
    %v8563 = vmul.f32 %v8307, %v8307
    %v8564 = vmul.f32 %v8308, %v8308
    %v8565 = vmul.f32 %v8309, %v8309
    %v8566 = vmul.f32 %v8310, %v8310
    %v8567 = vmul.f32 %v8311, %v8311
    %v8568 = vmul.f32 %v8312, %v8312
    %v8569 = vmul.f32 %v8313, %v8313
    %v8570 = vmul.f32 %v8314, %v8314
    %v8571 = vmul.f32 %v8315, %v8315
    %v8572 = vmul.f32 %v8316, %v8316
    %v8573 = vmul.f32 %v8317, %v8317
    %v8574 = vmul.f32 %v8318, %v8318
    %v8575 = vmul.f32 %v8319, %v8319
    %v8576 = vmul.f32 %v8320, %v8320
    %v8577 = vmul.f32 %v8321, %v8321
    %v8578 = vmul.f32 %v8322, %v8322
    %v8579 = vmul.f32 %v8323, %v8323
    %v8580 = vmul.f32 %v8324, %v8324
    %v8581 = vmul.f32 %v8325, %v8325
    %v8582 = vmul.f32 %v8326, %v8326
    %v8583 = vmul.f32 %v8327, %v8327
    %v8584 = vmul.f32 %v8328, %v8328
    %v8585 = vmul.f32 %v8329, %v8329
    %v8586 = vmul.f32 %v8330, %v8330
    %v8587 = vmul.f32 %v8331, %v8331
    %v8588 = vmul.f32 %v8332, %v8332
    %v8589 = vmul.f32 %v8333, %v8333
    %v8590 = vmul.f32 %v8334, %v8334
    %v8591 = vmul.f32 %v8335, %v8335
    %v8592 = vmul.f32 %v8336, %v8336
    %v8593 = vmul.f32 %v8337, %v8337
    %v8594 = vmul.f32 %v8338, %v8338
    %v8595 = vmul.f32 %v8339, %v8339
    %v8596 = vmul.f32 %v8340, %v8340
    %v8597 = vmul.f32 %v8341, %v8341
    %v8598 = vmul.f32 %v8342, %v8342
    %v8599 = vmul.f32 %v8343, %v8343
    %v8600 = vmul.f32 %v8344, %v8344
    %v8601 = vmul.f32 %v8345, %v8345
    %v8602 = vmul.f32 %v8346, %v8346
    %v8603 = vmul.f32 %v8347, %v8347
    %v8604 = vmul.f32 %v8348, %v8348
    %v8605 = vmul.f32 %v8349, %v8349
    %v8606 = vmul.f32 %v8350, %v8350
    %v8607 = vmul.f32 %v8351, %v8351
    %v8608 = vmul.f32 %v8352, %v8352
    %v8609 = vmul.f32 %v8353, %v8353
    %v8610 = vmul.f32 %v8354, %v8354
    %v8611 = vmul.f32 %v8355, %v8355
    %v8612 = vmul.f32 %v8356, %v8356
    %v8613 = vmul.f32 %v8357, %v8357
    %v8614 = vmul.f32 %v8358, %v8358
    %v8615 = vmul.f32 %v8359, %v8359
    %v8616 = vmul.f32 %v8360, %v8360
    %v8617 = vmul.f32 %v8361, %v8361
    %v8618 = vmul.f32 %v8362, %v8362
    %v8619 = vmul.f32 %v8363, %v8363
    %v8620 = vmul.f32 %v8364, %v8364
    %v8621 = vmul.f32 %v8365, -100.0
    %v8622 = vmul.f32 %v8366, -100.0
    %v8623 = vmul.f32 %v8367, -100.0
    %v8624 = vmul.f32 %v8368, -100.0
    %v8625 = vmul.f32 %v8369, -100.0
    %v8626 = vmul.f32 %v8370, -100.0
    %v8627 = vmul.f32 %v8371, -100.0
    %v8628 = vmul.f32 %v8372, -100.0
    %v8629 = vmul.f32 %v8373, -100.0
    %v8630 = vmul.f32 %v8374, -100.0
    %v8631 = vmul.f32 %v8375, -100.0
    %v8632 = vmul.f32 %v8376, -100.0
    %v8633 = vmul.f32 %v8377, -100.0
    %v8634 = vmul.f32 %v8378, -100.0
    %v8635 = vmul.f32 %v8379, -100.0
    %v8636 = vmul.f32 %v8380, -100.0
    %v8637 = vmul.f32 %v8381, -100.0
    %v8638 = vmul.f32 %v8382, -100.0
    %v8639 = vmul.f32 %v8383, -100.0
    %v8640 = vmul.f32 %v8384, -100.0
    %v8641 = vmul.f32 %v8385, -100.0
    %v8642 = vmul.f32 %v8386, -100.0
    %v8643 = vmul.f32 %v8387, -100.0
    %v8644 = vmul.f32 %v8388, -100.0
    %v8645 = vmul.f32 %v8389, -100.0
    %v8646 = vmul.f32 %v8390, -100.0
    %v8647 = vmul.f32 %v8391, -100.0
    %v8648 = vmul.f32 %v8392, -100.0
    %v8649 = vmul.f32 %v8393, -100.0
    %v8650 = vmul.f32 %v8394, -100.0
    %v8651 = vmul.f32 %v8395, -100.0
    %v8652 = vmul.f32 %v8396, -100.0
    %v8653 = vmul.f32 %v8397, -100.0
    %v8654 = vmul.f32 %v8398, -100.0
    %v8655 = vmul.f32 %v8399, -100.0
    %v8656 = vmul.f32 %v8400, -100.0
    %v8657 = vmul.f32 %v8401, -100.0
    %v8658 = vmul.f32 %v8402, -100.0
    %v8659 = vmul.f32 %v8403, -100.0
    %v8660 = vmul.f32 %v8404, -100.0
    %v8661 = vmul.f32 %v8405, -100.0
    %v8662 = vmul.f32 %v8406, -100.0
    %v8663 = vmul.f32 %v8407, -100.0
    %v8664 = vmul.f32 %v8408, -100.0
    %v8665 = vmul.f32 %v8409, -100.0
    %v8666 = vmul.f32 %v8410, -100.0
    %v8667 = vmul.f32 %v8411, -100.0
    %v8668 = vmul.f32 %v8412, -100.0
    %v8669 = vmul.f32 %v8413, -100.0
    %v8670 = vmul.f32 %v8414, -100.0
    %v8671 = vmul.f32 %v8415, -100.0
    %v8672 = vmul.f32 %v8416, -100.0
    %v8673 = vmul.f32 %v8417, -100.0
    %v8674 = vmul.f32 %v8418, -100.0
    %v8675 = vmul.f32 %v8419, -100.0
    %v8676 = vmul.f32 %v8420, -100.0
    %v8677 = vmul.f32 %v8421, -100.0
    %v8678 = vmul.f32 %v8422, -100.0
    %v8679 = vmul.f32 %v8423, -100.0
    %v8680 = vmul.f32 %v8424, -100.0
    %v8681 = vmul.f32 %v8425, -100.0
    %v8682 = vmul.f32 %v8426, -100.0
    %v8683 = vmul.f32 %v8427, -100.0
    %v8684 = vmul.f32 %v8428, -100.0
    %v8685 = vmul.f32 %v8429, -100.0
    %v8686 = vmul.f32 %v8430, -100.0
    %v8687 = vmul.f32 %v8431, -100.0
    %v8688 = vmul.f32 %v8432, -100.0
    %v8689 = vmul.f32 %v8433, -100.0
    %v8690 = vmul.f32 %v8434, -100.0
    %v8691 = vmul.f32 %v8435, -100.0
    %v8692 = vmul.f32 %v8436, -100.0
    %v8693 = vmul.f32 %v8437, -100.0
    %v8694 = vmul.f32 %v8438, -100.0
    %v8695 = vmul.f32 %v8439, -100.0
    %v8696 = vmul.f32 %v8440, -100.0
    %v8697 = vmul.f32 %v8441, -100.0
    %v8698 = vmul.f32 %v8442, -100.0
    %v8699 = vmul.f32 %v8443, -100.0
    %v8700 = vmul.f32 %v8444, -100.0
    %v8701 = vmul.f32 %v8445, -100.0
    %v8702 = vmul.f32 %v8446, -100.0
    %v8703 = vmul.f32 %v8447, -100.0
    %v8704 = vmul.f32 %v8448, -100.0
    %v8705 = vmul.f32 %v8449, -100.0
    %v8706 = vmul.f32 %v8450, -100.0
    %v8707 = vmul.f32 %v8451, -100.0
    %v8708 = vmul.f32 %v8452, -100.0
    %v8709 = vmul.f32 %v8453, -100.0
    %v8710 = vmul.f32 %v8454, -100.0
    %v8711 = vmul.f32 %v8455, -100.0
    %v8712 = vmul.f32 %v8456, -100.0
    %v8713 = vmul.f32 %v8457, -100.0
    %v8714 = vmul.f32 %v8458, -100.0
    %v8715 = vmul.f32 %v8459, -100.0
    %v8716 = vmul.f32 %v8460, -100.0
    %v8717 = vmul.f32 %v8461, -100.0
    %v8718 = vmul.f32 %v8462, -100.0
    %v8719 = vmul.f32 %v8463, -100.0
    %v8720 = vmul.f32 %v8464, -100.0
    %v8721 = vmul.f32 %v8465, -100.0
    %v8722 = vmul.f32 %v8466, -100.0
    %v8723 = vmul.f32 %v8467, -100.0
    %v8724 = vmul.f32 %v8468, -100.0
    %v8725 = vmul.f32 %v8469, -100.0
    %v8726 = vmul.f32 %v8470, -100.0
    %v8727 = vmul.f32 %v8471, -100.0
    %v8728 = vmul.f32 %v8472, -100.0
    %v8729 = vmul.f32 %v8473, -100.0
    %v8730 = vmul.f32 %v8474, -100.0
    %v8731 = vmul.f32 %v8475, -100.0
    %v8732 = vmul.f32 %v8476, -100.0
    %v8733 = vmul.f32 %v8477, -100.0
    %v8734 = vmul.f32 %v8478, -100.0
    %v8735 = vmul.f32 %v8479, -100.0
    %v8736 = vmul.f32 %v8480, -100.0
    %v8737 = vmul.f32 %v8481, -100.0
    %v8738 = vmul.f32 %v8482, -100.0
    %v8739 = vmul.f32 %v8483, -100.0
    %v8740 = vmul.f32 %v8484, -100.0
    %v8741 = vmul.f32 %v8485, -100.0
    %v8742 = vmul.f32 %v8486, -100.0
    %v8743 = vmul.f32 %v8487, -100.0
    %v8744 = vmul.f32 %v8488, -100.0
    %v8745 = vmul.f32 %v8489, -100.0
    %v8746 = vmul.f32 %v8490, -100.0
    %v8747 = vmul.f32 %v8491, -100.0
    %v8748 = vmul.f32 %v8492, -100.0
    %v8749 = vmul.f32 %v8493, -100.0
    %v8750 = vmul.f32 %v8494, -100.0
    %v8751 = vmul.f32 %v8495, -100.0
    %v8752 = vmul.f32 %v8496, -100.0
    %v8753 = vmul.f32 %v8497, -100.0
    %v8754 = vmul.f32 %v8498, -100.0
    %v8755 = vmul.f32 %v8499, -100.0
    %v8756 = vmul.f32 %v8500, -100.0
    %v8757 = vmul.f32 %v8501, -100.0
    %v8758 = vmul.f32 %v8502, -100.0
    %v8759 = vmul.f32 %v8503, -100.0
    %v8760 = vmul.f32 %v8504, -100.0
    %v8761 = vmul.f32 %v8505, -100.0
    %v8762 = vmul.f32 %v8506, -100.0
    %v8763 = vmul.f32 %v8507, -100.0
    %v8764 = vmul.f32 %v8508, -100.0
    %v8765 = vmul.f32 %v8509, -100.0
    %v8766 = vmul.f32 %v8510, -100.0
    %v8767 = vmul.f32 %v8511, -100.0
    %v8768 = vmul.f32 %v8512, -100.0
    %v8769 = vmul.f32 %v8513, -100.0
    %v8770 = vmul.f32 %v8514, -100.0
    %v8771 = vmul.f32 %v8515, -100.0
    %v8772 = vmul.f32 %v8516, -100.0
    %v8773 = vmul.f32 %v8517, -100.0
    %v8774 = vmul.f32 %v8518, -100.0
    %v8775 = vmul.f32 %v8519, -100.0
    %v8776 = vmul.f32 %v8520, -100.0
    %v8777 = vmul.f32 %v8521, -100.0
    %v8778 = vmul.f32 %v8522, -100.0
    %v8779 = vmul.f32 %v8523, -100.0
    %v8780 = vmul.f32 %v8524, -100.0
    %v8781 = vmul.f32 %v8525, -100.0
    %v8782 = vmul.f32 %v8526, -100.0
    %v8783 = vmul.f32 %v8527, -100.0
    %v8784 = vmul.f32 %v8528, -100.0
    %v8785 = vmul.f32 %v8529, -100.0
    %v8786 = vmul.f32 %v8530, -100.0
    %v8787 = vmul.f32 %v8531, -100.0
    %v8788 = vmul.f32 %v8532, -100.0
    %v8789 = vmul.f32 %v8533, -100.0
    %v8790 = vmul.f32 %v8534, -100.0
    %v8791 = vmul.f32 %v8535, -100.0
    %v8792 = vmul.f32 %v8536, -100.0
    %v8793 = vmul.f32 %v8537, -100.0
    %v8794 = vmul.f32 %v8538, -100.0
    %v8795 = vmul.f32 %v8539, -100.0
    %v8796 = vmul.f32 %v8540, -100.0
    %v8797 = vmul.f32 %v8541, -100.0
    %v8798 = vmul.f32 %v8542, -100.0
    %v8799 = vmul.f32 %v8543, -100.0
    %v8800 = vmul.f32 %v8544, -100.0
    %v8801 = vmul.f32 %v8545, -100.0
    %v8802 = vmul.f32 %v8546, -100.0
    %v8803 = vmul.f32 %v8547, -100.0
    %v8804 = vmul.f32 %v8548, -100.0
    %v8805 = vmul.f32 %v8549, -100.0
    %v8806 = vmul.f32 %v8550, -100.0
    %v8807 = vmul.f32 %v8551, -100.0
    %v8808 = vmul.f32 %v8552, -100.0
    %v8809 = vmul.f32 %v8553, -100.0
    %v8810 = vmul.f32 %v8554, -100.0
    %v8811 = vmul.f32 %v8555, -100.0
    %v8812 = vmul.f32 %v8556, -100.0
    %v8813 = vmul.f32 %v8557, -100.0
    %v8814 = vmul.f32 %v8558, -100.0
    %v8815 = vmul.f32 %v8559, -100.0
    %v8816 = vmul.f32 %v8560, -100.0
    %v8817 = vmul.f32 %v8561, -100.0
    %v8818 = vmul.f32 %v8562, -100.0
    %v8819 = vmul.f32 %v8563, -100.0
    %v8820 = vmul.f32 %v8564, -100.0
    %v8821 = vmul.f32 %v8565, -100.0
    %v8822 = vmul.f32 %v8566, -100.0
    %v8823 = vmul.f32 %v8567, -100.0
    %v8824 = vmul.f32 %v8568, -100.0
    %v8825 = vmul.f32 %v8569, -100.0
    %v8826 = vmul.f32 %v8570, -100.0
    %v8827 = vmul.f32 %v8571, -100.0
    %v8828 = vmul.f32 %v8572, -100.0
    %v8829 = vmul.f32 %v8573, -100.0
    %v8830 = vmul.f32 %v8574, -100.0
    %v8831 = vmul.f32 %v8575, -100.0
    %v8832 = vmul.f32 %v8576, -100.0
    %v8833 = vmul.f32 %v8577, -100.0
    %v8834 = vmul.f32 %v8578, -100.0
    %v8835 = vmul.f32 %v8579, -100.0
    %v8836 = vmul.f32 %v8580, -100.0
    %v8837 = vmul.f32 %v8581, -100.0
    %v8838 = vmul.f32 %v8582, -100.0
    %v8839 = vmul.f32 %v8583, -100.0
    %v8840 = vmul.f32 %v8584, -100.0
    %v8841 = vmul.f32 %v8585, -100.0
    %v8842 = vmul.f32 %v8586, -100.0
    %v8843 = vmul.f32 %v8587, -100.0
    %v8844 = vmul.f32 %v8588, -100.0
    %v8845 = vmul.f32 %v8589, -100.0
    %v8846 = vmul.f32 %v8590, -100.0
    %v8847 = vmul.f32 %v8591, -100.0
    %v8848 = vmul.f32 %v8592, -100.0
    %v8849 = vmul.f32 %v8593, -100.0
    %v8850 = vmul.f32 %v8594, -100.0
    %v8851 = vmul.f32 %v8595, -100.0
    %v8852 = vmul.f32 %v8596, -100.0
    %v8853 = vmul.f32 %v8597, -100.0
    %v8854 = vmul.f32 %v8598, -100.0
    %v8855 = vmul.f32 %v8599, -100.0
    %v8856 = vmul.f32 %v8600, -100.0
    %v8857 = vmul.f32 %v8601, -100.0
    %v8858 = vmul.f32 %v8602, -100.0
    %v8859 = vmul.f32 %v8603, -100.0
    %v8860 = vmul.f32 %v8604, -100.0
    %v8861 = vmul.f32 %v8605, -100.0
    %v8862 = vmul.f32 %v8606, -100.0
    %v8863 = vmul.f32 %v8607, -100.0
    %v8864 = vmul.f32 %v8608, -100.0
    %v8865 = vmul.f32 %v8609, -100.0
    %v8866 = vmul.f32 %v8610, -100.0
    %v8867 = vmul.f32 %v8611, -100.0
    %v8868 = vmul.f32 %v8612, -100.0
    %v8869 = vmul.f32 %v8613, -100.0
    %v8870 = vmul.f32 %v8614, -100.0
    %v8871 = vmul.f32 %v8615, -100.0
    %v8872 = vmul.f32 %v8616, -100.0
    %v8873 = vmul.f32 %v8617, -100.0
    %v8874 = vmul.f32 %v8618, -100.0
    %v8875 = vmul.f32 %v8619, -100.0
    %v8876 = vmul.f32 %v8620, -100.0
    %v8877 = vmul.f32 %v8621, 1.442695
    %v8878 = vpow.pop %v8877
    %v8879 = vmul.f32 %v8622, 1.442695
    %v8880 = vpow.pop %v8879
    %v8881 = vmul.f32 %v8623, 1.442695
    %v8882 = vpow.pop %v8881
    %v8883 = vmul.f32 %v8624, 1.442695
    %v8884 = vpow.pop %v8883
    %v8885 = vmul.f32 %v8625, 1.442695
    %v8886 = vpow.pop %v8885
    %v8887 = vmul.f32 %v8626, 1.442695
    %v8888 = vpow.pop %v8887
    %v8889 = vmul.f32 %v8627, 1.442695
    %v8890 = vpow.pop %v8889
    %v8891 = vmul.f32 %v8628, 1.442695
    %v8892 = vpow.pop %v8891
    %v8893 = vmul.f32 %v8629, 1.442695
    %v8894 = vpow.pop %v8893
    %v8895 = vmul.f32 %v8630, 1.442695
    %v8896 = vpow.pop %v8895
    %v8897 = vmul.f32 %v8631, 1.442695
    %v8898 = vpow.pop %v8897
    %v8899 = vmul.f32 %v8632, 1.442695
    %v8900 = vpow.pop %v8899
    %v8901 = vmul.f32 %v8633, 1.442695
    %v8902 = vpow.pop %v8901
    %v8903 = vmul.f32 %v8634, 1.442695
    %v8904 = vpow.pop %v8903
    %v8905 = vmul.f32 %v8635, 1.442695
    %v8906 = vpow.pop %v8905
    %v8907 = vmul.f32 %v8636, 1.442695
    %v8908 = vpow.pop %v8907
    %v8909 = vmul.f32 %v8637, 1.442695
    %v8910 = vpow.pop %v8909
    %v8911 = vmul.f32 %v8638, 1.442695
    %v8912 = vpow.pop %v8911
    %v8913 = vmul.f32 %v8639, 1.442695
    %v8914 = vpow.pop %v8913
    %v8915 = vmul.f32 %v8640, 1.442695
    %v8916 = vpow.pop %v8915
    %v8917 = vmul.f32 %v8641, 1.442695
    %v8918 = vpow.pop %v8917
    %v8919 = vmul.f32 %v8642, 1.442695
    %v8920 = vpow.pop %v8919
    %v8921 = vmul.f32 %v8643, 1.442695
    %v8922 = vpow.pop %v8921
    %v8923 = vmul.f32 %v8644, 1.442695
    %v8924 = vpow.pop %v8923
    %v8925 = vmul.f32 %v8645, 1.442695
    %v8926 = vpow.pop %v8925
    %v8927 = vmul.f32 %v8646, 1.442695
    %v8928 = vpow.pop %v8927
    %v8929 = vmul.f32 %v8647, 1.442695
    %v8930 = vpow.pop %v8929
    %v8931 = vmul.f32 %v8648, 1.442695
    %v8932 = vpow.pop %v8931
    %v8933 = vmul.f32 %v8649, 1.442695
    %v8934 = vpow.pop %v8933
    %v8935 = vmul.f32 %v8650, 1.442695
    %v8936 = vpow.pop %v8935
    %v8937 = vmul.f32 %v8651, 1.442695
    %v8938 = vpow.pop %v8937
    %v8939 = vmul.f32 %v8652, 1.442695
    %v8940 = vpow.pop %v8939
    %v8941 = vmul.f32 %v8653, 1.442695
    %v8942 = vpow.pop %v8941
    %v8943 = vmul.f32 %v8654, 1.442695
    %v8944 = vpow.pop %v8943
    %v8945 = vmul.f32 %v8655, 1.442695
    %v8946 = vpow.pop %v8945
    %v8947 = vmul.f32 %v8656, 1.442695
    %v8948 = vpow.pop %v8947
    %v8949 = vmul.f32 %v8657, 1.442695
    %v8950 = vpow.pop %v8949
    %v8951 = vmul.f32 %v8658, 1.442695
    %v8952 = vpow.pop %v8951
    %v8953 = vmul.f32 %v8659, 1.442695
    %v8954 = vpow.pop %v8953
    %v8955 = vmul.f32 %v8660, 1.442695
    %v8956 = vpow.pop %v8955
    %v8957 = vmul.f32 %v8661, 1.442695
    %v8958 = vpow.pop %v8957
    %v8959 = vmul.f32 %v8662, 1.442695
    %v8960 = vpow.pop %v8959
    %v8961 = vmul.f32 %v8663, 1.442695
    %v8962 = vpow.pop %v8961
    %v8963 = vmul.f32 %v8664, 1.442695
    %v8964 = vpow.pop %v8963
    %v8965 = vmul.f32 %v8665, 1.442695
    %v8966 = vpow.pop %v8965
    %v8967 = vmul.f32 %v8666, 1.442695
    %v8968 = vpow.pop %v8967
    %v8969 = vmul.f32 %v8667, 1.442695
    %v8970 = vpow.pop %v8969
    %v8971 = vmul.f32 %v8668, 1.442695
    %v8972 = vpow.pop %v8971
    %v8973 = vmul.f32 %v8669, 1.442695
    %v8974 = vpow.pop %v8973
    %v8975 = vmul.f32 %v8670, 1.442695
    %v8976 = vpow.pop %v8975
    %v8977 = vmul.f32 %v8671, 1.442695
    %v8978 = vpow.pop %v8977
    %v8979 = vmul.f32 %v8672, 1.442695
    %v8980 = vpow.pop %v8979
    %v8981 = vmul.f32 %v8673, 1.442695
    %v8982 = vpow.pop %v8981
    %v8983 = vmul.f32 %v8674, 1.442695
    %v8984 = vpow.pop %v8983
    %v8985 = vmul.f32 %v8675, 1.442695
    %v8986 = vpow.pop %v8985
    %v8987 = vmul.f32 %v8676, 1.442695
    %v8988 = vpow.pop %v8987
    %v8989 = vmul.f32 %v8677, 1.442695
    %v8990 = vpow.pop %v8989
    %v8991 = vmul.f32 %v8678, 1.442695
    %v8992 = vpow.pop %v8991
    %v8993 = vmul.f32 %v8679, 1.442695
    %v8994 = vpow.pop %v8993
    %v8995 = vmul.f32 %v8680, 1.442695
    %v8996 = vpow.pop %v8995
    %v8997 = vmul.f32 %v8681, 1.442695
    %v8998 = vpow.pop %v8997
    %v8999 = vmul.f32 %v8682, 1.442695
    %v9000 = vpow.pop %v8999
    %v9001 = vmul.f32 %v8683, 1.442695
    %v9002 = vpow.pop %v9001
    %v9003 = vmul.f32 %v8684, 1.442695
    %v9004 = vpow.pop %v9003
    %v9005 = vmul.f32 %v8685, 1.442695
    %v9006 = vpow.pop %v9005
    %v9007 = vmul.f32 %v8686, 1.442695
    %v9008 = vpow.pop %v9007
    %v9009 = vmul.f32 %v8687, 1.442695
    %v9010 = vpow.pop %v9009
    %v9011 = vmul.f32 %v8688, 1.442695
    %v9012 = vpow.pop %v9011
    %v9013 = vmul.f32 %v8689, 1.442695
    %v9014 = vpow.pop %v9013
    %v9015 = vmul.f32 %v8690, 1.442695
    %v9016 = vpow.pop %v9015
    %v9017 = vmul.f32 %v8691, 1.442695
    %v9018 = vpow.pop %v9017
    %v9019 = vmul.f32 %v8692, 1.442695
    %v9020 = vpow.pop %v9019
    %v9021 = vmul.f32 %v8693, 1.442695
    %v9022 = vpow.pop %v9021
    %v9023 = vmul.f32 %v8694, 1.442695
    %v9024 = vpow.pop %v9023
    %v9025 = vmul.f32 %v8695, 1.442695
    %v9026 = vpow.pop %v9025
    %v9027 = vmul.f32 %v8696, 1.442695
    %v9028 = vpow.pop %v9027
    %v9029 = vmul.f32 %v8697, 1.442695
    %v9030 = vpow.pop %v9029
    %v9031 = vmul.f32 %v8698, 1.442695
    %v9032 = vpow.pop %v9031
    %v9033 = vmul.f32 %v8699, 1.442695
    %v9034 = vpow.pop %v9033
    %v9035 = vmul.f32 %v8700, 1.442695
    %v9036 = vpow.pop %v9035
    %v9037 = vmul.f32 %v8701, 1.442695
    %v9038 = vpow.pop %v9037
    %v9039 = vmul.f32 %v8702, 1.442695
    %v9040 = vpow.pop %v9039
    %v9041 = vmul.f32 %v8703, 1.442695
    %v9042 = vpow.pop %v9041
    %v9043 = vmul.f32 %v8704, 1.442695
    %v9044 = vpow.pop %v9043
    %v9045 = vmul.f32 %v8705, 1.442695
    %v9046 = vpow.pop %v9045
    %v9047 = vmul.f32 %v8706, 1.442695
    %v9048 = vpow.pop %v9047
    %v9049 = vmul.f32 %v8707, 1.442695
    %v9050 = vpow.pop %v9049
    %v9051 = vmul.f32 %v8708, 1.442695
    %v9052 = vpow.pop %v9051
    %v9053 = vmul.f32 %v8709, 1.442695
    %v9054 = vpow.pop %v9053
    %v9055 = vmul.f32 %v8710, 1.442695
    %v9056 = vpow.pop %v9055
    %v9057 = vmul.f32 %v8711, 1.442695
    %v9058 = vpow.pop %v9057
    %v9059 = vmul.f32 %v8712, 1.442695
    %v9060 = vpow.pop %v9059
    %v9061 = vmul.f32 %v8713, 1.442695
    %v9062 = vpow.pop %v9061
    %v9063 = vmul.f32 %v8714, 1.442695
    %v9064 = vpow.pop %v9063
    %v9065 = vmul.f32 %v8715, 1.442695
    %v9066 = vpow.pop %v9065
    %v9067 = vmul.f32 %v8716, 1.442695
    %v9068 = vpow.pop %v9067
    %v9069 = vmul.f32 %v8717, 1.442695
    %v9070 = vpow.pop %v9069
    %v9071 = vmul.f32 %v8718, 1.442695
    %v9072 = vpow.pop %v9071
    %v9073 = vmul.f32 %v8719, 1.442695
    %v9074 = vpow.pop %v9073
    %v9075 = vmul.f32 %v8720, 1.442695
    %v9076 = vpow.pop %v9075
    %v9077 = vmul.f32 %v8721, 1.442695
    %v9078 = vpow.pop %v9077
    %v9079 = vmul.f32 %v8722, 1.442695
    %v9080 = vpow.pop %v9079
    %v9081 = vmul.f32 %v8723, 1.442695
    %v9082 = vpow.pop %v9081
    %v9083 = vmul.f32 %v8724, 1.442695
    %v9084 = vpow.pop %v9083
    %v9085 = vmul.f32 %v8725, 1.442695
    %v9086 = vpow.pop %v9085
    %v9087 = vmul.f32 %v8726, 1.442695
    %v9088 = vpow.pop %v9087
    %v9089 = vmul.f32 %v8727, 1.442695
    %v9090 = vpow.pop %v9089
    %v9091 = vmul.f32 %v8728, 1.442695
    %v9092 = vpow.pop %v9091
    %v9093 = vmul.f32 %v8729, 1.442695
    %v9094 = vpow.pop %v9093
    %v9095 = vmul.f32 %v8730, 1.442695
    %v9096 = vpow.pop %v9095
    %v9097 = vmul.f32 %v8731, 1.442695
    %v9098 = vpow.pop %v9097
    %v9099 = vmul.f32 %v8732, 1.442695
    %v9100 = vpow.pop %v9099
    %v9101 = vmul.f32 %v8733, 1.442695
    %v9102 = vpow.pop %v9101
    %v9103 = vmul.f32 %v8734, 1.442695
    %v9104 = vpow.pop %v9103
    %v9105 = vmul.f32 %v8735, 1.442695
    %v9106 = vpow.pop %v9105
    %v9107 = vmul.f32 %v8736, 1.442695
    %v9108 = vpow.pop %v9107
    %v9109 = vmul.f32 %v8737, 1.442695
    %v9110 = vpow.pop %v9109
    %v9111 = vmul.f32 %v8738, 1.442695
    %v9112 = vpow.pop %v9111
    %v9113 = vmul.f32 %v8739, 1.442695
    %v9114 = vpow.pop %v9113
    %v9115 = vmul.f32 %v8740, 1.442695
    %v9116 = vpow.pop %v9115
    %v9117 = vmul.f32 %v8741, 1.442695
    %v9118 = vpow.pop %v9117
    %v9119 = vmul.f32 %v8742, 1.442695
    %v9120 = vpow.pop %v9119
    %v9121 = vmul.f32 %v8743, 1.442695
    %v9122 = vpow.pop %v9121
    %v9123 = vmul.f32 %v8744, 1.442695
    %v9124 = vpow.pop %v9123
    %v9125 = vmul.f32 %v8745, 1.442695
    %v9126 = vpow.pop %v9125
    %v9127 = vmul.f32 %v8746, 1.442695
    %v9128 = vpow.pop %v9127
    %v9129 = vmul.f32 %v8747, 1.442695
    %v9130 = vpow.pop %v9129
    %v9131 = vmul.f32 %v8748, 1.442695
    %v9132 = vpow.pop %v9131
    %v9133 = vmul.f32 %v8749, 1.442695
    %v9134 = vpow.pop %v9133
    %v9135 = vmul.f32 %v8750, 1.442695
    %v9136 = vpow.pop %v9135
    %v9137 = vmul.f32 %v8751, 1.442695
    %v9138 = vpow.pop %v9137
    %v9139 = vmul.f32 %v8752, 1.442695
    %v9140 = vpow.pop %v9139
    %v9141 = vmul.f32 %v8753, 1.442695
    %v9142 = vpow.pop %v9141
    %v9143 = vmul.f32 %v8754, 1.442695
    %v9144 = vpow.pop %v9143
    %v9145 = vmul.f32 %v8755, 1.442695
    %v9146 = vpow.pop %v9145
    %v9147 = vmul.f32 %v8756, 1.442695
    %v9148 = vpow.pop %v9147
    %v9149 = vmul.f32 %v8757, 1.442695
    %v9150 = vpow.pop %v9149
    %v9151 = vmul.f32 %v8758, 1.442695
    %v9152 = vpow.pop %v9151
    %v9153 = vmul.f32 %v8759, 1.442695
    %v9154 = vpow.pop %v9153
    %v9155 = vmul.f32 %v8760, 1.442695
    %v9156 = vpow.pop %v9155
    %v9157 = vmul.f32 %v8761, 1.442695
    %v9158 = vpow.pop %v9157
    %v9159 = vmul.f32 %v8762, 1.442695
    %v9160 = vpow.pop %v9159
    %v9161 = vmul.f32 %v8763, 1.442695
    %v9162 = vpow.pop %v9161
    %v9163 = vmul.f32 %v8764, 1.442695
    %v9164 = vpow.pop %v9163
    %v9165 = vmul.f32 %v8765, 1.442695
    %v9166 = vpow.pop %v9165
    %v9167 = vmul.f32 %v8766, 1.442695
    %v9168 = vpow.pop %v9167
    %v9169 = vmul.f32 %v8767, 1.442695
    %v9170 = vpow.pop %v9169
    %v9171 = vmul.f32 %v8768, 1.442695
    %v9172 = vpow.pop %v9171
    %v9173 = vmul.f32 %v8769, 1.442695
    %v9174 = vpow.pop %v9173
    %v9175 = vmul.f32 %v8770, 1.442695
    %v9176 = vpow.pop %v9175
    %v9177 = vmul.f32 %v8771, 1.442695
    %v9178 = vpow.pop %v9177
    %v9179 = vmul.f32 %v8772, 1.442695
    %v9180 = vpow.pop %v9179
    %v9181 = vmul.f32 %v8773, 1.442695
    %v9182 = vpow.pop %v9181
    %v9183 = vmul.f32 %v8774, 1.442695
    %v9184 = vpow.pop %v9183
    %v9185 = vmul.f32 %v8775, 1.442695
    %v9186 = vpow.pop %v9185
    %v9187 = vmul.f32 %v8776, 1.442695
    %v9188 = vpow.pop %v9187
    %v9189 = vmul.f32 %v8777, 1.442695
    %v9190 = vpow.pop %v9189
    %v9191 = vmul.f32 %v8778, 1.442695
    %v9192 = vpow.pop %v9191
    %v9193 = vmul.f32 %v8779, 1.442695
    %v9194 = vpow.pop %v9193
    %v9195 = vmul.f32 %v8780, 1.442695
    %v9196 = vpow.pop %v9195
    %v9197 = vmul.f32 %v8781, 1.442695
    %v9198 = vpow.pop %v9197
    %v9199 = vmul.f32 %v8782, 1.442695
    %v9200 = vpow.pop %v9199
    %v9201 = vmul.f32 %v8783, 1.442695
    %v9202 = vpow.pop %v9201
    %v9203 = vmul.f32 %v8784, 1.442695
    %v9204 = vpow.pop %v9203
    %v9205 = vmul.f32 %v8785, 1.442695
    %v9206 = vpow.pop %v9205
    %v9207 = vmul.f32 %v8786, 1.442695
    %v9208 = vpow.pop %v9207
    %v9209 = vmul.f32 %v8787, 1.442695
    %v9210 = vpow.pop %v9209
    %v9211 = vmul.f32 %v8788, 1.442695
    %v9212 = vpow.pop %v9211
    %v9213 = vmul.f32 %v8789, 1.442695
    %v9214 = vpow.pop %v9213
    %v9215 = vmul.f32 %v8790, 1.442695
    %v9216 = vpow.pop %v9215
    %v9217 = vmul.f32 %v8791, 1.442695
    %v9218 = vpow.pop %v9217
    %v9219 = vmul.f32 %v8792, 1.442695
    %v9220 = vpow.pop %v9219
    %v9221 = vmul.f32 %v8793, 1.442695
    %v9222 = vpow.pop %v9221
    %v9223 = vmul.f32 %v8794, 1.442695
    %v9224 = vpow.pop %v9223
    %v9225 = vmul.f32 %v8795, 1.442695
    %v9226 = vpow.pop %v9225
    %v9227 = vmul.f32 %v8796, 1.442695
    %v9228 = vpow.pop %v9227
    %v9229 = vmul.f32 %v8797, 1.442695
    %v9230 = vpow.pop %v9229
    %v9231 = vmul.f32 %v8798, 1.442695
    %v9232 = vpow.pop %v9231
    %v9233 = vmul.f32 %v8799, 1.442695
    %v9234 = vpow.pop %v9233
    %v9235 = vmul.f32 %v8800, 1.442695
    %v9236 = vpow.pop %v9235
    %v9237 = vmul.f32 %v8801, 1.442695
    %v9238 = vpow.pop %v9237
    %v9239 = vmul.f32 %v8802, 1.442695
    %v9240 = vpow.pop %v9239
    %v9241 = vmul.f32 %v8803, 1.442695
    %v9242 = vpow.pop %v9241
    %v9243 = vmul.f32 %v8804, 1.442695
    %v9244 = vpow.pop %v9243
    %v9245 = vmul.f32 %v8805, 1.442695
    %v9246 = vpow.pop %v9245
    %v9247 = vmul.f32 %v8806, 1.442695
    %v9248 = vpow.pop %v9247
    %v9249 = vmul.f32 %v8807, 1.442695
    %v9250 = vpow.pop %v9249
    %v9251 = vmul.f32 %v8808, 1.442695
    %v9252 = vpow.pop %v9251
    %v9253 = vmul.f32 %v8809, 1.442695
    %v9254 = vpow.pop %v9253
    %v9255 = vmul.f32 %v8810, 1.442695
    %v9256 = vpow.pop %v9255
    %v9257 = vmul.f32 %v8811, 1.442695
    %v9258 = vpow.pop %v9257
    %v9259 = vmul.f32 %v8812, 1.442695
    %v9260 = vpow.pop %v9259
    %v9261 = vmul.f32 %v8813, 1.442695
    %v9262 = vpow.pop %v9261
    %v9263 = vmul.f32 %v8814, 1.442695
    %v9264 = vpow.pop %v9263
    %v9265 = vmul.f32 %v8815, 1.442695
    %v9266 = vpow.pop %v9265
    %v9267 = vmul.f32 %v8816, 1.442695
    %v9268 = vpow.pop %v9267
    %v9269 = vmul.f32 %v8817, 1.442695
    %v9270 = vpow.pop %v9269
    %v9271 = vmul.f32 %v8818, 1.442695
    %v9272 = vpow.pop %v9271
    %v9273 = vmul.f32 %v8819, 1.442695
    %v9274 = vpow.pop %v9273
    %v9275 = vmul.f32 %v8820, 1.442695
    %v9276 = vpow.pop %v9275
    %v9277 = vmul.f32 %v8821, 1.442695
    %v9278 = vpow.pop %v9277
    %v9279 = vmul.f32 %v8822, 1.442695
    %v9280 = vpow.pop %v9279
    %v9281 = vmul.f32 %v8823, 1.442695
    %v9282 = vpow.pop %v9281
    %v9283 = vmul.f32 %v8824, 1.442695
    %v9284 = vpow.pop %v9283
    %v9285 = vmul.f32 %v8825, 1.442695
    %v9286 = vpow.pop %v9285
    %v9287 = vmul.f32 %v8826, 1.442695
    %v9288 = vpow.pop %v9287
    %v9289 = vmul.f32 %v8827, 1.442695
    %v9290 = vpow.pop %v9289
    %v9291 = vmul.f32 %v8828, 1.442695
    %v9292 = vpow.pop %v9291
    %v9293 = vmul.f32 %v8829, 1.442695
    %v9294 = vpow.pop %v9293
    %v9295 = vmul.f32 %v8830, 1.442695
    %v9296 = vpow.pop %v9295
    %v9297 = vmul.f32 %v8831, 1.442695
    %v9298 = vpow.pop %v9297
    %v9299 = vmul.f32 %v8832, 1.442695
    %v9300 = vpow.pop %v9299
    %v9301 = vmul.f32 %v8833, 1.442695
    %v9302 = vpow.pop %v9301
    %v9303 = vmul.f32 %v8834, 1.442695
    %v9304 = vpow.pop %v9303
    %v9305 = vmul.f32 %v8835, 1.442695
    %v9306 = vpow.pop %v9305
    %v9307 = vmul.f32 %v8836, 1.442695
    %v9308 = vpow.pop %v9307
    %v9309 = vmul.f32 %v8837, 1.442695
    %v9310 = vpow.pop %v9309
    %v9311 = vmul.f32 %v8838, 1.442695
    %v9312 = vpow.pop %v9311
    %v9313 = vmul.f32 %v8839, 1.442695
    %v9314 = vpow.pop %v9313
    %v9315 = vmul.f32 %v8840, 1.442695
    %v9316 = vpow.pop %v9315
    %v9317 = vmul.f32 %v8841, 1.442695
    %v9318 = vpow.pop %v9317
    %v9319 = vmul.f32 %v8842, 1.442695
    %v9320 = vpow.pop %v9319
    %v9321 = vmul.f32 %v8843, 1.442695
    %v9322 = vpow.pop %v9321
    %v9323 = vmul.f32 %v8844, 1.442695
    %v9324 = vpow.pop %v9323
    %v9325 = vmul.f32 %v8845, 1.442695
    %v9326 = vpow.pop %v9325
    %v9327 = vmul.f32 %v8846, 1.442695
    %v9328 = vpow.pop %v9327
    %v9329 = vmul.f32 %v8847, 1.442695
    %v9330 = vpow.pop %v9329
    %v9331 = vmul.f32 %v8848, 1.442695
    %v9332 = vpow.pop %v9331
    %v9333 = vmul.f32 %v8849, 1.442695
    %v9334 = vpow.pop %v9333
    %v9335 = vmul.f32 %v8850, 1.442695
    %v9336 = vpow.pop %v9335
    %v9337 = vmul.f32 %v8851, 1.442695
    %v9338 = vpow.pop %v9337
    %v9339 = vmul.f32 %v8852, 1.442695
    %v9340 = vpow.pop %v9339
    %v9341 = vmul.f32 %v8853, 1.442695
    %v9342 = vpow.pop %v9341
    %v9343 = vmul.f32 %v8854, 1.442695
    %v9344 = vpow.pop %v9343
    %v9345 = vmul.f32 %v8855, 1.442695
    %v9346 = vpow.pop %v9345
    %v9347 = vmul.f32 %v8856, 1.442695
    %v9348 = vpow.pop %v9347
    %v9349 = vmul.f32 %v8857, 1.442695
    %v9350 = vpow.pop %v9349
    %v9351 = vmul.f32 %v8858, 1.442695
    %v9352 = vpow.pop %v9351
    %v9353 = vmul.f32 %v8859, 1.442695
    %v9354 = vpow.pop %v9353
    %v9355 = vmul.f32 %v8860, 1.442695
    %v9356 = vpow.pop %v9355
    %v9357 = vmul.f32 %v8861, 1.442695
    %v9358 = vpow.pop %v9357
    %v9359 = vmul.f32 %v8862, 1.442695
    %v9360 = vpow.pop %v9359
    %v9361 = vmul.f32 %v8863, 1.442695
    %v9362 = vpow.pop %v9361
    %v9363 = vmul.f32 %v8864, 1.442695
    %v9364 = vpow.pop %v9363
    %v9365 = vmul.f32 %v8865, 1.442695
    %v9366 = vpow.pop %v9365
    %v9367 = vmul.f32 %v8866, 1.442695
    %v9368 = vpow.pop %v9367
    %v9369 = vmul.f32 %v8867, 1.442695
    %v9370 = vpow.pop %v9369
    %v9371 = vmul.f32 %v8868, 1.442695
    %v9372 = vpow.pop %v9371
    %v9373 = vmul.f32 %v8869, 1.442695
    %v9374 = vpow.pop %v9373
    %v9375 = vmul.f32 %v8870, 1.442695
    %v9376 = vpow.pop %v9375
    %v9377 = vmul.f32 %v8871, 1.442695
    %v9378 = vpow.pop %v9377
    %v9379 = vmul.f32 %v8872, 1.442695
    %v9380 = vpow.pop %v9379
    %v9381 = vmul.f32 %v8873, 1.442695
    %v9382 = vpow.pop %v9381
    %v9383 = vmul.f32 %v8874, 1.442695
    %v9384 = vpow.pop %v9383
    %v9385 = vmul.f32 %v8875, 1.442695
    %v9386 = vpow.pop %v9385
    %v9387 = vmul.f32 %v8876, 1.442695
    %v9388 = vpow.pop %v9387
    %v9389 = vadd.f32 %v8878, %v8882
    %v9390 = vadd.f32 %v9389, %v8886
    %v9391 = vadd.f32 %v9390, %v8890
    %v9392 = vadd.f32 %v9391, %v8894
    %v9393 = vadd.f32 %v9392, %v8898
    %v9394 = vadd.f32 %v9393, %v8902
    %v9395 = vadd.f32 %v9394, %v8906
    %v9396 = vadd.f32 %v9395, %v8910
    %v9397 = vadd.f32 %v9396, %v8914
    %v9398 = vadd.f32 %v9397, %v8918
    %v9399 = vadd.f32 %v9398, %v8922
    %v9400 = vadd.f32 %v9399, %v8926
    %v9401 = vadd.f32 %v9400, %v8930
    %v9402 = vadd.f32 %v9401, %v8934
    %v9403 = vadd.f32 %v9402, %v8938
    %v9404 = vrot.slane %v9403, 4
    %v9405 = vadd.f32 %v9403, %v9404
    %v9406 = vrot.slane %v9405, 2
    %v9407 = vadd.f32 %v9405, %v9406
    %v9408 = vrot.slane %v9407, 1
    %v9409 = vadd.f32 %v9407, %v9408
    %v9410 = vadd.f32 %v8880, %v8884
    %v9411 = vadd.f32 %v9410, %v8888
    %v9412 = vadd.f32 %v9411, %v8892
    %v9413 = vadd.f32 %v9412, %v8896
    %v9414 = vadd.f32 %v9413, %v8900
    %v9415 = vadd.f32 %v9414, %v8904
    %v9416 = vadd.f32 %v9415, %v8908
    %v9417 = vadd.f32 %v9416, %v8912
    %v9418 = vadd.f32 %v9417, %v8916
    %v9419 = vadd.f32 %v9418, %v8920
    %v9420 = vadd.f32 %v9419, %v8924
    %v9421 = vadd.f32 %v9420, %v8928
    %v9422 = vadd.f32 %v9421, %v8932
    %v9423 = vadd.f32 %v9422, %v8936
    %v9424 = vadd.f32 %v9423, %v8940
    %v9425 = vrot.slane %v9424, 4
    %v9426 = vadd.f32 %v9424, %v9425
    %v9427 = vrot.slane %v9426, 2
    %v9428 = vadd.f32 %v9426, %v9427
    %v9429 = vrot.slane %v9428, 1
    %v9430 = vadd.f32 %v9428, %v9429
    %v9431 = vadd.f32 %v8942, %v8946
    %v9432 = vadd.f32 %v9431, %v8950
    %v9433 = vadd.f32 %v9432, %v8954
    %v9434 = vadd.f32 %v9433, %v8958
    %v9435 = vadd.f32 %v9434, %v8962
    %v9436 = vadd.f32 %v9435, %v8966
    %v9437 = vadd.f32 %v9436, %v8970
    %v9438 = vadd.f32 %v9437, %v8974
    %v9439 = vadd.f32 %v9438, %v8978
    %v9440 = vadd.f32 %v9439, %v8982
    %v9441 = vadd.f32 %v9440, %v8986
    %v9442 = vadd.f32 %v9441, %v8990
    %v9443 = vadd.f32 %v9442, %v8994
    %v9444 = vadd.f32 %v9443, %v8998
    %v9445 = vadd.f32 %v9444, %v9002
    %v9446 = vrot.slane %v9445, 4
    %v9447 = vadd.f32 %v9445, %v9446
    %v9448 = vrot.slane %v9447, 2
    %v9449 = vadd.f32 %v9447, %v9448
    %v9450 = vrot.slane %v9449, 1
    %v9451 = vadd.f32 %v9449, %v9450
    %v9452 = vadd.f32 %v8944, %v8948
    %v9453 = vadd.f32 %v9452, %v8952
    %v9454 = vadd.f32 %v9453, %v8956
    %v9455 = vadd.f32 %v9454, %v8960
    %v9456 = vadd.f32 %v9455, %v8964
    %v9457 = vadd.f32 %v9456, %v8968
    %v9458 = vadd.f32 %v9457, %v8972
    %v9459 = vadd.f32 %v9458, %v8976
    %v9460 = vadd.f32 %v9459, %v8980
    %v9461 = vadd.f32 %v9460, %v8984
    %v9462 = vadd.f32 %v9461, %v8988
    %v9463 = vadd.f32 %v9462, %v8992
    %v9464 = vadd.f32 %v9463, %v8996
    %v9465 = vadd.f32 %v9464, %v9000
    %v9466 = vadd.f32 %v9465, %v9004
    %v9467 = vrot.slane %v9466, 4
    %v9468 = vadd.f32 %v9466, %v9467
    %v9469 = vrot.slane %v9468, 2
    %v9470 = vadd.f32 %v9468, %v9469
    %v9471 = vrot.slane %v9470, 1
    %v9472 = vadd.f32 %v9470, %v9471
    %v9473 = vadd.f32 %v9006, %v9010
    %v9474 = vadd.f32 %v9473, %v9014
    %v9475 = vadd.f32 %v9474, %v9018
    %v9476 = vadd.f32 %v9475, %v9022
    %v9477 = vadd.f32 %v9476, %v9026
    %v9478 = vadd.f32 %v9477, %v9030
    %v9479 = vadd.f32 %v9478, %v9034
    %v9480 = vadd.f32 %v9479, %v9038
    %v9481 = vadd.f32 %v9480, %v9042
    %v9482 = vadd.f32 %v9481, %v9046
    %v9483 = vadd.f32 %v9482, %v9050
    %v9484 = vadd.f32 %v9483, %v9054
    %v9485 = vadd.f32 %v9484, %v9058
    %v9486 = vadd.f32 %v9485, %v9062
    %v9487 = vadd.f32 %v9486, %v9066
    %v9488 = vrot.slane %v9487, 4
    %v9489 = vadd.f32 %v9487, %v9488
    %v9490 = vrot.slane %v9489, 2
    %v9491 = vadd.f32 %v9489, %v9490
    %v9492 = vrot.slane %v9491, 1
    %v9493 = vadd.f32 %v9491, %v9492
    %v9494 = vadd.f32 %v9008, %v9012
    %v9495 = vadd.f32 %v9494, %v9016
    %v9496 = vadd.f32 %v9495, %v9020
    %v9497 = vadd.f32 %v9496, %v9024
    %v9498 = vadd.f32 %v9497, %v9028
    %v9499 = vadd.f32 %v9498, %v9032
    %v9500 = vadd.f32 %v9499, %v9036
    %v9501 = vadd.f32 %v9500, %v9040
    %v9502 = vadd.f32 %v9501, %v9044
    %v9503 = vadd.f32 %v9502, %v9048
    %v9504 = vadd.f32 %v9503, %v9052
    %v9505 = vadd.f32 %v9504, %v9056
    %v9506 = vadd.f32 %v9505, %v9060
    %v9507 = vadd.f32 %v9506, %v9064
    %v9508 = vadd.f32 %v9507, %v9068
    %v9509 = vrot.slane %v9508, 4
    %v9510 = vadd.f32 %v9508, %v9509
    %v9511 = vrot.slane %v9510, 2
    %v9512 = vadd.f32 %v9510, %v9511
    %v9513 = vrot.slane %v9512, 1
    %v9514 = vadd.f32 %v9512, %v9513
    %v9515 = vadd.f32 %v9070, %v9074
    %v9516 = vadd.f32 %v9515, %v9078
    %v9517 = vadd.f32 %v9516, %v9082
    %v9518 = vadd.f32 %v9517, %v9086
    %v9519 = vadd.f32 %v9518, %v9090
    %v9520 = vadd.f32 %v9519, %v9094
    %v9521 = vadd.f32 %v9520, %v9098
    %v9522 = vadd.f32 %v9521, %v9102
    %v9523 = vadd.f32 %v9522, %v9106
    %v9524 = vadd.f32 %v9523, %v9110
    %v9525 = vadd.f32 %v9524, %v9114
    %v9526 = vadd.f32 %v9525, %v9118
    %v9527 = vadd.f32 %v9526, %v9122
    %v9528 = vadd.f32 %v9527, %v9126
    %v9529 = vadd.f32 %v9528, %v9130
    %v9530 = vrot.slane %v9529, 4
    %v9531 = vadd.f32 %v9529, %v9530
    %v9532 = vrot.slane %v9531, 2
    %v9533 = vadd.f32 %v9531, %v9532
    %v9534 = vrot.slane %v9533, 1
    %v9535 = vadd.f32 %v9533, %v9534
    %v9536 = vadd.f32 %v9072, %v9076
    %v9537 = vadd.f32 %v9536, %v9080
    %v9538 = vadd.f32 %v9537, %v9084
    %v9539 = vadd.f32 %v9538, %v9088
    %v9540 = vadd.f32 %v9539, %v9092
    %v9541 = vadd.f32 %v9540, %v9096
    %v9542 = vadd.f32 %v9541, %v9100
    %v9543 = vadd.f32 %v9542, %v9104
    %v9544 = vadd.f32 %v9543, %v9108
    %v9545 = vadd.f32 %v9544, %v9112
    %v9546 = vadd.f32 %v9545, %v9116
    %v9547 = vadd.f32 %v9546, %v9120
    %v9548 = vadd.f32 %v9547, %v9124
    %v9549 = vadd.f32 %v9548, %v9128
    %v9550 = vadd.f32 %v9549, %v9132
    %v9551 = vrot.slane %v9550, 4
    %v9552 = vadd.f32 %v9550, %v9551
    %v9553 = vrot.slane %v9552, 2
    %v9554 = vadd.f32 %v9552, %v9553
    %v9555 = vrot.slane %v9554, 1
    %v9556 = vadd.f32 %v9554, %v9555
    %v9557 = vadd.f32 %v9134, %v9138
    %v9558 = vadd.f32 %v9557, %v9142
    %v9559 = vadd.f32 %v9558, %v9146
    %v9560 = vadd.f32 %v9559, %v9150
    %v9561 = vadd.f32 %v9560, %v9154
    %v9562 = vadd.f32 %v9561, %v9158
    %v9563 = vadd.f32 %v9562, %v9162
    %v9564 = vadd.f32 %v9563, %v9166
    %v9565 = vadd.f32 %v9564, %v9170
    %v9566 = vadd.f32 %v9565, %v9174
    %v9567 = vadd.f32 %v9566, %v9178
    %v9568 = vadd.f32 %v9567, %v9182
    %v9569 = vadd.f32 %v9568, %v9186
    %v9570 = vadd.f32 %v9569, %v9190
    %v9571 = vadd.f32 %v9570, %v9194
    %v9572 = vrot.slane %v9571, 4
    %v9573 = vadd.f32 %v9571, %v9572
    %v9574 = vrot.slane %v9573, 2
    %v9575 = vadd.f32 %v9573, %v9574
    %v9576 = vrot.slane %v9575, 1
    %v9577 = vadd.f32 %v9575, %v9576
    %v9578 = vadd.f32 %v9136, %v9140
    %v9579 = vadd.f32 %v9578, %v9144
    %v9580 = vadd.f32 %v9579, %v9148
    %v9581 = vadd.f32 %v9580, %v9152
    %v9582 = vadd.f32 %v9581, %v9156
    %v9583 = vadd.f32 %v9582, %v9160
    %v9584 = vadd.f32 %v9583, %v9164
    %v9585 = vadd.f32 %v9584, %v9168
    %v9586 = vadd.f32 %v9585, %v9172
    %v9587 = vadd.f32 %v9586, %v9176
    %v9588 = vadd.f32 %v9587, %v9180
    %v9589 = vadd.f32 %v9588, %v9184
    %v9590 = vadd.f32 %v9589, %v9188
    %v9591 = vadd.f32 %v9590, %v9192
    %v9592 = vadd.f32 %v9591, %v9196
    %v9593 = vrot.slane %v9592, 4
    %v9594 = vadd.f32 %v9592, %v9593
    %v9595 = vrot.slane %v9594, 2
    %v9596 = vadd.f32 %v9594, %v9595
    %v9597 = vrot.slane %v9596, 1
    %v9598 = vadd.f32 %v9596, %v9597
    %v9599 = vadd.f32 %v9198, %v9202
    %v9600 = vadd.f32 %v9599, %v9206
    %v9601 = vadd.f32 %v9600, %v9210
    %v9602 = vadd.f32 %v9601, %v9214
    %v9603 = vadd.f32 %v9602, %v9218
    %v9604 = vadd.f32 %v9603, %v9222
    %v9605 = vadd.f32 %v9604, %v9226
    %v9606 = vadd.f32 %v9605, %v9230
    %v9607 = vadd.f32 %v9606, %v9234
    %v9608 = vadd.f32 %v9607, %v9238
    %v9609 = vadd.f32 %v9608, %v9242
    %v9610 = vadd.f32 %v9609, %v9246
    %v9611 = vadd.f32 %v9610, %v9250
    %v9612 = vadd.f32 %v9611, %v9254
    %v9613 = vadd.f32 %v9612, %v9258
    %v9614 = vrot.slane %v9613, 4
    %v9615 = vadd.f32 %v9613, %v9614
    %v9616 = vrot.slane %v9615, 2
    %v9617 = vadd.f32 %v9615, %v9616
    %v9618 = vrot.slane %v9617, 1
    %v9619 = vadd.f32 %v9617, %v9618
    %v9620 = vadd.f32 %v9200, %v9204
    %v9621 = vadd.f32 %v9620, %v9208
    %v9622 = vadd.f32 %v9621, %v9212
    %v9623 = vadd.f32 %v9622, %v9216
    %v9624 = vadd.f32 %v9623, %v9220
    %v9625 = vadd.f32 %v9624, %v9224
    %v9626 = vadd.f32 %v9625, %v9228
    %v9627 = vadd.f32 %v9626, %v9232
    %v9628 = vadd.f32 %v9627, %v9236
    %v9629 = vadd.f32 %v9628, %v9240
    %v9630 = vadd.f32 %v9629, %v9244
    %v9631 = vadd.f32 %v9630, %v9248
    %v9632 = vadd.f32 %v9631, %v9252
    %v9633 = vadd.f32 %v9632, %v9256
    %v9634 = vadd.f32 %v9633, %v9260
    %v9635 = vrot.slane %v9634, 4
    %v9636 = vadd.f32 %v9634, %v9635
    %v9637 = vrot.slane %v9636, 2
    %v9638 = vadd.f32 %v9636, %v9637
    %v9639 = vrot.slane %v9638, 1
    %v9640 = vadd.f32 %v9638, %v9639
    %v9641 = vadd.f32 %v9262, %v9266
    %v9642 = vadd.f32 %v9641, %v9270
    %v9643 = vadd.f32 %v9642, %v9274
    %v9644 = vadd.f32 %v9643, %v9278
    %v9645 = vadd.f32 %v9644, %v9282
    %v9646 = vadd.f32 %v9645, %v9286
    %v9647 = vadd.f32 %v9646, %v9290
    %v9648 = vadd.f32 %v9647, %v9294
    %v9649 = vadd.f32 %v9648, %v9298
    %v9650 = vadd.f32 %v9649, %v9302
    %v9651 = vadd.f32 %v9650, %v9306
    %v9652 = vadd.f32 %v9651, %v9310
    %v9653 = vadd.f32 %v9652, %v9314
    %v9654 = vadd.f32 %v9653, %v9318
    %v9655 = vadd.f32 %v9654, %v9322
    %v9656 = vrot.slane %v9655, 4
    %v9657 = vadd.f32 %v9655, %v9656
    %v9658 = vrot.slane %v9657, 2
    %v9659 = vadd.f32 %v9657, %v9658
    %v9660 = vrot.slane %v9659, 1
    %v9661 = vadd.f32 %v9659, %v9660
    %v9662 = vadd.f32 %v9264, %v9268
    %v9663 = vadd.f32 %v9662, %v9272
    %v9664 = vadd.f32 %v9663, %v9276
    %v9665 = vadd.f32 %v9664, %v9280
    %v9666 = vadd.f32 %v9665, %v9284
    %v9667 = vadd.f32 %v9666, %v9288
    %v9668 = vadd.f32 %v9667, %v9292
    %v9669 = vadd.f32 %v9668, %v9296
    %v9670 = vadd.f32 %v9669, %v9300
    %v9671 = vadd.f32 %v9670, %v9304
    %v9672 = vadd.f32 %v9671, %v9308
    %v9673 = vadd.f32 %v9672, %v9312
    %v9674 = vadd.f32 %v9673, %v9316
    %v9675 = vadd.f32 %v9674, %v9320
    %v9676 = vadd.f32 %v9675, %v9324
    %v9677 = vrot.slane %v9676, 4
    %v9678 = vadd.f32 %v9676, %v9677
    %v9679 = vrot.slane %v9678, 2
    %v9680 = vadd.f32 %v9678, %v9679
    %v9681 = vrot.slane %v9680, 1
    %v9682 = vadd.f32 %v9680, %v9681
    %v9683 = vadd.f32 %v9326, %v9330
    %v9684 = vadd.f32 %v9683, %v9334
    %v9685 = vadd.f32 %v9684, %v9338
    %v9686 = vadd.f32 %v9685, %v9342
    %v9687 = vadd.f32 %v9686, %v9346
    %v9688 = vadd.f32 %v9687, %v9350
    %v9689 = vadd.f32 %v9688, %v9354
    %v9690 = vadd.f32 %v9689, %v9358
    %v9691 = vadd.f32 %v9690, %v9362
    %v9692 = vadd.f32 %v9691, %v9366
    %v9693 = vadd.f32 %v9692, %v9370
    %v9694 = vadd.f32 %v9693, %v9374
    %v9695 = vadd.f32 %v9694, %v9378
    %v9696 = vadd.f32 %v9695, %v9382
    %v9697 = vadd.f32 %v9696, %v9386
    %v9698 = vrot.slane %v9697, 4
    %v9699 = vadd.f32 %v9697, %v9698
    %v9700 = vrot.slane %v9699, 2
    %v9701 = vadd.f32 %v9699, %v9700
    %v9702 = vrot.slane %v9701, 1
    %v9703 = vadd.f32 %v9701, %v9702
    %v9704 = vadd.f32 %v9328, %v9332
    %v9705 = vadd.f32 %v9704, %v9336
    %v9706 = vadd.f32 %v9705, %v9340
    %v9707 = vadd.f32 %v9706, %v9344
    %v9708 = vadd.f32 %v9707, %v9348
    %v9709 = vadd.f32 %v9708, %v9352
    %v9710 = vadd.f32 %v9709, %v9356
    %v9711 = vadd.f32 %v9710, %v9360
    %v9712 = vadd.f32 %v9711, %v9364
    %v9713 = vadd.f32 %v9712, %v9368
    %v9714 = vadd.f32 %v9713, %v9372
    %v9715 = vadd.f32 %v9714, %v9376
    %v9716 = vadd.f32 %v9715, %v9380
    %v9717 = vadd.f32 %v9716, %v9384
    %v9718 = vadd.f32 %v9717, %v9388
    %v9719 = vrot.slane %v9718, 4
    %v9720 = vadd.f32 %v9718, %v9719
    %v9721 = vrot.slane %v9720, 2
    %v9722 = vadd.f32 %v9720, %v9721
    %v9723 = vrot.slane %v9722, 1
    %v9724 = vadd.f32 %v9722, %v9723
    %v9725 = vadd.f32 %v4886, %v9409
    %v9726 = vadd.f32 %v4887, %v9430
    %v9727 = vadd.f32 %v4888, %v9451
    %v9728 = vadd.f32 %v4889, %v9472
    %v9729 = vadd.f32 %v4890, %v9493
    %v9730 = vadd.f32 %v4891, %v9514
    %v9731 = vadd.f32 %v4892, %v9535
    %v9732 = vadd.f32 %v4893, %v9556
    %v9733 = vadd.f32 %v4894, %v9577
    %v9734 = vadd.f32 %v4895, %v9598
    %v9735 = vadd.f32 %v4896, %v9619
    %v9736 = vadd.f32 %v4897, %v9640
    %v9737 = vadd.f32 %v4898, %v9661
    %v9738 = vadd.f32 %v4899, %v9682
    %v9739 = vadd.f32 %v4900, %v9703
    %v9740 = vadd.f32 %v4901, %v9724
    %v9741 = vld [vmem:[#allocation7] sm:$0xff]
    %v9742 = vld [vmem:[#allocation7 + $0x8] sm:$0xff]
    %v9743 = vld [vmem:[#allocation7 + $0x10] sm:$0xff]
    %v9744 = vld [vmem:[#allocation7 + $0x18] sm:$0xff]
    %v9745 = vld [vmem:[#allocation7 + $0x20] sm:$0xff]
    %v9746 = vld [vmem:[#allocation7 + $0x28] sm:$0xff]
    %v9747 = vld [vmem:[#allocation7 + $0x30] sm:$0xff]
    %v9748 = vld [vmem:[#allocation7 + $0x38] sm:$0xff]
    %v9749 = vld [vmem:[#allocation7 + $0x40] sm:$0xff]
    %v9750 = vld [vmem:[#allocation7 + $0x48] sm:$0xff]
    %v9751 = vld [vmem:[#allocation7 + $0x50] sm:$0xff]
    %v9752 = vld [vmem:[#allocation7 + $0x58] sm:$0xff]
    %v9753 = vld [vmem:[#allocation7 + $0x60] sm:$0xff]
    %v9754 = vld [vmem:[#allocation7 + $0x68] sm:$0xff]
    %v9755 = vld [vmem:[#allocation7 + $0x70] sm:$0xff]
    %v9756 = vld [vmem:[#allocation7 + $0x78] sm:$0xff]
    %v9757 = vld [vmem:[#allocation7 + $0x80] sm:$0xff]
    %v9758 = vld [vmem:[#allocation7 + $0x88] sm:$0xff]
    %v9759 = vld [vmem:[#allocation7 + $0x90] sm:$0xff]
    %v9760 = vld [vmem:[#allocation7 + $0x98] sm:$0xff]
    %v9761 = vld [vmem:[#allocation7 + $0xa0] sm:$0xff]
    %v9762 = vld [vmem:[#allocation7 + $0xa8] sm:$0xff]
    %v9763 = vld [vmem:[#allocation7 + $0xb0] sm:$0xff]
    %v9764 = vld [vmem:[#allocation7 + $0xb8] sm:$0xff]
    %v9765 = vld [vmem:[#allocation7 + $0xc0] sm:$0xff]
    %v9766 = vld [vmem:[#allocation7 + $0xc8] sm:$0xff]
    %v9767 = vld [vmem:[#allocation7 + $0xd0] sm:$0xff]
    %v9768 = vld [vmem:[#allocation7 + $0xd8] sm:$0xff]
    %v9769 = vld [vmem:[#allocation7 + $0xe0] sm:$0xff]
    %v9770 = vld [vmem:[#allocation7 + $0xe8] sm:$0xff]
    %v9771 = vld [vmem:[#allocation7 + $0xf0] sm:$0xff]
    %v9772 = vld [vmem:[#allocation7 + $0xf8] sm:$0xff]
    %vm9789 = vcmask 1041409
    %v9790 = vsel %vm9789, %v7319, %v7317
    %vm9791 = vcmask 1042434
    %v9792 = vsel %vm9791, %v7321, %v9790
    %vm9793 = vcmask 1043459
    %v9794 = vsel %vm9793, %v7323, %v9792
    %vm9795 = vcmask 1044484
    %v9796 = vsel %vm9795, %v7325, %v9794
    %vm9797 = vcmask 1045509
    %v9798 = vsel %vm9797, %v7327, %v9796
    %vm9799 = vcmask 1046534
    %v9800 = vsel %vm9799, %v7329, %v9798
    %vm9801 = vcmask 1047559
    %v9802 = vsel %vm9801, %v7331, %v9800
    %v9803 = vsel %vm9789, %v7320, %v7318
    %v9804 = vsel %vm9791, %v7322, %v9803
    %v9805 = vsel %vm9793, %v7324, %v9804
    %v9806 = vsel %vm9795, %v7326, %v9805
    %v9807 = vsel %vm9797, %v7328, %v9806
    %v9808 = vsel %vm9799, %v7330, %v9807
    %v9809 = vsel %vm9801, %v7332, %v9808
    %9812 = vmatpush.msra.mxu0 %v9756
    %9813 = vmatpush.msra.mxu0 %v9755
    %9814 = vmatpush.msra.mxu0 %v9754
    %9815 = vmatpush.msra.mxu0 %v9753
    %9816 = vmatpush.msra.mxu0 %v9752
    %9817 = vmatpush.msra.mxu0 %v9751
    %9818 = vmatpush.msra.mxu0 %v9750
    %9819 = vmatpush.msra.mxu0 %v9749
    %9820 = vmatpush.msra.mxu0 %v9748
    %9821 = vmatpush.msra.mxu0 %v9747
    %9822 = vmatpush.msra.mxu0 %v9746
    %9823 = vmatpush.msra.mxu0 %v9745
    %9824 = vmatpush.msra.mxu0 %v9744
    %9825 = vmatpush.msra.mxu0 %v9743
    %9826 = vmatpush.msra.mxu0 %v9742
    %9827 = vmatpush.msra.mxu0 %v9741
    %9828 = vmatmul.f32.gmra.mxu0 %v9802
    %v9829 = vpop.f32.mrf.mxu0
    %v9830 = vadd.f32 0.0, %v9829
    %9831 = vdwg.mxu0
    %9832 = vmatpush.msra.mxu0 %v9772
    %9833 = vmatpush.msra.mxu0 %v9771
    %9834 = vmatpush.msra.mxu0 %v9770
    %9835 = vmatpush.msra.mxu0 %v9769
    %9836 = vmatpush.msra.mxu0 %v9768
    %9837 = vmatpush.msra.mxu0 %v9767
    %9838 = vmatpush.msra.mxu0 %v9766
    %9839 = vmatpush.msra.mxu0 %v9765
    %9840 = vmatpush.msra.mxu0 %v9764
    %9841 = vmatpush.msra.mxu0 %v9763
    %9842 = vmatpush.msra.mxu0 %v9762
    %9843 = vmatpush.msra.mxu0 %v9761
    %9844 = vmatpush.msra.mxu0 %v9760
    %9845 = vmatpush.msra.mxu0 %v9759
    %9846 = vmatpush.msra.mxu0 %v9758
    %9847 = vmatpush.msra.mxu0 %v9757
    %9848 = vmatmul.f32.gmra.mxu0 %v9809
    %v9849 = vpop.f32.mrf.mxu0
    %v9850 = vadd.f32 %v9830, %v9849
    %9851 = vdwg.mxu0
    %v9868 = vsel %vm9789, %v9727, %v9725
    %v9869 = vsel %vm9791, %v9729, %v9868
    %v9870 = vsel %vm9793, %v9731, %v9869
    %v9871 = vsel %vm9795, %v9733, %v9870
    %v9872 = vsel %vm9797, %v9735, %v9871
    %v9873 = vsel %vm9799, %v9737, %v9872
    %v9874 = vsel %vm9801, %v9739, %v9873
    %v9875 = vsel %vm9789, %v9728, %v9726
    %v9876 = vsel %vm9791, %v9730, %v9875
    %v9877 = vsel %vm9793, %v9732, %v9876
    %v9878 = vsel %vm9795, %v9734, %v9877
    %v9879 = vsel %vm9797, %v9736, %v9878
    %v9880 = vsel %vm9799, %v9738, %v9879
    %v9881 = vsel %vm9801, %v9740, %v9880
    %9884 = vmatpush.msra.mxu0 %v9756
    %9885 = vmatpush.msra.mxu0 %v9755
    %9886 = vmatpush.msra.mxu0 %v9754
    %9887 = vmatpush.msra.mxu0 %v9753
    %9888 = vmatpush.msra.mxu0 %v9752
    %9889 = vmatpush.msra.mxu0 %v9751
    %9890 = vmatpush.msra.mxu0 %v9750
    %9891 = vmatpush.msra.mxu0 %v9749
    %9892 = vmatpush.msra.mxu0 %v9748
    %9893 = vmatpush.msra.mxu0 %v9747
    %9894 = vmatpush.msra.mxu0 %v9746
    %9895 = vmatpush.msra.mxu0 %v9745
    %9896 = vmatpush.msra.mxu0 %v9744
    %9897 = vmatpush.msra.mxu0 %v9743
    %9898 = vmatpush.msra.mxu0 %v9742
    %9899 = vmatpush.msra.mxu0 %v9741
    %9900 = vmatmul.f32.gmra.mxu0 %v9874
    %v9901 = vpop.f32.mrf.mxu0
    %v9902 = vadd.f32 0.0, %v9901
    %9903 = vdwg.mxu0
    %9904 = vmatpush.msra.mxu0 %v9772
    %9905 = vmatpush.msra.mxu0 %v9771
    %9906 = vmatpush.msra.mxu0 %v9770
    %9907 = vmatpush.msra.mxu0 %v9769
    %9908 = vmatpush.msra.mxu0 %v9768
    %9909 = vmatpush.msra.mxu0 %v9767
    %9910 = vmatpush.msra.mxu0 %v9766
    %9911 = vmatpush.msra.mxu0 %v9765
    %9912 = vmatpush.msra.mxu0 %v9764
    %9913 = vmatpush.msra.mxu0 %v9763
    %9914 = vmatpush.msra.mxu0 %v9762
    %9915 = vmatpush.msra.mxu0 %v9761
    %9916 = vmatpush.msra.mxu0 %v9760
    %9917 = vmatpush.msra.mxu0 %v9759
    %9918 = vmatpush.msra.mxu0 %v9758
    %9919 = vmatpush.msra.mxu0 %v9757
    %9920 = vmatmul.f32.gmra.mxu0 %v9881
    %v9921 = vpop.f32.mrf.mxu0
    %v9922 = vadd.f32 %v9902, %v9921
    %9923 = vdwg.mxu0
    %v9924 = vmul.f32 %v9850, -10.0
    %v9925 = vmul.f32 %v9924, 1.442695
    %v9926 = vpow.pop %v9925
    %v9927 = vmul.f32 %v9922, %v9922
    %v9928 = vmul.f32 %v9926, %v9927
    %9929 = vst [vmem:[#allocation8] sm:$0xff] %v9928
    // Predicated region
    $region26: #{tpu_custom_call.1} parent=1 // pred_check
      _
    $region27: #{tpu_custom_call.1} parent=1 // pred_check_branch
      %9931 = sbr.rel (0) target = $region29
    $region28: #{tpu_custom_call.1} parent=1 // pred_region
      %9933 = vsyncadd [#allocation4], 0
      %s9935 = sshll.u32 [#allocation8], 4
      %s9936 = int_to_ptr.vmem [resolvable:$true] %s9935
      %s9937 = sshll.u32 %s3, 4
      %s9938 = int_to_ptr.hbm [resolvable:$true] %s9937
      %9940 = dma.vmem_to_hbm [thread:$0]  %s9936, 128, %s9938, [#allocation4]
    $region29: #{tpu_custom_call.1} parent=1 // pred_fallthru
      _
    // Predicated region
    $region30: #{tpu_custom_call.1} parent=1 // pred_check
      _
    $region31: #{tpu_custom_call.1} parent=1 // pred_check_branch
      %9942 = sbr.rel (0) target = $region33
    $region32: #{tpu_custom_call.1} parent=1 // pred_region
      %9944 = dma.done [#allocation4], 128
    $region33: #{tpu_custom_call.1} parent=1 // pred_fallthru
      _
    %9945 = vsyncpa [#allocation3], 1
    %9946 = vsyncpa [#allocation6], 1
    %9947 = vsyncpa [#allocation4], 1

</llo_original>
